<compile_context>
chip_gen: v7x
topology: tpu7x:2x2x1
jax: 0.10.0
libtpu: 0.0.40
codegen_flags: <defaults>
</compile_context>

<pallas_src>
import math
from functools import partial

import numpy as np
import jax
import jax.numpy as jnp
from jax.experimental import pallas as pl
from jax.experimental.pallas import tpu as pltpu

# ----------------------------- config (stand-in for `config` module) --------
PATCH_SIZE = 4
ENCODER_HIDDEN_DIMS = (8, 16)
EMBED_DIM = 32
NUM_HEADS = 4
DROPOUT_RATE = 0.1          # identity at inference
LN_EPS = 1e-5
BN_EPS = 1e-5


# ----------------------------- fused Pallas kernel --------------------------
def _fused_meg_encoder_kernel(*refs, n_conv, num_heads):
    """Whole MEG2DEncoder forward for one batch row, entirely in VMEM."""
    it = iter(refs)
    patches_ref = next(it)                                   # [1, S, P*P]
    patch_w_ref = next(it)                                   # [P*P, h0]
    patch_b_ref = next(it)                                   # [1, h0]
    shift_ref = next(it)                                     # [9, S, S] 0/1 taps
    conv_refs = [(next(it), next(it)) for _ in range(n_conv)]  # ([9,cin,cout], [1,cout])
    proj_w_ref = next(it)                                    # [h_last, E]
    pe_bias_ref = next(it)                                   # [S, E]  (PE + proj bias)
    layer_refs = [tuple(next(it) for _ in range(12)) for _ in range(2)]
    out_ref = next(it)                                       # [1, S, E]

    S, E = pe_bias_ref.shape
    head_dim = E // num_heads
    f32 = jnp.float32

    # ---- patchify: Conv2d(1, h0, k=P, stride=P) == per-patch matmul --------
    y = jnp.dot(patches_ref[0, :, :], patch_w_ref[...],
                preferred_element_type=f32) + patch_b_ref[...]

    # ---- Conv2d(3x3, pad=1) + BatchNorm(eval, folded) + ReLU ---------------
    # y1 = relu( sum_d Shift_d @ y @ W_d + bias );  Shift_d encodes the
    # zero-padded spatial shift of tap d, so the whole conv is 18 tiny
    # matmuls on the (otherwise idle) MXU with no im2col / masks.
    for w_ref, b_ref in conv_refs:
        cout = w_ref.shape[-1]
        acc = jnp.zeros((S, cout), f32)
        for d in range(9):
            shifted = jnp.dot(shift_ref[d], y, preferred_element_type=f32)
            acc = acc + jnp.dot(shifted, w_ref[d], preferred_element_type=f32)
        y = jnp.maximum(acc + b_ref[...], 0.0)

    # ---- Linear projection + positional encoding (dropout = identity) ------
    z = jnp.dot(y, proj_w_ref[...], preferred_element_type=f32) + pe_bias_ref[...]

    # ---- 2x TransformerEncoderLayer (post-norm, ReLU FFN, batch_first) -----
    inv_sqrt_d = 1.0 / math.sqrt(head_dim)

    def layer_norm(v, g, b):
        mu = jnp.mean(v, axis=-1, keepdims=True)
        var = jnp.mean((v - mu) ** 2, axis=-1, keepdims=True)
        return (v - mu) * jax.lax.rsqrt(var + LN_EPS) * g + b

    for (wqkv, bqkv, wo, bo, g1, be1, w1, b1, w2, b2, g2, be2) in layer_refs:
        qkv = jnp.dot(z, wqkv[...], preferred_element_type=f32) + bqkv[...]
        wo_val = wo[...]
        attn = jnp.zeros((S, E), f32)
        for h in range(num_heads):
            lo = h * head_dim
            qh = qkv[:, lo:lo + head_dim] * inv_sqrt_d
            kh = qkv[:, E + lo:E + lo + head_dim]
            vh = qkv[:, 2 * E + lo:2 * E + lo + head_dim]
            s = jax.lax.dot_general(qh, kh, (((1,), (1,)), ((), ())),
                                    preferred_element_type=f32)          # [S, S]
            s = s - jnp.max(s, axis=-1, keepdims=True)
            p = jnp.exp(s)
            p = p * pl.reciprocal(jnp.sum(p, axis=-1, keepdims=True), approx=True)
            # concat_h(P_h @ V_h) @ Wo == sum_h P_h @ (V_h @ Wo[h*dh:(h+1)*dh, :])
            vo = jnp.dot(vh, wo_val[lo:lo + head_dim, :], preferred_element_type=f32)
            attn = attn + jnp.dot(p, vo, preferred_element_type=f32)

        z = layer_norm(z + attn + bo[...], g1[...], be1[...])            # post-norm 1
        h1 = jnp.maximum(jnp.dot(z, w1[...], preferred_element_type=f32) + b1[...], 0.0)
        ff = jnp.dot(h1, w2[...], preferred_element_type=f32) + b2[...]
        z = layer_norm(z + ff, g2[...], be2[...])                        # post-norm 2

    out_ref[0, :, :] = z


# ----------------------------- parameters / glue ----------------------------
def positional_encoding(seq_len, d_model):
    # numpy -> trace-time constant (no per-call XLA ops)
    pos = np.arange(seq_len, dtype=np.float32)[:, None]
    div = np.exp(np.arange(0, d_model, 2, dtype=np.float32)
                 * (-math.log(10000.0) / d_model))
    pe = np.zeros((seq_len, d_model), np.float32)
    pe[:, 0::2] = np.sin(pos * div)
    pe[:, 1::2] = np.cos(pos * div)
    return jnp.asarray(pe)


def _make_shift_matrices(Hp, Wp):
    """[9, S, S] 0/1 matrices: tap d maps spatial row s to its (dy,dx)-shifted
    neighbor, zero when the neighbor falls outside the (zero-padded) image."""
    S = Hp * Wp
    mats = np.zeros((9, S, S), np.float32)
    for d in range(9):
        dy, dx = d // 3 - 1, d % 3 - 1
        for hi in range(Hp):
            for wi in range(Wp):
                hs, ws = hi + dy, wi + dx
                if 0 <= hs < Hp and 0 <= ws < Wp:
                    mats[d, hi * Wp + wi, hs * Wp + ws] = 1.0
    return jnp.asarray(mats)


def init_params(key):
    keys = iter(jax.random.split(key, 32))
    P, h0, E = PATCH_SIZE, ENCODER_HIDDEN_DIMS[0], EMBED_DIM
    params = {}
    # patchify: PyTorch Conv2d weight [h0, 1, P, P] stored here as [P*P, h0]
    params["patch_w"] = jax.random.normal(next(keys), (P * P, h0), jnp.float32) * 0.05
    params["patch_b"] = jax.random.normal(next(keys), (h0,), jnp.float32) * 0.05
    params["convs"] = []
    for cin, cout in zip(ENCODER_HIDDEN_DIMS[:-1], ENCODER_HIDDEN_DIMS[1:]):
        w = jax.random.normal(next(keys), (3, 3, cin, cout), jnp.float32) * 0.05
        b = jax.random.normal(next(keys), (cout,), jnp.float32) * 0.05
        gamma, beta = jnp.ones((cout,)), jnp.zeros((cout,))       # BN affine defaults
        mean, var = jnp.zeros((cout,)), jnp.ones((cout,))         # BN running stats
        params["convs"].append((w, b, gamma, beta, mean, var))
    hlast = ENCODER_HIDDEN_DIMS[-1]
    params["proj_w"] = jax.random.normal(next(keys), (hlast, E), jnp.float32) * 0.05
    params["proj_b"] = jax.random.normal(next(keys), (E,), jnp.float32) * 0.05
    params["layers"] = []
    for _ in range(2):
        wqkv = jax.random.normal(next(keys), (E, 3 * E), jnp.float32) * 0.05
        wo = jax.random.normal(next(keys), (E, E), jnp.float32) * 0.05
        w1 = jax.random.normal(next(keys), (E, 4 * E), jnp.float32) * 0.05
        w2 = jax.random.normal(next(keys), (4 * E, E), jnp.float32) * 0.05
        params["layers"].append((
            wqkv, jnp.zeros((1, 3 * E)), wo, jnp.zeros((1, E)),
            jnp.ones((1, E)), jnp.zeros((1, E)),                  # LN1 gamma / beta
            w1, jnp.zeros((1, 4 * E)), w2, jnp.zeros((1, E)),
            jnp.ones((1, E)), jnp.zeros((1, E)),                  # LN2 gamma / beta
        ))
    return params


def _resident_spec(arr):
    """Full-array block, constant index -> loaded once, stays in VMEM."""
    nd = arr.ndim
    return pl.BlockSpec(arr.shape, lambda b, _nd=nd: (0,) * _nd)


def meg2d_encoder_forward(x, params):
    """x: [B, meg_channels, time] -> [B, seq_len, EMBED_DIM]."""
    B, C, T = x.shape
    P = PATCH_SIZE
    assert C % P == 0 and T % P == 0
    Hp, Wp = C // P, T // P
    S, E = Hp * Wp, EMBED_DIM

    # Patch extraction (the only XLA-side op: one transpose of the raw input).
    patches = (x.reshape(B, Hp, P, Wp, P)
                 .transpose(0, 1, 3, 2, 4)
                 .reshape(B, S, P * P))

    shift_mats = _make_shift_matrices(Hp, Wp)

    # Fold BatchNorm (eval) into the conv weight / bias.
    conv_inputs = []
    for (w, b, gamma, beta, mean, var) in params["convs"]:
        cin, cout = w.shape[2], w.shape[3]
        scale = gamma / jnp.sqrt(var + BN_EPS)                    # [cout]
        w_folded = (w * scale[None, None, None, :]).reshape(9, cin, cout)
        bias_folded = ((b - mean) * scale + beta)[None, :]        # [1, cout]
        conv_inputs += [w_folded, bias_folded]

    # Positional encoding + projection bias folded into one [S, E] bias.
    pe_bias = positional_encoding(S, E) + params["proj_b"][None, :]

    layer_inputs = []
    for lp in params["layers"]:
        layer_inputs += list(lp)

    inputs = [patches, params["patch_w"], params["patch_b"][None, :],
              shift_mats, *conv_inputs, params["proj_w"], pe_bias, *layer_inputs]

    in_specs = [pl.BlockSpec((1, S, P * P), lambda b: (b, 0, 0))]
    in_specs += [_resident_spec(a) for a in inputs[1:]]

    return pl.pallas_call(
        partial(_fused_meg_encoder_kernel,
                n_conv=len(params["convs"]), num_heads=NUM_HEADS),
        out_shape=jax.ShapeDtypeStruct((B, S, E), jnp.float32),
        grid=(B,),
        in_specs=in_specs,
        out_specs=pl.BlockSpec((1, S, E), lambda b: (b, 0, 0)),
        compiler_params=pltpu.CompilerParams(
            dimension_semantics=("parallel",)),    # v7x: 2 batch rows -> 2 TCs
    )(*inputs)


if __name__ == "__main__":
    x = jax.random.normal(jax.random.PRNGKey(0), (2, 16, 32), jnp.float32)  # [B, C_meg, T]
    params = init_params(jax.random.PRNGKey(42))

    fwd = jax.jit(lambda a: meg2d_encoder_forward(a, params))
    out = jax.block_until_ready(fwd(x))

    assert out.shape == (2, (16 // PATCH_SIZE) * (32 // PATCH_SIZE), EMBED_DIM)
    assert bool(jnp.all(jnp.isfinite(out)))
    print("KERNEL_OK")
</pallas_src>

<mosaic_0001>
module attributes {stable_mosaic.version = 11 : i64} {
  func.func @_fused_meg_encoder_kernel(%arg0: i32, %arg1: memref<1x32x16xf32, #tpu.memory_space<vmem>>, %arg2: memref<16x8xf32, #tpu.memory_space<vmem>>, %arg3: memref<1x8xf32, #tpu.memory_space<vmem>>, %arg4: memref<9x32x32xf32, #tpu.memory_space<vmem>>, %arg5: memref<9x8x16xf32, #tpu.memory_space<vmem>>, %arg6: memref<1x16xf32, #tpu.memory_space<vmem>>, %arg7: memref<16x32xf32, #tpu.memory_space<vmem>>, %arg8: memref<32x32xf32, #tpu.memory_space<vmem>>, %arg9: memref<32x96xf32, #tpu.memory_space<vmem>>, %arg10: memref<1x96xf32, #tpu.memory_space<vmem>>, %arg11: memref<32x32xf32, #tpu.memory_space<vmem>>, %arg12: memref<1x32xf32, #tpu.memory_space<vmem>>, %arg13: memref<1x32xf32, #tpu.memory_space<vmem>>, %arg14: memref<1x32xf32, #tpu.memory_space<vmem>>, %arg15: memref<32x128xf32, #tpu.memory_space<vmem>>, %arg16: memref<1x128xf32, #tpu.memory_space<vmem>>, %arg17: memref<128x32xf32, #tpu.memory_space<vmem>>, %arg18: memref<1x32xf32, #tpu.memory_space<vmem>>, %arg19: memref<1x32xf32, #tpu.memory_space<vmem>>, %arg20: memref<1x32xf32, #tpu.memory_space<vmem>>, %arg21: memref<32x96xf32, #tpu.memory_space<vmem>>, %arg22: memref<1x96xf32, #tpu.memory_space<vmem>>, %arg23: memref<32x32xf32, #tpu.memory_space<vmem>>, %arg24: memref<1x32xf32, #tpu.memory_space<vmem>>, %arg25: memref<1x32xf32, #tpu.memory_space<vmem>>, %arg26: memref<1x32xf32, #tpu.memory_space<vmem>>, %arg27: memref<32x128xf32, #tpu.memory_space<vmem>>, %arg28: memref<1x128xf32, #tpu.memory_space<vmem>>, %arg29: memref<128x32xf32, #tpu.memory_space<vmem>>, %arg30: memref<1x32xf32, #tpu.memory_space<vmem>>, %arg31: memref<1x32xf32, #tpu.memory_space<vmem>>, %arg32: memref<1x32xf32, #tpu.memory_space<vmem>>, %arg33: memref<1x32x32xf32, #tpu.memory_space<vmem>>) attributes {dimension_semantics = [#tpu.dimension_semantics<parallel>], iteration_bounds = array<i64: 2>, scalar_prefetch = 0 : i64, scratch_operands = 0 : i64, tpu.core_type = #tpu.core_type<tc>, window_params = [{transform_indices = @transform_0, window_bounds = array<i64: 1, 32, 16>}, {pipeline_mode = #tpu.pipeline_mode<synchronous>, transform_indices = @transform_1, window_bounds = array<i64: 16, 8>}, {pipeline_mode = #tpu.pipeline_mode<synchronous>, transform_indices = @transform_2, window_bounds = array<i64: 1, 8>}, {pipeline_mode = #tpu.pipeline_mode<synchronous>, transform_indices = @transform_3, window_bounds = array<i64: 9, 32, 32>}, {pipeline_mode = #tpu.pipeline_mode<synchronous>, transform_indices = @transform_4, window_bounds = array<i64: 9, 8, 16>}, {pipeline_mode = #tpu.pipeline_mode<synchronous>, transform_indices = @transform_5, window_bounds = array<i64: 1, 16>}, {pipeline_mode = #tpu.pipeline_mode<synchronous>, transform_indices = @transform_6, window_bounds = array<i64: 16, 32>}, {pipeline_mode = #tpu.pipeline_mode<synchronous>, transform_indices = @transform_7, window_bounds = array<i64: 32, 32>}, {pipeline_mode = #tpu.pipeline_mode<synchronous>, transform_indices = @transform_8, window_bounds = array<i64: 32, 96>}, {pipeline_mode = #tpu.pipeline_mode<synchronous>, transform_indices = @transform_9, window_bounds = array<i64: 1, 96>}, {pipeline_mode = #tpu.pipeline_mode<synchronous>, transform_indices = @transform_10, window_bounds = array<i64: 32, 32>}, {pipeline_mode = #tpu.pipeline_mode<synchronous>, transform_indices = @transform_11, window_bounds = array<i64: 1, 32>}, {pipeline_mode = #tpu.pipeline_mode<synchronous>, transform_indices = @transform_12, window_bounds = array<i64: 1, 32>}, {pipeline_mode = #tpu.pipeline_mode<synchronous>, transform_indices = @transform_13, window_bounds = array<i64: 1, 32>}, {pipeline_mode = #tpu.pipeline_mode<synchronous>, transform_indices = @transform_14, window_bounds = array<i64: 32, 128>}, {pipeline_mode = #tpu.pipeline_mode<synchronous>, transform_indices = @transform_15, window_bounds = array<i64: 1, 128>}, {pipeline_mode = #tpu.pipeline_mode<synchronous>, transform_indices = @transform_16, window_bounds = array<i64: 128, 32>}, {pipeline_mode = #tpu.pipeline_mode<synchronous>, transform_indices = @transform_17, window_bounds = array<i64: 1, 32>}, {pipeline_mode = #tpu.pipeline_mode<synchronous>, transform_indices = @transform_18, window_bounds = array<i64: 1, 32>}, {pipeline_mode = #tpu.pipeline_mode<synchronous>, transform_indices = @transform_19, window_bounds = array<i64: 1, 32>}, {pipeline_mode = #tpu.pipeline_mode<synchronous>, transform_indices = @transform_20, window_bounds = array<i64: 32, 96>}, {pipeline_mode = #tpu.pipeline_mode<synchronous>, transform_indices = @transform_21, window_bounds = array<i64: 1, 96>}, {pipeline_mode = #tpu.pipeline_mode<synchronous>, transform_indices = @transform_22, window_bounds = array<i64: 32, 32>}, {pipeline_mode = #tpu.pipeline_mode<synchronous>, transform_indices = @transform_23, window_bounds = array<i64: 1, 32>}, {pipeline_mode = #tpu.pipeline_mode<synchronous>, transform_indices = @transform_24, window_bounds = array<i64: 1, 32>}, {pipeline_mode = #tpu.pipeline_mode<synchronous>, transform_indices = @transform_25, window_bounds = array<i64: 1, 32>}, {pipeline_mode = #tpu.pipeline_mode<synchronous>, transform_indices = @transform_26, window_bounds = array<i64: 32, 128>}, {pipeline_mode = #tpu.pipeline_mode<synchronous>, transform_indices = @transform_27, window_bounds = array<i64: 1, 128>}, {pipeline_mode = #tpu.pipeline_mode<synchronous>, transform_indices = @transform_28, window_bounds = array<i64: 128, 32>}, {pipeline_mode = #tpu.pipeline_mode<synchronous>, transform_indices = @transform_29, window_bounds = array<i64: 1, 32>}, {pipeline_mode = #tpu.pipeline_mode<synchronous>, transform_indices = @transform_30, window_bounds = array<i64: 1, 32>}, {pipeline_mode = #tpu.pipeline_mode<synchronous>, transform_indices = @transform_31, window_bounds = array<i64: 1, 32>}, {transform_indices = @transform_32, window_bounds = array<i64: 1, 32, 32>}]} {
    %c0 = arith.constant 0 : index
    %c0_0 = arith.constant 0 : index
    %c0_1 = arith.constant 0 : index
    %0 = vector.load %arg1[%c0, %c0_0, %c0_1] : memref<1x32x16xf32, #tpu.memory_space<vmem>>, vector<1x32x16xf32>
    %1 = vector.shape_cast %0 : vector<1x32x16xf32> to vector<32x16xf32>
    %c0_2 = arith.constant 0 : index
    %c0_3 = arith.constant 0 : index
    %2 = vector.load %arg2[%c0_2, %c0_3] : memref<16x8xf32, #tpu.memory_space<vmem>>, vector<16x8xf32>
    %cst = arith.constant dense<0.000000e+00> : vector<32x8xf32>
    %3 = tpu.matmul %1, %2, %cst {dimension_numbers = #tpu.dot_dimension_numbers<[1], [0], [0], [1], [0, 0, 1, 1], [], []>} : vector<32x16xf32>, vector<16x8xf32>, vector<32x8xf32> -> vector<32x8xf32>
    %c0_4 = arith.constant 0 : index
    %c0_5 = arith.constant 0 : index
    %4 = vector.load %arg3[%c0_4, %c0_5] : memref<1x8xf32, #tpu.memory_space<vmem>>, vector<1x8xf32>
    %5 = vector.broadcast %4 : vector<1x8xf32> to vector<32x8xf32>
    %6 = arith.addf %3, %5 : vector<32x8xf32>
    %cst_6 = arith.constant 0.000000e+00 : f32
    %7 = vector.broadcast %cst_6 : f32 to vector<32x16xf32>
    %c0_7 = arith.constant 0 : index
    %c0_8 = arith.constant 0 : index
    %c0_9 = arith.constant 0 : index
    %8 = vector.load %arg4[%c0_7, %c0_8, %c0_9] : memref<9x32x32xf32, #tpu.memory_space<vmem>>, vector<1x32x32xf32>
    %9 = vector.shape_cast %8 : vector<1x32x32xf32> to vector<32x32xf32>
    %cst_10 = arith.constant dense<0.000000e+00> : vector<32x8xf32>
    %10 = tpu.matmul %9, %6, %cst_10 {dimension_numbers = #tpu.dot_dimension_numbers<[1], [0], [0], [1], [0, 0, 1, 1], [], []>} : vector<32x32xf32>, vector<32x8xf32>, vector<32x8xf32> -> vector<32x8xf32>
    %c0_11 = arith.constant 0 : index
    %c0_12 = arith.constant 0 : index
    %c0_13 = arith.constant 0 : index
    %11 = vector.load %arg5[%c0_11, %c0_12, %c0_13] : memref<9x8x16xf32, #tpu.memory_space<vmem>>, vector<1x8x16xf32>
    %12 = vector.shape_cast %11 : vector<1x8x16xf32> to vector<8x16xf32>
    %cst_14 = arith.constant dense<0.000000e+00> : vector<32x16xf32>
    %13 = tpu.matmul %10, %12, %cst_14 {dimension_numbers = #tpu.dot_dimension_numbers<[1], [0], [0], [1], [0, 0, 1, 1], [], []>} : vector<32x8xf32>, vector<8x16xf32>, vector<32x16xf32> -> vector<32x16xf32>
    %14 = arith.addf %7, %13 : vector<32x16xf32>
    %c1 = arith.constant 1 : index
    %c0_15 = arith.constant 0 : index
    %c0_16 = arith.constant 0 : index
    %15 = vector.load %arg4[%c1, %c0_15, %c0_16] : memref<9x32x32xf32, #tpu.memory_space<vmem>>, vector<1x32x32xf32>
    %16 = vector.shape_cast %15 : vector<1x32x32xf32> to vector<32x32xf32>
    %cst_17 = arith.constant dense<0.000000e+00> : vector<32x8xf32>
    %17 = tpu.matmul %16, %6, %cst_17 {dimension_numbers = #tpu.dot_dimension_numbers<[1], [0], [0], [1], [0, 0, 1, 1], [], []>} : vector<32x32xf32>, vector<32x8xf32>, vector<32x8xf32> -> vector<32x8xf32>
    %c1_18 = arith.constant 1 : index
    %c0_19 = arith.constant 0 : index
    %c0_20 = arith.constant 0 : index
    %18 = vector.load %arg5[%c1_18, %c0_19, %c0_20] : memref<9x8x16xf32, #tpu.memory_space<vmem>>, vector<1x8x16xf32>
    %19 = vector.shape_cast %18 : vector<1x8x16xf32> to vector<8x16xf32>
    %cst_21 = arith.constant dense<0.000000e+00> : vector<32x16xf32>
    %20 = tpu.matmul %17, %19, %cst_21 {dimension_numbers = #tpu.dot_dimension_numbers<[1], [0], [0], [1], [0, 0, 1, 1], [], []>} : vector<32x8xf32>, vector<8x16xf32>, vector<32x16xf32> -> vector<32x16xf32>
    %21 = arith.addf %14, %20 : vector<32x16xf32>
    %c2 = arith.constant 2 : index
    %c0_22 = arith.constant 0 : index
    %c0_23 = arith.constant 0 : index
    %22 = vector.load %arg4[%c2, %c0_22, %c0_23] : memref<9x32x32xf32, #tpu.memory_space<vmem>>, vector<1x32x32xf32>
    %23 = vector.shape_cast %22 : vector<1x32x32xf32> to vector<32x32xf32>
    %cst_24 = arith.constant dense<0.000000e+00> : vector<32x8xf32>
    %24 = tpu.matmul %23, %6, %cst_24 {dimension_numbers = #tpu.dot_dimension_numbers<[1], [0], [0], [1], [0, 0, 1, 1], [], []>} : vector<32x32xf32>, vector<32x8xf32>, vector<32x8xf32> -> vector<32x8xf32>
    %c2_25 = arith.constant 2 : index
    %c0_26 = arith.constant 0 : index
    %c0_27 = arith.constant 0 : index
    %25 = vector.load %arg5[%c2_25, %c0_26, %c0_27] : memref<9x8x16xf32, #tpu.memory_space<vmem>>, vector<1x8x16xf32>
    %26 = vector.shape_cast %25 : vector<1x8x16xf32> to vector<8x16xf32>
    %cst_28 = arith.constant dense<0.000000e+00> : vector<32x16xf32>
    %27 = tpu.matmul %24, %26, %cst_28 {dimension_numbers = #tpu.dot_dimension_numbers<[1], [0], [0], [1], [0, 0, 1, 1], [], []>} : vector<32x8xf32>, vector<8x16xf32>, vector<32x16xf32> -> vector<32x16xf32>
    %28 = arith.addf %21, %27 : vector<32x16xf32>
    %c3 = arith.constant 3 : index
    %c0_29 = arith.constant 0 : index
    %c0_30 = arith.constant 0 : index
    %29 = vector.load %arg4[%c3, %c0_29, %c0_30] : memref<9x32x32xf32, #tpu.memory_space<vmem>>, vector<1x32x32xf32>
    %30 = vector.shape_cast %29 : vector<1x32x32xf32> to vector<32x32xf32>
    %cst_31 = arith.constant dense<0.000000e+00> : vector<32x8xf32>
    %31 = tpu.matmul %30, %6, %cst_31 {dimension_numbers = #tpu.dot_dimension_numbers<[1], [0], [0], [1], [0, 0, 1, 1], [], []>} : vector<32x32xf32>, vector<32x8xf32>, vector<32x8xf32> -> vector<32x8xf32>
    %c3_32 = arith.constant 3 : index
    %c0_33 = arith.constant 0 : index
    %c0_34 = arith.constant 0 : index
    %32 = vector.load %arg5[%c3_32, %c0_33, %c0_34] : memref<9x8x16xf32, #tpu.memory_space<vmem>>, vector<1x8x16xf32>
    %33 = vector.shape_cast %32 : vector<1x8x16xf32> to vector<8x16xf32>
    %cst_35 = arith.constant dense<0.000000e+00> : vector<32x16xf32>
    %34 = tpu.matmul %31, %33, %cst_35 {dimension_numbers = #tpu.dot_dimension_numbers<[1], [0], [0], [1], [0, 0, 1, 1], [], []>} : vector<32x8xf32>, vector<8x16xf32>, vector<32x16xf32> -> vector<32x16xf32>
    %35 = arith.addf %28, %34 : vector<32x16xf32>
    %c4 = arith.constant 4 : index
    %c0_36 = arith.constant 0 : index
    %c0_37 = arith.constant 0 : index
    %36 = vector.load %arg4[%c4, %c0_36, %c0_37] : memref<9x32x32xf32, #tpu.memory_space<vmem>>, vector<1x32x32xf32>
    %37 = vector.shape_cast %36 : vector<1x32x32xf32> to vector<32x32xf32>
    %cst_38 = arith.constant dense<0.000000e+00> : vector<32x8xf32>
    %38 = tpu.matmul %37, %6, %cst_38 {dimension_numbers = #tpu.dot_dimension_numbers<[1], [0], [0], [1], [0, 0, 1, 1], [], []>} : vector<32x32xf32>, vector<32x8xf32>, vector<32x8xf32> -> vector<32x8xf32>
    %c4_39 = arith.constant 4 : index
    %c0_40 = arith.constant 0 : index
    %c0_41 = arith.constant 0 : index
    %39 = vector.load %arg5[%c4_39, %c0_40, %c0_41] : memref<9x8x16xf32, #tpu.memory_space<vmem>>, vector<1x8x16xf32>
    %40 = vector.shape_cast %39 : vector<1x8x16xf32> to vector<8x16xf32>
    %cst_42 = arith.constant dense<0.000000e+00> : vector<32x16xf32>
    %41 = tpu.matmul %38, %40, %cst_42 {dimension_numbers = #tpu.dot_dimension_numbers<[1], [0], [0], [1], [0, 0, 1, 1], [], []>} : vector<32x8xf32>, vector<8x16xf32>, vector<32x16xf32> -> vector<32x16xf32>
    %42 = arith.addf %35, %41 : vector<32x16xf32>
    %c5 = arith.constant 5 : index
    %c0_43 = arith.constant 0 : index
    %c0_44 = arith.constant 0 : index
    %43 = vector.load %arg4[%c5, %c0_43, %c0_44] : memref<9x32x32xf32, #tpu.memory_space<vmem>>, vector<1x32x32xf32>
    %44 = vector.shape_cast %43 : vector<1x32x32xf32> to vector<32x32xf32>
    %cst_45 = arith.constant dense<0.000000e+00> : vector<32x8xf32>
    %45 = tpu.matmul %44, %6, %cst_45 {dimension_numbers = #tpu.dot_dimension_numbers<[1], [0], [0], [1], [0, 0, 1, 1], [], []>} : vector<32x32xf32>, vector<32x8xf32>, vector<32x8xf32> -> vector<32x8xf32>
    %c5_46 = arith.constant 5 : index
    %c0_47 = arith.constant 0 : index
    %c0_48 = arith.constant 0 : index
    %46 = vector.load %arg5[%c5_46, %c0_47, %c0_48] : memref<9x8x16xf32, #tpu.memory_space<vmem>>, vector<1x8x16xf32>
    %47 = vector.shape_cast %46 : vector<1x8x16xf32> to vector<8x16xf32>
    %cst_49 = arith.constant dense<0.000000e+00> : vector<32x16xf32>
    %48 = tpu.matmul %45, %47, %cst_49 {dimension_numbers = #tpu.dot_dimension_numbers<[1], [0], [0], [1], [0, 0, 1, 1], [], []>} : vector<32x8xf32>, vector<8x16xf32>, vector<32x16xf32> -> vector<32x16xf32>
    %49 = arith.addf %42, %48 : vector<32x16xf32>
    %c6 = arith.constant 6 : index
    %c0_50 = arith.constant 0 : index
    %c0_51 = arith.constant 0 : index
    %50 = vector.load %arg4[%c6, %c0_50, %c0_51] : memref<9x32x32xf32, #tpu.memory_space<vmem>>, vector<1x32x32xf32>
    %51 = vector.shape_cast %50 : vector<1x32x32xf32> to vector<32x32xf32>
    %cst_52 = arith.constant dense<0.000000e+00> : vector<32x8xf32>
    %52 = tpu.matmul %51, %6, %cst_52 {dimension_numbers = #tpu.dot_dimension_numbers<[1], [0], [0], [1], [0, 0, 1, 1], [], []>} : vector<32x32xf32>, vector<32x8xf32>, vector<32x8xf32> -> vector<32x8xf32>
    %c6_53 = arith.constant 6 : index
    %c0_54 = arith.constant 0 : index
    %c0_55 = arith.constant 0 : index
    %53 = vector.load %arg5[%c6_53, %c0_54, %c0_55] : memref<9x8x16xf32, #tpu.memory_space<vmem>>, vector<1x8x16xf32>
    %54 = vector.shape_cast %53 : vector<1x8x16xf32> to vector<8x16xf32>
    %cst_56 = arith.constant dense<0.000000e+00> : vector<32x16xf32>
    %55 = tpu.matmul %52, %54, %cst_56 {dimension_numbers = #tpu.dot_dimension_numbers<[1], [0], [0], [1], [0, 0, 1, 1], [], []>} : vector<32x8xf32>, vector<8x16xf32>, vector<32x16xf32> -> vector<32x16xf32>
    %56 = arith.addf %49, %55 : vector<32x16xf32>
    %c7 = arith.constant 7 : index
    %c0_57 = arith.constant 0 : index
    %c0_58 = arith.constant 0 : index
    %57 = vector.load %arg4[%c7, %c0_57, %c0_58] : memref<9x32x32xf32, #tpu.memory_space<vmem>>, vector<1x32x32xf32>
    %58 = vector.shape_cast %57 : vector<1x32x32xf32> to vector<32x32xf32>
    %cst_59 = arith.constant dense<0.000000e+00> : vector<32x8xf32>
    %59 = tpu.matmul %58, %6, %cst_59 {dimension_numbers = #tpu.dot_dimension_numbers<[1], [0], [0], [1], [0, 0, 1, 1], [], []>} : vector<32x32xf32>, vector<32x8xf32>, vector<32x8xf32> -> vector<32x8xf32>
    %c7_60 = arith.constant 7 : index
    %c0_61 = arith.constant 0 : index
    %c0_62 = arith.constant 0 : index
    %60 = vector.load %arg5[%c7_60, %c0_61, %c0_62] : memref<9x8x16xf32, #tpu.memory_space<vmem>>, vector<1x8x16xf32>
    %61 = vector.shape_cast %60 : vector<1x8x16xf32> to vector<8x16xf32>
    %cst_63 = arith.constant dense<0.000000e+00> : vector<32x16xf32>
    %62 = tpu.matmul %59, %61, %cst_63 {dimension_numbers = #tpu.dot_dimension_numbers<[1], [0], [0], [1], [0, 0, 1, 1], [], []>} : vector<32x8xf32>, vector<8x16xf32>, vector<32x16xf32> -> vector<32x16xf32>
    %63 = arith.addf %56, %62 : vector<32x16xf32>
    %c8 = arith.constant 8 : index
    %c0_64 = arith.constant 0 : index
    %c0_65 = arith.constant 0 : index
    %64 = vector.load %arg4[%c8, %c0_64, %c0_65] : memref<9x32x32xf32, #tpu.memory_space<vmem>>, vector<1x32x32xf32>
    %65 = vector.shape_cast %64 : vector<1x32x32xf32> to vector<32x32xf32>
    %cst_66 = arith.constant dense<0.000000e+00> : vector<32x8xf32>
    %66 = tpu.matmul %65, %6, %cst_66 {dimension_numbers = #tpu.dot_dimension_numbers<[1], [0], [0], [1], [0, 0, 1, 1], [], []>} : vector<32x32xf32>, vector<32x8xf32>, vector<32x8xf32> -> vector<32x8xf32>
    %c8_67 = arith.constant 8 : index
    %c0_68 = arith.constant 0 : index
    %c0_69 = arith.constant 0 : index
    %67 = vector.load %arg5[%c8_67, %c0_68, %c0_69] : memref<9x8x16xf32, #tpu.memory_space<vmem>>, vector<1x8x16xf32>
    %68 = vector.shape_cast %67 : vector<1x8x16xf32> to vector<8x16xf32>
    %cst_70 = arith.constant dense<0.000000e+00> : vector<32x16xf32>
    %69 = tpu.matmul %66, %68, %cst_70 {dimension_numbers = #tpu.dot_dimension_numbers<[1], [0], [0], [1], [0, 0, 1, 1], [], []>} : vector<32x8xf32>, vector<8x16xf32>, vector<32x16xf32> -> vector<32x16xf32>
    %70 = arith.addf %63, %69 : vector<32x16xf32>
    %c0_71 = arith.constant 0 : index
    %c0_72 = arith.constant 0 : index
    %71 = vector.load %arg6[%c0_71, %c0_72] : memref<1x16xf32, #tpu.memory_space<vmem>>, vector<1x16xf32>
    %72 = vector.broadcast %71 : vector<1x16xf32> to vector<32x16xf32>
    %73 = arith.addf %70, %72 : vector<32x16xf32>
    %cst_73 = arith.constant 0.000000e+00 : f32
    %74 = vector.broadcast %cst_73 : f32 to vector<32x16xf32>
    %75 = arith.maximumf %73, %74 : vector<32x16xf32>
    %c0_74 = arith.constant 0 : index
    %c0_75 = arith.constant 0 : index
    %76 = vector.load %arg7[%c0_74, %c0_75] : memref<16x32xf32, #tpu.memory_space<vmem>>, vector<16x32xf32>
    %cst_76 = arith.constant dense<0.000000e+00> : vector<32x32xf32>
    %77 = tpu.matmul %75, %76, %cst_76 {dimension_numbers = #tpu.dot_dimension_numbers<[1], [0], [0], [1], [0, 0, 1, 1], [], []>} : vector<32x16xf32>, vector<16x32xf32>, vector<32x32xf32> -> vector<32x32xf32>
    %c0_77 = arith.constant 0 : index
    %c0_78 = arith.constant 0 : index
    %78 = vector.load %arg8[%c0_77, %c0_78] : memref<32x32xf32, #tpu.memory_space<vmem>>, vector<32x32xf32>
    %79 = arith.addf %77, %78 : vector<32x32xf32>
    %c0_79 = arith.constant 0 : index
    %c0_80 = arith.constant 0 : index
    %80 = vector.load %arg9[%c0_79, %c0_80] : memref<32x96xf32, #tpu.memory_space<vmem>>, vector<32x96xf32>
    %cst_81 = arith.constant dense<0.000000e+00> : vector<32x96xf32>
    %81 = tpu.matmul %79, %80, %cst_81 {dimension_numbers = #tpu.dot_dimension_numbers<[1], [0], [0], [1], [0, 0, 1, 1], [], []>} : vector<32x32xf32>, vector<32x96xf32>, vector<32x96xf32> -> vector<32x96xf32>
    %c0_82 = arith.constant 0 : index
    %c0_83 = arith.constant 0 : index
    %82 = vector.load %arg10[%c0_82, %c0_83] : memref<1x96xf32, #tpu.memory_space<vmem>>, vector<1x96xf32>
    %83 = vector.broadcast %82 : vector<1x96xf32> to vector<32x96xf32>
    %84 = arith.addf %81, %83 : vector<32x96xf32>
    %c0_84 = arith.constant 0 : index
    %c0_85 = arith.constant 0 : index
    %85 = vector.load %arg11[%c0_84, %c0_85] : memref<32x32xf32, #tpu.memory_space<vmem>>, vector<32x32xf32>
    %cst_86 = arith.constant 0.000000e+00 : f32
    %86 = vector.broadcast %cst_86 : f32 to vector<32x32xf32>
    %87 = vector.extract_strided_slice %84 {offsets = [0, 0], sizes = [32, 8], strides = [1, 1]} : vector<32x96xf32> to vector<32x8xf32>
    %cst_87 = arith.constant 0.353553385 : f32
    %88 = vector.broadcast %cst_87 : f32 to vector<32x8xf32>
    %89 = arith.mulf %87, %88 : vector<32x8xf32>
    %90 = vector.extract_strided_slice %84 {offsets = [0, 32], sizes = [32, 8], strides = [1, 1]} : vector<32x96xf32> to vector<32x8xf32>
    %91 = vector.extract_strided_slice %84 {offsets = [0, 64], sizes = [32, 8], strides = [1, 1]} : vector<32x96xf32> to vector<32x8xf32>
    %cst_88 = arith.constant dense<0.000000e+00> : vector<32x32xf32>
    %92 = tpu.matmul %89, %90, %cst_88 {dimension_numbers = #tpu.dot_dimension_numbers<[1], [1], [0], [0], [0, 0, 1, 0], [], []>} : vector<32x8xf32>, vector<32x8xf32>, vector<32x32xf32> -> vector<32x32xf32>
    %cst_89 = arith.constant dense<0xFF800000> : vector<32xf32>
    %93 = vector.multi_reduction <maximumf>, %92, %cst_89 [1] : vector<32x32xf32> to vector<32xf32>
    %94 = vector.shape_cast %93 : vector<32xf32> to vector<32x1xf32>
    %95 = vector.broadcast %94 : vector<32x1xf32> to vector<32x32xf32>
    %96 = arith.subf %92, %95 : vector<32x32xf32>
    %97 = math.exp %96 : vector<32x32xf32>
    %cst_90 = arith.constant dense<0.000000e+00> : vector<32xf32>
    %98 = vector.multi_reduction <add>, %97, %cst_90 [1] : vector<32x32xf32> to vector<32xf32>
    %99 = vector.shape_cast %98 : vector<32xf32> to vector<32x1xf32>
    %100 = tpu.reciprocal %99 {approx = true} : vector<32x1xf32> -> vector<32x1xf32>
    %101 = vector.broadcast %100 : vector<32x1xf32> to vector<32x32xf32>
    %102 = arith.mulf %97, %101 : vector<32x32xf32>
    %103 = vector.extract_strided_slice %85 {offsets = [0, 0], sizes = [8, 32], strides = [1, 1]} : vector<32x32xf32> to vector<8x32xf32>
    %cst_91 = arith.constant dense<0.000000e+00> : vector<32x32xf32>
    %104 = tpu.matmul %91, %103, %cst_91 {dimension_numbers = #tpu.dot_dimension_numbers<[1], [0], [0], [1], [0, 0, 1, 1], [], []>} : vector<32x8xf32>, vector<8x32xf32>, vector<32x32xf32> -> vector<32x32xf32>
    %cst_92 = arith.constant dense<0.000000e+00> : vector<32x32xf32>
    %105 = tpu.matmul %102, %104, %cst_92 {dimension_numbers = #tpu.dot_dimension_numbers<[1], [0], [0], [1], [0, 0, 1, 1], [], []>} : vector<32x32xf32>, vector<32x32xf32>, vector<32x32xf32> -> vector<32x32xf32>
    %106 = arith.addf %86, %105 : vector<32x32xf32>
    %107 = vector.extract_strided_slice %84 {offsets = [0, 8], sizes = [32, 8], strides = [1, 1]} : vector<32x96xf32> to vector<32x8xf32>
    %cst_93 = arith.constant 0.353553385 : f32
    %108 = vector.broadcast %cst_93 : f32 to vector<32x8xf32>
    %109 = arith.mulf %107, %108 : vector<32x8xf32>
    %110 = vector.extract_strided_slice %84 {offsets = [0, 40], sizes = [32, 8], strides = [1, 1]} : vector<32x96xf32> to vector<32x8xf32>
    %111 = vector.extract_strided_slice %84 {offsets = [0, 72], sizes = [32, 8], strides = [1, 1]} : vector<32x96xf32> to vector<32x8xf32>
    %cst_94 = arith.constant dense<0.000000e+00> : vector<32x32xf32>
    %112 = tpu.matmul %109, %110, %cst_94 {dimension_numbers = #tpu.dot_dimension_numbers<[1], [1], [0], [0], [0, 0, 1, 0], [], []>} : vector<32x8xf32>, vector<32x8xf32>, vector<32x32xf32> -> vector<32x32xf32>
    %cst_95 = arith.constant dense<0xFF800000> : vector<32xf32>
    %113 = vector.multi_reduction <maximumf>, %112, %cst_95 [1] : vector<32x32xf32> to vector<32xf32>
    %114 = vector.shape_cast %113 : vector<32xf32> to vector<32x1xf32>
    %115 = vector.broadcast %114 : vector<32x1xf32> to vector<32x32xf32>
    %116 = arith.subf %112, %115 : vector<32x32xf32>
    %117 = math.exp %116 : vector<32x32xf32>
    %cst_96 = arith.constant dense<0.000000e+00> : vector<32xf32>
    %118 = vector.multi_reduction <add>, %117, %cst_96 [1] : vector<32x32xf32> to vector<32xf32>
    %119 = vector.shape_cast %118 : vector<32xf32> to vector<32x1xf32>
    %120 = tpu.reciprocal %119 {approx = true} : vector<32x1xf32> -> vector<32x1xf32>
    %121 = vector.broadcast %120 : vector<32x1xf32> to vector<32x32xf32>
    %122 = arith.mulf %117, %121 : vector<32x32xf32>
    %123 = vector.extract_strided_slice %85 {offsets = [8, 0], sizes = [8, 32], strides = [1, 1]} : vector<32x32xf32> to vector<8x32xf32>
    %cst_97 = arith.constant dense<0.000000e+00> : vector<32x32xf32>
    %124 = tpu.matmul %111, %123, %cst_97 {dimension_numbers = #tpu.dot_dimension_numbers<[1], [0], [0], [1], [0, 0, 1, 1], [], []>} : vector<32x8xf32>, vector<8x32xf32>, vector<32x32xf32> -> vector<32x32xf32>
    %cst_98 = arith.constant dense<0.000000e+00> : vector<32x32xf32>
    %125 = tpu.matmul %122, %124, %cst_98 {dimension_numbers = #tpu.dot_dimension_numbers<[1], [0], [0], [1], [0, 0, 1, 1], [], []>} : vector<32x32xf32>, vector<32x32xf32>, vector<32x32xf32> -> vector<32x32xf32>
    %126 = arith.addf %106, %125 : vector<32x32xf32>
    %127 = vector.extract_strided_slice %84 {offsets = [0, 16], sizes = [32, 8], strides = [1, 1]} : vector<32x96xf32> to vector<32x8xf32>
    %cst_99 = arith.constant 0.353553385 : f32
    %128 = vector.broadcast %cst_99 : f32 to vector<32x8xf32>
    %129 = arith.mulf %127, %128 : vector<32x8xf32>
    %130 = vector.extract_strided_slice %84 {offsets = [0, 48], sizes = [32, 8], strides = [1, 1]} : vector<32x96xf32> to vector<32x8xf32>
    %131 = vector.extract_strided_slice %84 {offsets = [0, 80], sizes = [32, 8], strides = [1, 1]} : vector<32x96xf32> to vector<32x8xf32>
    %cst_100 = arith.constant dense<0.000000e+00> : vector<32x32xf32>
    %132 = tpu.matmul %129, %130, %cst_100 {dimension_numbers = #tpu.dot_dimension_numbers<[1], [1], [0], [0], [0, 0, 1, 0], [], []>} : vector<32x8xf32>, vector<32x8xf32>, vector<32x32xf32> -> vector<32x32xf32>
    %cst_101 = arith.constant dense<0xFF800000> : vector<32xf32>
    %133 = vector.multi_reduction <maximumf>, %132, %cst_101 [1] : vector<32x32xf32> to vector<32xf32>
    %134 = vector.shape_cast %133 : vector<32xf32> to vector<32x1xf32>
    %135 = vector.broadcast %134 : vector<32x1xf32> to vector<32x32xf32>
    %136 = arith.subf %132, %135 : vector<32x32xf32>
    %137 = math.exp %136 : vector<32x32xf32>
    %cst_102 = arith.constant dense<0.000000e+00> : vector<32xf32>
    %138 = vector.multi_reduction <add>, %137, %cst_102 [1] : vector<32x32xf32> to vector<32xf32>
    %139 = vector.shape_cast %138 : vector<32xf32> to vector<32x1xf32>
    %140 = tpu.reciprocal %139 {approx = true} : vector<32x1xf32> -> vector<32x1xf32>
    %141 = vector.broadcast %140 : vector<32x1xf32> to vector<32x32xf32>
    %142 = arith.mulf %137, %141 : vector<32x32xf32>
    %143 = vector.extract_strided_slice %85 {offsets = [16, 0], sizes = [8, 32], strides = [1, 1]} : vector<32x32xf32> to vector<8x32xf32>
    %cst_103 = arith.constant dense<0.000000e+00> : vector<32x32xf32>
    %144 = tpu.matmul %131, %143, %cst_103 {dimension_numbers = #tpu.dot_dimension_numbers<[1], [0], [0], [1], [0, 0, 1, 1], [], []>} : vector<32x8xf32>, vector<8x32xf32>, vector<32x32xf32> -> vector<32x32xf32>
    %cst_104 = arith.constant dense<0.000000e+00> : vector<32x32xf32>
    %145 = tpu.matmul %142, %144, %cst_104 {dimension_numbers = #tpu.dot_dimension_numbers<[1], [0], [0], [1], [0, 0, 1, 1], [], []>} : vector<32x32xf32>, vector<32x32xf32>, vector<32x32xf32> -> vector<32x32xf32>
    %146 = arith.addf %126, %145 : vector<32x32xf32>
    %147 = vector.extract_strided_slice %84 {offsets = [0, 24], sizes = [32, 8], strides = [1, 1]} : vector<32x96xf32> to vector<32x8xf32>
    %cst_105 = arith.constant 0.353553385 : f32
    %148 = vector.broadcast %cst_105 : f32 to vector<32x8xf32>
    %149 = arith.mulf %147, %148 : vector<32x8xf32>
    %150 = vector.extract_strided_slice %84 {offsets = [0, 56], sizes = [32, 8], strides = [1, 1]} : vector<32x96xf32> to vector<32x8xf32>
    %151 = vector.extract_strided_slice %84 {offsets = [0, 88], sizes = [32, 8], strides = [1, 1]} : vector<32x96xf32> to vector<32x8xf32>
    %cst_106 = arith.constant dense<0.000000e+00> : vector<32x32xf32>
    %152 = tpu.matmul %149, %150, %cst_106 {dimension_numbers = #tpu.dot_dimension_numbers<[1], [1], [0], [0], [0, 0, 1, 0], [], []>} : vector<32x8xf32>, vector<32x8xf32>, vector<32x32xf32> -> vector<32x32xf32>
    %cst_107 = arith.constant dense<0xFF800000> : vector<32xf32>
    %153 = vector.multi_reduction <maximumf>, %152, %cst_107 [1] : vector<32x32xf32> to vector<32xf32>
    %154 = vector.shape_cast %153 : vector<32xf32> to vector<32x1xf32>
    %155 = vector.broadcast %154 : vector<32x1xf32> to vector<32x32xf32>
    %156 = arith.subf %152, %155 : vector<32x32xf32>
    %157 = math.exp %156 : vector<32x32xf32>
    %cst_108 = arith.constant dense<0.000000e+00> : vector<32xf32>
    %158 = vector.multi_reduction <add>, %157, %cst_108 [1] : vector<32x32xf32> to vector<32xf32>
    %159 = vector.shape_cast %158 : vector<32xf32> to vector<32x1xf32>
    %160 = tpu.reciprocal %159 {approx = true} : vector<32x1xf32> -> vector<32x1xf32>
    %161 = vector.broadcast %160 : vector<32x1xf32> to vector<32x32xf32>
    %162 = arith.mulf %157, %161 : vector<32x32xf32>
    %163 = vector.extract_strided_slice %85 {offsets = [24, 0], sizes = [8, 32], strides = [1, 1]} : vector<32x32xf32> to vector<8x32xf32>
    %cst_109 = arith.constant dense<0.000000e+00> : vector<32x32xf32>
    %164 = tpu.matmul %151, %163, %cst_109 {dimension_numbers = #tpu.dot_dimension_numbers<[1], [0], [0], [1], [0, 0, 1, 1], [], []>} : vector<32x8xf32>, vector<8x32xf32>, vector<32x32xf32> -> vector<32x32xf32>
    %cst_110 = arith.constant dense<0.000000e+00> : vector<32x32xf32>
    %165 = tpu.matmul %162, %164, %cst_110 {dimension_numbers = #tpu.dot_dimension_numbers<[1], [0], [0], [1], [0, 0, 1, 1], [], []>} : vector<32x32xf32>, vector<32x32xf32>, vector<32x32xf32> -> vector<32x32xf32>
    %166 = arith.addf %146, %165 : vector<32x32xf32>
    %167 = arith.addf %79, %166 : vector<32x32xf32>
    %c0_111 = arith.constant 0 : index
    %c0_112 = arith.constant 0 : index
    %168 = vector.load %arg12[%c0_111, %c0_112] : memref<1x32xf32, #tpu.memory_space<vmem>>, vector<1x32xf32>
    %169 = vector.broadcast %168 : vector<1x32xf32> to vector<32x32xf32>
    %170 = arith.addf %167, %169 : vector<32x32xf32>
    %c0_113 = arith.constant 0 : index
    %c0_114 = arith.constant 0 : index
    %171 = vector.load %arg13[%c0_113, %c0_114] : memref<1x32xf32, #tpu.memory_space<vmem>>, vector<1x32xf32>
    %c0_115 = arith.constant 0 : index
    %c0_116 = arith.constant 0 : index
    %172 = vector.load %arg14[%c0_115, %c0_116] : memref<1x32xf32, #tpu.memory_space<vmem>>, vector<1x32xf32>
    %cst_117 = arith.constant dense<0.000000e+00> : vector<32xf32>
    %173 = vector.multi_reduction <add>, %170, %cst_117 [1] : vector<32x32xf32> to vector<32xf32>
    %174 = vector.shape_cast %173 : vector<32xf32> to vector<32x1xf32>
    %cst_118 = arith.constant 3.200000e+01 : f32
    %175 = vector.broadcast %cst_118 : f32 to vector<32x1xf32>
    %176 = arith.divf %174, %175 : vector<32x1xf32>
    %177 = vector.broadcast %176 : vector<32x1xf32> to vector<32x32xf32>
    %178 = arith.subf %170, %177 : vector<32x32xf32>
    %179 = arith.mulf %178, %178 : vector<32x32xf32>
    %cst_119 = arith.constant dense<0.000000e+00> : vector<32xf32>
    %180 = vector.multi_reduction <add>, %179, %cst_119 [1] : vector<32x32xf32> to vector<32xf32>
    %181 = vector.shape_cast %180 : vector<32xf32> to vector<32x1xf32>
    %cst_120 = arith.constant 3.200000e+01 : f32
    %182 = vector.broadcast %cst_120 : f32 to vector<32x1xf32>
    %183 = arith.divf %181, %182 : vector<32x1xf32>
    %184 = vector.broadcast %176 : vector<32x1xf32> to vector<32x32xf32>
    %185 = arith.subf %170, %184 : vector<32x32xf32>
    %cst_121 = arith.constant 9.99999974E-6 : f32
    %186 = vector.broadcast %cst_121 : f32 to vector<32x1xf32>
    %187 = arith.addf %183, %186 : vector<32x1xf32>
    %188 = math.rsqrt %187 : vector<32x1xf32>
    %189 = vector.broadcast %188 : vector<32x1xf32> to vector<32x32xf32>
    %190 = arith.mulf %185, %189 : vector<32x32xf32>
    %191 = vector.broadcast %171 : vector<1x32xf32> to vector<32x32xf32>
    %192 = arith.mulf %190, %191 : vector<32x32xf32>
    %193 = vector.broadcast %172 : vector<1x32xf32> to vector<32x32xf32>
    %194 = arith.addf %192, %193 : vector<32x32xf32>
    %c0_122 = arith.constant 0 : index
    %c0_123 = arith.constant 0 : index
    %195 = vector.load %arg15[%c0_122, %c0_123] : memref<32x128xf32, #tpu.memory_space<vmem>>, vector<32x128xf32>
    %cst_124 = arith.constant dense<0.000000e+00> : vector<32x128xf32>
    %196 = tpu.matmul %194, %195, %cst_124 {dimension_numbers = #tpu.dot_dimension_numbers<[1], [0], [0], [1], [0, 0, 1, 1], [], []>} : vector<32x32xf32>, vector<32x128xf32>, vector<32x128xf32> -> vector<32x128xf32>
    %c0_125 = arith.constant 0 : index
    %c0_126 = arith.constant 0 : index
    %197 = vector.load %arg16[%c0_125, %c0_126] : memref<1x128xf32, #tpu.memory_space<vmem>>, vector<1x128xf32>
    %198 = vector.broadcast %197 : vector<1x128xf32> to vector<32x128xf32>
    %199 = arith.addf %196, %198 : vector<32x128xf32>
    %cst_127 = arith.constant 0.000000e+00 : f32
    %200 = vector.broadcast %cst_127 : f32 to vector<32x128xf32>
    %201 = arith.maximumf %199, %200 : vector<32x128xf32>
    %c0_128 = arith.constant 0 : index
    %c0_129 = arith.constant 0 : index
    %202 = vector.load %arg17[%c0_128, %c0_129] : memref<128x32xf32, #tpu.memory_space<vmem>>, vector<128x32xf32>
    %cst_130 = arith.constant dense<0.000000e+00> : vector<32x32xf32>
    %203 = tpu.matmul %201, %202, %cst_130 {dimension_numbers = #tpu.dot_dimension_numbers<[1], [0], [0], [1], [0, 0, 1, 1], [], []>} : vector<32x128xf32>, vector<128x32xf32>, vector<32x32xf32> -> vector<32x32xf32>
    %c0_131 = arith.constant 0 : index
    %c0_132 = arith.constant 0 : index
    %204 = vector.load %arg18[%c0_131, %c0_132] : memref<1x32xf32, #tpu.memory_space<vmem>>, vector<1x32xf32>
    %205 = vector.broadcast %204 : vector<1x32xf32> to vector<32x32xf32>
    %206 = arith.addf %203, %205 : vector<32x32xf32>
    %207 = arith.addf %194, %206 : vector<32x32xf32>
    %c0_133 = arith.constant 0 : index
    %c0_134 = arith.constant 0 : index
    %208 = vector.load %arg19[%c0_133, %c0_134] : memref<1x32xf32, #tpu.memory_space<vmem>>, vector<1x32xf32>
    %c0_135 = arith.constant 0 : index
    %c0_136 = arith.constant 0 : index
    %209 = vector.load %arg20[%c0_135, %c0_136] : memref<1x32xf32, #tpu.memory_space<vmem>>, vector<1x32xf32>
    %cst_137 = arith.constant dense<0.000000e+00> : vector<32xf32>
    %210 = vector.multi_reduction <add>, %207, %cst_137 [1] : vector<32x32xf32> to vector<32xf32>
    %211 = vector.shape_cast %210 : vector<32xf32> to vector<32x1xf32>
    %cst_138 = arith.constant 3.200000e+01 : f32
    %212 = vector.broadcast %cst_138 : f32 to vector<32x1xf32>
    %213 = arith.divf %211, %212 : vector<32x1xf32>
    %214 = vector.broadcast %213 : vector<32x1xf32> to vector<32x32xf32>
    %215 = arith.subf %207, %214 : vector<32x32xf32>
    %216 = arith.mulf %215, %215 : vector<32x32xf32>
    %cst_139 = arith.constant dense<0.000000e+00> : vector<32xf32>
    %217 = vector.multi_reduction <add>, %216, %cst_139 [1] : vector<32x32xf32> to vector<32xf32>
    %218 = vector.shape_cast %217 : vector<32xf32> to vector<32x1xf32>
    %cst_140 = arith.constant 3.200000e+01 : f32
    %219 = vector.broadcast %cst_140 : f32 to vector<32x1xf32>
    %220 = arith.divf %218, %219 : vector<32x1xf32>
    %221 = vector.broadcast %213 : vector<32x1xf32> to vector<32x32xf32>
    %222 = arith.subf %207, %221 : vector<32x32xf32>
    %cst_141 = arith.constant 9.99999974E-6 : f32
    %223 = vector.broadcast %cst_141 : f32 to vector<32x1xf32>
    %224 = arith.addf %220, %223 : vector<32x1xf32>
    %225 = math.rsqrt %224 : vector<32x1xf32>
    %226 = vector.broadcast %225 : vector<32x1xf32> to vector<32x32xf32>
    %227 = arith.mulf %222, %226 : vector<32x32xf32>
    %228 = vector.broadcast %208 : vector<1x32xf32> to vector<32x32xf32>
    %229 = arith.mulf %227, %228 : vector<32x32xf32>
    %230 = vector.broadcast %209 : vector<1x32xf32> to vector<32x32xf32>
    %231 = arith.addf %229, %230 : vector<32x32xf32>
    %c0_142 = arith.constant 0 : index
    %c0_143 = arith.constant 0 : index
    %232 = vector.load %arg21[%c0_142, %c0_143] : memref<32x96xf32, #tpu.memory_space<vmem>>, vector<32x96xf32>
    %cst_144 = arith.constant dense<0.000000e+00> : vector<32x96xf32>
    %233 = tpu.matmul %231, %232, %cst_144 {dimension_numbers = #tpu.dot_dimension_numbers<[1], [0], [0], [1], [0, 0, 1, 1], [], []>} : vector<32x32xf32>, vector<32x96xf32>, vector<32x96xf32> -> vector<32x96xf32>
    %c0_145 = arith.constant 0 : index
    %c0_146 = arith.constant 0 : index
    %234 = vector.load %arg22[%c0_145, %c0_146] : memref<1x96xf32, #tpu.memory_space<vmem>>, vector<1x96xf32>
    %235 = vector.broadcast %234 : vector<1x96xf32> to vector<32x96xf32>
    %236 = arith.addf %233, %235 : vector<32x96xf32>
    %c0_147 = arith.constant 0 : index
    %c0_148 = arith.constant 0 : index
    %237 = vector.load %arg23[%c0_147, %c0_148] : memref<32x32xf32, #tpu.memory_space<vmem>>, vector<32x32xf32>
    %cst_149 = arith.constant 0.000000e+00 : f32
    %238 = vector.broadcast %cst_149 : f32 to vector<32x32xf32>
    %239 = vector.extract_strided_slice %236 {offsets = [0, 0], sizes = [32, 8], strides = [1, 1]} : vector<32x96xf32> to vector<32x8xf32>
    %cst_150 = arith.constant 0.353553385 : f32
    %240 = vector.broadcast %cst_150 : f32 to vector<32x8xf32>
    %241 = arith.mulf %239, %240 : vector<32x8xf32>
    %242 = vector.extract_strided_slice %236 {offsets = [0, 32], sizes = [32, 8], strides = [1, 1]} : vector<32x96xf32> to vector<32x8xf32>
    %243 = vector.extract_strided_slice %236 {offsets = [0, 64], sizes = [32, 8], strides = [1, 1]} : vector<32x96xf32> to vector<32x8xf32>
    %cst_151 = arith.constant dense<0.000000e+00> : vector<32x32xf32>
    %244 = tpu.matmul %241, %242, %cst_151 {dimension_numbers = #tpu.dot_dimension_numbers<[1], [1], [0], [0], [0, 0, 1, 0], [], []>} : vector<32x8xf32>, vector<32x8xf32>, vector<32x32xf32> -> vector<32x32xf32>
    %cst_152 = arith.constant dense<0xFF800000> : vector<32xf32>
    %245 = vector.multi_reduction <maximumf>, %244, %cst_152 [1] : vector<32x32xf32> to vector<32xf32>
    %246 = vector.shape_cast %245 : vector<32xf32> to vector<32x1xf32>
    %247 = vector.broadcast %246 : vector<32x1xf32> to vector<32x32xf32>
    %248 = arith.subf %244, %247 : vector<32x32xf32>
    %249 = math.exp %248 : vector<32x32xf32>
    %cst_153 = arith.constant dense<0.000000e+00> : vector<32xf32>
    %250 = vector.multi_reduction <add>, %249, %cst_153 [1] : vector<32x32xf32> to vector<32xf32>
    %251 = vector.shape_cast %250 : vector<32xf32> to vector<32x1xf32>
    %252 = tpu.reciprocal %251 {approx = true} : vector<32x1xf32> -> vector<32x1xf32>
    %253 = vector.broadcast %252 : vector<32x1xf32> to vector<32x32xf32>
    %254 = arith.mulf %249, %253 : vector<32x32xf32>
    %255 = vector.extract_strided_slice %237 {offsets = [0, 0], sizes = [8, 32], strides = [1, 1]} : vector<32x32xf32> to vector<8x32xf32>
    %cst_154 = arith.constant dense<0.000000e+00> : vector<32x32xf32>
    %256 = tpu.matmul %243, %255, %cst_154 {dimension_numbers = #tpu.dot_dimension_numbers<[1], [0], [0], [1], [0, 0, 1, 1], [], []>} : vector<32x8xf32>, vector<8x32xf32>, vector<32x32xf32> -> vector<32x32xf32>
    %cst_155 = arith.constant dense<0.000000e+00> : vector<32x32xf32>
    %257 = tpu.matmul %254, %256, %cst_155 {dimension_numbers = #tpu.dot_dimension_numbers<[1], [0], [0], [1], [0, 0, 1, 1], [], []>} : vector<32x32xf32>, vector<32x32xf32>, vector<32x32xf32> -> vector<32x32xf32>
    %258 = arith.addf %238, %257 : vector<32x32xf32>
    %259 = vector.extract_strided_slice %236 {offsets = [0, 8], sizes = [32, 8], strides = [1, 1]} : vector<32x96xf32> to vector<32x8xf32>
    %cst_156 = arith.constant 0.353553385 : f32
    %260 = vector.broadcast %cst_156 : f32 to vector<32x8xf32>
    %261 = arith.mulf %259, %260 : vector<32x8xf32>
    %262 = vector.extract_strided_slice %236 {offsets = [0, 40], sizes = [32, 8], strides = [1, 1]} : vector<32x96xf32> to vector<32x8xf32>
    %263 = vector.extract_strided_slice %236 {offsets = [0, 72], sizes = [32, 8], strides = [1, 1]} : vector<32x96xf32> to vector<32x8xf32>
    %cst_157 = arith.constant dense<0.000000e+00> : vector<32x32xf32>
    %264 = tpu.matmul %261, %262, %cst_157 {dimension_numbers = #tpu.dot_dimension_numbers<[1], [1], [0], [0], [0, 0, 1, 0], [], []>} : vector<32x8xf32>, vector<32x8xf32>, vector<32x32xf32> -> vector<32x32xf32>
    %cst_158 = arith.constant dense<0xFF800000> : vector<32xf32>
    %265 = vector.multi_reduction <maximumf>, %264, %cst_158 [1] : vector<32x32xf32> to vector<32xf32>
    %266 = vector.shape_cast %265 : vector<32xf32> to vector<32x1xf32>
    %267 = vector.broadcast %266 : vector<32x1xf32> to vector<32x32xf32>
    %268 = arith.subf %264, %267 : vector<32x32xf32>
    %269 = math.exp %268 : vector<32x32xf32>
    %cst_159 = arith.constant dense<0.000000e+00> : vector<32xf32>
    %270 = vector.multi_reduction <add>, %269, %cst_159 [1] : vector<32x32xf32> to vector<32xf32>
    %271 = vector.shape_cast %270 : vector<32xf32> to vector<32x1xf32>
    %272 = tpu.reciprocal %271 {approx = true} : vector<32x1xf32> -> vector<32x1xf32>
    %273 = vector.broadcast %272 : vector<32x1xf32> to vector<32x32xf32>
    %274 = arith.mulf %269, %273 : vector<32x32xf32>
    %275 = vector.extract_strided_slice %237 {offsets = [8, 0], sizes = [8, 32], strides = [1, 1]} : vector<32x32xf32> to vector<8x32xf32>
    %cst_160 = arith.constant dense<0.000000e+00> : vector<32x32xf32>
    %276 = tpu.matmul %263, %275, %cst_160 {dimension_numbers = #tpu.dot_dimension_numbers<[1], [0], [0], [1], [0, 0, 1, 1], [], []>} : vector<32x8xf32>, vector<8x32xf32>, vector<32x32xf32> -> vector<32x32xf32>
    %cst_161 = arith.constant dense<0.000000e+00> : vector<32x32xf32>
    %277 = tpu.matmul %274, %276, %cst_161 {dimension_numbers = #tpu.dot_dimension_numbers<[1], [0], [0], [1], [0, 0, 1, 1], [], []>} : vector<32x32xf32>, vector<32x32xf32>, vector<32x32xf32> -> vector<32x32xf32>
    %278 = arith.addf %258, %277 : vector<32x32xf32>
    %279 = vector.extract_strided_slice %236 {offsets = [0, 16], sizes = [32, 8], strides = [1, 1]} : vector<32x96xf32> to vector<32x8xf32>
    %cst_162 = arith.constant 0.353553385 : f32
    %280 = vector.broadcast %cst_162 : f32 to vector<32x8xf32>
    %281 = arith.mulf %279, %280 : vector<32x8xf32>
    %282 = vector.extract_strided_slice %236 {offsets = [0, 48], sizes = [32, 8], strides = [1, 1]} : vector<32x96xf32> to vector<32x8xf32>
    %283 = vector.extract_strided_slice %236 {offsets = [0, 80], sizes = [32, 8], strides = [1, 1]} : vector<32x96xf32> to vector<32x8xf32>
    %cst_163 = arith.constant dense<0.000000e+00> : vector<32x32xf32>
    %284 = tpu.matmul %281, %282, %cst_163 {dimension_numbers = #tpu.dot_dimension_numbers<[1], [1], [0], [0], [0, 0, 1, 0], [], []>} : vector<32x8xf32>, vector<32x8xf32>, vector<32x32xf32> -> vector<32x32xf32>
    %cst_164 = arith.constant dense<0xFF800000> : vector<32xf32>
    %285 = vector.multi_reduction <maximumf>, %284, %cst_164 [1] : vector<32x32xf32> to vector<32xf32>
    %286 = vector.shape_cast %285 : vector<32xf32> to vector<32x1xf32>
    %287 = vector.broadcast %286 : vector<32x1xf32> to vector<32x32xf32>
    %288 = arith.subf %284, %287 : vector<32x32xf32>
    %289 = math.exp %288 : vector<32x32xf32>
    %cst_165 = arith.constant dense<0.000000e+00> : vector<32xf32>
    %290 = vector.multi_reduction <add>, %289, %cst_165 [1] : vector<32x32xf32> to vector<32xf32>
    %291 = vector.shape_cast %290 : vector<32xf32> to vector<32x1xf32>
    %292 = tpu.reciprocal %291 {approx = true} : vector<32x1xf32> -> vector<32x1xf32>
    %293 = vector.broadcast %292 : vector<32x1xf32> to vector<32x32xf32>
    %294 = arith.mulf %289, %293 : vector<32x32xf32>
    %295 = vector.extract_strided_slice %237 {offsets = [16, 0], sizes = [8, 32], strides = [1, 1]} : vector<32x32xf32> to vector<8x32xf32>
    %cst_166 = arith.constant dense<0.000000e+00> : vector<32x32xf32>
    %296 = tpu.matmul %283, %295, %cst_166 {dimension_numbers = #tpu.dot_dimension_numbers<[1], [0], [0], [1], [0, 0, 1, 1], [], []>} : vector<32x8xf32>, vector<8x32xf32>, vector<32x32xf32> -> vector<32x32xf32>
    %cst_167 = arith.constant dense<0.000000e+00> : vector<32x32xf32>
    %297 = tpu.matmul %294, %296, %cst_167 {dimension_numbers = #tpu.dot_dimension_numbers<[1], [0], [0], [1], [0, 0, 1, 1], [], []>} : vector<32x32xf32>, vector<32x32xf32>, vector<32x32xf32> -> vector<32x32xf32>
    %298 = arith.addf %278, %297 : vector<32x32xf32>
    %299 = vector.extract_strided_slice %236 {offsets = [0, 24], sizes = [32, 8], strides = [1, 1]} : vector<32x96xf32> to vector<32x8xf32>
    %cst_168 = arith.constant 0.353553385 : f32
    %300 = vector.broadcast %cst_168 : f32 to vector<32x8xf32>
    %301 = arith.mulf %299, %300 : vector<32x8xf32>
    %302 = vector.extract_strided_slice %236 {offsets = [0, 56], sizes = [32, 8], strides = [1, 1]} : vector<32x96xf32> to vector<32x8xf32>
    %303 = vector.extract_strided_slice %236 {offsets = [0, 88], sizes = [32, 8], strides = [1, 1]} : vector<32x96xf32> to vector<32x8xf32>
    %cst_169 = arith.constant dense<0.000000e+00> : vector<32x32xf32>
    %304 = tpu.matmul %301, %302, %cst_169 {dimension_numbers = #tpu.dot_dimension_numbers<[1], [1], [0], [0], [0, 0, 1, 0], [], []>} : vector<32x8xf32>, vector<32x8xf32>, vector<32x32xf32> -> vector<32x32xf32>
    %cst_170 = arith.constant dense<0xFF800000> : vector<32xf32>
    %305 = vector.multi_reduction <maximumf>, %304, %cst_170 [1] : vector<32x32xf32> to vector<32xf32>
    %306 = vector.shape_cast %305 : vector<32xf32> to vector<32x1xf32>
    %307 = vector.broadcast %306 : vector<32x1xf32> to vector<32x32xf32>
    %308 = arith.subf %304, %307 : vector<32x32xf32>
    %309 = math.exp %308 : vector<32x32xf32>
    %cst_171 = arith.constant dense<0.000000e+00> : vector<32xf32>
    %310 = vector.multi_reduction <add>, %309, %cst_171 [1] : vector<32x32xf32> to vector<32xf32>
    %311 = vector.shape_cast %310 : vector<32xf32> to vector<32x1xf32>
    %312 = tpu.reciprocal %311 {approx = true} : vector<32x1xf32> -> vector<32x1xf32>
    %313 = vector.broadcast %312 : vector<32x1xf32> to vector<32x32xf32>
    %314 = arith.mulf %309, %313 : vector<32x32xf32>
    %315 = vector.extract_strided_slice %237 {offsets = [24, 0], sizes = [8, 32], strides = [1, 1]} : vector<32x32xf32> to vector<8x32xf32>
    %cst_172 = arith.constant dense<0.000000e+00> : vector<32x32xf32>
    %316 = tpu.matmul %303, %315, %cst_172 {dimension_numbers = #tpu.dot_dimension_numbers<[1], [0], [0], [1], [0, 0, 1, 1], [], []>} : vector<32x8xf32>, vector<8x32xf32>, vector<32x32xf32> -> vector<32x32xf32>
    %cst_173 = arith.constant dense<0.000000e+00> : vector<32x32xf32>
    %317 = tpu.matmul %314, %316, %cst_173 {dimension_numbers = #tpu.dot_dimension_numbers<[1], [0], [0], [1], [0, 0, 1, 1], [], []>} : vector<32x32xf32>, vector<32x32xf32>, vector<32x32xf32> -> vector<32x32xf32>
    %318 = arith.addf %298, %317 : vector<32x32xf32>
    %319 = arith.addf %231, %318 : vector<32x32xf32>
    %c0_174 = arith.constant 0 : index
    %c0_175 = arith.constant 0 : index
    %320 = vector.load %arg24[%c0_174, %c0_175] : memref<1x32xf32, #tpu.memory_space<vmem>>, vector<1x32xf32>
    %321 = vector.broadcast %320 : vector<1x32xf32> to vector<32x32xf32>
    %322 = arith.addf %319, %321 : vector<32x32xf32>
    %c0_176 = arith.constant 0 : index
    %c0_177 = arith.constant 0 : index
    %323 = vector.load %arg25[%c0_176, %c0_177] : memref<1x32xf32, #tpu.memory_space<vmem>>, vector<1x32xf32>
    %c0_178 = arith.constant 0 : index
    %c0_179 = arith.constant 0 : index
    %324 = vector.load %arg26[%c0_178, %c0_179] : memref<1x32xf32, #tpu.memory_space<vmem>>, vector<1x32xf32>
    %cst_180 = arith.constant dense<0.000000e+00> : vector<32xf32>
    %325 = vector.multi_reduction <add>, %322, %cst_180 [1] : vector<32x32xf32> to vector<32xf32>
    %326 = vector.shape_cast %325 : vector<32xf32> to vector<32x1xf32>
    %cst_181 = arith.constant 3.200000e+01 : f32
    %327 = vector.broadcast %cst_181 : f32 to vector<32x1xf32>
    %328 = arith.divf %326, %327 : vector<32x1xf32>
    %329 = vector.broadcast %328 : vector<32x1xf32> to vector<32x32xf32>
    %330 = arith.subf %322, %329 : vector<32x32xf32>
    %331 = arith.mulf %330, %330 : vector<32x32xf32>
    %cst_182 = arith.constant dense<0.000000e+00> : vector<32xf32>
    %332 = vector.multi_reduction <add>, %331, %cst_182 [1] : vector<32x32xf32> to vector<32xf32>
    %333 = vector.shape_cast %332 : vector<32xf32> to vector<32x1xf32>
    %cst_183 = arith.constant 3.200000e+01 : f32
    %334 = vector.broadcast %cst_183 : f32 to vector<32x1xf32>
    %335 = arith.divf %333, %334 : vector<32x1xf32>
    %336 = vector.broadcast %328 : vector<32x1xf32> to vector<32x32xf32>
    %337 = arith.subf %322, %336 : vector<32x32xf32>
    %cst_184 = arith.constant 9.99999974E-6 : f32
    %338 = vector.broadcast %cst_184 : f32 to vector<32x1xf32>
    %339 = arith.addf %335, %338 : vector<32x1xf32>
    %340 = math.rsqrt %339 : vector<32x1xf32>
    %341 = vector.broadcast %340 : vector<32x1xf32> to vector<32x32xf32>
    %342 = arith.mulf %337, %341 : vector<32x32xf32>
    %343 = vector.broadcast %323 : vector<1x32xf32> to vector<32x32xf32>
    %344 = arith.mulf %342, %343 : vector<32x32xf32>
    %345 = vector.broadcast %324 : vector<1x32xf32> to vector<32x32xf32>
    %346 = arith.addf %344, %345 : vector<32x32xf32>
    %c0_185 = arith.constant 0 : index
    %c0_186 = arith.constant 0 : index
    %347 = vector.load %arg27[%c0_185, %c0_186] : memref<32x128xf32, #tpu.memory_space<vmem>>, vector<32x128xf32>
    %cst_187 = arith.constant dense<0.000000e+00> : vector<32x128xf32>
    %348 = tpu.matmul %346, %347, %cst_187 {dimension_numbers = #tpu.dot_dimension_numbers<[1], [0], [0], [1], [0, 0, 1, 1], [], []>} : vector<32x32xf32>, vector<32x128xf32>, vector<32x128xf32> -> vector<32x128xf32>
    %c0_188 = arith.constant 0 : index
    %c0_189 = arith.constant 0 : index
    %349 = vector.load %arg28[%c0_188, %c0_189] : memref<1x128xf32, #tpu.memory_space<vmem>>, vector<1x128xf32>
    %350 = vector.broadcast %349 : vector<1x128xf32> to vector<32x128xf32>
    %351 = arith.addf %348, %350 : vector<32x128xf32>
    %cst_190 = arith.constant 0.000000e+00 : f32
    %352 = vector.broadcast %cst_190 : f32 to vector<32x128xf32>
    %353 = arith.maximumf %351, %352 : vector<32x128xf32>
    %c0_191 = arith.constant 0 : index
    %c0_192 = arith.constant 0 : index
    %354 = vector.load %arg29[%c0_191, %c0_192] : memref<128x32xf32, #tpu.memory_space<vmem>>, vector<128x32xf32>
    %cst_193 = arith.constant dense<0.000000e+00> : vector<32x32xf32>
    %355 = tpu.matmul %353, %354, %cst_193 {dimension_numbers = #tpu.dot_dimension_numbers<[1], [0], [0], [1], [0, 0, 1, 1], [], []>} : vector<32x128xf32>, vector<128x32xf32>, vector<32x32xf32> -> vector<32x32xf32>
    %c0_194 = arith.constant 0 : index
    %c0_195 = arith.constant 0 : index
    %356 = vector.load %arg30[%c0_194, %c0_195] : memref<1x32xf32, #tpu.memory_space<vmem>>, vector<1x32xf32>
    %357 = vector.broadcast %356 : vector<1x32xf32> to vector<32x32xf32>
    %358 = arith.addf %355, %357 : vector<32x32xf32>
    %359 = arith.addf %346, %358 : vector<32x32xf32>
    %c0_196 = arith.constant 0 : index
    %c0_197 = arith.constant 0 : index
    %360 = vector.load %arg31[%c0_196, %c0_197] : memref<1x32xf32, #tpu.memory_space<vmem>>, vector<1x32xf32>
    %c0_198 = arith.constant 0 : index
    %c0_199 = arith.constant 0 : index
    %361 = vector.load %arg32[%c0_198, %c0_199] : memref<1x32xf32, #tpu.memory_space<vmem>>, vector<1x32xf32>
    %cst_200 = arith.constant dense<0.000000e+00> : vector<32xf32>
    %362 = vector.multi_reduction <add>, %359, %cst_200 [1] : vector<32x32xf32> to vector<32xf32>
    %363 = vector.shape_cast %362 : vector<32xf32> to vector<32x1xf32>
    %cst_201 = arith.constant 3.200000e+01 : f32
    %364 = vector.broadcast %cst_201 : f32 to vector<32x1xf32>
    %365 = arith.divf %363, %364 : vector<32x1xf32>
    %366 = vector.broadcast %365 : vector<32x1xf32> to vector<32x32xf32>
    %367 = arith.subf %359, %366 : vector<32x32xf32>
    %368 = arith.mulf %367, %367 : vector<32x32xf32>
    %cst_202 = arith.constant dense<0.000000e+00> : vector<32xf32>
    %369 = vector.multi_reduction <add>, %368, %cst_202 [1] : vector<32x32xf32> to vector<32xf32>
    %370 = vector.shape_cast %369 : vector<32xf32> to vector<32x1xf32>
    %cst_203 = arith.constant 3.200000e+01 : f32
    %371 = vector.broadcast %cst_203 : f32 to vector<32x1xf32>
    %372 = arith.divf %370, %371 : vector<32x1xf32>
    %373 = vector.broadcast %365 : vector<32x1xf32> to vector<32x32xf32>
    %374 = arith.subf %359, %373 : vector<32x32xf32>
    %cst_204 = arith.constant 9.99999974E-6 : f32
    %375 = vector.broadcast %cst_204 : f32 to vector<32x1xf32>
    %376 = arith.addf %372, %375 : vector<32x1xf32>
    %377 = math.rsqrt %376 : vector<32x1xf32>
    %378 = vector.broadcast %377 : vector<32x1xf32> to vector<32x32xf32>
    %379 = arith.mulf %374, %378 : vector<32x32xf32>
    %380 = vector.broadcast %360 : vector<1x32xf32> to vector<32x32xf32>
    %381 = arith.mulf %379, %380 : vector<32x32xf32>
    %382 = vector.broadcast %361 : vector<1x32xf32> to vector<32x32xf32>
    %383 = arith.addf %381, %382 : vector<32x32xf32>
    %c0_205 = arith.constant 0 : index
    %c0_206 = arith.constant 0 : index
    %c0_207 = arith.constant 0 : index
    %384 = vector.load %arg33[%c0_205, %c0_206, %c0_207] : memref<1x32x32xf32, #tpu.memory_space<vmem>>, vector<1x32x32xf32>
    %385 = vector.shape_cast %384 : vector<1x32x32xf32> to vector<32x32xf32>
    %386 = vector.shape_cast %383 : vector<32x32xf32> to vector<1x32x32xf32>
    tpu.vector_store %arg33[%c0_205, %c0_206, %c0_207], %386 {strides = array<i32>} : memref<1x32x32xf32, #tpu.memory_space<vmem>>, vector<1x32x32xf32>,
    return
  }
  func.func @transform_0(%arg0: i32) -> (i32, i32, i32) {
    %c0_i32 = arith.constant 0 : i32
    %c0_i32_0 = arith.constant 0 : i32
    %c0_i32_1 = arith.constant 0 : i32
    return %arg0, %c0_i32, %c0_i32_0 : i32, i32, i32
  }
  func.func @transform_1(%arg0: i32) -> (i32, i32) {
    %c0_i32 = arith.constant 0 : i32
    %c0_i32_0 = arith.constant 0 : i32
    %c0_i32_1 = arith.constant 0 : i32
    return %c0_i32, %c0_i32_0 : i32, i32
  }
  func.func @transform_2(%arg0: i32) -> (i32, i32) {
    %c0_i32 = arith.constant 0 : i32
    %c0_i32_0 = arith.constant 0 : i32
    %c0_i32_1 = arith.constant 0 : i32
    return %c0_i32, %c0_i32_0 : i32, i32
  }
  func.func @transform_3(%arg0: i32) -> (i32, i32, i32) {
    %c0_i32 = arith.constant 0 : i32
    %c0_i32_0 = arith.constant 0 : i32
    %c0_i32_1 = arith.constant 0 : i32
    %c0_i32_2 = arith.constant 0 : i32
    return %c0_i32, %c0_i32_0, %c0_i32_1 : i32, i32, i32
  }
  func.func @transform_4(%arg0: i32) -> (i32, i32, i32) {
    %c0_i32 = arith.constant 0 : i32
    %c0_i32_0 = arith.constant 0 : i32
    %c0_i32_1 = arith.constant 0 : i32
    %c0_i32_2 = arith.constant 0 : i32
    return %c0_i32, %c0_i32_0, %c0_i32_1 : i32, i32, i32
  }
  func.func @transform_5(%arg0: i32) -> (i32, i32) {
    %c0_i32 = arith.constant 0 : i32
    %c0_i32_0 = arith.constant 0 : i32
    %c0_i32_1 = arith.constant 0 : i32
    return %c0_i32, %c0_i32_0 : i32, i32
  }
  func.func @transform_6(%arg0: i32) -> (i32, i32) {
    %c0_i32 = arith.constant 0 : i32
    %c0_i32_0 = arith.constant 0 : i32
    %c0_i32_1 = arith.constant 0 : i32
    return %c0_i32, %c0_i32_0 : i32, i32
  }
  func.func @transform_7(%arg0: i32) -> (i32, i32) {
    %c0_i32 = arith.constant 0 : i32
    %c0_i32_0 = arith.constant 0 : i32
    %c0_i32_1 = arith.constant 0 : i32
    return %c0_i32, %c0_i32_0 : i32, i32
  }
  func.func @transform_8(%arg0: i32) -> (i32, i32) {
    %c0_i32 = arith.constant 0 : i32
    %c0_i32_0 = arith.constant 0 : i32
    %c0_i32_1 = arith.constant 0 : i32
    return %c0_i32, %c0_i32_0 : i32, i32
  }
  func.func @transform_9(%arg0: i32) -> (i32, i32) {
    %c0_i32 = arith.constant 0 : i32
    %c0_i32_0 = arith.constant 0 : i32
    %c0_i32_1 = arith.constant 0 : i32
    return %c0_i32, %c0_i32_0 : i32, i32
  }
  func.func @transform_10(%arg0: i32) -> (i32, i32) {
    %c0_i32 = arith.constant 0 : i32
    %c0_i32_0 = arith.constant 0 : i32
    %c0_i32_1 = arith.constant 0 : i32
    return %c0_i32, %c0_i32_0 : i32, i32
  }
  func.func @transform_11(%arg0: i32) -> (i32, i32) {
    %c0_i32 = arith.constant 0 : i32
    %c0_i32_0 = arith.constant 0 : i32
    %c0_i32_1 = arith.constant 0 : i32
    return %c0_i32, %c0_i32_0 : i32, i32
  }
  func.func @transform_12(%arg0: i32) -> (i32, i32) {
    %c0_i32 = arith.constant 0 : i32
    %c0_i32_0 = arith.constant 0 : i32
    %c0_i32_1 = arith.constant 0 : i32
    return %c0_i32, %c0_i32_0 : i32, i32
  }
  func.func @transform_13(%arg0: i32) -> (i32, i32) {
    %c0_i32 = arith.constant 0 : i32
    %c0_i32_0 = arith.constant 0 : i32
    %c0_i32_1 = arith.constant 0 : i32
    return %c0_i32, %c0_i32_0 : i32, i32
  }
  func.func @transform_14(%arg0: i32) -> (i32, i32) {
    %c0_i32 = arith.constant 0 : i32
    %c0_i32_0 = arith.constant 0 : i32
    %c0_i32_1 = arith.constant 0 : i32
    return %c0_i32, %c0_i32_0 : i32, i32
  }
  func.func @transform_15(%arg0: i32) -> (i32, i32) {
    %c0_i32 = arith.constant 0 : i32
    %c0_i32_0 = arith.constant 0 : i32
    %c0_i32_1 = arith.constant 0 : i32
    return %c0_i32, %c0_i32_0 : i32, i32
  }
  func.func @transform_16(%arg0: i32) -> (i32, i32) {
    %c0_i32 = arith.constant 0 : i32
    %c0_i32_0 = arith.constant 0 : i32
    %c0_i32_1 = arith.constant 0 : i32
    return %c0_i32, %c0_i32_0 : i32, i32
  }
  func.func @transform_17(%arg0: i32) -> (i32, i32) {
    %c0_i32 = arith.constant 0 : i32
    %c0_i32_0 = arith.constant 0 : i32
    %c0_i32_1 = arith.constant 0 : i32
    return %c0_i32, %c0_i32_0 : i32, i32
  }
  func.func @transform_18(%arg0: i32) -> (i32, i32) {
    %c0_i32 = arith.constant 0 : i32
    %c0_i32_0 = arith.constant 0 : i32
    %c0_i32_1 = arith.constant 0 : i32
    return %c0_i32, %c0_i32_0 : i32, i32
  }
  func.func @transform_19(%arg0: i32) -> (i32, i32) {
    %c0_i32 = arith.constant 0 : i32
    %c0_i32_0 = arith.constant 0 : i32
    %c0_i32_1 = arith.constant 0 : i32
    return %c0_i32, %c0_i32_0 : i32, i32
  }
  func.func @transform_20(%arg0: i32) -> (i32, i32) {
    %c0_i32 = arith.constant 0 : i32
    %c0_i32_0 = arith.constant 0 : i32
    %c0_i32_1 = arith.constant 0 : i32
    return %c0_i32, %c0_i32_0 : i32, i32
  }
  func.func @transform_21(%arg0: i32) -> (i32, i32) {
    %c0_i32 = arith.constant 0 : i32
    %c0_i32_0 = arith.constant 0 : i32
    %c0_i32_1 = arith.constant 0 : i32
    return %c0_i32, %c0_i32_0 : i32, i32
  }
  func.func @transform_22(%arg0: i32) -> (i32, i32) {
    %c0_i32 = arith.constant 0 : i32
    %c0_i32_0 = arith.constant 0 : i32
    %c0_i32_1 = arith.constant 0 : i32
    return %c0_i32, %c0_i32_0 : i32, i32
  }
  func.func @transform_23(%arg0: i32) -> (i32, i32) {
    %c0_i32 = arith.constant 0 : i32
    %c0_i32_0 = arith.constant 0 : i32
    %c0_i32_1 = arith.constant 0 : i32
    return %c0_i32, %c0_i32_0 : i32, i32
  }
  func.func @transform_24(%arg0: i32) -> (i32, i32) {
    %c0_i32 = arith.constant 0 : i32
    %c0_i32_0 = arith.constant 0 : i32
    %c0_i32_1 = arith.constant 0 : i32
    return %c0_i32, %c0_i32_0 : i32, i32
  }
  func.func @transform_25(%arg0: i32) -> (i32, i32) {
    %c0_i32 = arith.constant 0 : i32
    %c0_i32_0 = arith.constant 0 : i32
    %c0_i32_1 = arith.constant 0 : i32
    return %c0_i32, %c0_i32_0 : i32, i32
  }
  func.func @transform_26(%arg0: i32) -> (i32, i32) {
    %c0_i32 = arith.constant 0 : i32
    %c0_i32_0 = arith.constant 0 : i32
    %c0_i32_1 = arith.constant 0 : i32
    return %c0_i32, %c0_i32_0 : i32, i32
  }
  func.func @transform_27(%arg0: i32) -> (i32, i32) {
    %c0_i32 = arith.constant 0 : i32
    %c0_i32_0 = arith.constant 0 : i32
    %c0_i32_1 = arith.constant 0 : i32
    return %c0_i32, %c0_i32_0 : i32, i32
  }
  func.func @transform_28(%arg0: i32) -> (i32, i32) {
    %c0_i32 = arith.constant 0 : i32
    %c0_i32_0 = arith.constant 0 : i32
    %c0_i32_1 = arith.constant 0 : i32
    return %c0_i32, %c0_i32_0 : i32, i32
  }
  func.func @transform_29(%arg0: i32) -> (i32, i32) {
    %c0_i32 = arith.constant 0 : i32
    %c0_i32_0 = arith.constant 0 : i32
    %c0_i32_1 = arith.constant 0 : i32
    return %c0_i32, %c0_i32_0 : i32, i32
  }
  func.func @transform_30(%arg0: i32) -> (i32, i32) {
    %c0_i32 = arith.constant 0 : i32
    %c0_i32_0 = arith.constant 0 : i32
    %c0_i32_1 = arith.constant 0 : i32
    return %c0_i32, %c0_i32_0 : i32, i32
  }
  func.func @transform_31(%arg0: i32) -> (i32, i32) {
    %c0_i32 = arith.constant 0 : i32
    %c0_i32_0 = arith.constant 0 : i32
    %c0_i32_1 = arith.constant 0 : i32
    return %c0_i32, %c0_i32_0 : i32, i32
  }
  func.func @transform_32(%arg0: i32) -> (i32, i32, i32) {
    %c0_i32 = arith.constant 0 : i32
    %c0_i32_0 = arith.constant 0 : i32
    %c0_i32_1 = arith.constant 0 : i32
    return %arg0, %c0_i32, %c0_i32_0 : i32, i32, i32
  }
}

</mosaic_0001>

<llo_original>
// kernel: _lambda_.1
$region0: #{_lambda_.1}
  #allocation0 [shape = 'u32[]', space=smem, size = 0x4, offset = 0x4, fixed_abs, tag = 'smem constant byte address 0x4 - core index']
  #allocation1 [shape = 'u32[144,128]{1,0:T(1,128)}', space=vmem, size = 0x12000, scoped, tag = 'internal scratch']
  %s0 = inlined_call_operand.smem [shape: u32[33], index: -1, kind: input, shape index: {}]
  %s1 = sld [smem:[%s0]]
  %s2 = scalar_lea.smem %s0, 1
  %s3 = sld [smem:[%s2]]
  %s4 = scalar_lea.smem %s0, 2
  %s5 = sld [smem:[%s4]]
  %s6 = scalar_lea.smem %s0, 3
  %s7 = sld [smem:[%s6]]
  %s8 = scalar_lea.smem %s0, 4
  %s9 = sld [smem:[%s8]]
  %s10 = scalar_lea.smem %s0, 5
  %s11 = sld [smem:[%s10]]
  %s12 = scalar_lea.smem %s0, 6
  %s13 = sld [smem:[%s12]]
  %s14 = scalar_lea.smem %s0, 7
  %s15 = sld [smem:[%s14]]
  %s16 = scalar_lea.smem %s0, 8
  %s17 = sld [smem:[%s16]]
  %s18 = scalar_lea.smem %s0, 9
  %s19 = sld [smem:[%s18]]
  %s20 = scalar_lea.smem %s0, 10
  %s21 = sld [smem:[%s20]]
  %s22 = scalar_lea.smem %s0, 11
  %s23 = sld [smem:[%s22]]
  %s24 = scalar_lea.smem %s0, 12
  %s25 = sld [smem:[%s24]]
  %s26 = scalar_lea.smem %s0, 13
  %s27 = sld [smem:[%s26]]
  %s28 = scalar_lea.smem %s0, 14
  %s29 = sld [smem:[%s28]]
  %s30 = scalar_lea.smem %s0, 15
  %s31 = sld [smem:[%s30]]
  %s32 = scalar_lea.smem %s0, 16
  %s33 = sld [smem:[%s32]]
  %s34 = scalar_lea.smem %s0, 17
  %s35 = sld [smem:[%s34]]
  %s36 = scalar_lea.smem %s0, 18
  %s37 = sld [smem:[%s36]]
  %s38 = scalar_lea.smem %s0, 19
  %s39 = sld [smem:[%s38]]
  %s40 = scalar_lea.smem %s0, 20
  %s41 = sld [smem:[%s40]]
  %s42 = scalar_lea.smem %s0, 21
  %s43 = sld [smem:[%s42]]
  %s44 = scalar_lea.smem %s0, 22
  %s45 = sld [smem:[%s44]]
  %s46 = scalar_lea.smem %s0, 23
  %s47 = sld [smem:[%s46]]
  %s48 = scalar_lea.smem %s0, 24
  %s49 = sld [smem:[%s48]]
  %s50 = scalar_lea.smem %s0, 25
  %s51 = sld [smem:[%s50]]
  %s52 = scalar_lea.smem %s0, 26
  %s53 = sld [smem:[%s52]]
  %s54 = scalar_lea.smem %s0, 27
  %s55 = sld [smem:[%s54]]
  %s56 = scalar_lea.smem %s0, 28
  %s57 = sld [smem:[%s56]]
  %s58 = scalar_lea.smem %s0, 29
  %s59 = sld [smem:[%s58]]
  %s60 = scalar_lea.smem %s0, 30
  %s61 = sld [smem:[%s60]]
  %s62 = scalar_lea.smem %s0, 31
  %s63 = sld [smem:[%s62]]
  %s64 = scalar_lea.smem %s0, 32
  %s65 = sld [smem:[%s64]]
  %s66 = sld [smem:[#allocation0]]
  $region161: #{_lambda_.1} parent=0
    _
  %s68 = ssub.s32 1, %s66
  %s69 = scalar_select 0, %s68, %s66
  $region1: #{_lambda_.1} parent=0
    #allocation2 [shape = 'u8[32768]{0}', space=vmem, size = 0x8000, scoped, tag = 'output window, operand 0']
    #allocation3 [shape = 's32[2]{0}', space=sflag, size = 0x8, scoped, tag = 'scoped memory for _lambda_.1']
    %70 = vsyncpa [#allocation3], 0
    %s71 = scalar_lea.sflag [#allocation3], 1
    %72 = vsyncpa %s71, 0
    loop: start=0, step=1, limit=4
    $region2: #{_lambda_.1} parent=1 // loop_pre_header
      _
    $region3: #{_lambda_.1} parent=1 // loop_header
      %s74 = sphi 0, %s78
      %p75 = scmp.ge.s32.totalorder %s74, 4
      %s84 = sphi 0, %s86
      %s87 = sphi 0, %s84
      %s88 = sphi 0, %s87
      %s104 = sphi 0, %s88
      %s108 = sphi 0, %s108
      %s110 = sphi 0, %s108
      %s111 = sphi 0, %s110
      %s125 = sphi 0, %s111
      %s129 = sphi 0, %s129
      %s131 = sphi 0, %s129
      %s132 = sphi 0, %s131
      %s146 = sphi 0, %s132
      %s150 = sphi 0, %s150
      %s152 = sphi 0, %s150
      %s153 = sphi 0, %s152
      %s167 = sphi 0, %s153
      %s171 = sphi 0, %s171
      %s173 = sphi 0, %s171
      %s174 = sphi 0, %s173
      %s188 = sphi 0, %s174
      %s192 = sphi 0, %s192
      %s194 = sphi 0, %s192
      %s195 = sphi 0, %s194
      %s209 = sphi 0, %s195
      %s213 = sphi 0, %s213
      %s215 = sphi 0, %s213
      %s216 = sphi 0, %s215
      %s230 = sphi 0, %s216
      %s234 = sphi 0, %s234
      %s236 = sphi 0, %s234
      %s237 = sphi 0, %s236
      %s251 = sphi 0, %s237
      %s255 = sphi 0, %s255
      %s257 = sphi 0, %s255
      %s258 = sphi 0, %s257
      %s272 = sphi 0, %s258
      %s276 = sphi 0, %s276
      %s278 = sphi 0, %s276
      %s279 = sphi 0, %s278
      %s293 = sphi 0, %s279
      %s297 = sphi 0, %s297
      %s299 = sphi 0, %s297
      %s300 = sphi 0, %s299
      %s314 = sphi 0, %s300
      %s318 = sphi 0, %s318
      %s320 = sphi 0, %s318
      %s321 = sphi 0, %s320
      %s335 = sphi 0, %s321
      %s339 = sphi 0, %s339
      %s341 = sphi 0, %s339
      %s342 = sphi 0, %s341
      %s356 = sphi 0, %s342
      %s360 = sphi 0, %s360
      %s362 = sphi 0, %s360
      %s363 = sphi 0, %s362
      %s377 = sphi 0, %s363
      %s381 = sphi 0, %s381
      %s383 = sphi 0, %s381
      %s384 = sphi 0, %s383
      %s398 = sphi 0, %s384
      %s402 = sphi 0, %s402
      %s404 = sphi 0, %s402
      %s405 = sphi 0, %s404
      %s419 = sphi 0, %s405
      %s423 = sphi 0, %s423
      %s425 = sphi 0, %s423
      %s426 = sphi 0, %s425
      %s440 = sphi 0, %s426
      %s444 = sphi 0, %s444
      %s446 = sphi 0, %s444
      %s447 = sphi 0, %s446
      %s461 = sphi 0, %s447
      %s465 = sphi 0, %s465
      %s467 = sphi 0, %s465
      %s468 = sphi 0, %s467
      %s482 = sphi 0, %s468
      %s486 = sphi 0, %s486
      %s488 = sphi 0, %s486
      %s489 = sphi 0, %s488
      %s503 = sphi 0, %s489
      %s507 = sphi 0, %s507
      %s509 = sphi 0, %s507
      %s510 = sphi 0, %s509
      %s524 = sphi 0, %s510
      %s528 = sphi 0, %s528
      %s530 = sphi 0, %s528
      %s531 = sphi 0, %s530
      %s545 = sphi 0, %s531
      %s549 = sphi 0, %s549
      %s551 = sphi 0, %s549
      %s552 = sphi 0, %s551
      %s566 = sphi 0, %s552
      %s570 = sphi 0, %s570
      %s572 = sphi 0, %s570
      %s573 = sphi 0, %s572
      %s587 = sphi 0, %s573
      %s591 = sphi 0, %s591
      %s593 = sphi 0, %s591
      %s594 = sphi 0, %s593
      %s608 = sphi 0, %s594
      %s612 = sphi 0, %s612
      %s614 = sphi 0, %s612
      %s615 = sphi 0, %s614
      %s629 = sphi 0, %s615
      %s633 = sphi 0, %s633
      %s635 = sphi 0, %s633
      %s636 = sphi 0, %s635
      %s650 = sphi 0, %s636
      %s654 = sphi 0, %s654
      %s656 = sphi 0, %s654
      %s657 = sphi 0, %s656
      %s671 = sphi 0, %s657
      %s675 = sphi 0, %s675
      %s677 = sphi 0, %s675
      %s678 = sphi 0, %s677
      %s692 = sphi 0, %s678
      %s696 = sphi 0, %s696
      %s698 = sphi 0, %s696
      %s699 = sphi 0, %s698
      %s713 = sphi 0, %s699
      %s717 = sphi 0, %s717
      %s719 = sphi 0, %s717
      %s720 = sphi 0, %s719
      %s734 = sphi 0, %s720
      %s738 = sphi 0, %s738
      %s740 = sphi 0, %s738
      %s741 = sphi 0, %s740
      %s755 = sphi 0, %s741
      %s761 = sphi 0, %s763
      %s764 = sphi 0, %s761
      %s765 = sphi 0, %s764
      %s781 = sphi 0, %s765
    $region4: #{_lambda_.1} parent=1 // loop_header_branch
      %77 = sbr.rel (%p75) target = $region8
    $region5: #{_lambda_.1} parent=1 // loop_body
      %s79 = ssub.s32 %s74, 1
      %s80 = ssub.s32 %s74, 2
      %s81 = sadd.s32 %s74, 1
      %s82 = ssub.s32 %s74, %s81
      %p83 = scmp.eq.s32.totalorder %s82, 0
      %s85 = sadd.s32 %s84, 1
      %s86 = scalar_select %p83, %s84, %s85
      %p89 = pneg %p83
      %p90 = scmp.eq.s32.totalorder %s74, 1
      %p91 = por %p89, %p90
      %p92 = scmp.ne.s32.totalorder %s84, %s87
      %p93 = scmp.eq.s32.totalorder %s74, 0
      %p94 = por %p92, %p93
      %p95 = scmp.ne.s32.totalorder %s84, %s87
      %p96 = scmp.eq.s32.totalorder %s79, 1
      %p97 = por %p95, %p96
      %p98 = scmp.ne.s32.totalorder %s87, %s88
      %p99 = scmp.eq.s32.totalorder %s79, 0
      %p100 = por %p98, %p99
      %p101 = scmp.ne.s32.totalorder %s87, %s88
      %p102 = scmp.eq.s32.totalorder %s80, 1
      %p103 = por %p101, %p102
      %p105 = scmp.ne.s32.totalorder %s88, %s104
      %p106 = scmp.eq.s32.totalorder %s80, 0
      %p107 = por %p105, %p106
      %s109 = sadd.s32 %s108, 1
      %p112 = scmp.eq.s32.totalorder %s74, 1
      %p113 = scmp.ne.s32.totalorder %s108, %s110
      %p114 = scmp.eq.s32.totalorder %s74, 0
      %p115 = por %p113, %p114
      %p116 = scmp.ne.s32.totalorder %s108, %s110
      %p117 = scmp.eq.s32.totalorder %s79, 1
      %p118 = por %p116, %p117
      %p119 = scmp.ne.s32.totalorder %s110, %s111
      %p120 = scmp.eq.s32.totalorder %s79, 0
      %p121 = por %p119, %p120
      %p122 = scmp.ne.s32.totalorder %s110, %s111
      %p123 = scmp.eq.s32.totalorder %s80, 1
      %p124 = por %p122, %p123
      %p126 = scmp.ne.s32.totalorder %s111, %s125
      %p127 = scmp.eq.s32.totalorder %s80, 0
      %p128 = por %p126, %p127
      %s130 = sadd.s32 %s129, 1
      %p133 = scmp.eq.s32.totalorder %s74, 1
      %p134 = scmp.ne.s32.totalorder %s129, %s131
      %p135 = scmp.eq.s32.totalorder %s74, 0
      %p136 = por %p134, %p135
      %p137 = scmp.ne.s32.totalorder %s129, %s131
      %p138 = scmp.eq.s32.totalorder %s79, 1
      %p139 = por %p137, %p138
      %p140 = scmp.ne.s32.totalorder %s131, %s132
      %p141 = scmp.eq.s32.totalorder %s79, 0
      %p142 = por %p140, %p141
      %p143 = scmp.ne.s32.totalorder %s131, %s132
      %p144 = scmp.eq.s32.totalorder %s80, 1
      %p145 = por %p143, %p144
      %p147 = scmp.ne.s32.totalorder %s132, %s146
      %p148 = scmp.eq.s32.totalorder %s80, 0
      %p149 = por %p147, %p148
      %s151 = sadd.s32 %s150, 1
      %p154 = scmp.eq.s32.totalorder %s74, 1
      %p155 = scmp.ne.s32.totalorder %s150, %s152
      %p156 = scmp.eq.s32.totalorder %s74, 0
      %p157 = por %p155, %p156
      %p158 = scmp.ne.s32.totalorder %s150, %s152
      %p159 = scmp.eq.s32.totalorder %s79, 1
      %p160 = por %p158, %p159
      %p161 = scmp.ne.s32.totalorder %s152, %s153
      %p162 = scmp.eq.s32.totalorder %s79, 0
      %p163 = por %p161, %p162
      %p164 = scmp.ne.s32.totalorder %s152, %s153
      %p165 = scmp.eq.s32.totalorder %s80, 1
      %p166 = por %p164, %p165
      %p168 = scmp.ne.s32.totalorder %s153, %s167
      %p169 = scmp.eq.s32.totalorder %s80, 0
      %p170 = por %p168, %p169
      %s172 = sadd.s32 %s171, 1
      %p175 = scmp.eq.s32.totalorder %s74, 1
      %p176 = scmp.ne.s32.totalorder %s171, %s173
      %p177 = scmp.eq.s32.totalorder %s74, 0
      %p178 = por %p176, %p177
      %p179 = scmp.ne.s32.totalorder %s171, %s173
      %p180 = scmp.eq.s32.totalorder %s79, 1
      %p181 = por %p179, %p180
      %p182 = scmp.ne.s32.totalorder %s173, %s174
      %p183 = scmp.eq.s32.totalorder %s79, 0
      %p184 = por %p182, %p183
      %p185 = scmp.ne.s32.totalorder %s173, %s174
      %p186 = scmp.eq.s32.totalorder %s80, 1
      %p187 = por %p185, %p186
      %p189 = scmp.ne.s32.totalorder %s174, %s188
      %p190 = scmp.eq.s32.totalorder %s80, 0
      %p191 = por %p189, %p190
      %s193 = sadd.s32 %s192, 1
      %p196 = scmp.eq.s32.totalorder %s74, 1
      %p197 = scmp.ne.s32.totalorder %s192, %s194
      %p198 = scmp.eq.s32.totalorder %s74, 0
      %p199 = por %p197, %p198
      %p200 = scmp.ne.s32.totalorder %s192, %s194
      %p201 = scmp.eq.s32.totalorder %s79, 1
      %p202 = por %p200, %p201
      %p203 = scmp.ne.s32.totalorder %s194, %s195
      %p204 = scmp.eq.s32.totalorder %s79, 0
      %p205 = por %p203, %p204
      %p206 = scmp.ne.s32.totalorder %s194, %s195
      %p207 = scmp.eq.s32.totalorder %s80, 1
      %p208 = por %p206, %p207
      %p210 = scmp.ne.s32.totalorder %s195, %s209
      %p211 = scmp.eq.s32.totalorder %s80, 0
      %p212 = por %p210, %p211
      %s214 = sadd.s32 %s213, 1
      %p217 = scmp.eq.s32.totalorder %s74, 1
      %p218 = scmp.ne.s32.totalorder %s213, %s215
      %p219 = scmp.eq.s32.totalorder %s74, 0
      %p220 = por %p218, %p219
      %p221 = scmp.ne.s32.totalorder %s213, %s215
      %p222 = scmp.eq.s32.totalorder %s79, 1
      %p223 = por %p221, %p222
      %p224 = scmp.ne.s32.totalorder %s215, %s216
      %p225 = scmp.eq.s32.totalorder %s79, 0
      %p226 = por %p224, %p225
      %p227 = scmp.ne.s32.totalorder %s215, %s216
      %p228 = scmp.eq.s32.totalorder %s80, 1
      %p229 = por %p227, %p228
      %p231 = scmp.ne.s32.totalorder %s216, %s230
      %p232 = scmp.eq.s32.totalorder %s80, 0
      %p233 = por %p231, %p232
      %s235 = sadd.s32 %s234, 1
      %p238 = scmp.eq.s32.totalorder %s74, 1
      %p239 = scmp.ne.s32.totalorder %s234, %s236
      %p240 = scmp.eq.s32.totalorder %s74, 0
      %p241 = por %p239, %p240
      %p242 = scmp.ne.s32.totalorder %s234, %s236
      %p243 = scmp.eq.s32.totalorder %s79, 1
      %p244 = por %p242, %p243
      %p245 = scmp.ne.s32.totalorder %s236, %s237
      %p246 = scmp.eq.s32.totalorder %s79, 0
      %p247 = por %p245, %p246
      %p248 = scmp.ne.s32.totalorder %s236, %s237
      %p249 = scmp.eq.s32.totalorder %s80, 1
      %p250 = por %p248, %p249
      %p252 = scmp.ne.s32.totalorder %s237, %s251
      %p253 = scmp.eq.s32.totalorder %s80, 0
      %p254 = por %p252, %p253
      %s256 = sadd.s32 %s255, 1
      %p259 = scmp.eq.s32.totalorder %s74, 1
      %p260 = scmp.ne.s32.totalorder %s255, %s257
      %p261 = scmp.eq.s32.totalorder %s74, 0
      %p262 = por %p260, %p261
      %p263 = scmp.ne.s32.totalorder %s255, %s257
      %p264 = scmp.eq.s32.totalorder %s79, 1
      %p265 = por %p263, %p264
      %p266 = scmp.ne.s32.totalorder %s257, %s258
      %p267 = scmp.eq.s32.totalorder %s79, 0
      %p268 = por %p266, %p267
      %p269 = scmp.ne.s32.totalorder %s257, %s258
      %p270 = scmp.eq.s32.totalorder %s80, 1
      %p271 = por %p269, %p270
      %p273 = scmp.ne.s32.totalorder %s258, %s272
      %p274 = scmp.eq.s32.totalorder %s80, 0
      %p275 = por %p273, %p274
      %s277 = sadd.s32 %s276, 1
      %p280 = scmp.eq.s32.totalorder %s74, 1
      %p281 = scmp.ne.s32.totalorder %s276, %s278
      %p282 = scmp.eq.s32.totalorder %s74, 0
      %p283 = por %p281, %p282
      %p284 = scmp.ne.s32.totalorder %s276, %s278
      %p285 = scmp.eq.s32.totalorder %s79, 1
      %p286 = por %p284, %p285
      %p287 = scmp.ne.s32.totalorder %s278, %s279
      %p288 = scmp.eq.s32.totalorder %s79, 0
      %p289 = por %p287, %p288
      %p290 = scmp.ne.s32.totalorder %s278, %s279
      %p291 = scmp.eq.s32.totalorder %s80, 1
      %p292 = por %p290, %p291
      %p294 = scmp.ne.s32.totalorder %s279, %s293
      %p295 = scmp.eq.s32.totalorder %s80, 0
      %p296 = por %p294, %p295
      %s298 = sadd.s32 %s297, 1
      %p301 = scmp.eq.s32.totalorder %s74, 1
      %p302 = scmp.ne.s32.totalorder %s297, %s299
      %p303 = scmp.eq.s32.totalorder %s74, 0
      %p304 = por %p302, %p303
      %p305 = scmp.ne.s32.totalorder %s297, %s299
      %p306 = scmp.eq.s32.totalorder %s79, 1
      %p307 = por %p305, %p306
      %p308 = scmp.ne.s32.totalorder %s299, %s300
      %p309 = scmp.eq.s32.totalorder %s79, 0
      %p310 = por %p308, %p309
      %p311 = scmp.ne.s32.totalorder %s299, %s300
      %p312 = scmp.eq.s32.totalorder %s80, 1
      %p313 = por %p311, %p312
      %p315 = scmp.ne.s32.totalorder %s300, %s314
      %p316 = scmp.eq.s32.totalorder %s80, 0
      %p317 = por %p315, %p316
      %s319 = sadd.s32 %s318, 1
      %p322 = scmp.eq.s32.totalorder %s74, 1
      %p323 = scmp.ne.s32.totalorder %s318, %s320
      %p324 = scmp.eq.s32.totalorder %s74, 0
      %p325 = por %p323, %p324
      %p326 = scmp.ne.s32.totalorder %s318, %s320
      %p327 = scmp.eq.s32.totalorder %s79, 1
      %p328 = por %p326, %p327
      %p329 = scmp.ne.s32.totalorder %s320, %s321
      %p330 = scmp.eq.s32.totalorder %s79, 0
      %p331 = por %p329, %p330
      %p332 = scmp.ne.s32.totalorder %s320, %s321
      %p333 = scmp.eq.s32.totalorder %s80, 1
      %p334 = por %p332, %p333
      %p336 = scmp.ne.s32.totalorder %s321, %s335
      %p337 = scmp.eq.s32.totalorder %s80, 0
      %p338 = por %p336, %p337
      %s340 = sadd.s32 %s339, 1
      %p343 = scmp.eq.s32.totalorder %s74, 1
      %p344 = scmp.ne.s32.totalorder %s339, %s341
      %p345 = scmp.eq.s32.totalorder %s74, 0
      %p346 = por %p344, %p345
      %p347 = scmp.ne.s32.totalorder %s339, %s341
      %p348 = scmp.eq.s32.totalorder %s79, 1
      %p349 = por %p347, %p348
      %p350 = scmp.ne.s32.totalorder %s341, %s342
      %p351 = scmp.eq.s32.totalorder %s79, 0
      %p352 = por %p350, %p351
      %p353 = scmp.ne.s32.totalorder %s341, %s342
      %p354 = scmp.eq.s32.totalorder %s80, 1
      %p355 = por %p353, %p354
      %p357 = scmp.ne.s32.totalorder %s342, %s356
      %p358 = scmp.eq.s32.totalorder %s80, 0
      %p359 = por %p357, %p358
      %s361 = sadd.s32 %s360, 1
      %p364 = scmp.eq.s32.totalorder %s74, 1
      %p365 = scmp.ne.s32.totalorder %s360, %s362
      %p366 = scmp.eq.s32.totalorder %s74, 0
      %p367 = por %p365, %p366
      %p368 = scmp.ne.s32.totalorder %s360, %s362
      %p369 = scmp.eq.s32.totalorder %s79, 1
      %p370 = por %p368, %p369
      %p371 = scmp.ne.s32.totalorder %s362, %s363
      %p372 = scmp.eq.s32.totalorder %s79, 0
      %p373 = por %p371, %p372
      %p374 = scmp.ne.s32.totalorder %s362, %s363
      %p375 = scmp.eq.s32.totalorder %s80, 1
      %p376 = por %p374, %p375
      %p378 = scmp.ne.s32.totalorder %s363, %s377
      %p379 = scmp.eq.s32.totalorder %s80, 0
      %p380 = por %p378, %p379
      %s382 = sadd.s32 %s381, 1
      %p385 = scmp.eq.s32.totalorder %s74, 1
      %p386 = scmp.ne.s32.totalorder %s381, %s383
      %p387 = scmp.eq.s32.totalorder %s74, 0
      %p388 = por %p386, %p387
      %p389 = scmp.ne.s32.totalorder %s381, %s383
      %p390 = scmp.eq.s32.totalorder %s79, 1
      %p391 = por %p389, %p390
      %p392 = scmp.ne.s32.totalorder %s383, %s384
      %p393 = scmp.eq.s32.totalorder %s79, 0
      %p394 = por %p392, %p393
      %p395 = scmp.ne.s32.totalorder %s383, %s384
      %p396 = scmp.eq.s32.totalorder %s80, 1
      %p397 = por %p395, %p396
      %p399 = scmp.ne.s32.totalorder %s384, %s398
      %p400 = scmp.eq.s32.totalorder %s80, 0
      %p401 = por %p399, %p400
      %s403 = sadd.s32 %s402, 1
      %p406 = scmp.eq.s32.totalorder %s74, 1
      %p407 = scmp.ne.s32.totalorder %s402, %s404
      %p408 = scmp.eq.s32.totalorder %s74, 0
      %p409 = por %p407, %p408
      %p410 = scmp.ne.s32.totalorder %s402, %s404
      %p411 = scmp.eq.s32.totalorder %s79, 1
      %p412 = por %p410, %p411
      %p413 = scmp.ne.s32.totalorder %s404, %s405
      %p414 = scmp.eq.s32.totalorder %s79, 0
      %p415 = por %p413, %p414
      %p416 = scmp.ne.s32.totalorder %s404, %s405
      %p417 = scmp.eq.s32.totalorder %s80, 1
      %p418 = por %p416, %p417
      %p420 = scmp.ne.s32.totalorder %s405, %s419
      %p421 = scmp.eq.s32.totalorder %s80, 0
      %p422 = por %p420, %p421
      %s424 = sadd.s32 %s423, 1
      %p427 = scmp.eq.s32.totalorder %s74, 1
      %p428 = scmp.ne.s32.totalorder %s423, %s425
      %p429 = scmp.eq.s32.totalorder %s74, 0
      %p430 = por %p428, %p429
      %p431 = scmp.ne.s32.totalorder %s423, %s425
      %p432 = scmp.eq.s32.totalorder %s79, 1
      %p433 = por %p431, %p432
      %p434 = scmp.ne.s32.totalorder %s425, %s426
      %p435 = scmp.eq.s32.totalorder %s79, 0
      %p436 = por %p434, %p435
      %p437 = scmp.ne.s32.totalorder %s425, %s426
      %p438 = scmp.eq.s32.totalorder %s80, 1
      %p439 = por %p437, %p438
      %p441 = scmp.ne.s32.totalorder %s426, %s440
      %p442 = scmp.eq.s32.totalorder %s80, 0
      %p443 = por %p441, %p442
      %s445 = sadd.s32 %s444, 1
      %p448 = scmp.eq.s32.totalorder %s74, 1
      %p449 = scmp.ne.s32.totalorder %s444, %s446
      %p450 = scmp.eq.s32.totalorder %s74, 0
      %p451 = por %p449, %p450
      %p452 = scmp.ne.s32.totalorder %s444, %s446
      %p453 = scmp.eq.s32.totalorder %s79, 1
      %p454 = por %p452, %p453
      %p455 = scmp.ne.s32.totalorder %s446, %s447
      %p456 = scmp.eq.s32.totalorder %s79, 0
      %p457 = por %p455, %p456
      %p458 = scmp.ne.s32.totalorder %s446, %s447
      %p459 = scmp.eq.s32.totalorder %s80, 1
      %p460 = por %p458, %p459
      %p462 = scmp.ne.s32.totalorder %s447, %s461
      %p463 = scmp.eq.s32.totalorder %s80, 0
      %p464 = por %p462, %p463
      %s466 = sadd.s32 %s465, 1
      %p469 = scmp.eq.s32.totalorder %s74, 1
      %p470 = scmp.ne.s32.totalorder %s465, %s467
      %p471 = scmp.eq.s32.totalorder %s74, 0
      %p472 = por %p470, %p471
      %p473 = scmp.ne.s32.totalorder %s465, %s467
      %p474 = scmp.eq.s32.totalorder %s79, 1
      %p475 = por %p473, %p474
      %p476 = scmp.ne.s32.totalorder %s467, %s468
      %p477 = scmp.eq.s32.totalorder %s79, 0
      %p478 = por %p476, %p477
      %p479 = scmp.ne.s32.totalorder %s467, %s468
      %p480 = scmp.eq.s32.totalorder %s80, 1
      %p481 = por %p479, %p480
      %p483 = scmp.ne.s32.totalorder %s468, %s482
      %p484 = scmp.eq.s32.totalorder %s80, 0
      %p485 = por %p483, %p484
      %s487 = sadd.s32 %s486, 1
      %p490 = scmp.eq.s32.totalorder %s74, 1
      %p491 = scmp.ne.s32.totalorder %s486, %s488
      %p492 = scmp.eq.s32.totalorder %s74, 0
      %p493 = por %p491, %p492
      %p494 = scmp.ne.s32.totalorder %s486, %s488
      %p495 = scmp.eq.s32.totalorder %s79, 1
      %p496 = por %p494, %p495
      %p497 = scmp.ne.s32.totalorder %s488, %s489
      %p498 = scmp.eq.s32.totalorder %s79, 0
      %p499 = por %p497, %p498
      %p500 = scmp.ne.s32.totalorder %s488, %s489
      %p501 = scmp.eq.s32.totalorder %s80, 1
      %p502 = por %p500, %p501
      %p504 = scmp.ne.s32.totalorder %s489, %s503
      %p505 = scmp.eq.s32.totalorder %s80, 0
      %p506 = por %p504, %p505
      %s508 = sadd.s32 %s507, 1
      %p511 = scmp.eq.s32.totalorder %s74, 1
      %p512 = scmp.ne.s32.totalorder %s507, %s509
      %p513 = scmp.eq.s32.totalorder %s74, 0
      %p514 = por %p512, %p513
      %p515 = scmp.ne.s32.totalorder %s507, %s509
      %p516 = scmp.eq.s32.totalorder %s79, 1
      %p517 = por %p515, %p516
      %p518 = scmp.ne.s32.totalorder %s509, %s510
      %p519 = scmp.eq.s32.totalorder %s79, 0
      %p520 = por %p518, %p519
      %p521 = scmp.ne.s32.totalorder %s509, %s510
      %p522 = scmp.eq.s32.totalorder %s80, 1
      %p523 = por %p521, %p522
      %p525 = scmp.ne.s32.totalorder %s510, %s524
      %p526 = scmp.eq.s32.totalorder %s80, 0
      %p527 = por %p525, %p526
      %s529 = sadd.s32 %s528, 1
      %p532 = scmp.eq.s32.totalorder %s74, 1
      %p533 = scmp.ne.s32.totalorder %s528, %s530
      %p534 = scmp.eq.s32.totalorder %s74, 0
      %p535 = por %p533, %p534
      %p536 = scmp.ne.s32.totalorder %s528, %s530
      %p537 = scmp.eq.s32.totalorder %s79, 1
      %p538 = por %p536, %p537
      %p539 = scmp.ne.s32.totalorder %s530, %s531
      %p540 = scmp.eq.s32.totalorder %s79, 0
      %p541 = por %p539, %p540
      %p542 = scmp.ne.s32.totalorder %s530, %s531
      %p543 = scmp.eq.s32.totalorder %s80, 1
      %p544 = por %p542, %p543
      %p546 = scmp.ne.s32.totalorder %s531, %s545
      %p547 = scmp.eq.s32.totalorder %s80, 0
      %p548 = por %p546, %p547
      %s550 = sadd.s32 %s549, 1
      %p553 = scmp.eq.s32.totalorder %s74, 1
      %p554 = scmp.ne.s32.totalorder %s549, %s551
      %p555 = scmp.eq.s32.totalorder %s74, 0
      %p556 = por %p554, %p555
      %p557 = scmp.ne.s32.totalorder %s549, %s551
      %p558 = scmp.eq.s32.totalorder %s79, 1
      %p559 = por %p557, %p558
      %p560 = scmp.ne.s32.totalorder %s551, %s552
      %p561 = scmp.eq.s32.totalorder %s79, 0
      %p562 = por %p560, %p561
      %p563 = scmp.ne.s32.totalorder %s551, %s552
      %p564 = scmp.eq.s32.totalorder %s80, 1
      %p565 = por %p563, %p564
      %p567 = scmp.ne.s32.totalorder %s552, %s566
      %p568 = scmp.eq.s32.totalorder %s80, 0
      %p569 = por %p567, %p568
      %s571 = sadd.s32 %s570, 1
      %p574 = scmp.eq.s32.totalorder %s74, 1
      %p575 = scmp.ne.s32.totalorder %s570, %s572
      %p576 = scmp.eq.s32.totalorder %s74, 0
      %p577 = por %p575, %p576
      %p578 = scmp.ne.s32.totalorder %s570, %s572
      %p579 = scmp.eq.s32.totalorder %s79, 1
      %p580 = por %p578, %p579
      %p581 = scmp.ne.s32.totalorder %s572, %s573
      %p582 = scmp.eq.s32.totalorder %s79, 0
      %p583 = por %p581, %p582
      %p584 = scmp.ne.s32.totalorder %s572, %s573
      %p585 = scmp.eq.s32.totalorder %s80, 1
      %p586 = por %p584, %p585
      %p588 = scmp.ne.s32.totalorder %s573, %s587
      %p589 = scmp.eq.s32.totalorder %s80, 0
      %p590 = por %p588, %p589
      %s592 = sadd.s32 %s591, 1
      %p595 = scmp.eq.s32.totalorder %s74, 1
      %p596 = scmp.ne.s32.totalorder %s591, %s593
      %p597 = scmp.eq.s32.totalorder %s74, 0
      %p598 = por %p596, %p597
      %p599 = scmp.ne.s32.totalorder %s591, %s593
      %p600 = scmp.eq.s32.totalorder %s79, 1
      %p601 = por %p599, %p600
      %p602 = scmp.ne.s32.totalorder %s593, %s594
      %p603 = scmp.eq.s32.totalorder %s79, 0
      %p604 = por %p602, %p603
      %p605 = scmp.ne.s32.totalorder %s593, %s594
      %p606 = scmp.eq.s32.totalorder %s80, 1
      %p607 = por %p605, %p606
      %p609 = scmp.ne.s32.totalorder %s594, %s608
      %p610 = scmp.eq.s32.totalorder %s80, 0
      %p611 = por %p609, %p610
      %s613 = sadd.s32 %s612, 1
      %p616 = scmp.eq.s32.totalorder %s74, 1
      %p617 = scmp.ne.s32.totalorder %s612, %s614
      %p618 = scmp.eq.s32.totalorder %s74, 0
      %p619 = por %p617, %p618
      %p620 = scmp.ne.s32.totalorder %s612, %s614
      %p621 = scmp.eq.s32.totalorder %s79, 1
      %p622 = por %p620, %p621
      %p623 = scmp.ne.s32.totalorder %s614, %s615
      %p624 = scmp.eq.s32.totalorder %s79, 0
      %p625 = por %p623, %p624
      %p626 = scmp.ne.s32.totalorder %s614, %s615
      %p627 = scmp.eq.s32.totalorder %s80, 1
      %p628 = por %p626, %p627
      %p630 = scmp.ne.s32.totalorder %s615, %s629
      %p631 = scmp.eq.s32.totalorder %s80, 0
      %p632 = por %p630, %p631
      %s634 = sadd.s32 %s633, 1
      %p637 = scmp.eq.s32.totalorder %s74, 1
      %p638 = scmp.ne.s32.totalorder %s633, %s635
      %p639 = scmp.eq.s32.totalorder %s74, 0
      %p640 = por %p638, %p639
      %p641 = scmp.ne.s32.totalorder %s633, %s635
      %p642 = scmp.eq.s32.totalorder %s79, 1
      %p643 = por %p641, %p642
      %p644 = scmp.ne.s32.totalorder %s635, %s636
      %p645 = scmp.eq.s32.totalorder %s79, 0
      %p646 = por %p644, %p645
      %p647 = scmp.ne.s32.totalorder %s635, %s636
      %p648 = scmp.eq.s32.totalorder %s80, 1
      %p649 = por %p647, %p648
      %p651 = scmp.ne.s32.totalorder %s636, %s650
      %p652 = scmp.eq.s32.totalorder %s80, 0
      %p653 = por %p651, %p652
      %s655 = sadd.s32 %s654, 1
      %p658 = scmp.eq.s32.totalorder %s74, 1
      %p659 = scmp.ne.s32.totalorder %s654, %s656
      %p660 = scmp.eq.s32.totalorder %s74, 0
      %p661 = por %p659, %p660
      %p662 = scmp.ne.s32.totalorder %s654, %s656
      %p663 = scmp.eq.s32.totalorder %s79, 1
      %p664 = por %p662, %p663
      %p665 = scmp.ne.s32.totalorder %s656, %s657
      %p666 = scmp.eq.s32.totalorder %s79, 0
      %p667 = por %p665, %p666
      %p668 = scmp.ne.s32.totalorder %s656, %s657
      %p669 = scmp.eq.s32.totalorder %s80, 1
      %p670 = por %p668, %p669
      %p672 = scmp.ne.s32.totalorder %s657, %s671
      %p673 = scmp.eq.s32.totalorder %s80, 0
      %p674 = por %p672, %p673
      %s676 = sadd.s32 %s675, 1
      %p679 = scmp.eq.s32.totalorder %s74, 1
      %p680 = scmp.ne.s32.totalorder %s675, %s677
      %p681 = scmp.eq.s32.totalorder %s74, 0
      %p682 = por %p680, %p681
      %p683 = scmp.ne.s32.totalorder %s675, %s677
      %p684 = scmp.eq.s32.totalorder %s79, 1
      %p685 = por %p683, %p684
      %p686 = scmp.ne.s32.totalorder %s677, %s678
      %p687 = scmp.eq.s32.totalorder %s79, 0
      %p688 = por %p686, %p687
      %p689 = scmp.ne.s32.totalorder %s677, %s678
      %p690 = scmp.eq.s32.totalorder %s80, 1
      %p691 = por %p689, %p690
      %p693 = scmp.ne.s32.totalorder %s678, %s692
      %p694 = scmp.eq.s32.totalorder %s80, 0
      %p695 = por %p693, %p694
      %s697 = sadd.s32 %s696, 1
      %p700 = scmp.eq.s32.totalorder %s74, 1
      %p701 = scmp.ne.s32.totalorder %s696, %s698
      %p702 = scmp.eq.s32.totalorder %s74, 0
      %p703 = por %p701, %p702
      %p704 = scmp.ne.s32.totalorder %s696, %s698
      %p705 = scmp.eq.s32.totalorder %s79, 1
      %p706 = por %p704, %p705
      %p707 = scmp.ne.s32.totalorder %s698, %s699
      %p708 = scmp.eq.s32.totalorder %s79, 0
      %p709 = por %p707, %p708
      %p710 = scmp.ne.s32.totalorder %s698, %s699
      %p711 = scmp.eq.s32.totalorder %s80, 1
      %p712 = por %p710, %p711
      %p714 = scmp.ne.s32.totalorder %s699, %s713
      %p715 = scmp.eq.s32.totalorder %s80, 0
      %p716 = por %p714, %p715
      %s718 = sadd.s32 %s717, 1
      %p721 = scmp.eq.s32.totalorder %s74, 1
      %p722 = scmp.ne.s32.totalorder %s717, %s719
      %p723 = scmp.eq.s32.totalorder %s74, 0
      %p724 = por %p722, %p723
      %p725 = scmp.ne.s32.totalorder %s717, %s719
      %p726 = scmp.eq.s32.totalorder %s79, 1
      %p727 = por %p725, %p726
      %p728 = scmp.ne.s32.totalorder %s719, %s720
      %p729 = scmp.eq.s32.totalorder %s79, 0
      %p730 = por %p728, %p729
      %p731 = scmp.ne.s32.totalorder %s719, %s720
      %p732 = scmp.eq.s32.totalorder %s80, 1
      %p733 = por %p731, %p732
      %p735 = scmp.ne.s32.totalorder %s720, %s734
      %p736 = scmp.eq.s32.totalorder %s80, 0
      %p737 = por %p735, %p736
      %s739 = sadd.s32 %s738, 1
      %p742 = scmp.eq.s32.totalorder %s74, 1
      %p743 = scmp.ne.s32.totalorder %s738, %s740
      %p744 = scmp.eq.s32.totalorder %s74, 0
      %p745 = por %p743, %p744
      %p746 = scmp.ne.s32.totalorder %s738, %s740
      %p747 = scmp.eq.s32.totalorder %s79, 1
      %p748 = por %p746, %p747
      %p749 = scmp.ne.s32.totalorder %s740, %s741
      %p750 = scmp.eq.s32.totalorder %s79, 0
      %p751 = por %p749, %p750
      %p752 = scmp.ne.s32.totalorder %s740, %s741
      %p753 = scmp.eq.s32.totalorder %s80, 1
      %p754 = por %p752, %p753
      %p756 = scmp.ne.s32.totalorder %s741, %s755
      %p757 = scmp.eq.s32.totalorder %s80, 0
      %p758 = por %p756, %p757
      %s759 = ssub.s32 %s74, %s81
      %p760 = scmp.eq.s32.totalorder %s759, 0
      %s762 = sadd.s32 %s761, 1
      %s763 = scalar_select %p760, %s761, %s762
      %p766 = pneg %p760
      %p767 = scmp.eq.s32.totalorder %s74, 1
      %p768 = por %p766, %p767
      %p769 = scmp.ne.s32.totalorder %s761, %s764
      %p770 = scmp.eq.s32.totalorder %s74, 0
      %p771 = por %p769, %p770
      %p772 = scmp.ne.s32.totalorder %s761, %s764
      %p773 = scmp.eq.s32.totalorder %s79, 1
      %p774 = por %p772, %p773
      %p775 = scmp.ne.s32.totalorder %s764, %s765
      %p776 = scmp.eq.s32.totalorder %s79, 0
      %p777 = por %p775, %p776
      %p778 = scmp.ne.s32.totalorder %s764, %s765
      %p779 = scmp.eq.s32.totalorder %s80, 1
      %p780 = por %p778, %p779
      %p782 = scmp.ne.s32.totalorder %s765, %s781
      %p783 = scmp.eq.s32.totalorder %s80, 0
      %p784 = por %p782, %p783
      %p785 = scmp.le.s32.totalorder 1, %s74
      %p786 = scmp.lt.s32.totalorder %s74, 3
      %p787 = pnand %p785, %p786
      %p788 = pneg %p787
      // Predicated region
      $region9: #{_lambda_.1} parent=5 // pred_check
        _
      $region10: #{_lambda_.1} parent=5 // pred_check_branch
        %790 = sbr.rel (%p787) target = $region12
      $region11: #{_lambda_.1} parent=5 // pred_region
        %s791 = ssub.s32 %s74, 1
        // Predicated region
        $region13: #{_lambda_.1} parent=11 // pred_check
          %p792 = pneg %p121
        $region14: #{_lambda_.1} parent=11 // pred_check_branch
          %794 = sbr.rel (%p792) target = $region16
        $region15: #{_lambda_.1} parent=11 // pred_region
          _
        $region16: #{_lambda_.1} parent=11 // pred_fallthru
          _
        // Predicated region
        $region17: #{_lambda_.1} parent=11 // pred_check
          %p795 = pneg %p142
        $region18: #{_lambda_.1} parent=11 // pred_check_branch
          %797 = sbr.rel (%p795) target = $region20
        $region19: #{_lambda_.1} parent=11 // pred_region
          _
        $region20: #{_lambda_.1} parent=11 // pred_fallthru
          _
        // Predicated region
        $region21: #{_lambda_.1} parent=11 // pred_check
          %p798 = pneg %p163
        $region22: #{_lambda_.1} parent=11 // pred_check_branch
          %800 = sbr.rel (%p798) target = $region24
        $region23: #{_lambda_.1} parent=11 // pred_region
          _
        $region24: #{_lambda_.1} parent=11 // pred_fallthru
          _
        // Predicated region
        $region25: #{_lambda_.1} parent=11 // pred_check
          %p801 = pneg %p184
        $region26: #{_lambda_.1} parent=11 // pred_check_branch
          %803 = sbr.rel (%p801) target = $region28
        $region27: #{_lambda_.1} parent=11 // pred_region
          _
        $region28: #{_lambda_.1} parent=11 // pred_fallthru
          _
        // Predicated region
        $region29: #{_lambda_.1} parent=11 // pred_check
          %p804 = pneg %p205
        $region30: #{_lambda_.1} parent=11 // pred_check_branch
          %806 = sbr.rel (%p804) target = $region32
        $region31: #{_lambda_.1} parent=11 // pred_region
          _
        $region32: #{_lambda_.1} parent=11 // pred_fallthru
          _
        // Predicated region
        $region33: #{_lambda_.1} parent=11 // pred_check
          %p807 = pneg %p226
        $region34: #{_lambda_.1} parent=11 // pred_check_branch
          %809 = sbr.rel (%p807) target = $region36
        $region35: #{_lambda_.1} parent=11 // pred_region
          _
        $region36: #{_lambda_.1} parent=11 // pred_fallthru
          _
        // Predicated region
        $region37: #{_lambda_.1} parent=11 // pred_check
          %p810 = pneg %p247
        $region38: #{_lambda_.1} parent=11 // pred_check_branch
          %812 = sbr.rel (%p810) target = $region40
        $region39: #{_lambda_.1} parent=11 // pred_region
          _
        $region40: #{_lambda_.1} parent=11 // pred_fallthru
          _
        // Predicated region
        $region41: #{_lambda_.1} parent=11 // pred_check
          %p813 = pneg %p268
        $region42: #{_lambda_.1} parent=11 // pred_check_branch
          %815 = sbr.rel (%p813) target = $region44
        $region43: #{_lambda_.1} parent=11 // pred_region
          _
        $region44: #{_lambda_.1} parent=11 // pred_fallthru
          _
        // Predicated region
        $region45: #{_lambda_.1} parent=11 // pred_check
          %p816 = pneg %p289
        $region46: #{_lambda_.1} parent=11 // pred_check_branch
          %818 = sbr.rel (%p816) target = $region48
        $region47: #{_lambda_.1} parent=11 // pred_region
          _
        $region48: #{_lambda_.1} parent=11 // pred_fallthru
          _
        // Predicated region
        $region49: #{_lambda_.1} parent=11 // pred_check
          %p819 = pneg %p310
        $region50: #{_lambda_.1} parent=11 // pred_check_branch
          %821 = sbr.rel (%p819) target = $region52
        $region51: #{_lambda_.1} parent=11 // pred_region
          _
        $region52: #{_lambda_.1} parent=11 // pred_fallthru
          _
        // Predicated region
        $region53: #{_lambda_.1} parent=11 // pred_check
          %p822 = pneg %p331
        $region54: #{_lambda_.1} parent=11 // pred_check_branch
          %824 = sbr.rel (%p822) target = $region56
        $region55: #{_lambda_.1} parent=11 // pred_region
          _
        $region56: #{_lambda_.1} parent=11 // pred_fallthru
          _
        // Predicated region
        $region57: #{_lambda_.1} parent=11 // pred_check
          %p825 = pneg %p352
        $region58: #{_lambda_.1} parent=11 // pred_check_branch
          %827 = sbr.rel (%p825) target = $region60
        $region59: #{_lambda_.1} parent=11 // pred_region
          _
        $region60: #{_lambda_.1} parent=11 // pred_fallthru
          _
        // Predicated region
        $region61: #{_lambda_.1} parent=11 // pred_check
          %p828 = pneg %p373
        $region62: #{_lambda_.1} parent=11 // pred_check_branch
          %830 = sbr.rel (%p828) target = $region64
        $region63: #{_lambda_.1} parent=11 // pred_region
          _
        $region64: #{_lambda_.1} parent=11 // pred_fallthru
          _
        // Predicated region
        $region65: #{_lambda_.1} parent=11 // pred_check
          %p831 = pneg %p394
        $region66: #{_lambda_.1} parent=11 // pred_check_branch
          %833 = sbr.rel (%p831) target = $region68
        $region67: #{_lambda_.1} parent=11 // pred_region
          _
        $region68: #{_lambda_.1} parent=11 // pred_fallthru
          _
        // Predicated region
        $region69: #{_lambda_.1} parent=11 // pred_check
          %p834 = pneg %p415
        $region70: #{_lambda_.1} parent=11 // pred_check_branch
          %836 = sbr.rel (%p834) target = $region72
        $region71: #{_lambda_.1} parent=11 // pred_region
          _
        $region72: #{_lambda_.1} parent=11 // pred_fallthru
          _
        // Predicated region
        $region73: #{_lambda_.1} parent=11 // pred_check
          %p837 = pneg %p436
        $region74: #{_lambda_.1} parent=11 // pred_check_branch
          %839 = sbr.rel (%p837) target = $region76
        $region75: #{_lambda_.1} parent=11 // pred_region
          _
        $region76: #{_lambda_.1} parent=11 // pred_fallthru
          _
        // Predicated region
        $region77: #{_lambda_.1} parent=11 // pred_check
          %p840 = pneg %p457
        $region78: #{_lambda_.1} parent=11 // pred_check_branch
          %842 = sbr.rel (%p840) target = $region80
        $region79: #{_lambda_.1} parent=11 // pred_region
          _
        $region80: #{_lambda_.1} parent=11 // pred_fallthru
          _
        // Predicated region
        $region81: #{_lambda_.1} parent=11 // pred_check
          %p843 = pneg %p478
        $region82: #{_lambda_.1} parent=11 // pred_check_branch
          %845 = sbr.rel (%p843) target = $region84
        $region83: #{_lambda_.1} parent=11 // pred_region
          _
        $region84: #{_lambda_.1} parent=11 // pred_fallthru
          _
        // Predicated region
        $region85: #{_lambda_.1} parent=11 // pred_check
          %p846 = pneg %p499
        $region86: #{_lambda_.1} parent=11 // pred_check_branch
          %848 = sbr.rel (%p846) target = $region88
        $region87: #{_lambda_.1} parent=11 // pred_region
          _
        $region88: #{_lambda_.1} parent=11 // pred_fallthru
          _
        // Predicated region
        $region89: #{_lambda_.1} parent=11 // pred_check
          %p849 = pneg %p520
        $region90: #{_lambda_.1} parent=11 // pred_check_branch
          %851 = sbr.rel (%p849) target = $region92
        $region91: #{_lambda_.1} parent=11 // pred_region
          _
        $region92: #{_lambda_.1} parent=11 // pred_fallthru
          _
        // Predicated region
        $region93: #{_lambda_.1} parent=11 // pred_check
          %p852 = pneg %p541
        $region94: #{_lambda_.1} parent=11 // pred_check_branch
          %854 = sbr.rel (%p852) target = $region96
        $region95: #{_lambda_.1} parent=11 // pred_region
          _
        $region96: #{_lambda_.1} parent=11 // pred_fallthru
          _
        // Predicated region
        $region97: #{_lambda_.1} parent=11 // pred_check
          %p855 = pneg %p562
        $region98: #{_lambda_.1} parent=11 // pred_check_branch
          %857 = sbr.rel (%p855) target = $region100
        $region99: #{_lambda_.1} parent=11 // pred_region
          _
        $region100: #{_lambda_.1} parent=11 // pred_fallthru
          _
        // Predicated region
        $region101: #{_lambda_.1} parent=11 // pred_check
          %p858 = pneg %p583
        $region102: #{_lambda_.1} parent=11 // pred_check_branch
          %860 = sbr.rel (%p858) target = $region104
        $region103: #{_lambda_.1} parent=11 // pred_region
          _
        $region104: #{_lambda_.1} parent=11 // pred_fallthru
          _
        // Predicated region
        $region105: #{_lambda_.1} parent=11 // pred_check
          %p861 = pneg %p604
        $region106: #{_lambda_.1} parent=11 // pred_check_branch
          %863 = sbr.rel (%p861) target = $region108
        $region107: #{_lambda_.1} parent=11 // pred_region
          _
        $region108: #{_lambda_.1} parent=11 // pred_fallthru
          _
        // Predicated region
        $region109: #{_lambda_.1} parent=11 // pred_check
          %p864 = pneg %p625
        $region110: #{_lambda_.1} parent=11 // pred_check_branch
          %866 = sbr.rel (%p864) target = $region112
        $region111: #{_lambda_.1} parent=11 // pred_region
          _
        $region112: #{_lambda_.1} parent=11 // pred_fallthru
          _
        // Predicated region
        $region113: #{_lambda_.1} parent=11 // pred_check
          %p867 = pneg %p646
        $region114: #{_lambda_.1} parent=11 // pred_check_branch
          %869 = sbr.rel (%p867) target = $region116
        $region115: #{_lambda_.1} parent=11 // pred_region
          _
        $region116: #{_lambda_.1} parent=11 // pred_fallthru
          _
        // Predicated region
        $region117: #{_lambda_.1} parent=11 // pred_check
          %p870 = pneg %p667
        $region118: #{_lambda_.1} parent=11 // pred_check_branch
          %872 = sbr.rel (%p870) target = $region120
        $region119: #{_lambda_.1} parent=11 // pred_region
          _
        $region120: #{_lambda_.1} parent=11 // pred_fallthru
          _
        // Predicated region
        $region121: #{_lambda_.1} parent=11 // pred_check
          %p873 = pneg %p688
        $region122: #{_lambda_.1} parent=11 // pred_check_branch
          %875 = sbr.rel (%p873) target = $region124
        $region123: #{_lambda_.1} parent=11 // pred_region
          _
        $region124: #{_lambda_.1} parent=11 // pred_fallthru
          _
        // Predicated region
        $region125: #{_lambda_.1} parent=11 // pred_check
          %p876 = pneg %p709
        $region126: #{_lambda_.1} parent=11 // pred_check_branch
          %878 = sbr.rel (%p876) target = $region128
        $region127: #{_lambda_.1} parent=11 // pred_region
          _
        $region128: #{_lambda_.1} parent=11 // pred_fallthru
          _
        // Predicated region
        $region129: #{_lambda_.1} parent=11 // pred_check
          %p879 = pneg %p730
        $region130: #{_lambda_.1} parent=11 // pred_check_branch
          %881 = sbr.rel (%p879) target = $region132
        $region131: #{_lambda_.1} parent=11 // pred_region
          _
        $region132: #{_lambda_.1} parent=11 // pred_fallthru
          _
        // Predicated region
        $region133: #{_lambda_.1} parent=11 // pred_check
          %p882 = pneg %p751
        $region134: #{_lambda_.1} parent=11 // pred_check_branch
          %884 = sbr.rel (%p882) target = $region136
        $region135: #{_lambda_.1} parent=11 // pred_region
          _
        $region136: #{_lambda_.1} parent=11 // pred_fallthru
          _
      $region12: #{_lambda_.1} parent=5 // pred_fallthru
        _
      %p885 = scmp.lt.s32.totalorder %s74, 2
      // Predicated region
      $region137: #{_lambda_.1} parent=5 // pred_check
        %p886 = pneg %p885
      $region138: #{_lambda_.1} parent=5 // pred_check_branch
        %888 = sbr.rel (%p886) target = $region140
      $region139: #{_lambda_.1} parent=5 // pred_region
        // Predicated region
        $region141: #{_lambda_.1} parent=139 // pred_check
          %p889 = pneg %p94
        $region142: #{_lambda_.1} parent=139 // pred_check_branch
          %891 = sbr.rel (%p889) target = $region144
        $region143: #{_lambda_.1} parent=139 // pred_region
          %p892 = scmp.lt.s32.totalorder %s74, 1
          %s893 = scalar_select %p892, %s74, 1
          %s894 = smul.addr %s893, 4
          %s895 = smul.addr %s894, 8
          %s896 = scalar_lea.vmem %s1, %s895
        $region144: #{_lambda_.1} parent=139 // pred_fallthru
          _
      $region140: #{_lambda_.1} parent=5 // pred_fallthru
        _
      %p897 = scmp.le.s32.totalorder 1, %s74
      %p898 = scmp.lt.s32.totalorder %s74, 3
      %p899 = pnand %p897, %p898
      %p900 = pneg %p899
      // Predicated region
      $region145: #{_lambda_.1} parent=5 // pred_check
        _
      $region146: #{_lambda_.1} parent=5 // pred_check_branch
        %902 = sbr.rel (%p899) target = $region148
      $region147: #{_lambda_.1} parent=5 // pred_region
        %s903 = ssub.s32 %s74, 1
        %p904 = scmp.lt.s32.totalorder %s79, 1
        %s905 = scalar_select %p904, %s79, 1
        %s906 = smul.addr %s905, 4
        %s907 = smul.addr %s906, 8
        %s908 = scalar_lea.vmem %s1, %s907
        %p909 = pneg %p100
        %p910 = pneg %p97
        %p911 = pneg %p121
        %p912 = pneg %p118
        %p913 = pneg %p142
        %p914 = pneg %p139
        %p915 = pneg %p163
        %p916 = pneg %p160
        %p917 = pneg %p184
        %p918 = pneg %p181
        %p919 = pneg %p205
        %p920 = pneg %p202
        %p921 = pneg %p226
        %p922 = pneg %p223
        %p923 = pneg %p247
        %p924 = pneg %p244
        %p925 = pneg %p268
        %p926 = pneg %p265
        %p927 = pneg %p289
        %p928 = pneg %p286
        %p929 = pneg %p310
        %p930 = pneg %p307
        %p931 = pneg %p331
        %p932 = pneg %p328
        %p933 = pneg %p352
        %p934 = pneg %p349
        %p935 = pneg %p373
        %p936 = pneg %p370
        %p937 = pneg %p394
        %p938 = pneg %p391
        %p939 = pneg %p415
        %p940 = pneg %p412
        %p941 = pneg %p436
        %p942 = pneg %p433
        %p943 = pneg %p457
        %p944 = pneg %p454
        %p945 = pneg %p478
        %p946 = pneg %p475
        %p947 = pneg %p499
        %p948 = pneg %p496
        %p949 = pneg %p520
        %p950 = pneg %p517
        %p951 = pneg %p541
        %p952 = pneg %p538
        %p953 = pneg %p562
        %p954 = pneg %p559
        %p955 = pneg %p583
        %p956 = pneg %p580
        %p957 = pneg %p604
        %p958 = pneg %p601
        %p959 = pneg %p625
        %p960 = pneg %p622
        %p961 = pneg %p646
        %p962 = pneg %p643
        %p963 = pneg %p667
        %p964 = pneg %p664
        %p965 = pneg %p688
        %p966 = pneg %p685
        %p967 = pneg %p709
        %p968 = pneg %p706
        %p969 = pneg %p730
        %p970 = pneg %p727
        %p971 = pneg %p751
        %p972 = pneg %p748
        %p973 = pneg %p777
        %p974 = pneg %p774
        %s975 = sand.u32 %s764, 1
        %s976 = scalar_lea.sflag [#allocation3], %s975
        %s977 = sand.u32 %s764, 1
        %s978 = smul.addr %s977, 32
        %s979 = scalar_lea.vmem [#allocation2], %s978
        %p980 = scmp.lt.s32.totalorder %s79, 1
        %s981 = scalar_select %p980, %s79, 1
        %s982 = smul.addr %s981, 4
        %s983 = smul.addr %s982, 8
        %s984 = scalar_lea.vmem %s1, %s983
        %v985 = vld [vmem:[%s984] sm:$0xff]
        %v986 = vld [vmem:[%s984 + $0x8] sm:$0xff]
        %v987 = vld [vmem:[%s984 + $0x10] sm:$0xff]
        %v988 = vld [vmem:[%s984 + $0x18] sm:$0xff]
        %v989 = vld [vmem:[%s3] sm:$0xff]
        %v990 = vld [vmem:[%s3 + $0x8] sm:$0xff]
        %v991 = vld [vmem:[%s5] sm:$0x1]
        %v993 = vlaneseq
        %v994 = vshrl.u32 %v993, 7
        %v995 = vsub.s32 0, %v994
        %v996 = vrot.slane %v991, %v995
        %vm998 = vcmask 130048
        %v1000 = vsel %vm998, %v985, 0
        %v1003 = vsel %vm998, %v986, 0
        %v1006 = vsel %vm998, %v987, 0
        %v1009 = vsel %vm998, %v988, 0
        %1011 = vmatprep.subr.mxu0 0.0
        %1012 = vmatpush1.msra.mxu0 %v989
        %1013 = vmatprep.subr.mxu0 0.0
        %1014 = vmatpush1.msra.mxu0 %v990
        %1015 = vmatprep.subr.mxu0 0.0
        %1016 = vmatpush1.msra.mxu0 0.0
        %1017 = vmatprep.subr.mxu0 0.0
        %1018 = vmatpush1.msra.mxu0 0.0
        %1019 = vmatprep.subr.mxu0 0.0
        %1020 = vmatpush1.msra.mxu0 0.0
        %1021 = vmatprep.subr.mxu0 0.0
        %1022 = vmatpush1.msra.mxu0 0.0
        %1023 = vmatprep.subr.mxu0 0.0
        %1024 = vmatpush1.msra.mxu0 0.0
        %1025 = vmatprep.subr.mxu0 0.0
        %1026 = vmatpush1.msra.mxu0 0.0
        %1027 = vmatprep.subr.mxu0 0.0
        %1028 = vmatpush1.msra.mxu0 0.0
        %1029 = vmatprep.subr.mxu0 0.0
        %1030 = vmatpush1.msra.mxu0 0.0
        %1031 = vmatprep.subr.mxu0 0.0
        %1032 = vmatpush1.msra.mxu0 0.0
        %1033 = vmatprep.subr.mxu0 0.0
        %1034 = vmatpush1.msra.mxu0 0.0
        %1035 = vmatprep.subr.mxu0 0.0
        %1036 = vmatpush1.msra.mxu0 0.0
        %1037 = vmatprep.subr.mxu0 0.0
        %1038 = vmatpush1.msra.mxu0 0.0
        %1039 = vmatprep.subr.mxu0 0.0
        %1040 = vmatpush1.msra.mxu0 0.0
        %1041 = vmatprep.subr.mxu0 0.0
        %1042 = vmatpush1.msra.mxu0 0.0
        %1043 = vmatprep.subr.mxu0 0.0
        %1044 = vmatpush1.msra.mxu0 0.0
        %1045 = vmatprep.subr.mxu0 0.0
        %1046 = vmatpush1.msra.mxu0 0.0
        %1047 = vmatprep.subr.mxu0 0.0
        %1048 = vmatpush1.msra.mxu0 0.0
        %1049 = vmatprep.subr.mxu0 0.0
        %1050 = vmatpush1.msra.mxu0 0.0
        %1051 = vmatprep.subr.mxu0 0.0
        %1052 = vmatpush1.msra.mxu0 0.0
        %1053 = vmatprep.subr.mxu0 0.0
        %1054 = vmatpush1.msra.mxu0 0.0
        %1055 = vmatprep.subr.mxu0 0.0
        %1056 = vmatpush1.msra.mxu0 0.0
        %1057 = vmatprep.subr.mxu0 0.0
        %1058 = vmatpush1.msra.mxu0 0.0
        %1059 = vmatprep.subr.mxu0 0.0
        %1060 = vmatpush1.msra.mxu0 0.0
        %1061 = vmatprep.subr.mxu0 0.0
        %1062 = vmatpush1.msra.mxu0 0.0
        %1063 = vmatprep.subr.mxu0 0.0
        %1064 = vmatpush1.msra.mxu0 0.0
        %1065 = vmatprep.subr.mxu0 0.0
        %1066 = vmatpush1.msra.mxu0 0.0
        %1067 = vmatprep.subr.mxu0 0.0
        %1068 = vmatpush1.msra.mxu0 0.0
        %1069 = vmatprep.subr.mxu0 0.0
        %1070 = vmatpush1.msra.mxu0 0.0
        %1071 = vmatprep.subr.mxu0 0.0
        %1072 = vmatpush1.msra.mxu0 0.0
        %1073 = vmatprep.subr.mxu0 0.0
        %1074 = vmatpush1.msra.mxu0 0.0
        %1075 = vmatprep.mubr.f32.mxu0 0.0
        %1076 = vmatmul.mubr.f32.gmra.mrb[0].mxu0 %v1000
        %v1077 = vpop.f32.mrb[0].mxu0
        %v1078 = vadd.f32 %v996, %v1077
        %v1079 = vpop.f32.mrb[0].mxu0
        %1080 = vmatprep.mubr.f32.mxu0 0.0
        %1081 = vmatmul.mubr.f32.gmra.mrb[0].mxu0 %v1003
        %v1082 = vpop.f32.mrb[0].mxu0
        %v1083 = vadd.f32 %v996, %v1082
        %v1084 = vpop.f32.mrb[0].mxu0
        %1085 = vmatprep.mubr.f32.mxu0 0.0
        %1086 = vmatmul.mubr.f32.gmra.mrb[0].mxu0 %v1006
        %v1087 = vpop.f32.mrb[0].mxu0
        %v1088 = vadd.f32 %v996, %v1087
        %v1089 = vpop.f32.mrb[0].mxu0
        %1090 = vmatprep.mubr.f32.mxu0 0.0
        %1091 = vmatmul.mubr.f32.gmra.mrb[0].mxu0 %v1009
        %v1092 = vpop.f32.mrb[0].mxu0
        %v1093 = vadd.f32 %v996, %v1092
        %v1094 = vpop.f32.mrb[0].mxu0
        %1095 = vdwg.mxu0
        %v1096 = vld [vmem:[%s7] sm:$0xff]
        %v1097 = vld [vmem:[%s7 + $0x8] sm:$0xff]
        %v1098 = vld [vmem:[%s7 + $0x10] sm:$0xff]
        %v1099 = vld [vmem:[%s7 + $0x18] sm:$0xff]
        %vm1100 = vcmask 261120
        %v1102 = vsel %vm1100, %v1096, 0
        %v1105 = vsel %vm1100, %v1097, 0
        %v1108 = vsel %vm1100, %v1098, 0
        %v1111 = vsel %vm1100, %v1099, 0
        %1113 = vmatprep.subr.mxu0 0.0
        %1114 = vmatpush1.msra.mxu0 %v1078
        %1115 = vmatprep.subr.mxu0 0.0
        %1116 = vmatpush1.msra.mxu0 %v1083
        %1117 = vmatprep.subr.mxu0 0.0
        %1118 = vmatpush1.msra.mxu0 %v1088
        %1119 = vmatprep.subr.mxu0 0.0
        %1120 = vmatpush1.msra.mxu0 %v1093
        %1121 = vmatprep.subr.mxu0 0.0
        %1122 = vmatpush1.msra.mxu0 0.0
        %1123 = vmatprep.subr.mxu0 0.0
        %1124 = vmatpush1.msra.mxu0 0.0
        %1125 = vmatprep.subr.mxu0 0.0
        %1126 = vmatpush1.msra.mxu0 0.0
        %1127 = vmatprep.subr.mxu0 0.0
        %1128 = vmatpush1.msra.mxu0 0.0
        %1129 = vmatprep.subr.mxu0 0.0
        %1130 = vmatpush1.msra.mxu0 0.0
        %1131 = vmatprep.subr.mxu0 0.0
        %1132 = vmatpush1.msra.mxu0 0.0
        %1133 = vmatprep.subr.mxu0 0.0
        %1134 = vmatpush1.msra.mxu0 0.0
        %1135 = vmatprep.subr.mxu0 0.0
        %1136 = vmatpush1.msra.mxu0 0.0
        %1137 = vmatprep.subr.mxu0 0.0
        %1138 = vmatpush1.msra.mxu0 0.0
        %1139 = vmatprep.subr.mxu0 0.0
        %1140 = vmatpush1.msra.mxu0 0.0
        %1141 = vmatprep.subr.mxu0 0.0
        %1142 = vmatpush1.msra.mxu0 0.0
        %1143 = vmatprep.subr.mxu0 0.0
        %1144 = vmatpush1.msra.mxu0 0.0
        %1145 = vmatprep.subr.mxu0 0.0
        %1146 = vmatpush1.msra.mxu0 0.0
        %1147 = vmatprep.subr.mxu0 0.0
        %1148 = vmatpush1.msra.mxu0 0.0
        %1149 = vmatprep.subr.mxu0 0.0
        %1150 = vmatpush1.msra.mxu0 0.0
        %1151 = vmatprep.subr.mxu0 0.0
        %1152 = vmatpush1.msra.mxu0 0.0
        %1153 = vmatprep.subr.mxu0 0.0
        %1154 = vmatpush1.msra.mxu0 0.0
        %1155 = vmatprep.subr.mxu0 0.0
        %1156 = vmatpush1.msra.mxu0 0.0
        %1157 = vmatprep.subr.mxu0 0.0
        %1158 = vmatpush1.msra.mxu0 0.0
        %1159 = vmatprep.subr.mxu0 0.0
        %1160 = vmatpush1.msra.mxu0 0.0
        %1161 = vmatprep.subr.mxu0 0.0
        %1162 = vmatpush1.msra.mxu0 0.0
        %1163 = vmatprep.subr.mxu0 0.0
        %1164 = vmatpush1.msra.mxu0 0.0
        %1165 = vmatprep.subr.mxu0 0.0
        %1166 = vmatpush1.msra.mxu0 0.0
        %1167 = vmatprep.subr.mxu0 0.0
        %1168 = vmatpush1.msra.mxu0 0.0
        %1169 = vmatprep.subr.mxu0 0.0
        %1170 = vmatpush1.msra.mxu0 0.0
        %1171 = vmatprep.subr.mxu0 0.0
        %1172 = vmatpush1.msra.mxu0 0.0
        %1173 = vmatprep.subr.mxu0 0.0
        %1174 = vmatpush1.msra.mxu0 0.0
        %1175 = vmatprep.subr.mxu0 0.0
        %1176 = vmatpush1.msra.mxu0 0.0
        %1177 = vmatprep.mubr.f32.mxu0 0.0
        %1178 = vmatmul.mubr.f32.gmra.mrb[0].mxu0 %v1102
        %v1179 = vpop.f32.mrb[0].mxu0
        %v1180 = vadd.f32 0.0, %v1179
        %v1181 = vpop.f32.mrb[0].mxu0
        %1182 = vmatprep.mubr.f32.mxu0 0.0
        %1183 = vmatmul.mubr.f32.gmra.mrb[0].mxu0 %v1105
        %v1184 = vpop.f32.mrb[0].mxu0
        %v1185 = vadd.f32 0.0, %v1184
        %v1186 = vpop.f32.mrb[0].mxu0
        %1187 = vmatprep.mubr.f32.mxu0 0.0
        %1188 = vmatmul.mubr.f32.gmra.mrb[0].mxu0 %v1108
        %v1189 = vpop.f32.mrb[0].mxu0
        %v1190 = vadd.f32 0.0, %v1189
        %v1191 = vpop.f32.mrb[0].mxu0
        %1192 = vmatprep.mubr.f32.mxu0 0.0
        %1193 = vmatmul.mubr.f32.gmra.mrb[0].mxu0 %v1111
        %v1194 = vpop.f32.mrb[0].mxu0
        %v1195 = vadd.f32 0.0, %v1194
        %v1196 = vpop.f32.mrb[0].mxu0
        %1197 = vdwg.mxu0
        %v1198 = vld [vmem:[%s9] sm:$0xff]
        %s1199 = scalar_lea.vmem %s7, 32
        %v1200 = vld [vmem:[%s1199] sm:$0xff]
        %v1201 = vld [vmem:[%s1199 + $0x8] sm:$0xff]
        %v1202 = vld [vmem:[%s1199 + $0x10] sm:$0xff]
        %v1203 = vld [vmem:[%s1199 + $0x18] sm:$0xff]
        %v1205 = vsel %vm1100, %v1200, 0
        %v1208 = vsel %vm1100, %v1201, 0
        %v1211 = vsel %vm1100, %v1202, 0
        %v1214 = vsel %vm1100, %v1203, 0
        %1216 = vmatprep.subr.mxu0 0.0
        %1217 = vmatpush1.msra.mxu0 %v1078
        %1218 = vmatprep.subr.mxu0 0.0
        %1219 = vmatpush1.msra.mxu0 %v1083
        %1220 = vmatprep.subr.mxu0 0.0
        %1221 = vmatpush1.msra.mxu0 %v1088
        %1222 = vmatprep.subr.mxu0 0.0
        %1223 = vmatpush1.msra.mxu0 %v1093
        %1224 = vmatprep.subr.mxu0 0.0
        %1225 = vmatpush1.msra.mxu0 0.0
        %1226 = vmatprep.subr.mxu0 0.0
        %1227 = vmatpush1.msra.mxu0 0.0
        %1228 = vmatprep.subr.mxu0 0.0
        %1229 = vmatpush1.msra.mxu0 0.0
        %1230 = vmatprep.subr.mxu0 0.0
        %1231 = vmatpush1.msra.mxu0 0.0
        %1232 = vmatprep.subr.mxu0 0.0
        %1233 = vmatpush1.msra.mxu0 0.0
        %1234 = vmatprep.subr.mxu0 0.0
        %1235 = vmatpush1.msra.mxu0 0.0
        %1236 = vmatprep.subr.mxu0 0.0
        %1237 = vmatpush1.msra.mxu0 0.0
        %1238 = vmatprep.subr.mxu0 0.0
        %1239 = vmatpush1.msra.mxu0 0.0
        %1240 = vmatprep.subr.mxu0 0.0
        %1241 = vmatpush1.msra.mxu0 0.0
        %1242 = vmatprep.subr.mxu0 0.0
        %1243 = vmatpush1.msra.mxu0 0.0
        %1244 = vmatprep.subr.mxu0 0.0
        %1245 = vmatpush1.msra.mxu0 0.0
        %1246 = vmatprep.subr.mxu0 0.0
        %1247 = vmatpush1.msra.mxu0 0.0
        %1248 = vmatprep.subr.mxu0 0.0
        %1249 = vmatpush1.msra.mxu0 0.0
        %1250 = vmatprep.subr.mxu0 0.0
        %1251 = vmatpush1.msra.mxu0 0.0
        %1252 = vmatprep.subr.mxu0 0.0
        %1253 = vmatpush1.msra.mxu0 0.0
        %1254 = vmatprep.subr.mxu0 0.0
        %1255 = vmatpush1.msra.mxu0 0.0
        %1256 = vmatprep.subr.mxu0 0.0
        %1257 = vmatpush1.msra.mxu0 0.0
        %1258 = vmatprep.subr.mxu0 0.0
        %1259 = vmatpush1.msra.mxu0 0.0
        %1260 = vmatprep.subr.mxu0 0.0
        %1261 = vmatpush1.msra.mxu0 0.0
        %1262 = vmatprep.subr.mxu0 0.0
        %1263 = vmatpush1.msra.mxu0 0.0
        %1264 = vmatprep.subr.mxu0 0.0
        %1265 = vmatpush1.msra.mxu0 0.0
        %1266 = vmatprep.subr.mxu0 0.0
        %1267 = vmatpush1.msra.mxu0 0.0
        %1268 = vmatprep.subr.mxu0 0.0
        %1269 = vmatpush1.msra.mxu0 0.0
        %1270 = vmatprep.subr.mxu0 0.0
        %1271 = vmatpush1.msra.mxu0 0.0
        %1272 = vmatprep.subr.mxu0 0.0
        %1273 = vmatpush1.msra.mxu0 0.0
        %1274 = vmatprep.subr.mxu0 0.0
        %1275 = vmatpush1.msra.mxu0 0.0
        %1276 = vmatprep.subr.mxu0 0.0
        %1277 = vmatpush1.msra.mxu0 0.0
        %1278 = vmatprep.subr.mxu0 0.0
        %1279 = vmatpush1.msra.mxu0 0.0
        %1280 = vmatprep.mubr.f32.mxu0 0.0
        %1281 = vmatmul.mubr.f32.gmra.mrb[0].mxu0 %v1205
        %v1282 = vpop.f32.mrb[0].mxu0
        %v1283 = vadd.f32 0.0, %v1282
        %v1284 = vpop.f32.mrb[0].mxu0
        %1285 = vmatprep.mubr.f32.mxu0 0.0
        %1286 = vmatmul.mubr.f32.gmra.mrb[0].mxu0 %v1208
        %v1287 = vpop.f32.mrb[0].mxu0
        %v1288 = vadd.f32 0.0, %v1287
        %v1289 = vpop.f32.mrb[0].mxu0
        %1290 = vmatprep.mubr.f32.mxu0 0.0
        %1291 = vmatmul.mubr.f32.gmra.mrb[0].mxu0 %v1211
        %v1292 = vpop.f32.mrb[0].mxu0
        %v1293 = vadd.f32 0.0, %v1292
        %v1294 = vpop.f32.mrb[0].mxu0
        %1295 = vmatprep.mubr.f32.mxu0 0.0
        %1296 = vmatmul.mubr.f32.gmra.mrb[0].mxu0 %v1214
        %v1297 = vpop.f32.mrb[0].mxu0
        %v1298 = vadd.f32 0.0, %v1297
        %v1299 = vpop.f32.mrb[0].mxu0
        %1300 = vdwg.mxu0
        %s1301 = scalar_lea.vmem %s9, 8
        %v1302 = vld [vmem:[%s1301] sm:$0xff]
        %vm1303 = vcmask 64512
        %v1305 = vsel %vm1303, %v1283, 0
        %v1308 = vsel %vm1303, %v1288, 0
        %v1311 = vsel %vm1303, %v1293, 0
        %v1314 = vsel %vm1303, %v1298, 0
        %1316 = vmatprep.subr.mxu0 0.0
        %1317 = vmatpush1.msra.mxu0 %v1302
        %1318 = vmatprep.subr.mxu0 0.0
        %1319 = vmatpush1.msra.mxu0 0.0
        %1320 = vmatprep.subr.mxu0 0.0
        %1321 = vmatpush1.msra.mxu0 0.0
        %1322 = vmatprep.subr.mxu0 0.0
        %1323 = vmatpush1.msra.mxu0 0.0
        %1324 = vmatprep.subr.mxu0 0.0
        %1325 = vmatpush1.msra.mxu0 0.0
        %1326 = vmatprep.subr.mxu0 0.0
        %1327 = vmatpush1.msra.mxu0 0.0
        %1328 = vmatprep.subr.mxu0 0.0
        %1329 = vmatpush1.msra.mxu0 0.0
        %1330 = vmatprep.subr.mxu0 0.0
        %1331 = vmatpush1.msra.mxu0 0.0
        %1332 = vmatprep.subr.mxu0 0.0
        %1333 = vmatpush1.msra.mxu0 0.0
        %1334 = vmatprep.subr.mxu0 0.0
        %1335 = vmatpush1.msra.mxu0 0.0
        %1336 = vmatprep.subr.mxu0 0.0
        %1337 = vmatpush1.msra.mxu0 0.0
        %1338 = vmatprep.subr.mxu0 0.0
        %1339 = vmatpush1.msra.mxu0 0.0
        %1340 = vmatprep.subr.mxu0 0.0
        %1341 = vmatpush1.msra.mxu0 0.0
        %1342 = vmatprep.subr.mxu0 0.0
        %1343 = vmatpush1.msra.mxu0 0.0
        %1344 = vmatprep.subr.mxu0 0.0
        %1345 = vmatpush1.msra.mxu0 0.0
        %1346 = vmatprep.subr.mxu0 0.0
        %1347 = vmatpush1.msra.mxu0 0.0
        %1348 = vmatprep.subr.mxu0 0.0
        %1349 = vmatpush1.msra.mxu0 0.0
        %1350 = vmatprep.subr.mxu0 0.0
        %1351 = vmatpush1.msra.mxu0 0.0
        %1352 = vmatprep.subr.mxu0 0.0
        %1353 = vmatpush1.msra.mxu0 0.0
        %1354 = vmatprep.subr.mxu0 0.0
        %1355 = vmatpush1.msra.mxu0 0.0
        %1356 = vmatprep.subr.mxu0 0.0
        %1357 = vmatpush1.msra.mxu0 0.0
        %1358 = vmatprep.subr.mxu0 0.0
        %1359 = vmatpush1.msra.mxu0 0.0
        %1360 = vmatprep.subr.mxu0 0.0
        %1361 = vmatpush1.msra.mxu0 0.0
        %1362 = vmatprep.subr.mxu0 0.0
        %1363 = vmatpush1.msra.mxu0 0.0
        %1364 = vmatprep.subr.mxu0 0.0
        %1365 = vmatpush1.msra.mxu0 0.0
        %1366 = vmatprep.subr.mxu0 0.0
        %1367 = vmatpush1.msra.mxu0 0.0
        %1368 = vmatprep.subr.mxu0 0.0
        %1369 = vmatpush1.msra.mxu0 0.0
        %1370 = vmatprep.subr.mxu0 0.0
        %1371 = vmatpush1.msra.mxu0 0.0
        %1372 = vmatprep.subr.mxu0 0.0
        %1373 = vmatpush1.msra.mxu0 0.0
        %1374 = vmatprep.subr.mxu0 0.0
        %1375 = vmatpush1.msra.mxu0 0.0
        %1376 = vmatprep.subr.mxu0 0.0
        %1377 = vmatpush1.msra.mxu0 0.0
        %1378 = vmatprep.subr.mxu0 0.0
        %1379 = vmatpush1.msra.mxu0 0.0
        %1380 = vmatprep.mubr.f32.mxu0 0.0
        %1381 = vmatmul.mubr.f32.gmra.mrb[0].mxu0 %v1305
        %v1382 = vpop.f32.mrb[0].mxu0
        %v1383 = vadd.f32 0.0, %v1382
        %v1384 = vpop.f32.mrb[0].mxu0
        %1385 = vmatprep.mubr.f32.mxu0 0.0
        %1386 = vmatmul.mubr.f32.gmra.mrb[0].mxu0 %v1308
        %v1387 = vpop.f32.mrb[0].mxu0
        %v1388 = vadd.f32 0.0, %v1387
        %v1389 = vpop.f32.mrb[0].mxu0
        %1390 = vmatprep.mubr.f32.mxu0 0.0
        %1391 = vmatmul.mubr.f32.gmra.mrb[0].mxu0 %v1311
        %v1392 = vpop.f32.mrb[0].mxu0
        %v1393 = vadd.f32 0.0, %v1392
        %v1394 = vpop.f32.mrb[0].mxu0
        %1395 = vmatprep.mubr.f32.mxu0 0.0
        %1396 = vmatmul.mubr.f32.gmra.mrb[0].mxu0 %v1314
        %v1397 = vpop.f32.mrb[0].mxu0
        %v1398 = vadd.f32 0.0, %v1397
        %v1399 = vpop.f32.mrb[0].mxu0
        %1400 = vdwg.mxu0
        %v1402 = vsel %vm1303, %v1180, 0
        %v1405 = vsel %vm1303, %v1185, 0
        %v1408 = vsel %vm1303, %v1190, 0
        %v1411 = vsel %vm1303, %v1195, 0
        %1413 = vmatprep.subr.mxu0 0.0
        %1414 = vmatpush1.msra.mxu0 %v1198
        %1415 = vmatprep.subr.mxu0 0.0
        %1416 = vmatpush1.msra.mxu0 0.0
        %1417 = vmatprep.subr.mxu0 0.0
        %1418 = vmatpush1.msra.mxu0 0.0
        %1419 = vmatprep.subr.mxu0 0.0
        %1420 = vmatpush1.msra.mxu0 0.0
        %1421 = vmatprep.subr.mxu0 0.0
        %1422 = vmatpush1.msra.mxu0 0.0
        %1423 = vmatprep.subr.mxu0 0.0
        %1424 = vmatpush1.msra.mxu0 0.0
        %1425 = vmatprep.subr.mxu0 0.0
        %1426 = vmatpush1.msra.mxu0 0.0
        %1427 = vmatprep.subr.mxu0 0.0
        %1428 = vmatpush1.msra.mxu0 0.0
        %1429 = vmatprep.subr.mxu0 0.0
        %1430 = vmatpush1.msra.mxu0 0.0
        %1431 = vmatprep.subr.mxu0 0.0
        %1432 = vmatpush1.msra.mxu0 0.0
        %1433 = vmatprep.subr.mxu0 0.0
        %1434 = vmatpush1.msra.mxu0 0.0
        %1435 = vmatprep.subr.mxu0 0.0
        %1436 = vmatpush1.msra.mxu0 0.0
        %1437 = vmatprep.subr.mxu0 0.0
        %1438 = vmatpush1.msra.mxu0 0.0
        %1439 = vmatprep.subr.mxu0 0.0
        %1440 = vmatpush1.msra.mxu0 0.0
        %1441 = vmatprep.subr.mxu0 0.0
        %1442 = vmatpush1.msra.mxu0 0.0
        %1443 = vmatprep.subr.mxu0 0.0
        %1444 = vmatpush1.msra.mxu0 0.0
        %1445 = vmatprep.subr.mxu0 0.0
        %1446 = vmatpush1.msra.mxu0 0.0
        %1447 = vmatprep.subr.mxu0 0.0
        %1448 = vmatpush1.msra.mxu0 0.0
        %1449 = vmatprep.subr.mxu0 0.0
        %1450 = vmatpush1.msra.mxu0 0.0
        %1451 = vmatprep.subr.mxu0 0.0
        %1452 = vmatpush1.msra.mxu0 0.0
        %1453 = vmatprep.subr.mxu0 0.0
        %1454 = vmatpush1.msra.mxu0 0.0
        %1455 = vmatprep.subr.mxu0 0.0
        %1456 = vmatpush1.msra.mxu0 0.0
        %1457 = vmatprep.subr.mxu0 0.0
        %1458 = vmatpush1.msra.mxu0 0.0
        %1459 = vmatprep.subr.mxu0 0.0
        %1460 = vmatpush1.msra.mxu0 0.0
        %1461 = vmatprep.subr.mxu0 0.0
        %1462 = vmatpush1.msra.mxu0 0.0
        %1463 = vmatprep.subr.mxu0 0.0
        %1464 = vmatpush1.msra.mxu0 0.0
        %1465 = vmatprep.subr.mxu0 0.0
        %1466 = vmatpush1.msra.mxu0 0.0
        %1467 = vmatprep.subr.mxu0 0.0
        %1468 = vmatpush1.msra.mxu0 0.0
        %1469 = vmatprep.subr.mxu0 0.0
        %1470 = vmatpush1.msra.mxu0 0.0
        %1471 = vmatprep.subr.mxu0 0.0
        %1472 = vmatpush1.msra.mxu0 0.0
        %1473 = vmatprep.subr.mxu0 0.0
        %1474 = vmatpush1.msra.mxu0 0.0
        %1475 = vmatprep.subr.mxu0 0.0
        %1476 = vmatpush1.msra.mxu0 0.0
        %1477 = vmatprep.mubr.f32.mxu0 0.0
        %1478 = vmatmul.mubr.f32.gmra.mrb[0].mxu0 %v1402
        %v1479 = vpop.f32.mrb[0].mxu0
        %v1480 = vadd.f32 %v1383, %v1479
        %v1481 = vpop.f32.mrb[0].mxu0
        %1482 = vmatprep.mubr.f32.mxu0 0.0
        %1483 = vmatmul.mubr.f32.gmra.mrb[0].mxu0 %v1405
        %v1484 = vpop.f32.mrb[0].mxu0
        %v1485 = vadd.f32 %v1388, %v1484
        %v1486 = vpop.f32.mrb[0].mxu0
        %1487 = vmatprep.mubr.f32.mxu0 0.0
        %1488 = vmatmul.mubr.f32.gmra.mrb[0].mxu0 %v1408
        %v1489 = vpop.f32.mrb[0].mxu0
        %v1490 = vadd.f32 %v1393, %v1489
        %v1491 = vpop.f32.mrb[0].mxu0
        %1492 = vmatprep.mubr.f32.mxu0 0.0
        %1493 = vmatmul.mubr.f32.gmra.mrb[0].mxu0 %v1411
        %v1494 = vpop.f32.mrb[0].mxu0
        %v1495 = vadd.f32 %v1398, %v1494
        %v1496 = vpop.f32.mrb[0].mxu0
        %1497 = vdwg.mxu0
        %s1498 = scalar_lea.vmem %s7, 64
        %v1499 = vld [vmem:[%s1498] sm:$0xff]
        %v1500 = vld [vmem:[%s1498 + $0x8] sm:$0xff]
        %v1501 = vld [vmem:[%s1498 + $0x10] sm:$0xff]
        %v1502 = vld [vmem:[%s1498 + $0x18] sm:$0xff]
        %v1504 = vsel %vm1100, %v1499, 0
        %v1507 = vsel %vm1100, %v1500, 0
        %v1510 = vsel %vm1100, %v1501, 0
        %v1513 = vsel %vm1100, %v1502, 0
        %1515 = vmatprep.subr.mxu0 0.0
        %1516 = vmatpush1.msra.mxu0 %v1078
        %1517 = vmatprep.subr.mxu0 0.0
        %1518 = vmatpush1.msra.mxu0 %v1083
        %1519 = vmatprep.subr.mxu0 0.0
        %1520 = vmatpush1.msra.mxu0 %v1088
        %1521 = vmatprep.subr.mxu0 0.0
        %1522 = vmatpush1.msra.mxu0 %v1093
        %1523 = vmatprep.subr.mxu0 0.0
        %1524 = vmatpush1.msra.mxu0 0.0
        %1525 = vmatprep.subr.mxu0 0.0
        %1526 = vmatpush1.msra.mxu0 0.0
        %1527 = vmatprep.subr.mxu0 0.0
        %1528 = vmatpush1.msra.mxu0 0.0
        %1529 = vmatprep.subr.mxu0 0.0
        %1530 = vmatpush1.msra.mxu0 0.0
        %1531 = vmatprep.subr.mxu0 0.0
        %1532 = vmatpush1.msra.mxu0 0.0
        %1533 = vmatprep.subr.mxu0 0.0
        %1534 = vmatpush1.msra.mxu0 0.0
        %1535 = vmatprep.subr.mxu0 0.0
        %1536 = vmatpush1.msra.mxu0 0.0
        %1537 = vmatprep.subr.mxu0 0.0
        %1538 = vmatpush1.msra.mxu0 0.0
        %1539 = vmatprep.subr.mxu0 0.0
        %1540 = vmatpush1.msra.mxu0 0.0
        %1541 = vmatprep.subr.mxu0 0.0
        %1542 = vmatpush1.msra.mxu0 0.0
        %1543 = vmatprep.subr.mxu0 0.0
        %1544 = vmatpush1.msra.mxu0 0.0
        %1545 = vmatprep.subr.mxu0 0.0
        %1546 = vmatpush1.msra.mxu0 0.0
        %1547 = vmatprep.subr.mxu0 0.0
        %1548 = vmatpush1.msra.mxu0 0.0
        %1549 = vmatprep.subr.mxu0 0.0
        %1550 = vmatpush1.msra.mxu0 0.0
        %1551 = vmatprep.subr.mxu0 0.0
        %1552 = vmatpush1.msra.mxu0 0.0
        %1553 = vmatprep.subr.mxu0 0.0
        %1554 = vmatpush1.msra.mxu0 0.0
        %1555 = vmatprep.subr.mxu0 0.0
        %1556 = vmatpush1.msra.mxu0 0.0
        %1557 = vmatprep.subr.mxu0 0.0
        %1558 = vmatpush1.msra.mxu0 0.0
        %1559 = vmatprep.subr.mxu0 0.0
        %1560 = vmatpush1.msra.mxu0 0.0
        %1561 = vmatprep.subr.mxu0 0.0
        %1562 = vmatpush1.msra.mxu0 0.0
        %1563 = vmatprep.subr.mxu0 0.0
        %1564 = vmatpush1.msra.mxu0 0.0
        %1565 = vmatprep.subr.mxu0 0.0
        %1566 = vmatpush1.msra.mxu0 0.0
        %1567 = vmatprep.subr.mxu0 0.0
        %1568 = vmatpush1.msra.mxu0 0.0
        %1569 = vmatprep.subr.mxu0 0.0
        %1570 = vmatpush1.msra.mxu0 0.0
        %1571 = vmatprep.subr.mxu0 0.0
        %1572 = vmatpush1.msra.mxu0 0.0
        %1573 = vmatprep.subr.mxu0 0.0
        %1574 = vmatpush1.msra.mxu0 0.0
        %1575 = vmatprep.subr.mxu0 0.0
        %1576 = vmatpush1.msra.mxu0 0.0
        %1577 = vmatprep.subr.mxu0 0.0
        %1578 = vmatpush1.msra.mxu0 0.0
        %1579 = vmatprep.mubr.f32.mxu0 0.0
        %1580 = vmatmul.mubr.f32.gmra.mrb[0].mxu0 %v1504
        %v1581 = vpop.f32.mrb[0].mxu0
        %v1582 = vadd.f32 0.0, %v1581
        %v1583 = vpop.f32.mrb[0].mxu0
        %1584 = vmatprep.mubr.f32.mxu0 0.0
        %1585 = vmatmul.mubr.f32.gmra.mrb[0].mxu0 %v1507
        %v1586 = vpop.f32.mrb[0].mxu0
        %v1587 = vadd.f32 0.0, %v1586
        %v1588 = vpop.f32.mrb[0].mxu0
        %1589 = vmatprep.mubr.f32.mxu0 0.0
        %1590 = vmatmul.mubr.f32.gmra.mrb[0].mxu0 %v1510
        %v1591 = vpop.f32.mrb[0].mxu0
        %v1592 = vadd.f32 0.0, %v1591
        %v1593 = vpop.f32.mrb[0].mxu0
        %1594 = vmatprep.mubr.f32.mxu0 0.0
        %1595 = vmatmul.mubr.f32.gmra.mrb[0].mxu0 %v1513
        %v1596 = vpop.f32.mrb[0].mxu0
        %v1597 = vadd.f32 0.0, %v1596
        %v1598 = vpop.f32.mrb[0].mxu0
        %1599 = vdwg.mxu0
        %s1600 = scalar_lea.vmem %s9, 16
        %v1601 = vld [vmem:[%s1600] sm:$0xff]
        %v1603 = vsel %vm1303, %v1582, 0
        %v1606 = vsel %vm1303, %v1587, 0
        %v1609 = vsel %vm1303, %v1592, 0
        %v1612 = vsel %vm1303, %v1597, 0
        %1614 = vmatprep.subr.mxu0 0.0
        %1615 = vmatpush1.msra.mxu0 %v1601
        %1616 = vmatprep.subr.mxu0 0.0
        %1617 = vmatpush1.msra.mxu0 0.0
        %1618 = vmatprep.subr.mxu0 0.0
        %1619 = vmatpush1.msra.mxu0 0.0
        %1620 = vmatprep.subr.mxu0 0.0
        %1621 = vmatpush1.msra.mxu0 0.0
        %1622 = vmatprep.subr.mxu0 0.0
        %1623 = vmatpush1.msra.mxu0 0.0
        %1624 = vmatprep.subr.mxu0 0.0
        %1625 = vmatpush1.msra.mxu0 0.0
        %1626 = vmatprep.subr.mxu0 0.0
        %1627 = vmatpush1.msra.mxu0 0.0
        %1628 = vmatprep.subr.mxu0 0.0
        %1629 = vmatpush1.msra.mxu0 0.0
        %1630 = vmatprep.subr.mxu0 0.0
        %1631 = vmatpush1.msra.mxu0 0.0
        %1632 = vmatprep.subr.mxu0 0.0
        %1633 = vmatpush1.msra.mxu0 0.0
        %1634 = vmatprep.subr.mxu0 0.0
        %1635 = vmatpush1.msra.mxu0 0.0
        %1636 = vmatprep.subr.mxu0 0.0
        %1637 = vmatpush1.msra.mxu0 0.0
        %1638 = vmatprep.subr.mxu0 0.0
        %1639 = vmatpush1.msra.mxu0 0.0
        %1640 = vmatprep.subr.mxu0 0.0
        %1641 = vmatpush1.msra.mxu0 0.0
        %1642 = vmatprep.subr.mxu0 0.0
        %1643 = vmatpush1.msra.mxu0 0.0
        %1644 = vmatprep.subr.mxu0 0.0
        %1645 = vmatpush1.msra.mxu0 0.0
        %1646 = vmatprep.subr.mxu0 0.0
        %1647 = vmatpush1.msra.mxu0 0.0
        %1648 = vmatprep.subr.mxu0 0.0
        %1649 = vmatpush1.msra.mxu0 0.0
        %1650 = vmatprep.subr.mxu0 0.0
        %1651 = vmatpush1.msra.mxu0 0.0
        %1652 = vmatprep.subr.mxu0 0.0
        %1653 = vmatpush1.msra.mxu0 0.0
        %1654 = vmatprep.subr.mxu0 0.0
        %1655 = vmatpush1.msra.mxu0 0.0
        %1656 = vmatprep.subr.mxu0 0.0
        %1657 = vmatpush1.msra.mxu0 0.0
        %1658 = vmatprep.subr.mxu0 0.0
        %1659 = vmatpush1.msra.mxu0 0.0
        %1660 = vmatprep.subr.mxu0 0.0
        %1661 = vmatpush1.msra.mxu0 0.0
        %1662 = vmatprep.subr.mxu0 0.0
        %1663 = vmatpush1.msra.mxu0 0.0
        %1664 = vmatprep.subr.mxu0 0.0
        %1665 = vmatpush1.msra.mxu0 0.0
        %1666 = vmatprep.subr.mxu0 0.0
        %1667 = vmatpush1.msra.mxu0 0.0
        %1668 = vmatprep.subr.mxu0 0.0
        %1669 = vmatpush1.msra.mxu0 0.0
        %1670 = vmatprep.subr.mxu0 0.0
        %1671 = vmatpush1.msra.mxu0 0.0
        %1672 = vmatprep.subr.mxu0 0.0
        %1673 = vmatpush1.msra.mxu0 0.0
        %1674 = vmatprep.subr.mxu0 0.0
        %1675 = vmatpush1.msra.mxu0 0.0
        %1676 = vmatprep.subr.mxu0 0.0
        %1677 = vmatpush1.msra.mxu0 0.0
        %1678 = vmatprep.mubr.f32.mxu0 0.0
        %1679 = vmatmul.mubr.f32.gmra.mrb[0].mxu0 %v1603
        %v1680 = vpop.f32.mrb[0].mxu0
        %v1681 = vadd.f32 0.0, %v1680
        %v1682 = vpop.f32.mrb[0].mxu0
        %1683 = vmatprep.mubr.f32.mxu0 0.0
        %1684 = vmatmul.mubr.f32.gmra.mrb[0].mxu0 %v1606
        %v1685 = vpop.f32.mrb[0].mxu0
        %v1686 = vadd.f32 0.0, %v1685
        %v1687 = vpop.f32.mrb[0].mxu0
        %1688 = vmatprep.mubr.f32.mxu0 0.0
        %1689 = vmatmul.mubr.f32.gmra.mrb[0].mxu0 %v1609
        %v1690 = vpop.f32.mrb[0].mxu0
        %v1691 = vadd.f32 0.0, %v1690
        %v1692 = vpop.f32.mrb[0].mxu0
        %1693 = vmatprep.mubr.f32.mxu0 0.0
        %1694 = vmatmul.mubr.f32.gmra.mrb[0].mxu0 %v1612
        %v1695 = vpop.f32.mrb[0].mxu0
        %v1696 = vadd.f32 0.0, %v1695
        %v1697 = vpop.f32.mrb[0].mxu0
        %1698 = vdwg.mxu0
        %v1699 = vadd.f32 %v1480, %v1681
        %v1700 = vadd.f32 %v1485, %v1686
        %v1701 = vadd.f32 %v1490, %v1691
        %v1702 = vadd.f32 %v1495, %v1696
        %s1703 = scalar_lea.vmem %s7, 96
        %v1704 = vld [vmem:[%s1703] sm:$0xff]
        %v1705 = vld [vmem:[%s1703 + $0x8] sm:$0xff]
        %v1706 = vld [vmem:[%s1703 + $0x10] sm:$0xff]
        %v1707 = vld [vmem:[%s1703 + $0x18] sm:$0xff]
        %v1709 = vsel %vm1100, %v1704, 0
        %v1712 = vsel %vm1100, %v1705, 0
        %v1715 = vsel %vm1100, %v1706, 0
        %v1718 = vsel %vm1100, %v1707, 0
        %1720 = vmatprep.subr.mxu0 0.0
        %1721 = vmatpush1.msra.mxu0 %v1078
        %1722 = vmatprep.subr.mxu0 0.0
        %1723 = vmatpush1.msra.mxu0 %v1083
        %1724 = vmatprep.subr.mxu0 0.0
        %1725 = vmatpush1.msra.mxu0 %v1088
        %1726 = vmatprep.subr.mxu0 0.0
        %1727 = vmatpush1.msra.mxu0 %v1093
        %1728 = vmatprep.subr.mxu0 0.0
        %1729 = vmatpush1.msra.mxu0 0.0
        %1730 = vmatprep.subr.mxu0 0.0
        %1731 = vmatpush1.msra.mxu0 0.0
        %1732 = vmatprep.subr.mxu0 0.0
        %1733 = vmatpush1.msra.mxu0 0.0
        %1734 = vmatprep.subr.mxu0 0.0
        %1735 = vmatpush1.msra.mxu0 0.0
        %1736 = vmatprep.subr.mxu0 0.0
        %1737 = vmatpush1.msra.mxu0 0.0
        %1738 = vmatprep.subr.mxu0 0.0
        %1739 = vmatpush1.msra.mxu0 0.0
        %1740 = vmatprep.subr.mxu0 0.0
        %1741 = vmatpush1.msra.mxu0 0.0
        %1742 = vmatprep.subr.mxu0 0.0
        %1743 = vmatpush1.msra.mxu0 0.0
        %1744 = vmatprep.subr.mxu0 0.0
        %1745 = vmatpush1.msra.mxu0 0.0
        %1746 = vmatprep.subr.mxu0 0.0
        %1747 = vmatpush1.msra.mxu0 0.0
        %1748 = vmatprep.subr.mxu0 0.0
        %1749 = vmatpush1.msra.mxu0 0.0
        %1750 = vmatprep.subr.mxu0 0.0
        %1751 = vmatpush1.msra.mxu0 0.0
        %1752 = vmatprep.subr.mxu0 0.0
        %1753 = vmatpush1.msra.mxu0 0.0
        %1754 = vmatprep.subr.mxu0 0.0
        %1755 = vmatpush1.msra.mxu0 0.0
        %1756 = vmatprep.subr.mxu0 0.0
        %1757 = vmatpush1.msra.mxu0 0.0
        %1758 = vmatprep.subr.mxu0 0.0
        %1759 = vmatpush1.msra.mxu0 0.0
        %1760 = vmatprep.subr.mxu0 0.0
        %1761 = vmatpush1.msra.mxu0 0.0
        %1762 = vmatprep.subr.mxu0 0.0
        %1763 = vmatpush1.msra.mxu0 0.0
        %1764 = vmatprep.subr.mxu0 0.0
        %1765 = vmatpush1.msra.mxu0 0.0
        %1766 = vmatprep.subr.mxu0 0.0
        %1767 = vmatpush1.msra.mxu0 0.0
        %1768 = vmatprep.subr.mxu0 0.0
        %1769 = vmatpush1.msra.mxu0 0.0
        %1770 = vmatprep.subr.mxu0 0.0
        %1771 = vmatpush1.msra.mxu0 0.0
        %1772 = vmatprep.subr.mxu0 0.0
        %1773 = vmatpush1.msra.mxu0 0.0
        %1774 = vmatprep.subr.mxu0 0.0
        %1775 = vmatpush1.msra.mxu0 0.0
        %1776 = vmatprep.subr.mxu0 0.0
        %1777 = vmatpush1.msra.mxu0 0.0
        %1778 = vmatprep.subr.mxu0 0.0
        %1779 = vmatpush1.msra.mxu0 0.0
        %1780 = vmatprep.subr.mxu0 0.0
        %1781 = vmatpush1.msra.mxu0 0.0
        %1782 = vmatprep.subr.mxu0 0.0
        %1783 = vmatpush1.msra.mxu0 0.0
        %1784 = vmatprep.mubr.f32.mxu0 0.0
        %1785 = vmatmul.mubr.f32.gmra.mrb[0].mxu0 %v1709
        %v1786 = vpop.f32.mrb[0].mxu0
        %v1787 = vadd.f32 0.0, %v1786
        %v1788 = vpop.f32.mrb[0].mxu0
        %1789 = vmatprep.mubr.f32.mxu0 0.0
        %1790 = vmatmul.mubr.f32.gmra.mrb[0].mxu0 %v1712
        %v1791 = vpop.f32.mrb[0].mxu0
        %v1792 = vadd.f32 0.0, %v1791
        %v1793 = vpop.f32.mrb[0].mxu0
        %1794 = vmatprep.mubr.f32.mxu0 0.0
        %1795 = vmatmul.mubr.f32.gmra.mrb[0].mxu0 %v1715
        %v1796 = vpop.f32.mrb[0].mxu0
        %v1797 = vadd.f32 0.0, %v1796
        %v1798 = vpop.f32.mrb[0].mxu0
        %1799 = vmatprep.mubr.f32.mxu0 0.0
        %1800 = vmatmul.mubr.f32.gmra.mrb[0].mxu0 %v1718
        %v1801 = vpop.f32.mrb[0].mxu0
        %v1802 = vadd.f32 0.0, %v1801
        %v1803 = vpop.f32.mrb[0].mxu0
        %1804 = vdwg.mxu0
        %s1805 = scalar_lea.vmem %s9, 24
        %v1806 = vld [vmem:[%s1805] sm:$0xff]
        %v1808 = vsel %vm1303, %v1787, 0
        %v1811 = vsel %vm1303, %v1792, 0
        %v1814 = vsel %vm1303, %v1797, 0
        %v1817 = vsel %vm1303, %v1802, 0
        %1819 = vmatprep.subr.mxu0 0.0
        %1820 = vmatpush1.msra.mxu0 %v1806
        %1821 = vmatprep.subr.mxu0 0.0
        %1822 = vmatpush1.msra.mxu0 0.0
        %1823 = vmatprep.subr.mxu0 0.0
        %1824 = vmatpush1.msra.mxu0 0.0
        %1825 = vmatprep.subr.mxu0 0.0
        %1826 = vmatpush1.msra.mxu0 0.0
        %1827 = vmatprep.subr.mxu0 0.0
        %1828 = vmatpush1.msra.mxu0 0.0
        %1829 = vmatprep.subr.mxu0 0.0
        %1830 = vmatpush1.msra.mxu0 0.0
        %1831 = vmatprep.subr.mxu0 0.0
        %1832 = vmatpush1.msra.mxu0 0.0
        %1833 = vmatprep.subr.mxu0 0.0
        %1834 = vmatpush1.msra.mxu0 0.0
        %1835 = vmatprep.subr.mxu0 0.0
        %1836 = vmatpush1.msra.mxu0 0.0
        %1837 = vmatprep.subr.mxu0 0.0
        %1838 = vmatpush1.msra.mxu0 0.0
        %1839 = vmatprep.subr.mxu0 0.0
        %1840 = vmatpush1.msra.mxu0 0.0
        %1841 = vmatprep.subr.mxu0 0.0
        %1842 = vmatpush1.msra.mxu0 0.0
        %1843 = vmatprep.subr.mxu0 0.0
        %1844 = vmatpush1.msra.mxu0 0.0
        %1845 = vmatprep.subr.mxu0 0.0
        %1846 = vmatpush1.msra.mxu0 0.0
        %1847 = vmatprep.subr.mxu0 0.0
        %1848 = vmatpush1.msra.mxu0 0.0
        %1849 = vmatprep.subr.mxu0 0.0
        %1850 = vmatpush1.msra.mxu0 0.0
        %1851 = vmatprep.subr.mxu0 0.0
        %1852 = vmatpush1.msra.mxu0 0.0
        %1853 = vmatprep.subr.mxu0 0.0
        %1854 = vmatpush1.msra.mxu0 0.0
        %1855 = vmatprep.subr.mxu0 0.0
        %1856 = vmatpush1.msra.mxu0 0.0
        %1857 = vmatprep.subr.mxu0 0.0
        %1858 = vmatpush1.msra.mxu0 0.0
        %1859 = vmatprep.subr.mxu0 0.0
        %1860 = vmatpush1.msra.mxu0 0.0
        %1861 = vmatprep.subr.mxu0 0.0
        %1862 = vmatpush1.msra.mxu0 0.0
        %1863 = vmatprep.subr.mxu0 0.0
        %1864 = vmatpush1.msra.mxu0 0.0
        %1865 = vmatprep.subr.mxu0 0.0
        %1866 = vmatpush1.msra.mxu0 0.0
        %1867 = vmatprep.subr.mxu0 0.0
        %1868 = vmatpush1.msra.mxu0 0.0
        %1869 = vmatprep.subr.mxu0 0.0
        %1870 = vmatpush1.msra.mxu0 0.0
        %1871 = vmatprep.subr.mxu0 0.0
        %1872 = vmatpush1.msra.mxu0 0.0
        %1873 = vmatprep.subr.mxu0 0.0
        %1874 = vmatpush1.msra.mxu0 0.0
        %1875 = vmatprep.subr.mxu0 0.0
        %1876 = vmatpush1.msra.mxu0 0.0
        %1877 = vmatprep.subr.mxu0 0.0
        %1878 = vmatpush1.msra.mxu0 0.0
        %1879 = vmatprep.subr.mxu0 0.0
        %1880 = vmatpush1.msra.mxu0 0.0
        %1881 = vmatprep.subr.mxu0 0.0
        %1882 = vmatpush1.msra.mxu0 0.0
        %1883 = vmatprep.mubr.f32.mxu0 0.0
        %1884 = vmatmul.mubr.f32.gmra.mrb[0].mxu0 %v1808
        %v1885 = vpop.f32.mrb[0].mxu0
        %v1886 = vadd.f32 0.0, %v1885
        %v1887 = vpop.f32.mrb[0].mxu0
        %1888 = vmatprep.mubr.f32.mxu0 0.0
        %1889 = vmatmul.mubr.f32.gmra.mrb[0].mxu0 %v1811
        %v1890 = vpop.f32.mrb[0].mxu0
        %v1891 = vadd.f32 0.0, %v1890
        %v1892 = vpop.f32.mrb[0].mxu0
        %1893 = vmatprep.mubr.f32.mxu0 0.0
        %1894 = vmatmul.mubr.f32.gmra.mrb[0].mxu0 %v1814
        %v1895 = vpop.f32.mrb[0].mxu0
        %v1896 = vadd.f32 0.0, %v1895
        %v1897 = vpop.f32.mrb[0].mxu0
        %1898 = vmatprep.mubr.f32.mxu0 0.0
        %1899 = vmatmul.mubr.f32.gmra.mrb[0].mxu0 %v1817
        %v1900 = vpop.f32.mrb[0].mxu0
        %v1901 = vadd.f32 0.0, %v1900
        %v1902 = vpop.f32.mrb[0].mxu0
        %1903 = vdwg.mxu0
        %v1904 = vadd.f32 %v1699, %v1886
        %v1905 = vadd.f32 %v1700, %v1891
        %v1906 = vadd.f32 %v1701, %v1896
        %v1907 = vadd.f32 %v1702, %v1901
        %s1908 = scalar_lea.vmem %s7, 128
        %v1909 = vld [vmem:[%s1908] sm:$0xff]
        %v1910 = vld [vmem:[%s1908 + $0x8] sm:$0xff]
        %v1911 = vld [vmem:[%s1908 + $0x10] sm:$0xff]
        %v1912 = vld [vmem:[%s1908 + $0x18] sm:$0xff]
        %v1914 = vsel %vm1100, %v1909, 0
        %v1917 = vsel %vm1100, %v1910, 0
        %v1920 = vsel %vm1100, %v1911, 0
        %v1923 = vsel %vm1100, %v1912, 0
        %1925 = vmatprep.subr.mxu0 0.0
        %1926 = vmatpush1.msra.mxu0 %v1078
        %1927 = vmatprep.subr.mxu0 0.0
        %1928 = vmatpush1.msra.mxu0 %v1083
        %1929 = vmatprep.subr.mxu0 0.0
        %1930 = vmatpush1.msra.mxu0 %v1088
        %1931 = vmatprep.subr.mxu0 0.0
        %1932 = vmatpush1.msra.mxu0 %v1093
        %1933 = vmatprep.subr.mxu0 0.0
        %1934 = vmatpush1.msra.mxu0 0.0
        %1935 = vmatprep.subr.mxu0 0.0
        %1936 = vmatpush1.msra.mxu0 0.0
        %1937 = vmatprep.subr.mxu0 0.0
        %1938 = vmatpush1.msra.mxu0 0.0
        %1939 = vmatprep.subr.mxu0 0.0
        %1940 = vmatpush1.msra.mxu0 0.0
        %1941 = vmatprep.subr.mxu0 0.0
        %1942 = vmatpush1.msra.mxu0 0.0
        %1943 = vmatprep.subr.mxu0 0.0
        %1944 = vmatpush1.msra.mxu0 0.0
        %1945 = vmatprep.subr.mxu0 0.0
        %1946 = vmatpush1.msra.mxu0 0.0
        %1947 = vmatprep.subr.mxu0 0.0
        %1948 = vmatpush1.msra.mxu0 0.0
        %1949 = vmatprep.subr.mxu0 0.0
        %1950 = vmatpush1.msra.mxu0 0.0
        %1951 = vmatprep.subr.mxu0 0.0
        %1952 = vmatpush1.msra.mxu0 0.0
        %1953 = vmatprep.subr.mxu0 0.0
        %1954 = vmatpush1.msra.mxu0 0.0
        %1955 = vmatprep.subr.mxu0 0.0
        %1956 = vmatpush1.msra.mxu0 0.0
        %1957 = vmatprep.subr.mxu0 0.0
        %1958 = vmatpush1.msra.mxu0 0.0
        %1959 = vmatprep.subr.mxu0 0.0
        %1960 = vmatpush1.msra.mxu0 0.0
        %1961 = vmatprep.subr.mxu0 0.0
        %1962 = vmatpush1.msra.mxu0 0.0
        %1963 = vmatprep.subr.mxu0 0.0
        %1964 = vmatpush1.msra.mxu0 0.0
        %1965 = vmatprep.subr.mxu0 0.0
        %1966 = vmatpush1.msra.mxu0 0.0
        %1967 = vmatprep.subr.mxu0 0.0
        %1968 = vmatpush1.msra.mxu0 0.0
        %1969 = vmatprep.subr.mxu0 0.0
        %1970 = vmatpush1.msra.mxu0 0.0
        %1971 = vmatprep.subr.mxu0 0.0
        %1972 = vmatpush1.msra.mxu0 0.0
        %1973 = vmatprep.subr.mxu0 0.0
        %1974 = vmatpush1.msra.mxu0 0.0
        %1975 = vmatprep.subr.mxu0 0.0
        %1976 = vmatpush1.msra.mxu0 0.0
        %1977 = vmatprep.subr.mxu0 0.0
        %1978 = vmatpush1.msra.mxu0 0.0
        %1979 = vmatprep.subr.mxu0 0.0
        %1980 = vmatpush1.msra.mxu0 0.0
        %1981 = vmatprep.subr.mxu0 0.0
        %1982 = vmatpush1.msra.mxu0 0.0
        %1983 = vmatprep.subr.mxu0 0.0
        %1984 = vmatpush1.msra.mxu0 0.0
        %1985 = vmatprep.subr.mxu0 0.0
        %1986 = vmatpush1.msra.mxu0 0.0
        %1987 = vmatprep.subr.mxu0 0.0
        %1988 = vmatpush1.msra.mxu0 0.0
        %1989 = vmatprep.mubr.f32.mxu0 0.0
        %1990 = vmatmul.mubr.f32.gmra.mrb[0].mxu0 %v1914
        %v1991 = vpop.f32.mrb[0].mxu0
        %v1992 = vadd.f32 0.0, %v1991
        %v1993 = vpop.f32.mrb[0].mxu0
        %1994 = vmatprep.mubr.f32.mxu0 0.0
        %1995 = vmatmul.mubr.f32.gmra.mrb[0].mxu0 %v1917
        %v1996 = vpop.f32.mrb[0].mxu0
        %v1997 = vadd.f32 0.0, %v1996
        %v1998 = vpop.f32.mrb[0].mxu0
        %1999 = vmatprep.mubr.f32.mxu0 0.0
        %2000 = vmatmul.mubr.f32.gmra.mrb[0].mxu0 %v1920
        %v2001 = vpop.f32.mrb[0].mxu0
        %v2002 = vadd.f32 0.0, %v2001
        %v2003 = vpop.f32.mrb[0].mxu0
        %2004 = vmatprep.mubr.f32.mxu0 0.0
        %2005 = vmatmul.mubr.f32.gmra.mrb[0].mxu0 %v1923
        %v2006 = vpop.f32.mrb[0].mxu0
        %v2007 = vadd.f32 0.0, %v2006
        %v2008 = vpop.f32.mrb[0].mxu0
        %2009 = vdwg.mxu0
        %s2010 = scalar_lea.vmem %s9, 32
        %v2011 = vld [vmem:[%s2010] sm:$0xff]
        %v2013 = vsel %vm1303, %v1992, 0
        %v2016 = vsel %vm1303, %v1997, 0
        %v2019 = vsel %vm1303, %v2002, 0
        %v2022 = vsel %vm1303, %v2007, 0
        %2024 = vmatprep.subr.mxu0 0.0
        %2025 = vmatpush1.msra.mxu0 %v2011
        %2026 = vmatprep.subr.mxu0 0.0
        %2027 = vmatpush1.msra.mxu0 0.0
        %2028 = vmatprep.subr.mxu0 0.0
        %2029 = vmatpush1.msra.mxu0 0.0
        %2030 = vmatprep.subr.mxu0 0.0
        %2031 = vmatpush1.msra.mxu0 0.0
        %2032 = vmatprep.subr.mxu0 0.0
        %2033 = vmatpush1.msra.mxu0 0.0
        %2034 = vmatprep.subr.mxu0 0.0
        %2035 = vmatpush1.msra.mxu0 0.0
        %2036 = vmatprep.subr.mxu0 0.0
        %2037 = vmatpush1.msra.mxu0 0.0
        %2038 = vmatprep.subr.mxu0 0.0
        %2039 = vmatpush1.msra.mxu0 0.0
        %2040 = vmatprep.subr.mxu0 0.0
        %2041 = vmatpush1.msra.mxu0 0.0
        %2042 = vmatprep.subr.mxu0 0.0
        %2043 = vmatpush1.msra.mxu0 0.0
        %2044 = vmatprep.subr.mxu0 0.0
        %2045 = vmatpush1.msra.mxu0 0.0
        %2046 = vmatprep.subr.mxu0 0.0
        %2047 = vmatpush1.msra.mxu0 0.0
        %2048 = vmatprep.subr.mxu0 0.0
        %2049 = vmatpush1.msra.mxu0 0.0
        %2050 = vmatprep.subr.mxu0 0.0
        %2051 = vmatpush1.msra.mxu0 0.0
        %2052 = vmatprep.subr.mxu0 0.0
        %2053 = vmatpush1.msra.mxu0 0.0
        %2054 = vmatprep.subr.mxu0 0.0
        %2055 = vmatpush1.msra.mxu0 0.0
        %2056 = vmatprep.subr.mxu0 0.0
        %2057 = vmatpush1.msra.mxu0 0.0
        %2058 = vmatprep.subr.mxu0 0.0
        %2059 = vmatpush1.msra.mxu0 0.0
        %2060 = vmatprep.subr.mxu0 0.0
        %2061 = vmatpush1.msra.mxu0 0.0
        %2062 = vmatprep.subr.mxu0 0.0
        %2063 = vmatpush1.msra.mxu0 0.0
        %2064 = vmatprep.subr.mxu0 0.0
        %2065 = vmatpush1.msra.mxu0 0.0
        %2066 = vmatprep.subr.mxu0 0.0
        %2067 = vmatpush1.msra.mxu0 0.0
        %2068 = vmatprep.subr.mxu0 0.0
        %2069 = vmatpush1.msra.mxu0 0.0
        %2070 = vmatprep.subr.mxu0 0.0
        %2071 = vmatpush1.msra.mxu0 0.0
        %2072 = vmatprep.subr.mxu0 0.0
        %2073 = vmatpush1.msra.mxu0 0.0
        %2074 = vmatprep.subr.mxu0 0.0
        %2075 = vmatpush1.msra.mxu0 0.0
        %2076 = vmatprep.subr.mxu0 0.0
        %2077 = vmatpush1.msra.mxu0 0.0
        %2078 = vmatprep.subr.mxu0 0.0
        %2079 = vmatpush1.msra.mxu0 0.0
        %2080 = vmatprep.subr.mxu0 0.0
        %2081 = vmatpush1.msra.mxu0 0.0
        %2082 = vmatprep.subr.mxu0 0.0
        %2083 = vmatpush1.msra.mxu0 0.0
        %2084 = vmatprep.subr.mxu0 0.0
        %2085 = vmatpush1.msra.mxu0 0.0
        %2086 = vmatprep.subr.mxu0 0.0
        %2087 = vmatpush1.msra.mxu0 0.0
        %2088 = vmatprep.mubr.f32.mxu0 0.0
        %2089 = vmatmul.mubr.f32.gmra.mrb[0].mxu0 %v2013
        %v2090 = vpop.f32.mrb[0].mxu0
        %v2091 = vadd.f32 0.0, %v2090
        %v2092 = vpop.f32.mrb[0].mxu0
        %2093 = vmatprep.mubr.f32.mxu0 0.0
        %2094 = vmatmul.mubr.f32.gmra.mrb[0].mxu0 %v2016
        %v2095 = vpop.f32.mrb[0].mxu0
        %v2096 = vadd.f32 0.0, %v2095
        %v2097 = vpop.f32.mrb[0].mxu0
        %2098 = vmatprep.mubr.f32.mxu0 0.0
        %2099 = vmatmul.mubr.f32.gmra.mrb[0].mxu0 %v2019
        %v2100 = vpop.f32.mrb[0].mxu0
        %v2101 = vadd.f32 0.0, %v2100
        %v2102 = vpop.f32.mrb[0].mxu0
        %2103 = vmatprep.mubr.f32.mxu0 0.0
        %2104 = vmatmul.mubr.f32.gmra.mrb[0].mxu0 %v2022
        %v2105 = vpop.f32.mrb[0].mxu0
        %v2106 = vadd.f32 0.0, %v2105
        %v2107 = vpop.f32.mrb[0].mxu0
        %2108 = vdwg.mxu0
        %v2109 = vadd.f32 %v1904, %v2091
        %v2110 = vadd.f32 %v1905, %v2096
        %v2111 = vadd.f32 %v1906, %v2101
        %v2112 = vadd.f32 %v1907, %v2106
        %s2113 = scalar_lea.vmem %s7, 160
        %v2114 = vld [vmem:[%s2113] sm:$0xff]
        %v2115 = vld [vmem:[%s2113 + $0x8] sm:$0xff]
        %v2116 = vld [vmem:[%s2113 + $0x10] sm:$0xff]
        %v2117 = vld [vmem:[%s2113 + $0x18] sm:$0xff]
        %v2119 = vsel %vm1100, %v2114, 0
        %v2122 = vsel %vm1100, %v2115, 0
        %v2125 = vsel %vm1100, %v2116, 0
        %v2128 = vsel %vm1100, %v2117, 0
        %2130 = vmatprep.subr.mxu0 0.0
        %2131 = vmatpush1.msra.mxu0 %v1078
        %2132 = vmatprep.subr.mxu0 0.0
        %2133 = vmatpush1.msra.mxu0 %v1083
        %2134 = vmatprep.subr.mxu0 0.0
        %2135 = vmatpush1.msra.mxu0 %v1088
        %2136 = vmatprep.subr.mxu0 0.0
        %2137 = vmatpush1.msra.mxu0 %v1093
        %2138 = vmatprep.subr.mxu0 0.0
        %2139 = vmatpush1.msra.mxu0 0.0
        %2140 = vmatprep.subr.mxu0 0.0
        %2141 = vmatpush1.msra.mxu0 0.0
        %2142 = vmatprep.subr.mxu0 0.0
        %2143 = vmatpush1.msra.mxu0 0.0
        %2144 = vmatprep.subr.mxu0 0.0
        %2145 = vmatpush1.msra.mxu0 0.0
        %2146 = vmatprep.subr.mxu0 0.0
        %2147 = vmatpush1.msra.mxu0 0.0
        %2148 = vmatprep.subr.mxu0 0.0
        %2149 = vmatpush1.msra.mxu0 0.0
        %2150 = vmatprep.subr.mxu0 0.0
        %2151 = vmatpush1.msra.mxu0 0.0
        %2152 = vmatprep.subr.mxu0 0.0
        %2153 = vmatpush1.msra.mxu0 0.0
        %2154 = vmatprep.subr.mxu0 0.0
        %2155 = vmatpush1.msra.mxu0 0.0
        %2156 = vmatprep.subr.mxu0 0.0
        %2157 = vmatpush1.msra.mxu0 0.0
        %2158 = vmatprep.subr.mxu0 0.0
        %2159 = vmatpush1.msra.mxu0 0.0
        %2160 = vmatprep.subr.mxu0 0.0
        %2161 = vmatpush1.msra.mxu0 0.0
        %2162 = vmatprep.subr.mxu0 0.0
        %2163 = vmatpush1.msra.mxu0 0.0
        %2164 = vmatprep.subr.mxu0 0.0
        %2165 = vmatpush1.msra.mxu0 0.0
        %2166 = vmatprep.subr.mxu0 0.0
        %2167 = vmatpush1.msra.mxu0 0.0
        %2168 = vmatprep.subr.mxu0 0.0
        %2169 = vmatpush1.msra.mxu0 0.0
        %2170 = vmatprep.subr.mxu0 0.0
        %2171 = vmatpush1.msra.mxu0 0.0
        %2172 = vmatprep.subr.mxu0 0.0
        %2173 = vmatpush1.msra.mxu0 0.0
        %2174 = vmatprep.subr.mxu0 0.0
        %2175 = vmatpush1.msra.mxu0 0.0
        %2176 = vmatprep.subr.mxu0 0.0
        %2177 = vmatpush1.msra.mxu0 0.0
        %2178 = vmatprep.subr.mxu0 0.0
        %2179 = vmatpush1.msra.mxu0 0.0
        %2180 = vmatprep.subr.mxu0 0.0
        %2181 = vmatpush1.msra.mxu0 0.0
        %2182 = vmatprep.subr.mxu0 0.0
        %2183 = vmatpush1.msra.mxu0 0.0
        %2184 = vmatprep.subr.mxu0 0.0
        %2185 = vmatpush1.msra.mxu0 0.0
        %2186 = vmatprep.subr.mxu0 0.0
        %2187 = vmatpush1.msra.mxu0 0.0
        %2188 = vmatprep.subr.mxu0 0.0
        %2189 = vmatpush1.msra.mxu0 0.0
        %2190 = vmatprep.subr.mxu0 0.0
        %2191 = vmatpush1.msra.mxu0 0.0
        %2192 = vmatprep.subr.mxu0 0.0
        %2193 = vmatpush1.msra.mxu0 0.0
        %2194 = vmatprep.mubr.f32.mxu0 0.0
        %2195 = vmatmul.mubr.f32.gmra.mrb[0].mxu0 %v2119
        %v2196 = vpop.f32.mrb[0].mxu0
        %v2197 = vadd.f32 0.0, %v2196
        %v2198 = vpop.f32.mrb[0].mxu0
        %2199 = vmatprep.mubr.f32.mxu0 0.0
        %2200 = vmatmul.mubr.f32.gmra.mrb[0].mxu0 %v2122
        %v2201 = vpop.f32.mrb[0].mxu0
        %v2202 = vadd.f32 0.0, %v2201
        %v2203 = vpop.f32.mrb[0].mxu0
        %2204 = vmatprep.mubr.f32.mxu0 0.0
        %2205 = vmatmul.mubr.f32.gmra.mrb[0].mxu0 %v2125
        %v2206 = vpop.f32.mrb[0].mxu0
        %v2207 = vadd.f32 0.0, %v2206
        %v2208 = vpop.f32.mrb[0].mxu0
        %2209 = vmatprep.mubr.f32.mxu0 0.0
        %2210 = vmatmul.mubr.f32.gmra.mrb[0].mxu0 %v2128
        %v2211 = vpop.f32.mrb[0].mxu0
        %v2212 = vadd.f32 0.0, %v2211
        %v2213 = vpop.f32.mrb[0].mxu0
        %2214 = vdwg.mxu0
        %s2215 = scalar_lea.vmem %s9, 40
        %v2216 = vld [vmem:[%s2215] sm:$0xff]
        %v2218 = vsel %vm1303, %v2197, 0
        %v2221 = vsel %vm1303, %v2202, 0
        %v2224 = vsel %vm1303, %v2207, 0
        %v2227 = vsel %vm1303, %v2212, 0
        %2229 = vmatprep.subr.mxu0 0.0
        %2230 = vmatpush1.msra.mxu0 %v2216
        %2231 = vmatprep.subr.mxu0 0.0
        %2232 = vmatpush1.msra.mxu0 0.0
        %2233 = vmatprep.subr.mxu0 0.0
        %2234 = vmatpush1.msra.mxu0 0.0
        %2235 = vmatprep.subr.mxu0 0.0
        %2236 = vmatpush1.msra.mxu0 0.0
        %2237 = vmatprep.subr.mxu0 0.0
        %2238 = vmatpush1.msra.mxu0 0.0
        %2239 = vmatprep.subr.mxu0 0.0
        %2240 = vmatpush1.msra.mxu0 0.0
        %2241 = vmatprep.subr.mxu0 0.0
        %2242 = vmatpush1.msra.mxu0 0.0
        %2243 = vmatprep.subr.mxu0 0.0
        %2244 = vmatpush1.msra.mxu0 0.0
        %2245 = vmatprep.subr.mxu0 0.0
        %2246 = vmatpush1.msra.mxu0 0.0
        %2247 = vmatprep.subr.mxu0 0.0
        %2248 = vmatpush1.msra.mxu0 0.0
        %2249 = vmatprep.subr.mxu0 0.0
        %2250 = vmatpush1.msra.mxu0 0.0
        %2251 = vmatprep.subr.mxu0 0.0
        %2252 = vmatpush1.msra.mxu0 0.0
        %2253 = vmatprep.subr.mxu0 0.0
        %2254 = vmatpush1.msra.mxu0 0.0
        %2255 = vmatprep.subr.mxu0 0.0
        %2256 = vmatpush1.msra.mxu0 0.0
        %2257 = vmatprep.subr.mxu0 0.0
        %2258 = vmatpush1.msra.mxu0 0.0
        %2259 = vmatprep.subr.mxu0 0.0
        %2260 = vmatpush1.msra.mxu0 0.0
        %2261 = vmatprep.subr.mxu0 0.0
        %2262 = vmatpush1.msra.mxu0 0.0
        %2263 = vmatprep.subr.mxu0 0.0
        %2264 = vmatpush1.msra.mxu0 0.0
        %2265 = vmatprep.subr.mxu0 0.0
        %2266 = vmatpush1.msra.mxu0 0.0
        %2267 = vmatprep.subr.mxu0 0.0
        %2268 = vmatpush1.msra.mxu0 0.0
        %2269 = vmatprep.subr.mxu0 0.0
        %2270 = vmatpush1.msra.mxu0 0.0
        %2271 = vmatprep.subr.mxu0 0.0
        %2272 = vmatpush1.msra.mxu0 0.0
        %2273 = vmatprep.subr.mxu0 0.0
        %2274 = vmatpush1.msra.mxu0 0.0
        %2275 = vmatprep.subr.mxu0 0.0
        %2276 = vmatpush1.msra.mxu0 0.0
        %2277 = vmatprep.subr.mxu0 0.0
        %2278 = vmatpush1.msra.mxu0 0.0
        %2279 = vmatprep.subr.mxu0 0.0
        %2280 = vmatpush1.msra.mxu0 0.0
        %2281 = vmatprep.subr.mxu0 0.0
        %2282 = vmatpush1.msra.mxu0 0.0
        %2283 = vmatprep.subr.mxu0 0.0
        %2284 = vmatpush1.msra.mxu0 0.0
        %2285 = vmatprep.subr.mxu0 0.0
        %2286 = vmatpush1.msra.mxu0 0.0
        %2287 = vmatprep.subr.mxu0 0.0
        %2288 = vmatpush1.msra.mxu0 0.0
        %2289 = vmatprep.subr.mxu0 0.0
        %2290 = vmatpush1.msra.mxu0 0.0
        %2291 = vmatprep.subr.mxu0 0.0
        %2292 = vmatpush1.msra.mxu0 0.0
        %2293 = vmatprep.mubr.f32.mxu0 0.0
        %2294 = vmatmul.mubr.f32.gmra.mrb[0].mxu0 %v2218
        %v2295 = vpop.f32.mrb[0].mxu0
        %v2296 = vadd.f32 0.0, %v2295
        %v2297 = vpop.f32.mrb[0].mxu0
        %2298 = vmatprep.mubr.f32.mxu0 0.0
        %2299 = vmatmul.mubr.f32.gmra.mrb[0].mxu0 %v2221
        %v2300 = vpop.f32.mrb[0].mxu0
        %v2301 = vadd.f32 0.0, %v2300
        %v2302 = vpop.f32.mrb[0].mxu0
        %2303 = vmatprep.mubr.f32.mxu0 0.0
        %2304 = vmatmul.mubr.f32.gmra.mrb[0].mxu0 %v2224
        %v2305 = vpop.f32.mrb[0].mxu0
        %v2306 = vadd.f32 0.0, %v2305
        %v2307 = vpop.f32.mrb[0].mxu0
        %2308 = vmatprep.mubr.f32.mxu0 0.0
        %2309 = vmatmul.mubr.f32.gmra.mrb[0].mxu0 %v2227
        %v2310 = vpop.f32.mrb[0].mxu0
        %v2311 = vadd.f32 0.0, %v2310
        %v2312 = vpop.f32.mrb[0].mxu0
        %2313 = vdwg.mxu0
        %v2314 = vadd.f32 %v2109, %v2296
        %v2315 = vadd.f32 %v2110, %v2301
        %v2316 = vadd.f32 %v2111, %v2306
        %v2317 = vadd.f32 %v2112, %v2311
        %s2318 = scalar_lea.vmem %s7, 192
        %v2319 = vld [vmem:[%s2318] sm:$0xff]
        %v2320 = vld [vmem:[%s2318 + $0x8] sm:$0xff]
        %v2321 = vld [vmem:[%s2318 + $0x10] sm:$0xff]
        %v2322 = vld [vmem:[%s2318 + $0x18] sm:$0xff]
        %v2324 = vsel %vm1100, %v2319, 0
        %v2327 = vsel %vm1100, %v2320, 0
        %v2330 = vsel %vm1100, %v2321, 0
        %v2333 = vsel %vm1100, %v2322, 0
        %2335 = vmatprep.subr.mxu0 0.0
        %2336 = vmatpush1.msra.mxu0 %v1078
        %2337 = vmatprep.subr.mxu0 0.0
        %2338 = vmatpush1.msra.mxu0 %v1083
        %2339 = vmatprep.subr.mxu0 0.0
        %2340 = vmatpush1.msra.mxu0 %v1088
        %2341 = vmatprep.subr.mxu0 0.0
        %2342 = vmatpush1.msra.mxu0 %v1093
        %2343 = vmatprep.subr.mxu0 0.0
        %2344 = vmatpush1.msra.mxu0 0.0
        %2345 = vmatprep.subr.mxu0 0.0
        %2346 = vmatpush1.msra.mxu0 0.0
        %2347 = vmatprep.subr.mxu0 0.0
        %2348 = vmatpush1.msra.mxu0 0.0
        %2349 = vmatprep.subr.mxu0 0.0
        %2350 = vmatpush1.msra.mxu0 0.0
        %2351 = vmatprep.subr.mxu0 0.0
        %2352 = vmatpush1.msra.mxu0 0.0
        %2353 = vmatprep.subr.mxu0 0.0
        %2354 = vmatpush1.msra.mxu0 0.0
        %2355 = vmatprep.subr.mxu0 0.0
        %2356 = vmatpush1.msra.mxu0 0.0
        %2357 = vmatprep.subr.mxu0 0.0
        %2358 = vmatpush1.msra.mxu0 0.0
        %2359 = vmatprep.subr.mxu0 0.0
        %2360 = vmatpush1.msra.mxu0 0.0
        %2361 = vmatprep.subr.mxu0 0.0
        %2362 = vmatpush1.msra.mxu0 0.0
        %2363 = vmatprep.subr.mxu0 0.0
        %2364 = vmatpush1.msra.mxu0 0.0
        %2365 = vmatprep.subr.mxu0 0.0
        %2366 = vmatpush1.msra.mxu0 0.0
        %2367 = vmatprep.subr.mxu0 0.0
        %2368 = vmatpush1.msra.mxu0 0.0
        %2369 = vmatprep.subr.mxu0 0.0
        %2370 = vmatpush1.msra.mxu0 0.0
        %2371 = vmatprep.subr.mxu0 0.0
        %2372 = vmatpush1.msra.mxu0 0.0
        %2373 = vmatprep.subr.mxu0 0.0
        %2374 = vmatpush1.msra.mxu0 0.0
        %2375 = vmatprep.subr.mxu0 0.0
        %2376 = vmatpush1.msra.mxu0 0.0
        %2377 = vmatprep.subr.mxu0 0.0
        %2378 = vmatpush1.msra.mxu0 0.0
        %2379 = vmatprep.subr.mxu0 0.0
        %2380 = vmatpush1.msra.mxu0 0.0
        %2381 = vmatprep.subr.mxu0 0.0
        %2382 = vmatpush1.msra.mxu0 0.0
        %2383 = vmatprep.subr.mxu0 0.0
        %2384 = vmatpush1.msra.mxu0 0.0
        %2385 = vmatprep.subr.mxu0 0.0
        %2386 = vmatpush1.msra.mxu0 0.0
        %2387 = vmatprep.subr.mxu0 0.0
        %2388 = vmatpush1.msra.mxu0 0.0
        %2389 = vmatprep.subr.mxu0 0.0
        %2390 = vmatpush1.msra.mxu0 0.0
        %2391 = vmatprep.subr.mxu0 0.0
        %2392 = vmatpush1.msra.mxu0 0.0
        %2393 = vmatprep.subr.mxu0 0.0
        %2394 = vmatpush1.msra.mxu0 0.0
        %2395 = vmatprep.subr.mxu0 0.0
        %2396 = vmatpush1.msra.mxu0 0.0
        %2397 = vmatprep.subr.mxu0 0.0
        %2398 = vmatpush1.msra.mxu0 0.0
        %2399 = vmatprep.mubr.f32.mxu0 0.0
        %2400 = vmatmul.mubr.f32.gmra.mrb[0].mxu0 %v2324
        %v2401 = vpop.f32.mrb[0].mxu0
        %v2402 = vadd.f32 0.0, %v2401
        %v2403 = vpop.f32.mrb[0].mxu0
        %2404 = vmatprep.mubr.f32.mxu0 0.0
        %2405 = vmatmul.mubr.f32.gmra.mrb[0].mxu0 %v2327
        %v2406 = vpop.f32.mrb[0].mxu0
        %v2407 = vadd.f32 0.0, %v2406
        %v2408 = vpop.f32.mrb[0].mxu0
        %2409 = vmatprep.mubr.f32.mxu0 0.0
        %2410 = vmatmul.mubr.f32.gmra.mrb[0].mxu0 %v2330
        %v2411 = vpop.f32.mrb[0].mxu0
        %v2412 = vadd.f32 0.0, %v2411
        %v2413 = vpop.f32.mrb[0].mxu0
        %2414 = vmatprep.mubr.f32.mxu0 0.0
        %2415 = vmatmul.mubr.f32.gmra.mrb[0].mxu0 %v2333
        %v2416 = vpop.f32.mrb[0].mxu0
        %v2417 = vadd.f32 0.0, %v2416
        %v2418 = vpop.f32.mrb[0].mxu0
        %2419 = vdwg.mxu0
        %s2420 = scalar_lea.vmem %s9, 48
        %v2421 = vld [vmem:[%s2420] sm:$0xff]
        %v2423 = vsel %vm1303, %v2402, 0
        %v2426 = vsel %vm1303, %v2407, 0
        %v2429 = vsel %vm1303, %v2412, 0
        %v2432 = vsel %vm1303, %v2417, 0
        %2434 = vmatprep.subr.mxu0 0.0
        %2435 = vmatpush1.msra.mxu0 %v2421
        %2436 = vmatprep.subr.mxu0 0.0
        %2437 = vmatpush1.msra.mxu0 0.0
        %2438 = vmatprep.subr.mxu0 0.0
        %2439 = vmatpush1.msra.mxu0 0.0
        %2440 = vmatprep.subr.mxu0 0.0
        %2441 = vmatpush1.msra.mxu0 0.0
        %2442 = vmatprep.subr.mxu0 0.0
        %2443 = vmatpush1.msra.mxu0 0.0
        %2444 = vmatprep.subr.mxu0 0.0
        %2445 = vmatpush1.msra.mxu0 0.0
        %2446 = vmatprep.subr.mxu0 0.0
        %2447 = vmatpush1.msra.mxu0 0.0
        %2448 = vmatprep.subr.mxu0 0.0
        %2449 = vmatpush1.msra.mxu0 0.0
        %2450 = vmatprep.subr.mxu0 0.0
        %2451 = vmatpush1.msra.mxu0 0.0
        %2452 = vmatprep.subr.mxu0 0.0
        %2453 = vmatpush1.msra.mxu0 0.0
        %2454 = vmatprep.subr.mxu0 0.0
        %2455 = vmatpush1.msra.mxu0 0.0
        %2456 = vmatprep.subr.mxu0 0.0
        %2457 = vmatpush1.msra.mxu0 0.0
        %2458 = vmatprep.subr.mxu0 0.0
        %2459 = vmatpush1.msra.mxu0 0.0
        %2460 = vmatprep.subr.mxu0 0.0
        %2461 = vmatpush1.msra.mxu0 0.0
        %2462 = vmatprep.subr.mxu0 0.0
        %2463 = vmatpush1.msra.mxu0 0.0
        %2464 = vmatprep.subr.mxu0 0.0
        %2465 = vmatpush1.msra.mxu0 0.0
        %2466 = vmatprep.subr.mxu0 0.0
        %2467 = vmatpush1.msra.mxu0 0.0
        %2468 = vmatprep.subr.mxu0 0.0
        %2469 = vmatpush1.msra.mxu0 0.0
        %2470 = vmatprep.subr.mxu0 0.0
        %2471 = vmatpush1.msra.mxu0 0.0
        %2472 = vmatprep.subr.mxu0 0.0
        %2473 = vmatpush1.msra.mxu0 0.0
        %2474 = vmatprep.subr.mxu0 0.0
        %2475 = vmatpush1.msra.mxu0 0.0
        %2476 = vmatprep.subr.mxu0 0.0
        %2477 = vmatpush1.msra.mxu0 0.0
        %2478 = vmatprep.subr.mxu0 0.0
        %2479 = vmatpush1.msra.mxu0 0.0
        %2480 = vmatprep.subr.mxu0 0.0
        %2481 = vmatpush1.msra.mxu0 0.0
        %2482 = vmatprep.subr.mxu0 0.0
        %2483 = vmatpush1.msra.mxu0 0.0
        %2484 = vmatprep.subr.mxu0 0.0
        %2485 = vmatpush1.msra.mxu0 0.0
        %2486 = vmatprep.subr.mxu0 0.0
        %2487 = vmatpush1.msra.mxu0 0.0
        %2488 = vmatprep.subr.mxu0 0.0
        %2489 = vmatpush1.msra.mxu0 0.0
        %2490 = vmatprep.subr.mxu0 0.0
        %2491 = vmatpush1.msra.mxu0 0.0
        %2492 = vmatprep.subr.mxu0 0.0
        %2493 = vmatpush1.msra.mxu0 0.0
        %2494 = vmatprep.subr.mxu0 0.0
        %2495 = vmatpush1.msra.mxu0 0.0
        %2496 = vmatprep.subr.mxu0 0.0
        %2497 = vmatpush1.msra.mxu0 0.0
        %2498 = vmatprep.mubr.f32.mxu0 0.0
        %2499 = vmatmul.mubr.f32.gmra.mrb[0].mxu0 %v2423
        %v2500 = vpop.f32.mrb[0].mxu0
        %v2501 = vadd.f32 0.0, %v2500
        %v2502 = vpop.f32.mrb[0].mxu0
        %2503 = vmatprep.mubr.f32.mxu0 0.0
        %2504 = vmatmul.mubr.f32.gmra.mrb[0].mxu0 %v2426
        %v2505 = vpop.f32.mrb[0].mxu0
        %v2506 = vadd.f32 0.0, %v2505
        %v2507 = vpop.f32.mrb[0].mxu0
        %2508 = vmatprep.mubr.f32.mxu0 0.0
        %2509 = vmatmul.mubr.f32.gmra.mrb[0].mxu0 %v2429
        %v2510 = vpop.f32.mrb[0].mxu0
        %v2511 = vadd.f32 0.0, %v2510
        %v2512 = vpop.f32.mrb[0].mxu0
        %2513 = vmatprep.mubr.f32.mxu0 0.0
        %2514 = vmatmul.mubr.f32.gmra.mrb[0].mxu0 %v2432
        %v2515 = vpop.f32.mrb[0].mxu0
        %v2516 = vadd.f32 0.0, %v2515
        %v2517 = vpop.f32.mrb[0].mxu0
        %2518 = vdwg.mxu0
        %v2519 = vadd.f32 %v2314, %v2501
        %v2520 = vadd.f32 %v2315, %v2506
        %v2521 = vadd.f32 %v2316, %v2511
        %v2522 = vadd.f32 %v2317, %v2516
        %s2523 = scalar_lea.vmem %s7, 224
        %v2524 = vld [vmem:[%s2523] sm:$0xff]
        %v2525 = vld [vmem:[%s2523 + $0x8] sm:$0xff]
        %v2526 = vld [vmem:[%s2523 + $0x10] sm:$0xff]
        %v2527 = vld [vmem:[%s2523 + $0x18] sm:$0xff]
        %v2529 = vsel %vm1100, %v2524, 0
        %v2532 = vsel %vm1100, %v2525, 0
        %v2535 = vsel %vm1100, %v2526, 0
        %v2538 = vsel %vm1100, %v2527, 0
        %2540 = vmatprep.subr.mxu0 0.0
        %2541 = vmatpush1.msra.mxu0 %v1078
        %2542 = vmatprep.subr.mxu0 0.0
        %2543 = vmatpush1.msra.mxu0 %v1083
        %2544 = vmatprep.subr.mxu0 0.0
        %2545 = vmatpush1.msra.mxu0 %v1088
        %2546 = vmatprep.subr.mxu0 0.0
        %2547 = vmatpush1.msra.mxu0 %v1093
        %2548 = vmatprep.subr.mxu0 0.0
        %2549 = vmatpush1.msra.mxu0 0.0
        %2550 = vmatprep.subr.mxu0 0.0
        %2551 = vmatpush1.msra.mxu0 0.0
        %2552 = vmatprep.subr.mxu0 0.0
        %2553 = vmatpush1.msra.mxu0 0.0
        %2554 = vmatprep.subr.mxu0 0.0
        %2555 = vmatpush1.msra.mxu0 0.0
        %2556 = vmatprep.subr.mxu0 0.0
        %2557 = vmatpush1.msra.mxu0 0.0
        %2558 = vmatprep.subr.mxu0 0.0
        %2559 = vmatpush1.msra.mxu0 0.0
        %2560 = vmatprep.subr.mxu0 0.0
        %2561 = vmatpush1.msra.mxu0 0.0
        %2562 = vmatprep.subr.mxu0 0.0
        %2563 = vmatpush1.msra.mxu0 0.0
        %2564 = vmatprep.subr.mxu0 0.0
        %2565 = vmatpush1.msra.mxu0 0.0
        %2566 = vmatprep.subr.mxu0 0.0
        %2567 = vmatpush1.msra.mxu0 0.0
        %2568 = vmatprep.subr.mxu0 0.0
        %2569 = vmatpush1.msra.mxu0 0.0
        %2570 = vmatprep.subr.mxu0 0.0
        %2571 = vmatpush1.msra.mxu0 0.0
        %2572 = vmatprep.subr.mxu0 0.0
        %2573 = vmatpush1.msra.mxu0 0.0
        %2574 = vmatprep.subr.mxu0 0.0
        %2575 = vmatpush1.msra.mxu0 0.0
        %2576 = vmatprep.subr.mxu0 0.0
        %2577 = vmatpush1.msra.mxu0 0.0
        %2578 = vmatprep.subr.mxu0 0.0
        %2579 = vmatpush1.msra.mxu0 0.0
        %2580 = vmatprep.subr.mxu0 0.0
        %2581 = vmatpush1.msra.mxu0 0.0
        %2582 = vmatprep.subr.mxu0 0.0
        %2583 = vmatpush1.msra.mxu0 0.0
        %2584 = vmatprep.subr.mxu0 0.0
        %2585 = vmatpush1.msra.mxu0 0.0
        %2586 = vmatprep.subr.mxu0 0.0
        %2587 = vmatpush1.msra.mxu0 0.0
        %2588 = vmatprep.subr.mxu0 0.0
        %2589 = vmatpush1.msra.mxu0 0.0
        %2590 = vmatprep.subr.mxu0 0.0
        %2591 = vmatpush1.msra.mxu0 0.0
        %2592 = vmatprep.subr.mxu0 0.0
        %2593 = vmatpush1.msra.mxu0 0.0
        %2594 = vmatprep.subr.mxu0 0.0
        %2595 = vmatpush1.msra.mxu0 0.0
        %2596 = vmatprep.subr.mxu0 0.0
        %2597 = vmatpush1.msra.mxu0 0.0
        %2598 = vmatprep.subr.mxu0 0.0
        %2599 = vmatpush1.msra.mxu0 0.0
        %2600 = vmatprep.subr.mxu0 0.0
        %2601 = vmatpush1.msra.mxu0 0.0
        %2602 = vmatprep.subr.mxu0 0.0
        %2603 = vmatpush1.msra.mxu0 0.0
        %2604 = vmatprep.mubr.f32.mxu0 0.0
        %2605 = vmatmul.mubr.f32.gmra.mrb[0].mxu0 %v2529
        %v2606 = vpop.f32.mrb[0].mxu0
        %v2607 = vadd.f32 0.0, %v2606
        %v2608 = vpop.f32.mrb[0].mxu0
        %2609 = vmatprep.mubr.f32.mxu0 0.0
        %2610 = vmatmul.mubr.f32.gmra.mrb[0].mxu0 %v2532
        %v2611 = vpop.f32.mrb[0].mxu0
        %v2612 = vadd.f32 0.0, %v2611
        %v2613 = vpop.f32.mrb[0].mxu0
        %2614 = vmatprep.mubr.f32.mxu0 0.0
        %2615 = vmatmul.mubr.f32.gmra.mrb[0].mxu0 %v2535
        %v2616 = vpop.f32.mrb[0].mxu0
        %v2617 = vadd.f32 0.0, %v2616
        %v2618 = vpop.f32.mrb[0].mxu0
        %2619 = vmatprep.mubr.f32.mxu0 0.0
        %2620 = vmatmul.mubr.f32.gmra.mrb[0].mxu0 %v2538
        %v2621 = vpop.f32.mrb[0].mxu0
        %v2622 = vadd.f32 0.0, %v2621
        %v2623 = vpop.f32.mrb[0].mxu0
        %2624 = vdwg.mxu0
        %s2625 = scalar_lea.vmem %s9, 56
        %v2626 = vld [vmem:[%s2625] sm:$0xff]
        %v2628 = vsel %vm1303, %v2607, 0
        %v2631 = vsel %vm1303, %v2612, 0
        %v2634 = vsel %vm1303, %v2617, 0
        %v2637 = vsel %vm1303, %v2622, 0
        %2639 = vmatprep.subr.mxu0 0.0
        %2640 = vmatpush1.msra.mxu0 %v2626
        %2641 = vmatprep.subr.mxu0 0.0
        %2642 = vmatpush1.msra.mxu0 0.0
        %2643 = vmatprep.subr.mxu0 0.0
        %2644 = vmatpush1.msra.mxu0 0.0
        %2645 = vmatprep.subr.mxu0 0.0
        %2646 = vmatpush1.msra.mxu0 0.0
        %2647 = vmatprep.subr.mxu0 0.0
        %2648 = vmatpush1.msra.mxu0 0.0
        %2649 = vmatprep.subr.mxu0 0.0
        %2650 = vmatpush1.msra.mxu0 0.0
        %2651 = vmatprep.subr.mxu0 0.0
        %2652 = vmatpush1.msra.mxu0 0.0
        %2653 = vmatprep.subr.mxu0 0.0
        %2654 = vmatpush1.msra.mxu0 0.0
        %2655 = vmatprep.subr.mxu0 0.0
        %2656 = vmatpush1.msra.mxu0 0.0
        %2657 = vmatprep.subr.mxu0 0.0
        %2658 = vmatpush1.msra.mxu0 0.0
        %2659 = vmatprep.subr.mxu0 0.0
        %2660 = vmatpush1.msra.mxu0 0.0
        %2661 = vmatprep.subr.mxu0 0.0
        %2662 = vmatpush1.msra.mxu0 0.0
        %2663 = vmatprep.subr.mxu0 0.0
        %2664 = vmatpush1.msra.mxu0 0.0
        %2665 = vmatprep.subr.mxu0 0.0
        %2666 = vmatpush1.msra.mxu0 0.0
        %2667 = vmatprep.subr.mxu0 0.0
        %2668 = vmatpush1.msra.mxu0 0.0
        %2669 = vmatprep.subr.mxu0 0.0
        %2670 = vmatpush1.msra.mxu0 0.0
        %2671 = vmatprep.subr.mxu0 0.0
        %2672 = vmatpush1.msra.mxu0 0.0
        %2673 = vmatprep.subr.mxu0 0.0
        %2674 = vmatpush1.msra.mxu0 0.0
        %2675 = vmatprep.subr.mxu0 0.0
        %2676 = vmatpush1.msra.mxu0 0.0
        %2677 = vmatprep.subr.mxu0 0.0
        %2678 = vmatpush1.msra.mxu0 0.0
        %2679 = vmatprep.subr.mxu0 0.0
        %2680 = vmatpush1.msra.mxu0 0.0
        %2681 = vmatprep.subr.mxu0 0.0
        %2682 = vmatpush1.msra.mxu0 0.0
        %2683 = vmatprep.subr.mxu0 0.0
        %2684 = vmatpush1.msra.mxu0 0.0
        %2685 = vmatprep.subr.mxu0 0.0
        %2686 = vmatpush1.msra.mxu0 0.0
        %2687 = vmatprep.subr.mxu0 0.0
        %2688 = vmatpush1.msra.mxu0 0.0
        %2689 = vmatprep.subr.mxu0 0.0
        %2690 = vmatpush1.msra.mxu0 0.0
        %2691 = vmatprep.subr.mxu0 0.0
        %2692 = vmatpush1.msra.mxu0 0.0
        %2693 = vmatprep.subr.mxu0 0.0
        %2694 = vmatpush1.msra.mxu0 0.0
        %2695 = vmatprep.subr.mxu0 0.0
        %2696 = vmatpush1.msra.mxu0 0.0
        %2697 = vmatprep.subr.mxu0 0.0
        %2698 = vmatpush1.msra.mxu0 0.0
        %2699 = vmatprep.subr.mxu0 0.0
        %2700 = vmatpush1.msra.mxu0 0.0
        %2701 = vmatprep.subr.mxu0 0.0
        %2702 = vmatpush1.msra.mxu0 0.0
        %2703 = vmatprep.mubr.f32.mxu0 0.0
        %2704 = vmatmul.mubr.f32.gmra.mrb[0].mxu0 %v2628
        %v2705 = vpop.f32.mrb[0].mxu0
        %v2706 = vadd.f32 0.0, %v2705
        %v2707 = vpop.f32.mrb[0].mxu0
        %2708 = vmatprep.mubr.f32.mxu0 0.0
        %2709 = vmatmul.mubr.f32.gmra.mrb[0].mxu0 %v2631
        %v2710 = vpop.f32.mrb[0].mxu0
        %v2711 = vadd.f32 0.0, %v2710
        %v2712 = vpop.f32.mrb[0].mxu0
        %2713 = vmatprep.mubr.f32.mxu0 0.0
        %2714 = vmatmul.mubr.f32.gmra.mrb[0].mxu0 %v2634
        %v2715 = vpop.f32.mrb[0].mxu0
        %v2716 = vadd.f32 0.0, %v2715
        %v2717 = vpop.f32.mrb[0].mxu0
        %2718 = vmatprep.mubr.f32.mxu0 0.0
        %2719 = vmatmul.mubr.f32.gmra.mrb[0].mxu0 %v2637
        %v2720 = vpop.f32.mrb[0].mxu0
        %v2721 = vadd.f32 0.0, %v2720
        %v2722 = vpop.f32.mrb[0].mxu0
        %2723 = vdwg.mxu0
        %v2724 = vadd.f32 %v2519, %v2706
        %v2725 = vadd.f32 %v2520, %v2711
        %v2726 = vadd.f32 %v2521, %v2716
        %v2727 = vadd.f32 %v2522, %v2721
        %s2728 = scalar_lea.vmem %s7, 256
        %v2729 = vld [vmem:[%s2728] sm:$0xff]
        %v2730 = vld [vmem:[%s2728 + $0x8] sm:$0xff]
        %v2731 = vld [vmem:[%s2728 + $0x10] sm:$0xff]
        %v2732 = vld [vmem:[%s2728 + $0x18] sm:$0xff]
        %v2734 = vsel %vm1100, %v2729, 0
        %v2737 = vsel %vm1100, %v2730, 0
        %v2740 = vsel %vm1100, %v2731, 0
        %v2743 = vsel %vm1100, %v2732, 0
        %2745 = vmatprep.subr.mxu0 0.0
        %2746 = vmatpush1.msra.mxu0 %v1078
        %2747 = vmatprep.subr.mxu0 0.0
        %2748 = vmatpush1.msra.mxu0 %v1083
        %2749 = vmatprep.subr.mxu0 0.0
        %2750 = vmatpush1.msra.mxu0 %v1088
        %2751 = vmatprep.subr.mxu0 0.0
        %2752 = vmatpush1.msra.mxu0 %v1093
        %2753 = vmatprep.subr.mxu0 0.0
        %2754 = vmatpush1.msra.mxu0 0.0
        %2755 = vmatprep.subr.mxu0 0.0
        %2756 = vmatpush1.msra.mxu0 0.0
        %2757 = vmatprep.subr.mxu0 0.0
        %2758 = vmatpush1.msra.mxu0 0.0
        %2759 = vmatprep.subr.mxu0 0.0
        %2760 = vmatpush1.msra.mxu0 0.0
        %2761 = vmatprep.subr.mxu0 0.0
        %2762 = vmatpush1.msra.mxu0 0.0
        %2763 = vmatprep.subr.mxu0 0.0
        %2764 = vmatpush1.msra.mxu0 0.0
        %2765 = vmatprep.subr.mxu0 0.0
        %2766 = vmatpush1.msra.mxu0 0.0
        %2767 = vmatprep.subr.mxu0 0.0
        %2768 = vmatpush1.msra.mxu0 0.0
        %2769 = vmatprep.subr.mxu0 0.0
        %2770 = vmatpush1.msra.mxu0 0.0
        %2771 = vmatprep.subr.mxu0 0.0
        %2772 = vmatpush1.msra.mxu0 0.0
        %2773 = vmatprep.subr.mxu0 0.0
        %2774 = vmatpush1.msra.mxu0 0.0
        %2775 = vmatprep.subr.mxu0 0.0
        %2776 = vmatpush1.msra.mxu0 0.0
        %2777 = vmatprep.subr.mxu0 0.0
        %2778 = vmatpush1.msra.mxu0 0.0
        %2779 = vmatprep.subr.mxu0 0.0
        %2780 = vmatpush1.msra.mxu0 0.0
        %2781 = vmatprep.subr.mxu0 0.0
        %2782 = vmatpush1.msra.mxu0 0.0
        %2783 = vmatprep.subr.mxu0 0.0
        %2784 = vmatpush1.msra.mxu0 0.0
        %2785 = vmatprep.subr.mxu0 0.0
        %2786 = vmatpush1.msra.mxu0 0.0
        %2787 = vmatprep.subr.mxu0 0.0
        %2788 = vmatpush1.msra.mxu0 0.0
        %2789 = vmatprep.subr.mxu0 0.0
        %2790 = vmatpush1.msra.mxu0 0.0
        %2791 = vmatprep.subr.mxu0 0.0
        %2792 = vmatpush1.msra.mxu0 0.0
        %2793 = vmatprep.subr.mxu0 0.0
        %2794 = vmatpush1.msra.mxu0 0.0
        %2795 = vmatprep.subr.mxu0 0.0
        %2796 = vmatpush1.msra.mxu0 0.0
        %2797 = vmatprep.subr.mxu0 0.0
        %2798 = vmatpush1.msra.mxu0 0.0
        %2799 = vmatprep.subr.mxu0 0.0
        %2800 = vmatpush1.msra.mxu0 0.0
        %2801 = vmatprep.subr.mxu0 0.0
        %2802 = vmatpush1.msra.mxu0 0.0
        %2803 = vmatprep.subr.mxu0 0.0
        %2804 = vmatpush1.msra.mxu0 0.0
        %2805 = vmatprep.subr.mxu0 0.0
        %2806 = vmatpush1.msra.mxu0 0.0
        %2807 = vmatprep.subr.mxu0 0.0
        %2808 = vmatpush1.msra.mxu0 0.0
        %2809 = vmatprep.mubr.f32.mxu0 0.0
        %2810 = vmatmul.mubr.f32.gmra.mrb[0].mxu0 %v2734
        %v2811 = vpop.f32.mrb[0].mxu0
        %v2812 = vadd.f32 0.0, %v2811
        %v2813 = vpop.f32.mrb[0].mxu0
        %2814 = vmatprep.mubr.f32.mxu0 0.0
        %2815 = vmatmul.mubr.f32.gmra.mrb[0].mxu0 %v2737
        %v2816 = vpop.f32.mrb[0].mxu0
        %v2817 = vadd.f32 0.0, %v2816
        %v2818 = vpop.f32.mrb[0].mxu0
        %2819 = vmatprep.mubr.f32.mxu0 0.0
        %2820 = vmatmul.mubr.f32.gmra.mrb[0].mxu0 %v2740
        %v2821 = vpop.f32.mrb[0].mxu0
        %v2822 = vadd.f32 0.0, %v2821
        %v2823 = vpop.f32.mrb[0].mxu0
        %2824 = vmatprep.mubr.f32.mxu0 0.0
        %2825 = vmatmul.mubr.f32.gmra.mrb[0].mxu0 %v2743
        %v2826 = vpop.f32.mrb[0].mxu0
        %v2827 = vadd.f32 0.0, %v2826
        %v2828 = vpop.f32.mrb[0].mxu0
        %2829 = vdwg.mxu0
        %s2830 = scalar_lea.vmem %s9, 64
        %v2831 = vld [vmem:[%s2830] sm:$0xff]
        %v2833 = vsel %vm1303, %v2812, 0
        %v2836 = vsel %vm1303, %v2817, 0
        %v2839 = vsel %vm1303, %v2822, 0
        %v2842 = vsel %vm1303, %v2827, 0
        %2844 = vmatprep.subr.mxu0 0.0
        %2845 = vmatpush1.msra.mxu0 %v2831
        %2846 = vmatprep.subr.mxu0 0.0
        %2847 = vmatpush1.msra.mxu0 0.0
        %2848 = vmatprep.subr.mxu0 0.0
        %2849 = vmatpush1.msra.mxu0 0.0
        %2850 = vmatprep.subr.mxu0 0.0
        %2851 = vmatpush1.msra.mxu0 0.0
        %2852 = vmatprep.subr.mxu0 0.0
        %2853 = vmatpush1.msra.mxu0 0.0
        %2854 = vmatprep.subr.mxu0 0.0
        %2855 = vmatpush1.msra.mxu0 0.0
        %2856 = vmatprep.subr.mxu0 0.0
        %2857 = vmatpush1.msra.mxu0 0.0
        %2858 = vmatprep.subr.mxu0 0.0
        %2859 = vmatpush1.msra.mxu0 0.0
        %2860 = vmatprep.subr.mxu0 0.0
        %2861 = vmatpush1.msra.mxu0 0.0
        %2862 = vmatprep.subr.mxu0 0.0
        %2863 = vmatpush1.msra.mxu0 0.0
        %2864 = vmatprep.subr.mxu0 0.0
        %2865 = vmatpush1.msra.mxu0 0.0
        %2866 = vmatprep.subr.mxu0 0.0
        %2867 = vmatpush1.msra.mxu0 0.0
        %2868 = vmatprep.subr.mxu0 0.0
        %2869 = vmatpush1.msra.mxu0 0.0
        %2870 = vmatprep.subr.mxu0 0.0
        %2871 = vmatpush1.msra.mxu0 0.0
        %2872 = vmatprep.subr.mxu0 0.0
        %2873 = vmatpush1.msra.mxu0 0.0
        %2874 = vmatprep.subr.mxu0 0.0
        %2875 = vmatpush1.msra.mxu0 0.0
        %2876 = vmatprep.subr.mxu0 0.0
        %2877 = vmatpush1.msra.mxu0 0.0
        %2878 = vmatprep.subr.mxu0 0.0
        %2879 = vmatpush1.msra.mxu0 0.0
        %2880 = vmatprep.subr.mxu0 0.0
        %2881 = vmatpush1.msra.mxu0 0.0
        %2882 = vmatprep.subr.mxu0 0.0
        %2883 = vmatpush1.msra.mxu0 0.0
        %2884 = vmatprep.subr.mxu0 0.0
        %2885 = vmatpush1.msra.mxu0 0.0
        %2886 = vmatprep.subr.mxu0 0.0
        %2887 = vmatpush1.msra.mxu0 0.0
        %2888 = vmatprep.subr.mxu0 0.0
        %2889 = vmatpush1.msra.mxu0 0.0
        %2890 = vmatprep.subr.mxu0 0.0
        %2891 = vmatpush1.msra.mxu0 0.0
        %2892 = vmatprep.subr.mxu0 0.0
        %2893 = vmatpush1.msra.mxu0 0.0
        %2894 = vmatprep.subr.mxu0 0.0
        %2895 = vmatpush1.msra.mxu0 0.0
        %2896 = vmatprep.subr.mxu0 0.0
        %2897 = vmatpush1.msra.mxu0 0.0
        %2898 = vmatprep.subr.mxu0 0.0
        %2899 = vmatpush1.msra.mxu0 0.0
        %2900 = vmatprep.subr.mxu0 0.0
        %2901 = vmatpush1.msra.mxu0 0.0
        %2902 = vmatprep.subr.mxu0 0.0
        %2903 = vmatpush1.msra.mxu0 0.0
        %2904 = vmatprep.subr.mxu0 0.0
        %2905 = vmatpush1.msra.mxu0 0.0
        %2906 = vmatprep.subr.mxu0 0.0
        %2907 = vmatpush1.msra.mxu0 0.0
        %2908 = vmatprep.mubr.f32.mxu0 0.0
        %2909 = vmatmul.mubr.f32.gmra.mrb[0].mxu0 %v2833
        %v2910 = vpop.f32.mrb[0].mxu0
        %v2911 = vadd.f32 0.0, %v2910
        %v2912 = vpop.f32.mrb[0].mxu0
        %2913 = vmatprep.mubr.f32.mxu0 0.0
        %2914 = vmatmul.mubr.f32.gmra.mrb[0].mxu0 %v2836
        %v2915 = vpop.f32.mrb[0].mxu0
        %v2916 = vadd.f32 0.0, %v2915
        %v2917 = vpop.f32.mrb[0].mxu0
        %2918 = vmatprep.mubr.f32.mxu0 0.0
        %2919 = vmatmul.mubr.f32.gmra.mrb[0].mxu0 %v2839
        %v2920 = vpop.f32.mrb[0].mxu0
        %v2921 = vadd.f32 0.0, %v2920
        %v2922 = vpop.f32.mrb[0].mxu0
        %2923 = vmatprep.mubr.f32.mxu0 0.0
        %2924 = vmatmul.mubr.f32.gmra.mrb[0].mxu0 %v2842
        %v2925 = vpop.f32.mrb[0].mxu0
        %v2926 = vadd.f32 0.0, %v2925
        %v2927 = vpop.f32.mrb[0].mxu0
        %2928 = vdwg.mxu0
        %v2929 = vadd.f32 %v2724, %v2911
        %v2930 = vadd.f32 %v2725, %v2916
        %v2931 = vadd.f32 %v2726, %v2921
        %v2932 = vadd.f32 %v2727, %v2926
        %v2933 = vld [vmem:[%s11] sm:$0x1]
        %v2935 = vlaneseq
        %v2936 = vshrl.u32 %v2935, 7
        %v2937 = vsub.s32 0, %v2936
        %v2938 = vrot.slane %v2933, %v2937
        %v2940 = vadd.f32 %v2929, %v2938
        %v2941 = vadd.f32 %v2930, %v2938
        %v2942 = vadd.f32 %v2931, %v2938
        %v2943 = vadd.f32 %v2932, %v2938
        %v2944 = vmax.f32 %v2940, 0.0
        %v2945 = vmax.f32 %v2941, 0.0
        %v2946 = vmax.f32 %v2942, 0.0
        %v2947 = vmax.f32 %v2943, 0.0
        %v2948 = vld [vmem:[%s13] sm:$0xff]
        %v2949 = vld [vmem:[%s13 + $0x8] sm:$0xff]
        %v2950 = vld [vmem:[%s15] sm:$0xff]
        %v2951 = vld [vmem:[%s15 + $0x8] sm:$0xff]
        %v2952 = vld [vmem:[%s15 + $0x10] sm:$0xff]
        %v2953 = vld [vmem:[%s15 + $0x18] sm:$0xff]
        %v2955 = vsel %vm998, %v2944, 0
        %v2958 = vsel %vm998, %v2945, 0
        %v2961 = vsel %vm998, %v2946, 0
        %v2964 = vsel %vm998, %v2947, 0
        %2966 = vmatprep.subr.mxu0 0.0
        %2967 = vmatpush1.msra.mxu0 %v2948
        %2968 = vmatprep.subr.mxu0 0.0
        %2969 = vmatpush1.msra.mxu0 %v2949
        %2970 = vmatprep.subr.mxu0 0.0
        %2971 = vmatpush1.msra.mxu0 0.0
        %2972 = vmatprep.subr.mxu0 0.0
        %2973 = vmatpush1.msra.mxu0 0.0
        %2974 = vmatprep.subr.mxu0 0.0
        %2975 = vmatpush1.msra.mxu0 0.0
        %2976 = vmatprep.subr.mxu0 0.0
        %2977 = vmatpush1.msra.mxu0 0.0
        %2978 = vmatprep.subr.mxu0 0.0
        %2979 = vmatpush1.msra.mxu0 0.0
        %2980 = vmatprep.subr.mxu0 0.0
        %2981 = vmatpush1.msra.mxu0 0.0
        %2982 = vmatprep.subr.mxu0 0.0
        %2983 = vmatpush1.msra.mxu0 0.0
        %2984 = vmatprep.subr.mxu0 0.0
        %2985 = vmatpush1.msra.mxu0 0.0
        %2986 = vmatprep.subr.mxu0 0.0
        %2987 = vmatpush1.msra.mxu0 0.0
        %2988 = vmatprep.subr.mxu0 0.0
        %2989 = vmatpush1.msra.mxu0 0.0
        %2990 = vmatprep.subr.mxu0 0.0
        %2991 = vmatpush1.msra.mxu0 0.0
        %2992 = vmatprep.subr.mxu0 0.0
        %2993 = vmatpush1.msra.mxu0 0.0
        %2994 = vmatprep.subr.mxu0 0.0
        %2995 = vmatpush1.msra.mxu0 0.0
        %2996 = vmatprep.subr.mxu0 0.0
        %2997 = vmatpush1.msra.mxu0 0.0
        %2998 = vmatprep.subr.mxu0 0.0
        %2999 = vmatpush1.msra.mxu0 0.0
        %3000 = vmatprep.subr.mxu0 0.0
        %3001 = vmatpush1.msra.mxu0 0.0
        %3002 = vmatprep.subr.mxu0 0.0
        %3003 = vmatpush1.msra.mxu0 0.0
        %3004 = vmatprep.subr.mxu0 0.0
        %3005 = vmatpush1.msra.mxu0 0.0
        %3006 = vmatprep.subr.mxu0 0.0
        %3007 = vmatpush1.msra.mxu0 0.0
        %3008 = vmatprep.subr.mxu0 0.0
        %3009 = vmatpush1.msra.mxu0 0.0
        %3010 = vmatprep.subr.mxu0 0.0
        %3011 = vmatpush1.msra.mxu0 0.0
        %3012 = vmatprep.subr.mxu0 0.0
        %3013 = vmatpush1.msra.mxu0 0.0
        %3014 = vmatprep.subr.mxu0 0.0
        %3015 = vmatpush1.msra.mxu0 0.0
        %3016 = vmatprep.subr.mxu0 0.0
        %3017 = vmatpush1.msra.mxu0 0.0
        %3018 = vmatprep.subr.mxu0 0.0
        %3019 = vmatpush1.msra.mxu0 0.0
        %3020 = vmatprep.subr.mxu0 0.0
        %3021 = vmatpush1.msra.mxu0 0.0
        %3022 = vmatprep.subr.mxu0 0.0
        %3023 = vmatpush1.msra.mxu0 0.0
        %3024 = vmatprep.subr.mxu0 0.0
        %3025 = vmatpush1.msra.mxu0 0.0
        %3026 = vmatprep.subr.mxu0 0.0
        %3027 = vmatpush1.msra.mxu0 0.0
        %3028 = vmatprep.subr.mxu0 0.0
        %3029 = vmatpush1.msra.mxu0 0.0
        %3030 = vmatprep.mubr.f32.mxu0 0.0
        %3031 = vmatmul.mubr.f32.gmra.mrb[0].mxu0 %v2955
        %v3032 = vpop.f32.mrb[0].mxu0
        %v3033 = vadd.f32 %v2950, %v3032
        %v3034 = vpop.f32.mrb[0].mxu0
        %3035 = vmatprep.mubr.f32.mxu0 0.0
        %3036 = vmatmul.mubr.f32.gmra.mrb[0].mxu0 %v2958
        %v3037 = vpop.f32.mrb[0].mxu0
        %v3038 = vadd.f32 %v2951, %v3037
        %v3039 = vpop.f32.mrb[0].mxu0
        %3040 = vmatprep.mubr.f32.mxu0 0.0
        %3041 = vmatmul.mubr.f32.gmra.mrb[0].mxu0 %v2961
        %v3042 = vpop.f32.mrb[0].mxu0
        %v3043 = vadd.f32 %v2952, %v3042
        %v3044 = vpop.f32.mrb[0].mxu0
        %3045 = vmatprep.mubr.f32.mxu0 0.0
        %3046 = vmatmul.mubr.f32.gmra.mrb[0].mxu0 %v2964
        %v3047 = vpop.f32.mrb[0].mxu0
        %v3048 = vadd.f32 %v2953, %v3047
        %v3049 = vpop.f32.mrb[0].mxu0
        %3050 = vdwg.mxu0
        %v3051 = vld [vmem:[%s17] sm:$0xff]
        %v3052 = vld [vmem:[%s17 + $0x8] sm:$0xff]
        %v3053 = vld [vmem:[%s17 + $0x10] sm:$0xff]
        %v3054 = vld [vmem:[%s17 + $0x18] sm:$0xff]
        %v3055 = vld [vmem:[%s19] sm:$0x1]
        %v3057 = vlaneseq
        %v3058 = vshrl.u32 %v3057, 7
        %v3059 = vsub.s32 0, %v3058
        %v3060 = vrot.slane %v3055, %v3059
        %v3063 = vsel %vm1100, %v3033, 0
        %v3066 = vsel %vm1100, %v3038, 0
        %v3069 = vsel %vm1100, %v3043, 0
        %v3072 = vsel %vm1100, %v3048, 0
        %3074 = vmatprep.subr.mxu0 0.0
        %3075 = vmatpush1.msra.mxu0 %v3051
        %3076 = vmatprep.subr.mxu0 0.0
        %3077 = vmatpush1.msra.mxu0 %v3052
        %3078 = vmatprep.subr.mxu0 0.0
        %3079 = vmatpush1.msra.mxu0 %v3053
        %3080 = vmatprep.subr.mxu0 0.0
        %3081 = vmatpush1.msra.mxu0 %v3054
        %3082 = vmatprep.subr.mxu0 0.0
        %3083 = vmatpush1.msra.mxu0 0.0
        %3084 = vmatprep.subr.mxu0 0.0
        %3085 = vmatpush1.msra.mxu0 0.0
        %3086 = vmatprep.subr.mxu0 0.0
        %3087 = vmatpush1.msra.mxu0 0.0
        %3088 = vmatprep.subr.mxu0 0.0
        %3089 = vmatpush1.msra.mxu0 0.0
        %3090 = vmatprep.subr.mxu0 0.0
        %3091 = vmatpush1.msra.mxu0 0.0
        %3092 = vmatprep.subr.mxu0 0.0
        %3093 = vmatpush1.msra.mxu0 0.0
        %3094 = vmatprep.subr.mxu0 0.0
        %3095 = vmatpush1.msra.mxu0 0.0
        %3096 = vmatprep.subr.mxu0 0.0
        %3097 = vmatpush1.msra.mxu0 0.0
        %3098 = vmatprep.subr.mxu0 0.0
        %3099 = vmatpush1.msra.mxu0 0.0
        %3100 = vmatprep.subr.mxu0 0.0
        %3101 = vmatpush1.msra.mxu0 0.0
        %3102 = vmatprep.subr.mxu0 0.0
        %3103 = vmatpush1.msra.mxu0 0.0
        %3104 = vmatprep.subr.mxu0 0.0
        %3105 = vmatpush1.msra.mxu0 0.0
        %3106 = vmatprep.subr.mxu0 0.0
        %3107 = vmatpush1.msra.mxu0 0.0
        %3108 = vmatprep.subr.mxu0 0.0
        %3109 = vmatpush1.msra.mxu0 0.0
        %3110 = vmatprep.subr.mxu0 0.0
        %3111 = vmatpush1.msra.mxu0 0.0
        %3112 = vmatprep.subr.mxu0 0.0
        %3113 = vmatpush1.msra.mxu0 0.0
        %3114 = vmatprep.subr.mxu0 0.0
        %3115 = vmatpush1.msra.mxu0 0.0
        %3116 = vmatprep.subr.mxu0 0.0
        %3117 = vmatpush1.msra.mxu0 0.0
        %3118 = vmatprep.subr.mxu0 0.0
        %3119 = vmatpush1.msra.mxu0 0.0
        %3120 = vmatprep.subr.mxu0 0.0
        %3121 = vmatpush1.msra.mxu0 0.0
        %3122 = vmatprep.subr.mxu0 0.0
        %3123 = vmatpush1.msra.mxu0 0.0
        %3124 = vmatprep.subr.mxu0 0.0
        %3125 = vmatpush1.msra.mxu0 0.0
        %3126 = vmatprep.subr.mxu0 0.0
        %3127 = vmatpush1.msra.mxu0 0.0
        %3128 = vmatprep.subr.mxu0 0.0
        %3129 = vmatpush1.msra.mxu0 0.0
        %3130 = vmatprep.subr.mxu0 0.0
        %3131 = vmatpush1.msra.mxu0 0.0
        %3132 = vmatprep.subr.mxu0 0.0
        %3133 = vmatpush1.msra.mxu0 0.0
        %3134 = vmatprep.subr.mxu0 0.0
        %3135 = vmatpush1.msra.mxu0 0.0
        %3136 = vmatprep.subr.mxu0 0.0
        %3137 = vmatpush1.msra.mxu0 0.0
        %3138 = vmatprep.mubr.f32.mxu0 0.0
        %3139 = vmatmul.mubr.f32.gmra.mrb[0].mxu0 %v3063
        %v3140 = vpop.f32.mrb[0].mxu0
        %v3141 = vadd.f32 %v3060, %v3140
        %v3142 = vpop.f32.mrb[0].mxu0
        %3143 = vmatprep.mubr.f32.mxu0 0.0
        %3144 = vmatmul.mubr.f32.gmra.mrb[0].mxu0 %v3066
        %v3145 = vpop.f32.mrb[0].mxu0
        %v3146 = vadd.f32 %v3060, %v3145
        %v3147 = vpop.f32.mrb[0].mxu0
        %3148 = vmatprep.mubr.f32.mxu0 0.0
        %3149 = vmatmul.mubr.f32.gmra.mrb[0].mxu0 %v3069
        %v3150 = vpop.f32.mrb[0].mxu0
        %v3151 = vadd.f32 %v3060, %v3150
        %v3152 = vpop.f32.mrb[0].mxu0
        %3153 = vmatprep.mubr.f32.mxu0 0.0
        %3154 = vmatmul.mubr.f32.gmra.mrb[0].mxu0 %v3072
        %v3155 = vpop.f32.mrb[0].mxu0
        %v3156 = vadd.f32 %v3060, %v3155
        %v3157 = vpop.f32.mrb[0].mxu0
        %3158 = vdwg.mxu0
        %v3159 = vld [vmem:[%s21] sm:$0xff]
        %v3160 = vld [vmem:[%s21 + $0x8] sm:$0xff]
        %v3161 = vld [vmem:[%s21 + $0x10] sm:$0xff]
        %v3162 = vld [vmem:[%s21 + $0x18] sm:$0xff]
        %v3163 = vmul.f32 %v3141, 0.35355338
        %v3164 = vmul.f32 %v3146, 0.35355338
        %v3165 = vmul.f32 %v3151, 0.35355338
        %v3166 = vmul.f32 %v3156, 0.35355338
        %3171 = vrot.lane.b32.xlu0 %v3141, 96
        %v3172 = vpop.permute.xlu0 %3171
        %3173 = vrot.lane.b32.xlu0 %v3146, 96
        %v3174 = vpop.permute.xlu0 %3173
        %3175 = vrot.lane.b32.xlu0 %v3151, 96
        %v3176 = vpop.permute.xlu0 %3175
        %3177 = vrot.lane.b32.xlu0 %v3156, 96
        %v3178 = vpop.permute.xlu0 %3177
        %v3180 = vsel %vm1303, %v3163, 0
        %v3183 = vsel %vm1303, %v3164, 0
        %v3186 = vsel %vm1303, %v3165, 0
        %v3189 = vsel %vm1303, %v3166, 0
        %v3191 = vsel %vm1303, %v3172, 0
        %v3193 = vsel %vm1303, %v3174, 0
        %v3195 = vsel %vm1303, %v3176, 0
        %v3197 = vsel %vm1303, %v3178, 0
        %3199 = vmatprep.subr.mxu0 0.0
        %3200 = vmatpush1.xpose.msra.mxu0 %v3191
        %3201 = vmatprep.subr.mxu0 0.0
        %3202 = vmatpush1.xpose.msra.mxu0 %v3193
        %3203 = vmatprep.subr.mxu0 0.0
        %3204 = vmatpush1.xpose.msra.mxu0 %v3195
        %3205 = vmatprep.subr.mxu0 0.0
        %3206 = vmatpush1.xpose.msra.mxu0 %v3197
        %3207 = vmatprep.subr.mxu0 0.0
        %3208 = vmatpush1.xpose.msra.mxu0 0.0
        %3209 = vmatprep.subr.mxu0 0.0
        %3210 = vmatpush1.xpose.msra.mxu0 0.0
        %3211 = vmatprep.subr.mxu0 0.0
        %3212 = vmatpush1.xpose.msra.mxu0 0.0
        %3213 = vmatprep.subr.mxu0 0.0
        %3214 = vmatpush1.xpose.msra.mxu0 0.0
        %3215 = vmatprep.subr.mxu0 0.0
        %3216 = vmatpush1.xpose.msra.mxu0 0.0
        %3217 = vmatprep.subr.mxu0 0.0
        %3218 = vmatpush1.xpose.msra.mxu0 0.0
        %3219 = vmatprep.subr.mxu0 0.0
        %3220 = vmatpush1.xpose.msra.mxu0 0.0
        %3221 = vmatprep.subr.mxu0 0.0
        %3222 = vmatpush1.xpose.msra.mxu0 0.0
        %3223 = vmatprep.subr.mxu0 0.0
        %3224 = vmatpush1.xpose.msra.mxu0 0.0
        %3225 = vmatprep.subr.mxu0 0.0
        %3226 = vmatpush1.xpose.msra.mxu0 0.0
        %3227 = vmatprep.subr.mxu0 0.0
        %3228 = vmatpush1.xpose.msra.mxu0 0.0
        %3229 = vmatprep.subr.mxu0 0.0
        %3230 = vmatpush1.xpose.msra.mxu0 0.0
        %3231 = vmatprep.subr.mxu0 0.0
        %3232 = vmatpush1.xpose.msra.mxu0 0.0
        %3233 = vmatprep.subr.mxu0 0.0
        %3234 = vmatpush1.xpose.msra.mxu0 0.0
        %3235 = vmatprep.subr.mxu0 0.0
        %3236 = vmatpush1.xpose.msra.mxu0 0.0
        %3237 = vmatprep.subr.mxu0 0.0
        %3238 = vmatpush1.xpose.msra.mxu0 0.0
        %3239 = vmatprep.subr.mxu0 0.0
        %3240 = vmatpush1.xpose.msra.mxu0 0.0
        %3241 = vmatprep.subr.mxu0 0.0
        %3242 = vmatpush1.xpose.msra.mxu0 0.0
        %3243 = vmatprep.subr.mxu0 0.0
        %3244 = vmatpush1.xpose.msra.mxu0 0.0
        %3245 = vmatprep.subr.mxu0 0.0
        %3246 = vmatpush1.xpose.msra.mxu0 0.0
        %3247 = vmatprep.subr.mxu0 0.0
        %3248 = vmatpush1.xpose.msra.mxu0 0.0
        %3249 = vmatprep.subr.mxu0 0.0
        %3250 = vmatpush1.xpose.msra.mxu0 0.0
        %3251 = vmatprep.subr.mxu0 0.0
        %3252 = vmatpush1.xpose.msra.mxu0 0.0
        %3253 = vmatprep.subr.mxu0 0.0
        %3254 = vmatpush1.xpose.msra.mxu0 0.0
        %3255 = vmatprep.subr.mxu0 0.0
        %3256 = vmatpush1.xpose.msra.mxu0 0.0
        %3257 = vmatprep.subr.mxu0 0.0
        %3258 = vmatpush1.xpose.msra.mxu0 0.0
        %3259 = vmatprep.subr.mxu0 0.0
        %3260 = vmatpush1.xpose.msra.mxu0 0.0
        %3261 = vmatprep.subr.mxu0 0.0
        %3262 = vmatpush1.xpose.msra.mxu0 0.0
        %3263 = vmatprep.mubr.f32.mxu0 0.0
        %3264 = vmatmul.mubr.f32.gmra.mrb[0].mxu0 %v3180
        %v3265 = vpop.f32.mrb[0].mxu0
        %v3266 = vadd.f32 0.0, %v3265
        %v3267 = vpop.f32.mrb[0].mxu0
        %3268 = vmatprep.mubr.f32.mxu0 0.0
        %3269 = vmatmul.mubr.f32.gmra.mrb[0].mxu0 %v3183
        %v3270 = vpop.f32.mrb[0].mxu0
        %v3271 = vadd.f32 0.0, %v3270
        %v3272 = vpop.f32.mrb[0].mxu0
        %3273 = vmatprep.mubr.f32.mxu0 0.0
        %3274 = vmatmul.mubr.f32.gmra.mrb[0].mxu0 %v3186
        %v3275 = vpop.f32.mrb[0].mxu0
        %v3276 = vadd.f32 0.0, %v3275
        %v3277 = vpop.f32.mrb[0].mxu0
        %3278 = vmatprep.mubr.f32.mxu0 0.0
        %3279 = vmatmul.mubr.f32.gmra.mrb[0].mxu0 %v3189
        %v3280 = vpop.f32.mrb[0].mxu0
        %v3281 = vadd.f32 0.0, %v3280
        %v3282 = vpop.f32.mrb[0].mxu0
        %3283 = vdwg.mxu0
        %v3284 = vsel %vm1100, %v3266, -inf
        %3285 = vmax.xlane.f32.xlu0 %v3284
        %v3286 = vpop.xlane.xlu0 %3285
        %v3287 = vsel %vm1100, %v3271, -inf
        %3288 = vmax.xlane.f32.xlu0 %v3287
        %v3289 = vpop.xlane.xlu0 %3288
        %v3290 = vsel %vm1100, %v3276, -inf
        %3291 = vmax.xlane.f32.xlu0 %v3290
        %v3292 = vpop.xlane.xlu0 %3291
        %v3293 = vsel %vm1100, %v3281, -inf
        %3294 = vmax.xlane.f32.xlu0 %v3293
        %v3295 = vpop.xlane.xlu0 %3294
        %v3296 = vsub.f32 %v3266, %v3286
        %v3297 = vsub.f32 %v3271, %v3289
        %v3298 = vsub.f32 %v3276, %v3292
        %v3299 = vsub.f32 %v3281, %v3295
        %v3300 = vmul.f32 %v3296, 1.442695
        %v3301 = vpow.pop %v3300
        %v3302 = vmul.f32 %v3297, 1.442695
        %v3303 = vpow.pop %v3302
        %v3304 = vmul.f32 %v3298, 1.442695
        %v3305 = vpow.pop %v3304
        %v3306 = vmul.f32 %v3299, 1.442695
        %v3307 = vpow.pop %v3306
        %v3308 = vsel %vm1100, %v3301, 0.0
        %3309 = vadd.xlane.f32.xlu0 %v3308
        %v3310 = vpop.xlane.xlu0 %3309
        %v3311 = vsel %vm1100, %v3303, 0.0
        %3312 = vadd.xlane.f32.xlu0 %v3311
        %v3313 = vpop.xlane.xlu0 %3312
        %v3314 = vsel %vm1100, %v3305, 0.0
        %3315 = vadd.xlane.f32.xlu0 %v3314
        %v3316 = vpop.xlane.xlu0 %3315
        %v3317 = vsel %vm1100, %v3307, 0.0
        %3318 = vadd.xlane.f32.xlu0 %v3317
        %v3319 = vpop.xlane.xlu0 %3318
        %v3320 = vrcp.pop %v3310
        %v3321 = vrcp.pop %v3313
        %v3322 = vrcp.pop %v3316
        %v3323 = vrcp.pop %v3319
        %v3324 = vmul.f32 %v3301, %v3320
        %v3325 = vmul.f32 %v3303, %v3321
        %v3326 = vmul.f32 %v3305, %v3322
        %v3327 = vmul.f32 %v3307, %v3323
        %3328 = vrot.lane.b32.xlu0 %v3141, 64
        %v3329 = vpop.permute.xlu0 %3328
        %3330 = vrot.lane.b32.xlu0 %v3146, 64
        %v3331 = vpop.permute.xlu0 %3330
        %3332 = vrot.lane.b32.xlu0 %v3151, 64
        %v3333 = vpop.permute.xlu0 %3332
        %3334 = vrot.lane.b32.xlu0 %v3156, 64
        %v3335 = vpop.permute.xlu0 %3334
        %v3336 = vsel %vm1303, %v3329, 0
        %v3338 = vsel %vm1303, %v3331, 0
        %v3340 = vsel %vm1303, %v3333, 0
        %v3342 = vsel %vm1303, %v3335, 0
        %3344 = vmatprep.subr.mxu0 0.0
        %3345 = vmatpush1.msra.mxu0 %v3159
        %3346 = vmatprep.subr.mxu0 0.0
        %3347 = vmatpush1.msra.mxu0 0.0
        %3348 = vmatprep.subr.mxu0 0.0
        %3349 = vmatpush1.msra.mxu0 0.0
        %3350 = vmatprep.subr.mxu0 0.0
        %3351 = vmatpush1.msra.mxu0 0.0
        %3352 = vmatprep.subr.mxu0 0.0
        %3353 = vmatpush1.msra.mxu0 0.0
        %3354 = vmatprep.subr.mxu0 0.0
        %3355 = vmatpush1.msra.mxu0 0.0
        %3356 = vmatprep.subr.mxu0 0.0
        %3357 = vmatpush1.msra.mxu0 0.0
        %3358 = vmatprep.subr.mxu0 0.0
        %3359 = vmatpush1.msra.mxu0 0.0
        %3360 = vmatprep.subr.mxu0 0.0
        %3361 = vmatpush1.msra.mxu0 0.0
        %3362 = vmatprep.subr.mxu0 0.0
        %3363 = vmatpush1.msra.mxu0 0.0
        %3364 = vmatprep.subr.mxu0 0.0
        %3365 = vmatpush1.msra.mxu0 0.0
        %3366 = vmatprep.subr.mxu0 0.0
        %3367 = vmatpush1.msra.mxu0 0.0
        %3368 = vmatprep.subr.mxu0 0.0
        %3369 = vmatpush1.msra.mxu0 0.0
        %3370 = vmatprep.subr.mxu0 0.0
        %3371 = vmatpush1.msra.mxu0 0.0
        %3372 = vmatprep.subr.mxu0 0.0
        %3373 = vmatpush1.msra.mxu0 0.0
        %3374 = vmatprep.subr.mxu0 0.0
        %3375 = vmatpush1.msra.mxu0 0.0
        %3376 = vmatprep.subr.mxu0 0.0
        %3377 = vmatpush1.msra.mxu0 0.0
        %3378 = vmatprep.subr.mxu0 0.0
        %3379 = vmatpush1.msra.mxu0 0.0
        %3380 = vmatprep.subr.mxu0 0.0
        %3381 = vmatpush1.msra.mxu0 0.0
        %3382 = vmatprep.subr.mxu0 0.0
        %3383 = vmatpush1.msra.mxu0 0.0
        %3384 = vmatprep.subr.mxu0 0.0
        %3385 = vmatpush1.msra.mxu0 0.0
        %3386 = vmatprep.subr.mxu0 0.0
        %3387 = vmatpush1.msra.mxu0 0.0
        %3388 = vmatprep.subr.mxu0 0.0
        %3389 = vmatpush1.msra.mxu0 0.0
        %3390 = vmatprep.subr.mxu0 0.0
        %3391 = vmatpush1.msra.mxu0 0.0
        %3392 = vmatprep.subr.mxu0 0.0
        %3393 = vmatpush1.msra.mxu0 0.0
        %3394 = vmatprep.subr.mxu0 0.0
        %3395 = vmatpush1.msra.mxu0 0.0
        %3396 = vmatprep.subr.mxu0 0.0
        %3397 = vmatpush1.msra.mxu0 0.0
        %3398 = vmatprep.subr.mxu0 0.0
        %3399 = vmatpush1.msra.mxu0 0.0
        %3400 = vmatprep.subr.mxu0 0.0
        %3401 = vmatpush1.msra.mxu0 0.0
        %3402 = vmatprep.subr.mxu0 0.0
        %3403 = vmatpush1.msra.mxu0 0.0
        %3404 = vmatprep.subr.mxu0 0.0
        %3405 = vmatpush1.msra.mxu0 0.0
        %3406 = vmatprep.subr.mxu0 0.0
        %3407 = vmatpush1.msra.mxu0 0.0
        %3408 = vmatprep.mubr.f32.mxu0 0.0
        %3409 = vmatmul.mubr.f32.gmra.mrb[0].mxu0 %v3336
        %v3410 = vpop.f32.mrb[0].mxu0
        %v3411 = vadd.f32 0.0, %v3410
        %v3412 = vpop.f32.mrb[0].mxu0
        %3413 = vmatprep.mubr.f32.mxu0 0.0
        %3414 = vmatmul.mubr.f32.gmra.mrb[0].mxu0 %v3338
        %v3415 = vpop.f32.mrb[0].mxu0
        %v3416 = vadd.f32 0.0, %v3415
        %v3417 = vpop.f32.mrb[0].mxu0
        %3418 = vmatprep.mubr.f32.mxu0 0.0
        %3419 = vmatmul.mubr.f32.gmra.mrb[0].mxu0 %v3340
        %v3420 = vpop.f32.mrb[0].mxu0
        %v3421 = vadd.f32 0.0, %v3420
        %v3422 = vpop.f32.mrb[0].mxu0
        %3423 = vmatprep.mubr.f32.mxu0 0.0
        %3424 = vmatmul.mubr.f32.gmra.mrb[0].mxu0 %v3342
        %v3425 = vpop.f32.mrb[0].mxu0
        %v3426 = vadd.f32 0.0, %v3425
        %v3427 = vpop.f32.mrb[0].mxu0
        %3428 = vdwg.mxu0
        %3429 = vrot.lane.b32.xlu0 %v3163, 120
        %v3430 = vpop.permute.xlu0 %3429
        %3431 = vrot.lane.b32.xlu0 %v3164, 120
        %v3432 = vpop.permute.xlu0 %3431
        %3433 = vrot.lane.b32.xlu0 %v3165, 120
        %v3434 = vpop.permute.xlu0 %3433
        %3435 = vrot.lane.b32.xlu0 %v3166, 120
        %v3436 = vpop.permute.xlu0 %3435
        %3437 = vrot.lane.b32.xlu0 %v3141, 88
        %v3438 = vpop.permute.xlu0 %3437
        %3439 = vrot.lane.b32.xlu0 %v3146, 88
        %v3440 = vpop.permute.xlu0 %3439
        %3441 = vrot.lane.b32.xlu0 %v3151, 88
        %v3442 = vpop.permute.xlu0 %3441
        %3443 = vrot.lane.b32.xlu0 %v3156, 88
        %v3444 = vpop.permute.xlu0 %3443
        %v3445 = vsel %vm1303, %v3430, 0
        %v3447 = vsel %vm1303, %v3432, 0
        %v3449 = vsel %vm1303, %v3434, 0
        %v3451 = vsel %vm1303, %v3436, 0
        %v3453 = vsel %vm1303, %v3438, 0
        %v3455 = vsel %vm1303, %v3440, 0
        %v3457 = vsel %vm1303, %v3442, 0
        %v3459 = vsel %vm1303, %v3444, 0
        %3461 = vmatprep.subr.mxu0 0.0
        %3462 = vmatpush1.xpose.msra.mxu0 %v3453
        %3463 = vmatprep.subr.mxu0 0.0
        %3464 = vmatpush1.xpose.msra.mxu0 %v3455
        %3465 = vmatprep.subr.mxu0 0.0
        %3466 = vmatpush1.xpose.msra.mxu0 %v3457
        %3467 = vmatprep.subr.mxu0 0.0
        %3468 = vmatpush1.xpose.msra.mxu0 %v3459
        %3469 = vmatprep.subr.mxu0 0.0
        %3470 = vmatpush1.xpose.msra.mxu0 0.0
        %3471 = vmatprep.subr.mxu0 0.0
        %3472 = vmatpush1.xpose.msra.mxu0 0.0
        %3473 = vmatprep.subr.mxu0 0.0
        %3474 = vmatpush1.xpose.msra.mxu0 0.0
        %3475 = vmatprep.subr.mxu0 0.0
        %3476 = vmatpush1.xpose.msra.mxu0 0.0
        %3477 = vmatprep.subr.mxu0 0.0
        %3478 = vmatpush1.xpose.msra.mxu0 0.0
        %3479 = vmatprep.subr.mxu0 0.0
        %3480 = vmatpush1.xpose.msra.mxu0 0.0
        %3481 = vmatprep.subr.mxu0 0.0
        %3482 = vmatpush1.xpose.msra.mxu0 0.0
        %3483 = vmatprep.subr.mxu0 0.0
        %3484 = vmatpush1.xpose.msra.mxu0 0.0
        %3485 = vmatprep.subr.mxu0 0.0
        %3486 = vmatpush1.xpose.msra.mxu0 0.0
        %3487 = vmatprep.subr.mxu0 0.0
        %3488 = vmatpush1.xpose.msra.mxu0 0.0
        %3489 = vmatprep.subr.mxu0 0.0
        %3490 = vmatpush1.xpose.msra.mxu0 0.0
        %3491 = vmatprep.subr.mxu0 0.0
        %3492 = vmatpush1.xpose.msra.mxu0 0.0
        %3493 = vmatprep.subr.mxu0 0.0
        %3494 = vmatpush1.xpose.msra.mxu0 0.0
        %3495 = vmatprep.subr.mxu0 0.0
        %3496 = vmatpush1.xpose.msra.mxu0 0.0
        %3497 = vmatprep.subr.mxu0 0.0
        %3498 = vmatpush1.xpose.msra.mxu0 0.0
        %3499 = vmatprep.subr.mxu0 0.0
        %3500 = vmatpush1.xpose.msra.mxu0 0.0
        %3501 = vmatprep.subr.mxu0 0.0
        %3502 = vmatpush1.xpose.msra.mxu0 0.0
        %3503 = vmatprep.subr.mxu0 0.0
        %3504 = vmatpush1.xpose.msra.mxu0 0.0
        %3505 = vmatprep.subr.mxu0 0.0
        %3506 = vmatpush1.xpose.msra.mxu0 0.0
        %3507 = vmatprep.subr.mxu0 0.0
        %3508 = vmatpush1.xpose.msra.mxu0 0.0
        %3509 = vmatprep.subr.mxu0 0.0
        %3510 = vmatpush1.xpose.msra.mxu0 0.0
        %3511 = vmatprep.subr.mxu0 0.0
        %3512 = vmatpush1.xpose.msra.mxu0 0.0
        %3513 = vmatprep.subr.mxu0 0.0
        %3514 = vmatpush1.xpose.msra.mxu0 0.0
        %3515 = vmatprep.subr.mxu0 0.0
        %3516 = vmatpush1.xpose.msra.mxu0 0.0
        %3517 = vmatprep.subr.mxu0 0.0
        %3518 = vmatpush1.xpose.msra.mxu0 0.0
        %3519 = vmatprep.subr.mxu0 0.0
        %3520 = vmatpush1.xpose.msra.mxu0 0.0
        %3521 = vmatprep.subr.mxu0 0.0
        %3522 = vmatpush1.xpose.msra.mxu0 0.0
        %3523 = vmatprep.subr.mxu0 0.0
        %3524 = vmatpush1.xpose.msra.mxu0 0.0
        %3525 = vmatprep.mubr.f32.mxu0 0.0
        %3526 = vmatmul.mubr.f32.gmra.mrb[0].mxu0 %v3445
        %v3527 = vpop.f32.mrb[0].mxu0
        %v3528 = vadd.f32 0.0, %v3527
        %v3529 = vpop.f32.mrb[0].mxu0
        %3530 = vmatprep.mubr.f32.mxu0 0.0
        %3531 = vmatmul.mubr.f32.gmra.mrb[0].mxu0 %v3447
        %v3532 = vpop.f32.mrb[0].mxu0
        %v3533 = vadd.f32 0.0, %v3532
        %v3534 = vpop.f32.mrb[0].mxu0
        %3535 = vmatprep.mubr.f32.mxu0 0.0
        %3536 = vmatmul.mubr.f32.gmra.mrb[0].mxu0 %v3449
        %v3537 = vpop.f32.mrb[0].mxu0
        %v3538 = vadd.f32 0.0, %v3537
        %v3539 = vpop.f32.mrb[0].mxu0
        %3540 = vmatprep.mubr.f32.mxu0 0.0
        %3541 = vmatmul.mubr.f32.gmra.mrb[0].mxu0 %v3451
        %v3542 = vpop.f32.mrb[0].mxu0
        %v3543 = vadd.f32 0.0, %v3542
        %v3544 = vpop.f32.mrb[0].mxu0
        %3545 = vdwg.mxu0
        %v3546 = vsel %vm1100, %v3528, -inf
        %3547 = vmax.xlane.f32.xlu0 %v3546
        %v3548 = vpop.xlane.xlu0 %3547
        %v3549 = vsel %vm1100, %v3533, -inf
        %3550 = vmax.xlane.f32.xlu0 %v3549
        %v3551 = vpop.xlane.xlu0 %3550
        %v3552 = vsel %vm1100, %v3538, -inf
        %3553 = vmax.xlane.f32.xlu0 %v3552
        %v3554 = vpop.xlane.xlu0 %3553
        %v3555 = vsel %vm1100, %v3543, -inf
        %3556 = vmax.xlane.f32.xlu0 %v3555
        %v3557 = vpop.xlane.xlu0 %3556
        %v3558 = vsub.f32 %v3528, %v3548
        %v3559 = vsub.f32 %v3533, %v3551
        %v3560 = vsub.f32 %v3538, %v3554
        %v3561 = vsub.f32 %v3543, %v3557
        %v3562 = vmul.f32 %v3558, 1.442695
        %v3563 = vpow.pop %v3562
        %v3564 = vmul.f32 %v3559, 1.442695
        %v3565 = vpow.pop %v3564
        %v3566 = vmul.f32 %v3560, 1.442695
        %v3567 = vpow.pop %v3566
        %v3568 = vmul.f32 %v3561, 1.442695
        %v3569 = vpow.pop %v3568
        %v3570 = vsel %vm1100, %v3563, 0.0
        %3571 = vadd.xlane.f32.xlu0 %v3570
        %v3572 = vpop.xlane.xlu0 %3571
        %v3573 = vsel %vm1100, %v3565, 0.0
        %3574 = vadd.xlane.f32.xlu0 %v3573
        %v3575 = vpop.xlane.xlu0 %3574
        %v3576 = vsel %vm1100, %v3567, 0.0
        %3577 = vadd.xlane.f32.xlu0 %v3576
        %v3578 = vpop.xlane.xlu0 %3577
        %v3579 = vsel %vm1100, %v3569, 0.0
        %3580 = vadd.xlane.f32.xlu0 %v3579
        %v3581 = vpop.xlane.xlu0 %3580
        %v3582 = vrcp.pop %v3572
        %v3583 = vrcp.pop %v3575
        %v3584 = vrcp.pop %v3578
        %v3585 = vrcp.pop %v3581
        %v3586 = vmul.f32 %v3563, %v3582
        %v3587 = vmul.f32 %v3565, %v3583
        %v3588 = vmul.f32 %v3567, %v3584
        %v3589 = vmul.f32 %v3569, %v3585
        %3590 = vrot.lane.b32.xlu0 %v3141, 56
        %v3591 = vpop.permute.xlu0 %3590
        %3592 = vrot.lane.b32.xlu0 %v3146, 56
        %v3593 = vpop.permute.xlu0 %3592
        %3594 = vrot.lane.b32.xlu0 %v3151, 56
        %v3595 = vpop.permute.xlu0 %3594
        %3596 = vrot.lane.b32.xlu0 %v3156, 56
        %v3597 = vpop.permute.xlu0 %3596
        %v3598 = vsel %vm1303, %v3591, 0
        %v3600 = vsel %vm1303, %v3593, 0
        %v3602 = vsel %vm1303, %v3595, 0
        %v3604 = vsel %vm1303, %v3597, 0
        %3606 = vmatprep.subr.mxu0 0.0
        %3607 = vmatpush1.msra.mxu0 %v3160
        %3608 = vmatprep.subr.mxu0 0.0
        %3609 = vmatpush1.msra.mxu0 0.0
        %3610 = vmatprep.subr.mxu0 0.0
        %3611 = vmatpush1.msra.mxu0 0.0
        %3612 = vmatprep.subr.mxu0 0.0
        %3613 = vmatpush1.msra.mxu0 0.0
        %3614 = vmatprep.subr.mxu0 0.0
        %3615 = vmatpush1.msra.mxu0 0.0
        %3616 = vmatprep.subr.mxu0 0.0
        %3617 = vmatpush1.msra.mxu0 0.0
        %3618 = vmatprep.subr.mxu0 0.0
        %3619 = vmatpush1.msra.mxu0 0.0
        %3620 = vmatprep.subr.mxu0 0.0
        %3621 = vmatpush1.msra.mxu0 0.0
        %3622 = vmatprep.subr.mxu0 0.0
        %3623 = vmatpush1.msra.mxu0 0.0
        %3624 = vmatprep.subr.mxu0 0.0
        %3625 = vmatpush1.msra.mxu0 0.0
        %3626 = vmatprep.subr.mxu0 0.0
        %3627 = vmatpush1.msra.mxu0 0.0
        %3628 = vmatprep.subr.mxu0 0.0
        %3629 = vmatpush1.msra.mxu0 0.0
        %3630 = vmatprep.subr.mxu0 0.0
        %3631 = vmatpush1.msra.mxu0 0.0
        %3632 = vmatprep.subr.mxu0 0.0
        %3633 = vmatpush1.msra.mxu0 0.0
        %3634 = vmatprep.subr.mxu0 0.0
        %3635 = vmatpush1.msra.mxu0 0.0
        %3636 = vmatprep.subr.mxu0 0.0
        %3637 = vmatpush1.msra.mxu0 0.0
        %3638 = vmatprep.subr.mxu0 0.0
        %3639 = vmatpush1.msra.mxu0 0.0
        %3640 = vmatprep.subr.mxu0 0.0
        %3641 = vmatpush1.msra.mxu0 0.0
        %3642 = vmatprep.subr.mxu0 0.0
        %3643 = vmatpush1.msra.mxu0 0.0
        %3644 = vmatprep.subr.mxu0 0.0
        %3645 = vmatpush1.msra.mxu0 0.0
        %3646 = vmatprep.subr.mxu0 0.0
        %3647 = vmatpush1.msra.mxu0 0.0
        %3648 = vmatprep.subr.mxu0 0.0
        %3649 = vmatpush1.msra.mxu0 0.0
        %3650 = vmatprep.subr.mxu0 0.0
        %3651 = vmatpush1.msra.mxu0 0.0
        %3652 = vmatprep.subr.mxu0 0.0
        %3653 = vmatpush1.msra.mxu0 0.0
        %3654 = vmatprep.subr.mxu0 0.0
        %3655 = vmatpush1.msra.mxu0 0.0
        %3656 = vmatprep.subr.mxu0 0.0
        %3657 = vmatpush1.msra.mxu0 0.0
        %3658 = vmatprep.subr.mxu0 0.0
        %3659 = vmatpush1.msra.mxu0 0.0
        %3660 = vmatprep.subr.mxu0 0.0
        %3661 = vmatpush1.msra.mxu0 0.0
        %3662 = vmatprep.subr.mxu0 0.0
        %3663 = vmatpush1.msra.mxu0 0.0
        %3664 = vmatprep.subr.mxu0 0.0
        %3665 = vmatpush1.msra.mxu0 0.0
        %3666 = vmatprep.subr.mxu0 0.0
        %3667 = vmatpush1.msra.mxu0 0.0
        %3668 = vmatprep.subr.mxu0 0.0
        %3669 = vmatpush1.msra.mxu0 0.0
        %3670 = vmatprep.mubr.f32.mxu0 0.0
        %3671 = vmatmul.mubr.f32.gmra.mrb[0].mxu0 %v3598
        %v3672 = vpop.f32.mrb[0].mxu0
        %v3673 = vadd.f32 0.0, %v3672
        %v3674 = vpop.f32.mrb[0].mxu0
        %3675 = vmatprep.mubr.f32.mxu0 0.0
        %3676 = vmatmul.mubr.f32.gmra.mrb[0].mxu0 %v3600
        %v3677 = vpop.f32.mrb[0].mxu0
        %v3678 = vadd.f32 0.0, %v3677
        %v3679 = vpop.f32.mrb[0].mxu0
        %3680 = vmatprep.mubr.f32.mxu0 0.0
        %3681 = vmatmul.mubr.f32.gmra.mrb[0].mxu0 %v3602
        %v3682 = vpop.f32.mrb[0].mxu0
        %v3683 = vadd.f32 0.0, %v3682
        %v3684 = vpop.f32.mrb[0].mxu0
        %3685 = vmatprep.mubr.f32.mxu0 0.0
        %3686 = vmatmul.mubr.f32.gmra.mrb[0].mxu0 %v3604
        %v3687 = vpop.f32.mrb[0].mxu0
        %v3688 = vadd.f32 0.0, %v3687
        %v3689 = vpop.f32.mrb[0].mxu0
        %3690 = vdwg.mxu0
        %v3692 = vsel %vm1100, %v3586, 0
        %v3695 = vsel %vm1100, %v3587, 0
        %v3698 = vsel %vm1100, %v3588, 0
        %v3701 = vsel %vm1100, %v3589, 0
        %3703 = vmatprep.subr.mxu0 0.0
        %3704 = vmatpush1.msra.mxu0 %v3673
        %3705 = vmatprep.subr.mxu0 0.0
        %3706 = vmatpush1.msra.mxu0 %v3678
        %3707 = vmatprep.subr.mxu0 0.0
        %3708 = vmatpush1.msra.mxu0 %v3683
        %3709 = vmatprep.subr.mxu0 0.0
        %3710 = vmatpush1.msra.mxu0 %v3688
        %3711 = vmatprep.subr.mxu0 0.0
        %3712 = vmatpush1.msra.mxu0 0.0
        %3713 = vmatprep.subr.mxu0 0.0
        %3714 = vmatpush1.msra.mxu0 0.0
        %3715 = vmatprep.subr.mxu0 0.0
        %3716 = vmatpush1.msra.mxu0 0.0
        %3717 = vmatprep.subr.mxu0 0.0
        %3718 = vmatpush1.msra.mxu0 0.0
        %3719 = vmatprep.subr.mxu0 0.0
        %3720 = vmatpush1.msra.mxu0 0.0
        %3721 = vmatprep.subr.mxu0 0.0
        %3722 = vmatpush1.msra.mxu0 0.0
        %3723 = vmatprep.subr.mxu0 0.0
        %3724 = vmatpush1.msra.mxu0 0.0
        %3725 = vmatprep.subr.mxu0 0.0
        %3726 = vmatpush1.msra.mxu0 0.0
        %3727 = vmatprep.subr.mxu0 0.0
        %3728 = vmatpush1.msra.mxu0 0.0
        %3729 = vmatprep.subr.mxu0 0.0
        %3730 = vmatpush1.msra.mxu0 0.0
        %3731 = vmatprep.subr.mxu0 0.0
        %3732 = vmatpush1.msra.mxu0 0.0
        %3733 = vmatprep.subr.mxu0 0.0
        %3734 = vmatpush1.msra.mxu0 0.0
        %3735 = vmatprep.subr.mxu0 0.0
        %3736 = vmatpush1.msra.mxu0 0.0
        %3737 = vmatprep.subr.mxu0 0.0
        %3738 = vmatpush1.msra.mxu0 0.0
        %3739 = vmatprep.subr.mxu0 0.0
        %3740 = vmatpush1.msra.mxu0 0.0
        %3741 = vmatprep.subr.mxu0 0.0
        %3742 = vmatpush1.msra.mxu0 0.0
        %3743 = vmatprep.subr.mxu0 0.0
        %3744 = vmatpush1.msra.mxu0 0.0
        %3745 = vmatprep.subr.mxu0 0.0
        %3746 = vmatpush1.msra.mxu0 0.0
        %3747 = vmatprep.subr.mxu0 0.0
        %3748 = vmatpush1.msra.mxu0 0.0
        %3749 = vmatprep.subr.mxu0 0.0
        %3750 = vmatpush1.msra.mxu0 0.0
        %3751 = vmatprep.subr.mxu0 0.0
        %3752 = vmatpush1.msra.mxu0 0.0
        %3753 = vmatprep.subr.mxu0 0.0
        %3754 = vmatpush1.msra.mxu0 0.0
        %3755 = vmatprep.subr.mxu0 0.0
        %3756 = vmatpush1.msra.mxu0 0.0
        %3757 = vmatprep.subr.mxu0 0.0
        %3758 = vmatpush1.msra.mxu0 0.0
        %3759 = vmatprep.subr.mxu0 0.0
        %3760 = vmatpush1.msra.mxu0 0.0
        %3761 = vmatprep.subr.mxu0 0.0
        %3762 = vmatpush1.msra.mxu0 0.0
        %3763 = vmatprep.subr.mxu0 0.0
        %3764 = vmatpush1.msra.mxu0 0.0
        %3765 = vmatprep.subr.mxu0 0.0
        %3766 = vmatpush1.msra.mxu0 0.0
        %3767 = vmatprep.mubr.f32.mxu0 0.0
        %3768 = vmatmul.mubr.f32.gmra.mrb[0].mxu0 %v3692
        %v3769 = vpop.f32.mrb[0].mxu0
        %v3770 = vadd.f32 0.0, %v3769
        %v3771 = vpop.f32.mrb[0].mxu0
        %3772 = vmatprep.mubr.f32.mxu0 0.0
        %3773 = vmatmul.mubr.f32.gmra.mrb[0].mxu0 %v3695
        %v3774 = vpop.f32.mrb[0].mxu0
        %v3775 = vadd.f32 0.0, %v3774
        %v3776 = vpop.f32.mrb[0].mxu0
        %3777 = vmatprep.mubr.f32.mxu0 0.0
        %3778 = vmatmul.mubr.f32.gmra.mrb[0].mxu0 %v3698
        %v3779 = vpop.f32.mrb[0].mxu0
        %v3780 = vadd.f32 0.0, %v3779
        %v3781 = vpop.f32.mrb[0].mxu0
        %3782 = vmatprep.mubr.f32.mxu0 0.0
        %3783 = vmatmul.mubr.f32.gmra.mrb[0].mxu0 %v3701
        %v3784 = vpop.f32.mrb[0].mxu0
        %v3785 = vadd.f32 0.0, %v3784
        %v3786 = vpop.f32.mrb[0].mxu0
        %3787 = vdwg.mxu0
        %v3789 = vsel %vm1100, %v3324, 0
        %v3792 = vsel %vm1100, %v3325, 0
        %v3795 = vsel %vm1100, %v3326, 0
        %v3798 = vsel %vm1100, %v3327, 0
        %3800 = vmatprep.subr.mxu0 0.0
        %3801 = vmatpush1.msra.mxu0 %v3411
        %3802 = vmatprep.subr.mxu0 0.0
        %3803 = vmatpush1.msra.mxu0 %v3416
        %3804 = vmatprep.subr.mxu0 0.0
        %3805 = vmatpush1.msra.mxu0 %v3421
        %3806 = vmatprep.subr.mxu0 0.0
        %3807 = vmatpush1.msra.mxu0 %v3426
        %3808 = vmatprep.subr.mxu0 0.0
        %3809 = vmatpush1.msra.mxu0 0.0
        %3810 = vmatprep.subr.mxu0 0.0
        %3811 = vmatpush1.msra.mxu0 0.0
        %3812 = vmatprep.subr.mxu0 0.0
        %3813 = vmatpush1.msra.mxu0 0.0
        %3814 = vmatprep.subr.mxu0 0.0
        %3815 = vmatpush1.msra.mxu0 0.0
        %3816 = vmatprep.subr.mxu0 0.0
        %3817 = vmatpush1.msra.mxu0 0.0
        %3818 = vmatprep.subr.mxu0 0.0
        %3819 = vmatpush1.msra.mxu0 0.0
        %3820 = vmatprep.subr.mxu0 0.0
        %3821 = vmatpush1.msra.mxu0 0.0
        %3822 = vmatprep.subr.mxu0 0.0
        %3823 = vmatpush1.msra.mxu0 0.0
        %3824 = vmatprep.subr.mxu0 0.0
        %3825 = vmatpush1.msra.mxu0 0.0
        %3826 = vmatprep.subr.mxu0 0.0
        %3827 = vmatpush1.msra.mxu0 0.0
        %3828 = vmatprep.subr.mxu0 0.0
        %3829 = vmatpush1.msra.mxu0 0.0
        %3830 = vmatprep.subr.mxu0 0.0
        %3831 = vmatpush1.msra.mxu0 0.0
        %3832 = vmatprep.subr.mxu0 0.0
        %3833 = vmatpush1.msra.mxu0 0.0
        %3834 = vmatprep.subr.mxu0 0.0
        %3835 = vmatpush1.msra.mxu0 0.0
        %3836 = vmatprep.subr.mxu0 0.0
        %3837 = vmatpush1.msra.mxu0 0.0
        %3838 = vmatprep.subr.mxu0 0.0
        %3839 = vmatpush1.msra.mxu0 0.0
        %3840 = vmatprep.subr.mxu0 0.0
        %3841 = vmatpush1.msra.mxu0 0.0
        %3842 = vmatprep.subr.mxu0 0.0
        %3843 = vmatpush1.msra.mxu0 0.0
        %3844 = vmatprep.subr.mxu0 0.0
        %3845 = vmatpush1.msra.mxu0 0.0
        %3846 = vmatprep.subr.mxu0 0.0
        %3847 = vmatpush1.msra.mxu0 0.0
        %3848 = vmatprep.subr.mxu0 0.0
        %3849 = vmatpush1.msra.mxu0 0.0
        %3850 = vmatprep.subr.mxu0 0.0
        %3851 = vmatpush1.msra.mxu0 0.0
        %3852 = vmatprep.subr.mxu0 0.0
        %3853 = vmatpush1.msra.mxu0 0.0
        %3854 = vmatprep.subr.mxu0 0.0
        %3855 = vmatpush1.msra.mxu0 0.0
        %3856 = vmatprep.subr.mxu0 0.0
        %3857 = vmatpush1.msra.mxu0 0.0
        %3858 = vmatprep.subr.mxu0 0.0
        %3859 = vmatpush1.msra.mxu0 0.0
        %3860 = vmatprep.subr.mxu0 0.0
        %3861 = vmatpush1.msra.mxu0 0.0
        %3862 = vmatprep.subr.mxu0 0.0
        %3863 = vmatpush1.msra.mxu0 0.0
        %3864 = vmatprep.mubr.f32.mxu0 0.0
        %3865 = vmatmul.mubr.f32.gmra.mrb[0].mxu0 %v3789
        %v3866 = vpop.f32.mrb[0].mxu0
        %v3867 = vadd.f32 %v3770, %v3866
        %v3868 = vpop.f32.mrb[0].mxu0
        %3869 = vmatprep.mubr.f32.mxu0 0.0
        %3870 = vmatmul.mubr.f32.gmra.mrb[0].mxu0 %v3792
        %v3871 = vpop.f32.mrb[0].mxu0
        %v3872 = vadd.f32 %v3775, %v3871
        %v3873 = vpop.f32.mrb[0].mxu0
        %3874 = vmatprep.mubr.f32.mxu0 0.0
        %3875 = vmatmul.mubr.f32.gmra.mrb[0].mxu0 %v3795
        %v3876 = vpop.f32.mrb[0].mxu0
        %v3877 = vadd.f32 %v3780, %v3876
        %v3878 = vpop.f32.mrb[0].mxu0
        %3879 = vmatprep.mubr.f32.mxu0 0.0
        %3880 = vmatmul.mubr.f32.gmra.mrb[0].mxu0 %v3798
        %v3881 = vpop.f32.mrb[0].mxu0
        %v3882 = vadd.f32 %v3785, %v3881
        %v3883 = vpop.f32.mrb[0].mxu0
        %3884 = vdwg.mxu0
        %3885 = vrot.lane.b32.xlu0 %v3163, 112
        %v3886 = vpop.permute.xlu0 %3885
        %3887 = vrot.lane.b32.xlu0 %v3164, 112
        %v3888 = vpop.permute.xlu0 %3887
        %3889 = vrot.lane.b32.xlu0 %v3165, 112
        %v3890 = vpop.permute.xlu0 %3889
        %3891 = vrot.lane.b32.xlu0 %v3166, 112
        %v3892 = vpop.permute.xlu0 %3891
        %3893 = vrot.lane.b32.xlu0 %v3141, 80
        %v3894 = vpop.permute.xlu0 %3893
        %3895 = vrot.lane.b32.xlu0 %v3146, 80
        %v3896 = vpop.permute.xlu0 %3895
        %3897 = vrot.lane.b32.xlu0 %v3151, 80
        %v3898 = vpop.permute.xlu0 %3897
        %3899 = vrot.lane.b32.xlu0 %v3156, 80
        %v3900 = vpop.permute.xlu0 %3899
        %v3901 = vsel %vm1303, %v3886, 0
        %v3903 = vsel %vm1303, %v3888, 0
        %v3905 = vsel %vm1303, %v3890, 0
        %v3907 = vsel %vm1303, %v3892, 0
        %v3909 = vsel %vm1303, %v3894, 0
        %v3911 = vsel %vm1303, %v3896, 0
        %v3913 = vsel %vm1303, %v3898, 0
        %v3915 = vsel %vm1303, %v3900, 0
        %3917 = vmatprep.subr.mxu0 0.0
        %3918 = vmatpush1.xpose.msra.mxu0 %v3909
        %3919 = vmatprep.subr.mxu0 0.0
        %3920 = vmatpush1.xpose.msra.mxu0 %v3911
        %3921 = vmatprep.subr.mxu0 0.0
        %3922 = vmatpush1.xpose.msra.mxu0 %v3913
        %3923 = vmatprep.subr.mxu0 0.0
        %3924 = vmatpush1.xpose.msra.mxu0 %v3915
        %3925 = vmatprep.subr.mxu0 0.0
        %3926 = vmatpush1.xpose.msra.mxu0 0.0
        %3927 = vmatprep.subr.mxu0 0.0
        %3928 = vmatpush1.xpose.msra.mxu0 0.0
        %3929 = vmatprep.subr.mxu0 0.0
        %3930 = vmatpush1.xpose.msra.mxu0 0.0
        %3931 = vmatprep.subr.mxu0 0.0
        %3932 = vmatpush1.xpose.msra.mxu0 0.0
        %3933 = vmatprep.subr.mxu0 0.0
        %3934 = vmatpush1.xpose.msra.mxu0 0.0
        %3935 = vmatprep.subr.mxu0 0.0
        %3936 = vmatpush1.xpose.msra.mxu0 0.0
        %3937 = vmatprep.subr.mxu0 0.0
        %3938 = vmatpush1.xpose.msra.mxu0 0.0
        %3939 = vmatprep.subr.mxu0 0.0
        %3940 = vmatpush1.xpose.msra.mxu0 0.0
        %3941 = vmatprep.subr.mxu0 0.0
        %3942 = vmatpush1.xpose.msra.mxu0 0.0
        %3943 = vmatprep.subr.mxu0 0.0
        %3944 = vmatpush1.xpose.msra.mxu0 0.0
        %3945 = vmatprep.subr.mxu0 0.0
        %3946 = vmatpush1.xpose.msra.mxu0 0.0
        %3947 = vmatprep.subr.mxu0 0.0
        %3948 = vmatpush1.xpose.msra.mxu0 0.0
        %3949 = vmatprep.subr.mxu0 0.0
        %3950 = vmatpush1.xpose.msra.mxu0 0.0
        %3951 = vmatprep.subr.mxu0 0.0
        %3952 = vmatpush1.xpose.msra.mxu0 0.0
        %3953 = vmatprep.subr.mxu0 0.0
        %3954 = vmatpush1.xpose.msra.mxu0 0.0
        %3955 = vmatprep.subr.mxu0 0.0
        %3956 = vmatpush1.xpose.msra.mxu0 0.0
        %3957 = vmatprep.subr.mxu0 0.0
        %3958 = vmatpush1.xpose.msra.mxu0 0.0
        %3959 = vmatprep.subr.mxu0 0.0
        %3960 = vmatpush1.xpose.msra.mxu0 0.0
        %3961 = vmatprep.subr.mxu0 0.0
        %3962 = vmatpush1.xpose.msra.mxu0 0.0
        %3963 = vmatprep.subr.mxu0 0.0
        %3964 = vmatpush1.xpose.msra.mxu0 0.0
        %3965 = vmatprep.subr.mxu0 0.0
        %3966 = vmatpush1.xpose.msra.mxu0 0.0
        %3967 = vmatprep.subr.mxu0 0.0
        %3968 = vmatpush1.xpose.msra.mxu0 0.0
        %3969 = vmatprep.subr.mxu0 0.0
        %3970 = vmatpush1.xpose.msra.mxu0 0.0
        %3971 = vmatprep.subr.mxu0 0.0
        %3972 = vmatpush1.xpose.msra.mxu0 0.0
        %3973 = vmatprep.subr.mxu0 0.0
        %3974 = vmatpush1.xpose.msra.mxu0 0.0
        %3975 = vmatprep.subr.mxu0 0.0
        %3976 = vmatpush1.xpose.msra.mxu0 0.0
        %3977 = vmatprep.subr.mxu0 0.0
        %3978 = vmatpush1.xpose.msra.mxu0 0.0
        %3979 = vmatprep.subr.mxu0 0.0
        %3980 = vmatpush1.xpose.msra.mxu0 0.0
        %3981 = vmatprep.mubr.f32.mxu0 0.0
        %3982 = vmatmul.mubr.f32.gmra.mrb[0].mxu0 %v3901
        %v3983 = vpop.f32.mrb[0].mxu0
        %v3984 = vadd.f32 0.0, %v3983
        %v3985 = vpop.f32.mrb[0].mxu0
        %3986 = vmatprep.mubr.f32.mxu0 0.0
        %3987 = vmatmul.mubr.f32.gmra.mrb[0].mxu0 %v3903
        %v3988 = vpop.f32.mrb[0].mxu0
        %v3989 = vadd.f32 0.0, %v3988
        %v3990 = vpop.f32.mrb[0].mxu0
        %3991 = vmatprep.mubr.f32.mxu0 0.0
        %3992 = vmatmul.mubr.f32.gmra.mrb[0].mxu0 %v3905
        %v3993 = vpop.f32.mrb[0].mxu0
        %v3994 = vadd.f32 0.0, %v3993
        %v3995 = vpop.f32.mrb[0].mxu0
        %3996 = vmatprep.mubr.f32.mxu0 0.0
        %3997 = vmatmul.mubr.f32.gmra.mrb[0].mxu0 %v3907
        %v3998 = vpop.f32.mrb[0].mxu0
        %v3999 = vadd.f32 0.0, %v3998
        %v4000 = vpop.f32.mrb[0].mxu0
        %4001 = vdwg.mxu0
        %v4002 = vsel %vm1100, %v3984, -inf
        %4003 = vmax.xlane.f32.xlu0 %v4002
        %v4004 = vpop.xlane.xlu0 %4003
        %v4005 = vsel %vm1100, %v3989, -inf
        %4006 = vmax.xlane.f32.xlu0 %v4005
        %v4007 = vpop.xlane.xlu0 %4006
        %v4008 = vsel %vm1100, %v3994, -inf
        %4009 = vmax.xlane.f32.xlu0 %v4008
        %v4010 = vpop.xlane.xlu0 %4009
        %v4011 = vsel %vm1100, %v3999, -inf
        %4012 = vmax.xlane.f32.xlu0 %v4011
        %v4013 = vpop.xlane.xlu0 %4012
        %v4014 = vsub.f32 %v3984, %v4004
        %v4015 = vsub.f32 %v3989, %v4007
        %v4016 = vsub.f32 %v3994, %v4010
        %v4017 = vsub.f32 %v3999, %v4013
        %v4018 = vmul.f32 %v4014, 1.442695
        %v4019 = vpow.pop %v4018
        %v4020 = vmul.f32 %v4015, 1.442695
        %v4021 = vpow.pop %v4020
        %v4022 = vmul.f32 %v4016, 1.442695
        %v4023 = vpow.pop %v4022
        %v4024 = vmul.f32 %v4017, 1.442695
        %v4025 = vpow.pop %v4024
        %v4026 = vsel %vm1100, %v4019, 0.0
        %4027 = vadd.xlane.f32.xlu0 %v4026
        %v4028 = vpop.xlane.xlu0 %4027
        %v4029 = vsel %vm1100, %v4021, 0.0
        %4030 = vadd.xlane.f32.xlu0 %v4029
        %v4031 = vpop.xlane.xlu0 %4030
        %v4032 = vsel %vm1100, %v4023, 0.0
        %4033 = vadd.xlane.f32.xlu0 %v4032
        %v4034 = vpop.xlane.xlu0 %4033
        %v4035 = vsel %vm1100, %v4025, 0.0
        %4036 = vadd.xlane.f32.xlu0 %v4035
        %v4037 = vpop.xlane.xlu0 %4036
        %v4038 = vrcp.pop %v4028
        %v4039 = vrcp.pop %v4031
        %v4040 = vrcp.pop %v4034
        %v4041 = vrcp.pop %v4037
        %v4042 = vmul.f32 %v4019, %v4038
        %v4043 = vmul.f32 %v4021, %v4039
        %v4044 = vmul.f32 %v4023, %v4040
        %v4045 = vmul.f32 %v4025, %v4041
        %4046 = vrot.lane.b32.xlu0 %v3141, 48
        %v4047 = vpop.permute.xlu0 %4046
        %4048 = vrot.lane.b32.xlu0 %v3146, 48
        %v4049 = vpop.permute.xlu0 %4048
        %4050 = vrot.lane.b32.xlu0 %v3151, 48
        %v4051 = vpop.permute.xlu0 %4050
        %4052 = vrot.lane.b32.xlu0 %v3156, 48
        %v4053 = vpop.permute.xlu0 %4052
        %v4054 = vsel %vm1303, %v4047, 0
        %v4056 = vsel %vm1303, %v4049, 0
        %v4058 = vsel %vm1303, %v4051, 0
        %v4060 = vsel %vm1303, %v4053, 0
        %4062 = vmatprep.subr.mxu0 0.0
        %4063 = vmatpush1.msra.mxu0 %v3161
        %4064 = vmatprep.subr.mxu0 0.0
        %4065 = vmatpush1.msra.mxu0 0.0
        %4066 = vmatprep.subr.mxu0 0.0
        %4067 = vmatpush1.msra.mxu0 0.0
        %4068 = vmatprep.subr.mxu0 0.0
        %4069 = vmatpush1.msra.mxu0 0.0
        %4070 = vmatprep.subr.mxu0 0.0
        %4071 = vmatpush1.msra.mxu0 0.0
        %4072 = vmatprep.subr.mxu0 0.0
        %4073 = vmatpush1.msra.mxu0 0.0
        %4074 = vmatprep.subr.mxu0 0.0
        %4075 = vmatpush1.msra.mxu0 0.0
        %4076 = vmatprep.subr.mxu0 0.0
        %4077 = vmatpush1.msra.mxu0 0.0
        %4078 = vmatprep.subr.mxu0 0.0
        %4079 = vmatpush1.msra.mxu0 0.0
        %4080 = vmatprep.subr.mxu0 0.0
        %4081 = vmatpush1.msra.mxu0 0.0
        %4082 = vmatprep.subr.mxu0 0.0
        %4083 = vmatpush1.msra.mxu0 0.0
        %4084 = vmatprep.subr.mxu0 0.0
        %4085 = vmatpush1.msra.mxu0 0.0
        %4086 = vmatprep.subr.mxu0 0.0
        %4087 = vmatpush1.msra.mxu0 0.0
        %4088 = vmatprep.subr.mxu0 0.0
        %4089 = vmatpush1.msra.mxu0 0.0
        %4090 = vmatprep.subr.mxu0 0.0
        %4091 = vmatpush1.msra.mxu0 0.0
        %4092 = vmatprep.subr.mxu0 0.0
        %4093 = vmatpush1.msra.mxu0 0.0
        %4094 = vmatprep.subr.mxu0 0.0
        %4095 = vmatpush1.msra.mxu0 0.0
        %4096 = vmatprep.subr.mxu0 0.0
        %4097 = vmatpush1.msra.mxu0 0.0
        %4098 = vmatprep.subr.mxu0 0.0
        %4099 = vmatpush1.msra.mxu0 0.0
        %4100 = vmatprep.subr.mxu0 0.0
        %4101 = vmatpush1.msra.mxu0 0.0
        %4102 = vmatprep.subr.mxu0 0.0
        %4103 = vmatpush1.msra.mxu0 0.0
        %4104 = vmatprep.subr.mxu0 0.0
        %4105 = vmatpush1.msra.mxu0 0.0
        %4106 = vmatprep.subr.mxu0 0.0
        %4107 = vmatpush1.msra.mxu0 0.0
        %4108 = vmatprep.subr.mxu0 0.0
        %4109 = vmatpush1.msra.mxu0 0.0
        %4110 = vmatprep.subr.mxu0 0.0
        %4111 = vmatpush1.msra.mxu0 0.0
        %4112 = vmatprep.subr.mxu0 0.0
        %4113 = vmatpush1.msra.mxu0 0.0
        %4114 = vmatprep.subr.mxu0 0.0
        %4115 = vmatpush1.msra.mxu0 0.0
        %4116 = vmatprep.subr.mxu0 0.0
        %4117 = vmatpush1.msra.mxu0 0.0
        %4118 = vmatprep.subr.mxu0 0.0
        %4119 = vmatpush1.msra.mxu0 0.0
        %4120 = vmatprep.subr.mxu0 0.0
        %4121 = vmatpush1.msra.mxu0 0.0
        %4122 = vmatprep.subr.mxu0 0.0
        %4123 = vmatpush1.msra.mxu0 0.0
        %4124 = vmatprep.subr.mxu0 0.0
        %4125 = vmatpush1.msra.mxu0 0.0
        %4126 = vmatprep.mubr.f32.mxu0 0.0
        %4127 = vmatmul.mubr.f32.gmra.mrb[0].mxu0 %v4054
        %v4128 = vpop.f32.mrb[0].mxu0
        %v4129 = vadd.f32 0.0, %v4128
        %v4130 = vpop.f32.mrb[0].mxu0
        %4131 = vmatprep.mubr.f32.mxu0 0.0
        %4132 = vmatmul.mubr.f32.gmra.mrb[0].mxu0 %v4056
        %v4133 = vpop.f32.mrb[0].mxu0
        %v4134 = vadd.f32 0.0, %v4133
        %v4135 = vpop.f32.mrb[0].mxu0
        %4136 = vmatprep.mubr.f32.mxu0 0.0
        %4137 = vmatmul.mubr.f32.gmra.mrb[0].mxu0 %v4058
        %v4138 = vpop.f32.mrb[0].mxu0
        %v4139 = vadd.f32 0.0, %v4138
        %v4140 = vpop.f32.mrb[0].mxu0
        %4141 = vmatprep.mubr.f32.mxu0 0.0
        %4142 = vmatmul.mubr.f32.gmra.mrb[0].mxu0 %v4060
        %v4143 = vpop.f32.mrb[0].mxu0
        %v4144 = vadd.f32 0.0, %v4143
        %v4145 = vpop.f32.mrb[0].mxu0
        %4146 = vdwg.mxu0
        %v4148 = vsel %vm1100, %v4042, 0
        %v4151 = vsel %vm1100, %v4043, 0
        %v4154 = vsel %vm1100, %v4044, 0
        %v4157 = vsel %vm1100, %v4045, 0
        %4159 = vmatprep.subr.mxu0 0.0
        %4160 = vmatpush1.msra.mxu0 %v4129
        %4161 = vmatprep.subr.mxu0 0.0
        %4162 = vmatpush1.msra.mxu0 %v4134
        %4163 = vmatprep.subr.mxu0 0.0
        %4164 = vmatpush1.msra.mxu0 %v4139
        %4165 = vmatprep.subr.mxu0 0.0
        %4166 = vmatpush1.msra.mxu0 %v4144
        %4167 = vmatprep.subr.mxu0 0.0
        %4168 = vmatpush1.msra.mxu0 0.0
        %4169 = vmatprep.subr.mxu0 0.0
        %4170 = vmatpush1.msra.mxu0 0.0
        %4171 = vmatprep.subr.mxu0 0.0
        %4172 = vmatpush1.msra.mxu0 0.0
        %4173 = vmatprep.subr.mxu0 0.0
        %4174 = vmatpush1.msra.mxu0 0.0
        %4175 = vmatprep.subr.mxu0 0.0
        %4176 = vmatpush1.msra.mxu0 0.0
        %4177 = vmatprep.subr.mxu0 0.0
        %4178 = vmatpush1.msra.mxu0 0.0
        %4179 = vmatprep.subr.mxu0 0.0
        %4180 = vmatpush1.msra.mxu0 0.0
        %4181 = vmatprep.subr.mxu0 0.0
        %4182 = vmatpush1.msra.mxu0 0.0
        %4183 = vmatprep.subr.mxu0 0.0
        %4184 = vmatpush1.msra.mxu0 0.0
        %4185 = vmatprep.subr.mxu0 0.0
        %4186 = vmatpush1.msra.mxu0 0.0
        %4187 = vmatprep.subr.mxu0 0.0
        %4188 = vmatpush1.msra.mxu0 0.0
        %4189 = vmatprep.subr.mxu0 0.0
        %4190 = vmatpush1.msra.mxu0 0.0
        %4191 = vmatprep.subr.mxu0 0.0
        %4192 = vmatpush1.msra.mxu0 0.0
        %4193 = vmatprep.subr.mxu0 0.0
        %4194 = vmatpush1.msra.mxu0 0.0
        %4195 = vmatprep.subr.mxu0 0.0
        %4196 = vmatpush1.msra.mxu0 0.0
        %4197 = vmatprep.subr.mxu0 0.0
        %4198 = vmatpush1.msra.mxu0 0.0
        %4199 = vmatprep.subr.mxu0 0.0
        %4200 = vmatpush1.msra.mxu0 0.0
        %4201 = vmatprep.subr.mxu0 0.0
        %4202 = vmatpush1.msra.mxu0 0.0
        %4203 = vmatprep.subr.mxu0 0.0
        %4204 = vmatpush1.msra.mxu0 0.0
        %4205 = vmatprep.subr.mxu0 0.0
        %4206 = vmatpush1.msra.mxu0 0.0
        %4207 = vmatprep.subr.mxu0 0.0
        %4208 = vmatpush1.msra.mxu0 0.0
        %4209 = vmatprep.subr.mxu0 0.0
        %4210 = vmatpush1.msra.mxu0 0.0
        %4211 = vmatprep.subr.mxu0 0.0
        %4212 = vmatpush1.msra.mxu0 0.0
        %4213 = vmatprep.subr.mxu0 0.0
        %4214 = vmatpush1.msra.mxu0 0.0
        %4215 = vmatprep.subr.mxu0 0.0
        %4216 = vmatpush1.msra.mxu0 0.0
        %4217 = vmatprep.subr.mxu0 0.0
        %4218 = vmatpush1.msra.mxu0 0.0
        %4219 = vmatprep.subr.mxu0 0.0
        %4220 = vmatpush1.msra.mxu0 0.0
        %4221 = vmatprep.subr.mxu0 0.0
        %4222 = vmatpush1.msra.mxu0 0.0
        %4223 = vmatprep.mubr.f32.mxu0 0.0
        %4224 = vmatmul.mubr.f32.gmra.mrb[0].mxu0 %v4148
        %v4225 = vpop.f32.mrb[0].mxu0
        %v4226 = vadd.f32 0.0, %v4225
        %v4227 = vpop.f32.mrb[0].mxu0
        %4228 = vmatprep.mubr.f32.mxu0 0.0
        %4229 = vmatmul.mubr.f32.gmra.mrb[0].mxu0 %v4151
        %v4230 = vpop.f32.mrb[0].mxu0
        %v4231 = vadd.f32 0.0, %v4230
        %v4232 = vpop.f32.mrb[0].mxu0
        %4233 = vmatprep.mubr.f32.mxu0 0.0
        %4234 = vmatmul.mubr.f32.gmra.mrb[0].mxu0 %v4154
        %v4235 = vpop.f32.mrb[0].mxu0
        %v4236 = vadd.f32 0.0, %v4235
        %v4237 = vpop.f32.mrb[0].mxu0
        %4238 = vmatprep.mubr.f32.mxu0 0.0
        %4239 = vmatmul.mubr.f32.gmra.mrb[0].mxu0 %v4157
        %v4240 = vpop.f32.mrb[0].mxu0
        %v4241 = vadd.f32 0.0, %v4240
        %v4242 = vpop.f32.mrb[0].mxu0
        %4243 = vdwg.mxu0
        %v4244 = vadd.f32 %v3867, %v4226
        %v4245 = vadd.f32 %v3872, %v4231
        %v4246 = vadd.f32 %v3877, %v4236
        %v4247 = vadd.f32 %v3882, %v4241
        %4248 = vrot.lane.b32.xlu0 %v3163, 104
        %v4249 = vpop.permute.xlu0 %4248
        %4250 = vrot.lane.b32.xlu0 %v3164, 104
        %v4251 = vpop.permute.xlu0 %4250
        %4252 = vrot.lane.b32.xlu0 %v3165, 104
        %v4253 = vpop.permute.xlu0 %4252
        %4254 = vrot.lane.b32.xlu0 %v3166, 104
        %v4255 = vpop.permute.xlu0 %4254
        %4256 = vrot.lane.b32.xlu0 %v3141, 72
        %v4257 = vpop.permute.xlu0 %4256
        %4258 = vrot.lane.b32.xlu0 %v3146, 72
        %v4259 = vpop.permute.xlu0 %4258
        %4260 = vrot.lane.b32.xlu0 %v3151, 72
        %v4261 = vpop.permute.xlu0 %4260
        %4262 = vrot.lane.b32.xlu0 %v3156, 72
        %v4263 = vpop.permute.xlu0 %4262
        %v4264 = vsel %vm1303, %v4249, 0
        %v4266 = vsel %vm1303, %v4251, 0
        %v4268 = vsel %vm1303, %v4253, 0
        %v4270 = vsel %vm1303, %v4255, 0
        %v4272 = vsel %vm1303, %v4257, 0
        %v4274 = vsel %vm1303, %v4259, 0
        %v4276 = vsel %vm1303, %v4261, 0
        %v4278 = vsel %vm1303, %v4263, 0
        %4280 = vmatprep.subr.mxu0 0.0
        %4281 = vmatpush1.xpose.msra.mxu0 %v4272
        %4282 = vmatprep.subr.mxu0 0.0
        %4283 = vmatpush1.xpose.msra.mxu0 %v4274
        %4284 = vmatprep.subr.mxu0 0.0
        %4285 = vmatpush1.xpose.msra.mxu0 %v4276
        %4286 = vmatprep.subr.mxu0 0.0
        %4287 = vmatpush1.xpose.msra.mxu0 %v4278
        %4288 = vmatprep.subr.mxu0 0.0
        %4289 = vmatpush1.xpose.msra.mxu0 0.0
        %4290 = vmatprep.subr.mxu0 0.0
        %4291 = vmatpush1.xpose.msra.mxu0 0.0
        %4292 = vmatprep.subr.mxu0 0.0
        %4293 = vmatpush1.xpose.msra.mxu0 0.0
        %4294 = vmatprep.subr.mxu0 0.0
        %4295 = vmatpush1.xpose.msra.mxu0 0.0
        %4296 = vmatprep.subr.mxu0 0.0
        %4297 = vmatpush1.xpose.msra.mxu0 0.0
        %4298 = vmatprep.subr.mxu0 0.0
        %4299 = vmatpush1.xpose.msra.mxu0 0.0
        %4300 = vmatprep.subr.mxu0 0.0
        %4301 = vmatpush1.xpose.msra.mxu0 0.0
        %4302 = vmatprep.subr.mxu0 0.0
        %4303 = vmatpush1.xpose.msra.mxu0 0.0
        %4304 = vmatprep.subr.mxu0 0.0
        %4305 = vmatpush1.xpose.msra.mxu0 0.0
        %4306 = vmatprep.subr.mxu0 0.0
        %4307 = vmatpush1.xpose.msra.mxu0 0.0
        %4308 = vmatprep.subr.mxu0 0.0
        %4309 = vmatpush1.xpose.msra.mxu0 0.0
        %4310 = vmatprep.subr.mxu0 0.0
        %4311 = vmatpush1.xpose.msra.mxu0 0.0
        %4312 = vmatprep.subr.mxu0 0.0
        %4313 = vmatpush1.xpose.msra.mxu0 0.0
        %4314 = vmatprep.subr.mxu0 0.0
        %4315 = vmatpush1.xpose.msra.mxu0 0.0
        %4316 = vmatprep.subr.mxu0 0.0
        %4317 = vmatpush1.xpose.msra.mxu0 0.0
        %4318 = vmatprep.subr.mxu0 0.0
        %4319 = vmatpush1.xpose.msra.mxu0 0.0
        %4320 = vmatprep.subr.mxu0 0.0
        %4321 = vmatpush1.xpose.msra.mxu0 0.0
        %4322 = vmatprep.subr.mxu0 0.0
        %4323 = vmatpush1.xpose.msra.mxu0 0.0
        %4324 = vmatprep.subr.mxu0 0.0
        %4325 = vmatpush1.xpose.msra.mxu0 0.0
        %4326 = vmatprep.subr.mxu0 0.0
        %4327 = vmatpush1.xpose.msra.mxu0 0.0
        %4328 = vmatprep.subr.mxu0 0.0
        %4329 = vmatpush1.xpose.msra.mxu0 0.0
        %4330 = vmatprep.subr.mxu0 0.0
        %4331 = vmatpush1.xpose.msra.mxu0 0.0
        %4332 = vmatprep.subr.mxu0 0.0
        %4333 = vmatpush1.xpose.msra.mxu0 0.0
        %4334 = vmatprep.subr.mxu0 0.0
        %4335 = vmatpush1.xpose.msra.mxu0 0.0
        %4336 = vmatprep.subr.mxu0 0.0
        %4337 = vmatpush1.xpose.msra.mxu0 0.0
        %4338 = vmatprep.subr.mxu0 0.0
        %4339 = vmatpush1.xpose.msra.mxu0 0.0
        %4340 = vmatprep.subr.mxu0 0.0
        %4341 = vmatpush1.xpose.msra.mxu0 0.0
        %4342 = vmatprep.subr.mxu0 0.0
        %4343 = vmatpush1.xpose.msra.mxu0 0.0
        %4344 = vmatprep.mubr.f32.mxu0 0.0
        %4345 = vmatmul.mubr.f32.gmra.mrb[0].mxu0 %v4264
        %v4346 = vpop.f32.mrb[0].mxu0
        %v4347 = vadd.f32 0.0, %v4346
        %v4348 = vpop.f32.mrb[0].mxu0
        %4349 = vmatprep.mubr.f32.mxu0 0.0
        %4350 = vmatmul.mubr.f32.gmra.mrb[0].mxu0 %v4266
        %v4351 = vpop.f32.mrb[0].mxu0
        %v4352 = vadd.f32 0.0, %v4351
        %v4353 = vpop.f32.mrb[0].mxu0
        %4354 = vmatprep.mubr.f32.mxu0 0.0
        %4355 = vmatmul.mubr.f32.gmra.mrb[0].mxu0 %v4268
        %v4356 = vpop.f32.mrb[0].mxu0
        %v4357 = vadd.f32 0.0, %v4356
        %v4358 = vpop.f32.mrb[0].mxu0
        %4359 = vmatprep.mubr.f32.mxu0 0.0
        %4360 = vmatmul.mubr.f32.gmra.mrb[0].mxu0 %v4270
        %v4361 = vpop.f32.mrb[0].mxu0
        %v4362 = vadd.f32 0.0, %v4361
        %v4363 = vpop.f32.mrb[0].mxu0
        %4364 = vdwg.mxu0
        %v4365 = vsel %vm1100, %v4347, -inf
        %4366 = vmax.xlane.f32.xlu0 %v4365
        %v4367 = vpop.xlane.xlu0 %4366
        %v4368 = vsel %vm1100, %v4352, -inf
        %4369 = vmax.xlane.f32.xlu0 %v4368
        %v4370 = vpop.xlane.xlu0 %4369
        %v4371 = vsel %vm1100, %v4357, -inf
        %4372 = vmax.xlane.f32.xlu0 %v4371
        %v4373 = vpop.xlane.xlu0 %4372
        %v4374 = vsel %vm1100, %v4362, -inf
        %4375 = vmax.xlane.f32.xlu0 %v4374
        %v4376 = vpop.xlane.xlu0 %4375
        %v4377 = vsub.f32 %v4347, %v4367
        %v4378 = vsub.f32 %v4352, %v4370
        %v4379 = vsub.f32 %v4357, %v4373
        %v4380 = vsub.f32 %v4362, %v4376
        %v4381 = vmul.f32 %v4377, 1.442695
        %v4382 = vpow.pop %v4381
        %v4383 = vmul.f32 %v4378, 1.442695
        %v4384 = vpow.pop %v4383
        %v4385 = vmul.f32 %v4379, 1.442695
        %v4386 = vpow.pop %v4385
        %v4387 = vmul.f32 %v4380, 1.442695
        %v4388 = vpow.pop %v4387
        %v4389 = vsel %vm1100, %v4382, 0.0
        %4390 = vadd.xlane.f32.xlu0 %v4389
        %v4391 = vpop.xlane.xlu0 %4390
        %v4392 = vsel %vm1100, %v4384, 0.0
        %4393 = vadd.xlane.f32.xlu0 %v4392
        %v4394 = vpop.xlane.xlu0 %4393
        %v4395 = vsel %vm1100, %v4386, 0.0
        %4396 = vadd.xlane.f32.xlu0 %v4395
        %v4397 = vpop.xlane.xlu0 %4396
        %v4398 = vsel %vm1100, %v4388, 0.0
        %4399 = vadd.xlane.f32.xlu0 %v4398
        %v4400 = vpop.xlane.xlu0 %4399
        %v4401 = vrcp.pop %v4391
        %v4402 = vrcp.pop %v4394
        %v4403 = vrcp.pop %v4397
        %v4404 = vrcp.pop %v4400
        %v4405 = vmul.f32 %v4382, %v4401
        %v4406 = vmul.f32 %v4384, %v4402
        %v4407 = vmul.f32 %v4386, %v4403
        %v4408 = vmul.f32 %v4388, %v4404
        %4409 = vrot.lane.b32.xlu0 %v3141, 40
        %v4410 = vpop.permute.xlu0 %4409
        %4411 = vrot.lane.b32.xlu0 %v3146, 40
        %v4412 = vpop.permute.xlu0 %4411
        %4413 = vrot.lane.b32.xlu0 %v3151, 40
        %v4414 = vpop.permute.xlu0 %4413
        %4415 = vrot.lane.b32.xlu0 %v3156, 40
        %v4416 = vpop.permute.xlu0 %4415
        %v4417 = vsel %vm1303, %v4410, 0
        %v4419 = vsel %vm1303, %v4412, 0
        %v4421 = vsel %vm1303, %v4414, 0
        %v4423 = vsel %vm1303, %v4416, 0
        %4425 = vmatprep.subr.mxu0 0.0
        %4426 = vmatpush1.msra.mxu0 %v3162
        %4427 = vmatprep.subr.mxu0 0.0
        %4428 = vmatpush1.msra.mxu0 0.0
        %4429 = vmatprep.subr.mxu0 0.0
        %4430 = vmatpush1.msra.mxu0 0.0
        %4431 = vmatprep.subr.mxu0 0.0
        %4432 = vmatpush1.msra.mxu0 0.0
        %4433 = vmatprep.subr.mxu0 0.0
        %4434 = vmatpush1.msra.mxu0 0.0
        %4435 = vmatprep.subr.mxu0 0.0
        %4436 = vmatpush1.msra.mxu0 0.0
        %4437 = vmatprep.subr.mxu0 0.0
        %4438 = vmatpush1.msra.mxu0 0.0
        %4439 = vmatprep.subr.mxu0 0.0
        %4440 = vmatpush1.msra.mxu0 0.0
        %4441 = vmatprep.subr.mxu0 0.0
        %4442 = vmatpush1.msra.mxu0 0.0
        %4443 = vmatprep.subr.mxu0 0.0
        %4444 = vmatpush1.msra.mxu0 0.0
        %4445 = vmatprep.subr.mxu0 0.0
        %4446 = vmatpush1.msra.mxu0 0.0
        %4447 = vmatprep.subr.mxu0 0.0
        %4448 = vmatpush1.msra.mxu0 0.0
        %4449 = vmatprep.subr.mxu0 0.0
        %4450 = vmatpush1.msra.mxu0 0.0
        %4451 = vmatprep.subr.mxu0 0.0
        %4452 = vmatpush1.msra.mxu0 0.0
        %4453 = vmatprep.subr.mxu0 0.0
        %4454 = vmatpush1.msra.mxu0 0.0
        %4455 = vmatprep.subr.mxu0 0.0
        %4456 = vmatpush1.msra.mxu0 0.0
        %4457 = vmatprep.subr.mxu0 0.0
        %4458 = vmatpush1.msra.mxu0 0.0
        %4459 = vmatprep.subr.mxu0 0.0
        %4460 = vmatpush1.msra.mxu0 0.0
        %4461 = vmatprep.subr.mxu0 0.0
        %4462 = vmatpush1.msra.mxu0 0.0
        %4463 = vmatprep.subr.mxu0 0.0
        %4464 = vmatpush1.msra.mxu0 0.0
        %4465 = vmatprep.subr.mxu0 0.0
        %4466 = vmatpush1.msra.mxu0 0.0
        %4467 = vmatprep.subr.mxu0 0.0
        %4468 = vmatpush1.msra.mxu0 0.0
        %4469 = vmatprep.subr.mxu0 0.0
        %4470 = vmatpush1.msra.mxu0 0.0
        %4471 = vmatprep.subr.mxu0 0.0
        %4472 = vmatpush1.msra.mxu0 0.0
        %4473 = vmatprep.subr.mxu0 0.0
        %4474 = vmatpush1.msra.mxu0 0.0
        %4475 = vmatprep.subr.mxu0 0.0
        %4476 = vmatpush1.msra.mxu0 0.0
        %4477 = vmatprep.subr.mxu0 0.0
        %4478 = vmatpush1.msra.mxu0 0.0
        %4479 = vmatprep.subr.mxu0 0.0
        %4480 = vmatpush1.msra.mxu0 0.0
        %4481 = vmatprep.subr.mxu0 0.0
        %4482 = vmatpush1.msra.mxu0 0.0
        %4483 = vmatprep.subr.mxu0 0.0
        %4484 = vmatpush1.msra.mxu0 0.0
        %4485 = vmatprep.subr.mxu0 0.0
        %4486 = vmatpush1.msra.mxu0 0.0
        %4487 = vmatprep.subr.mxu0 0.0
        %4488 = vmatpush1.msra.mxu0 0.0
        %4489 = vmatprep.mubr.f32.mxu0 0.0
        %4490 = vmatmul.mubr.f32.gmra.mrb[0].mxu0 %v4417
        %v4491 = vpop.f32.mrb[0].mxu0
        %v4492 = vadd.f32 0.0, %v4491
        %v4493 = vpop.f32.mrb[0].mxu0
        %4494 = vmatprep.mubr.f32.mxu0 0.0
        %4495 = vmatmul.mubr.f32.gmra.mrb[0].mxu0 %v4419
        %v4496 = vpop.f32.mrb[0].mxu0
        %v4497 = vadd.f32 0.0, %v4496
        %v4498 = vpop.f32.mrb[0].mxu0
        %4499 = vmatprep.mubr.f32.mxu0 0.0
        %4500 = vmatmul.mubr.f32.gmra.mrb[0].mxu0 %v4421
        %v4501 = vpop.f32.mrb[0].mxu0
        %v4502 = vadd.f32 0.0, %v4501
        %v4503 = vpop.f32.mrb[0].mxu0
        %4504 = vmatprep.mubr.f32.mxu0 0.0
        %4505 = vmatmul.mubr.f32.gmra.mrb[0].mxu0 %v4423
        %v4506 = vpop.f32.mrb[0].mxu0
        %v4507 = vadd.f32 0.0, %v4506
        %v4508 = vpop.f32.mrb[0].mxu0
        %4509 = vdwg.mxu0
        %v4511 = vsel %vm1100, %v4405, 0
        %v4514 = vsel %vm1100, %v4406, 0
        %v4517 = vsel %vm1100, %v4407, 0
        %v4520 = vsel %vm1100, %v4408, 0
        %4522 = vmatprep.subr.mxu0 0.0
        %4523 = vmatpush1.msra.mxu0 %v4492
        %4524 = vmatprep.subr.mxu0 0.0
        %4525 = vmatpush1.msra.mxu0 %v4497
        %4526 = vmatprep.subr.mxu0 0.0
        %4527 = vmatpush1.msra.mxu0 %v4502
        %4528 = vmatprep.subr.mxu0 0.0
        %4529 = vmatpush1.msra.mxu0 %v4507
        %4530 = vmatprep.subr.mxu0 0.0
        %4531 = vmatpush1.msra.mxu0 0.0
        %4532 = vmatprep.subr.mxu0 0.0
        %4533 = vmatpush1.msra.mxu0 0.0
        %4534 = vmatprep.subr.mxu0 0.0
        %4535 = vmatpush1.msra.mxu0 0.0
        %4536 = vmatprep.subr.mxu0 0.0
        %4537 = vmatpush1.msra.mxu0 0.0
        %4538 = vmatprep.subr.mxu0 0.0
        %4539 = vmatpush1.msra.mxu0 0.0
        %4540 = vmatprep.subr.mxu0 0.0
        %4541 = vmatpush1.msra.mxu0 0.0
        %4542 = vmatprep.subr.mxu0 0.0
        %4543 = vmatpush1.msra.mxu0 0.0
        %4544 = vmatprep.subr.mxu0 0.0
        %4545 = vmatpush1.msra.mxu0 0.0
        %4546 = vmatprep.subr.mxu0 0.0
        %4547 = vmatpush1.msra.mxu0 0.0
        %4548 = vmatprep.subr.mxu0 0.0
        %4549 = vmatpush1.msra.mxu0 0.0
        %4550 = vmatprep.subr.mxu0 0.0
        %4551 = vmatpush1.msra.mxu0 0.0
        %4552 = vmatprep.subr.mxu0 0.0
        %4553 = vmatpush1.msra.mxu0 0.0
        %4554 = vmatprep.subr.mxu0 0.0
        %4555 = vmatpush1.msra.mxu0 0.0
        %4556 = vmatprep.subr.mxu0 0.0
        %4557 = vmatpush1.msra.mxu0 0.0
        %4558 = vmatprep.subr.mxu0 0.0
        %4559 = vmatpush1.msra.mxu0 0.0
        %4560 = vmatprep.subr.mxu0 0.0
        %4561 = vmatpush1.msra.mxu0 0.0
        %4562 = vmatprep.subr.mxu0 0.0
        %4563 = vmatpush1.msra.mxu0 0.0
        %4564 = vmatprep.subr.mxu0 0.0
        %4565 = vmatpush1.msra.mxu0 0.0
        %4566 = vmatprep.subr.mxu0 0.0
        %4567 = vmatpush1.msra.mxu0 0.0
        %4568 = vmatprep.subr.mxu0 0.0
        %4569 = vmatpush1.msra.mxu0 0.0
        %4570 = vmatprep.subr.mxu0 0.0
        %4571 = vmatpush1.msra.mxu0 0.0
        %4572 = vmatprep.subr.mxu0 0.0
        %4573 = vmatpush1.msra.mxu0 0.0
        %4574 = vmatprep.subr.mxu0 0.0
        %4575 = vmatpush1.msra.mxu0 0.0
        %4576 = vmatprep.subr.mxu0 0.0
        %4577 = vmatpush1.msra.mxu0 0.0
        %4578 = vmatprep.subr.mxu0 0.0
        %4579 = vmatpush1.msra.mxu0 0.0
        %4580 = vmatprep.subr.mxu0 0.0
        %4581 = vmatpush1.msra.mxu0 0.0
        %4582 = vmatprep.subr.mxu0 0.0
        %4583 = vmatpush1.msra.mxu0 0.0
        %4584 = vmatprep.subr.mxu0 0.0
        %4585 = vmatpush1.msra.mxu0 0.0
        %4586 = vmatprep.mubr.f32.mxu0 0.0
        %4587 = vmatmul.mubr.f32.gmra.mrb[0].mxu0 %v4511
        %v4588 = vpop.f32.mrb[0].mxu0
        %v4589 = vadd.f32 0.0, %v4588
        %v4590 = vpop.f32.mrb[0].mxu0
        %4591 = vmatprep.mubr.f32.mxu0 0.0
        %4592 = vmatmul.mubr.f32.gmra.mrb[0].mxu0 %v4514
        %v4593 = vpop.f32.mrb[0].mxu0
        %v4594 = vadd.f32 0.0, %v4593
        %v4595 = vpop.f32.mrb[0].mxu0
        %4596 = vmatprep.mubr.f32.mxu0 0.0
        %4597 = vmatmul.mubr.f32.gmra.mrb[0].mxu0 %v4517
        %v4598 = vpop.f32.mrb[0].mxu0
        %v4599 = vadd.f32 0.0, %v4598
        %v4600 = vpop.f32.mrb[0].mxu0
        %4601 = vmatprep.mubr.f32.mxu0 0.0
        %4602 = vmatmul.mubr.f32.gmra.mrb[0].mxu0 %v4520
        %v4603 = vpop.f32.mrb[0].mxu0
        %v4604 = vadd.f32 0.0, %v4603
        %v4605 = vpop.f32.mrb[0].mxu0
        %4606 = vdwg.mxu0
        %v4607 = vadd.f32 %v4244, %v4589
        %v4608 = vadd.f32 %v4245, %v4594
        %v4609 = vadd.f32 %v4246, %v4599
        %v4610 = vadd.f32 %v4247, %v4604
        %v4611 = vadd.f32 %v3033, %v4607
        %v4612 = vadd.f32 %v3038, %v4608
        %v4613 = vadd.f32 %v3043, %v4609
        %v4614 = vadd.f32 %v3048, %v4610
        %v4615 = vld [vmem:[%s23] sm:$0x1]
        %v4617 = vlaneseq
        %v4618 = vshrl.u32 %v4617, 7
        %v4619 = vsub.s32 0, %v4618
        %v4620 = vrot.slane %v4615, %v4619
        %v4622 = vadd.f32 %v4611, %v4620
        %v4623 = vadd.f32 %v4612, %v4620
        %v4624 = vadd.f32 %v4613, %v4620
        %v4625 = vadd.f32 %v4614, %v4620
        %v4626 = vld [vmem:[%s25] sm:$0x1]
        %v4627 = vld [vmem:[%s27] sm:$0x1]
        %v4628 = vsel %vm1100, %v4622, 0.0
        %4629 = vadd.xlane.f32.xlu0 %v4628
        %v4630 = vpop.xlane.xlu0 %4629
        %v4631 = vsel %vm1100, %v4623, 0.0
        %4632 = vadd.xlane.f32.xlu0 %v4631
        %v4633 = vpop.xlane.xlu0 %4632
        %v4634 = vsel %vm1100, %v4624, 0.0
        %4635 = vadd.xlane.f32.xlu0 %v4634
        %v4636 = vpop.xlane.xlu0 %4635
        %v4637 = vsel %vm1100, %v4625, 0.0
        %4638 = vadd.xlane.f32.xlu0 %v4637
        %v4639 = vpop.xlane.xlu0 %4638
        %v4640 = vrcp.pop 32.0
        %v4641 = vmul.f32 %v4630, %v4640
        %v4642 = vmul.f32 %v4633, %v4640
        %v4643 = vmul.f32 %v4636, %v4640
        %v4644 = vmul.f32 %v4639, %v4640
        %v4645 = vsub.f32 %v4622, %v4641
        %v4646 = vsub.f32 %v4623, %v4642
        %v4647 = vsub.f32 %v4624, %v4643
        %v4648 = vsub.f32 %v4625, %v4644
        %v4649 = vmul.f32 %v4645, %v4645
        %v4650 = vmul.f32 %v4646, %v4646
        %v4651 = vmul.f32 %v4647, %v4647
        %v4652 = vmul.f32 %v4648, %v4648
        %v4653 = vsel %vm1100, %v4649, 0.0
        %4654 = vadd.xlane.f32.xlu0 %v4653
        %v4655 = vpop.xlane.xlu0 %4654
        %v4656 = vsel %vm1100, %v4650, 0.0
        %4657 = vadd.xlane.f32.xlu0 %v4656
        %v4658 = vpop.xlane.xlu0 %4657
        %v4659 = vsel %vm1100, %v4651, 0.0
        %4660 = vadd.xlane.f32.xlu0 %v4659
        %v4661 = vpop.xlane.xlu0 %4660
        %v4662 = vsel %vm1100, %v4652, 0.0
        %4663 = vadd.xlane.f32.xlu0 %v4662
        %v4664 = vpop.xlane.xlu0 %4663
        %v4665 = vmul.f32 %v4655, %v4640
        %v4666 = vmul.f32 %v4658, %v4640
        %v4667 = vmul.f32 %v4661, %v4640
        %v4668 = vmul.f32 %v4664, %v4640
        %v4669 = vadd.f32 %v4665, 1e-05
        %v4670 = vadd.f32 %v4666, 1e-05
        %v4671 = vadd.f32 %v4667, 1e-05
        %v4672 = vadd.f32 %v4668, 1e-05
        %v4673 = vrsqrt.pop %v4669
        %v4674 = vrsqrt.pop %v4670
        %v4675 = vrsqrt.pop %v4671
        %v4676 = vrsqrt.pop %v4672
        %v4677 = vmul.f32 %v4645, %v4673
        %v4678 = vmul.f32 %v4646, %v4674
        %v4679 = vmul.f32 %v4647, %v4675
        %v4680 = vmul.f32 %v4648, %v4676
        %v4682 = vlaneseq
        %v4683 = vshrl.u32 %v4682, 7
        %v4684 = vsub.s32 0, %v4683
        %v4685 = vrot.slane %v4626, %v4684
        %v4687 = vmul.f32 %v4677, %v4685
        %v4688 = vmul.f32 %v4678, %v4685
        %v4689 = vmul.f32 %v4679, %v4685
        %v4690 = vmul.f32 %v4680, %v4685
        %v4692 = vlaneseq
        %v4693 = vshrl.u32 %v4692, 7
        %v4694 = vsub.s32 0, %v4693
        %v4695 = vrot.slane %v4627, %v4694
        %v4697 = vadd.f32 %v4687, %v4695
        %v4698 = vadd.f32 %v4688, %v4695
        %v4699 = vadd.f32 %v4689, %v4695
        %v4700 = vadd.f32 %v4690, %v4695
        %v4701 = vld [vmem:[%s29] sm:$0xff]
        %v4702 = vld [vmem:[%s29 + $0x8] sm:$0xff]
        %v4703 = vld [vmem:[%s29 + $0x10] sm:$0xff]
        %v4704 = vld [vmem:[%s29 + $0x18] sm:$0xff]
        %v4705 = vld [vmem:[%s31] sm:$0x1]
        %v4707 = vlaneseq
        %v4708 = vshrl.u32 %v4707, 7
        %v4709 = vsub.s32 0, %v4708
        %v4710 = vrot.slane %v4705, %v4709
        %v4713 = vsel %vm1100, %v4697, 0
        %v4716 = vsel %vm1100, %v4698, 0
        %v4719 = vsel %vm1100, %v4699, 0
        %v4722 = vsel %vm1100, %v4700, 0
        %4724 = vmatprep.subr.mxu0 0.0
        %4725 = vmatpush1.msra.mxu0 %v4701
        %4726 = vmatprep.subr.mxu0 0.0
        %4727 = vmatpush1.msra.mxu0 %v4702
        %4728 = vmatprep.subr.mxu0 0.0
        %4729 = vmatpush1.msra.mxu0 %v4703
        %4730 = vmatprep.subr.mxu0 0.0
        %4731 = vmatpush1.msra.mxu0 %v4704
        %4732 = vmatprep.subr.mxu0 0.0
        %4733 = vmatpush1.msra.mxu0 0.0
        %4734 = vmatprep.subr.mxu0 0.0
        %4735 = vmatpush1.msra.mxu0 0.0
        %4736 = vmatprep.subr.mxu0 0.0
        %4737 = vmatpush1.msra.mxu0 0.0
        %4738 = vmatprep.subr.mxu0 0.0
        %4739 = vmatpush1.msra.mxu0 0.0
        %4740 = vmatprep.subr.mxu0 0.0
        %4741 = vmatpush1.msra.mxu0 0.0
        %4742 = vmatprep.subr.mxu0 0.0
        %4743 = vmatpush1.msra.mxu0 0.0
        %4744 = vmatprep.subr.mxu0 0.0
        %4745 = vmatpush1.msra.mxu0 0.0
        %4746 = vmatprep.subr.mxu0 0.0
        %4747 = vmatpush1.msra.mxu0 0.0
        %4748 = vmatprep.subr.mxu0 0.0
        %4749 = vmatpush1.msra.mxu0 0.0
        %4750 = vmatprep.subr.mxu0 0.0
        %4751 = vmatpush1.msra.mxu0 0.0
        %4752 = vmatprep.subr.mxu0 0.0
        %4753 = vmatpush1.msra.mxu0 0.0
        %4754 = vmatprep.subr.mxu0 0.0
        %4755 = vmatpush1.msra.mxu0 0.0
        %4756 = vmatprep.subr.mxu0 0.0
        %4757 = vmatpush1.msra.mxu0 0.0
        %4758 = vmatprep.subr.mxu0 0.0
        %4759 = vmatpush1.msra.mxu0 0.0
        %4760 = vmatprep.subr.mxu0 0.0
        %4761 = vmatpush1.msra.mxu0 0.0
        %4762 = vmatprep.subr.mxu0 0.0
        %4763 = vmatpush1.msra.mxu0 0.0
        %4764 = vmatprep.subr.mxu0 0.0
        %4765 = vmatpush1.msra.mxu0 0.0
        %4766 = vmatprep.subr.mxu0 0.0
        %4767 = vmatpush1.msra.mxu0 0.0
        %4768 = vmatprep.subr.mxu0 0.0
        %4769 = vmatpush1.msra.mxu0 0.0
        %4770 = vmatprep.subr.mxu0 0.0
        %4771 = vmatpush1.msra.mxu0 0.0
        %4772 = vmatprep.subr.mxu0 0.0
        %4773 = vmatpush1.msra.mxu0 0.0
        %4774 = vmatprep.subr.mxu0 0.0
        %4775 = vmatpush1.msra.mxu0 0.0
        %4776 = vmatprep.subr.mxu0 0.0
        %4777 = vmatpush1.msra.mxu0 0.0
        %4778 = vmatprep.subr.mxu0 0.0
        %4779 = vmatpush1.msra.mxu0 0.0
        %4780 = vmatprep.subr.mxu0 0.0
        %4781 = vmatpush1.msra.mxu0 0.0
        %4782 = vmatprep.subr.mxu0 0.0
        %4783 = vmatpush1.msra.mxu0 0.0
        %4784 = vmatprep.subr.mxu0 0.0
        %4785 = vmatpush1.msra.mxu0 0.0
        %4786 = vmatprep.subr.mxu0 0.0
        %4787 = vmatpush1.msra.mxu0 0.0
        %4788 = vmatprep.mubr.f32.mxu0 0.0
        %4789 = vmatmul.mubr.f32.gmra.mrb[0].mxu0 %v4713
        %v4790 = vpop.f32.mrb[0].mxu0
        %v4791 = vadd.f32 %v4710, %v4790
        %v4792 = vpop.f32.mrb[0].mxu0
        %4793 = vmatprep.mubr.f32.mxu0 0.0
        %4794 = vmatmul.mubr.f32.gmra.mrb[0].mxu0 %v4716
        %v4795 = vpop.f32.mrb[0].mxu0
        %v4796 = vadd.f32 %v4710, %v4795
        %v4797 = vpop.f32.mrb[0].mxu0
        %4798 = vmatprep.mubr.f32.mxu0 0.0
        %4799 = vmatmul.mubr.f32.gmra.mrb[0].mxu0 %v4719
        %v4800 = vpop.f32.mrb[0].mxu0
        %v4801 = vadd.f32 %v4710, %v4800
        %v4802 = vpop.f32.mrb[0].mxu0
        %4803 = vmatprep.mubr.f32.mxu0 0.0
        %4804 = vmatmul.mubr.f32.gmra.mrb[0].mxu0 %v4722
        %v4805 = vpop.f32.mrb[0].mxu0
        %v4806 = vadd.f32 %v4710, %v4805
        %v4807 = vpop.f32.mrb[0].mxu0
        %4808 = vdwg.mxu0
        %v4809 = vmax.f32 %v4791, 0.0
        %v4810 = vmax.f32 %v4796, 0.0
        %v4811 = vmax.f32 %v4801, 0.0
        %v4812 = vmax.f32 %v4806, 0.0
        %v4813 = vld [vmem:[%s33] sm:$0xff]
        %v4814 = vld [vmem:[%s33 + $0x8] sm:$0xff]
        %v4815 = vld [vmem:[%s33 + $0x10] sm:$0xff]
        %v4816 = vld [vmem:[%s33 + $0x18] sm:$0xff]
        %v4817 = vld [vmem:[%s33 + $0x20] sm:$0xff]
        %v4818 = vld [vmem:[%s33 + $0x28] sm:$0xff]
        %v4819 = vld [vmem:[%s33 + $0x30] sm:$0xff]
        %v4820 = vld [vmem:[%s33 + $0x38] sm:$0xff]
        %v4821 = vld [vmem:[%s33 + $0x40] sm:$0xff]
        %v4822 = vld [vmem:[%s33 + $0x48] sm:$0xff]
        %v4823 = vld [vmem:[%s33 + $0x50] sm:$0xff]
        %v4824 = vld [vmem:[%s33 + $0x58] sm:$0xff]
        %v4825 = vld [vmem:[%s33 + $0x60] sm:$0xff]
        %v4826 = vld [vmem:[%s33 + $0x68] sm:$0xff]
        %v4827 = vld [vmem:[%s33 + $0x70] sm:$0xff]
        %v4828 = vld [vmem:[%s33 + $0x78] sm:$0xff]
        %v4829 = vld [vmem:[%s35] sm:$0x1]
        %v4831 = vlaneseq
        %v4832 = vshrl.u32 %v4831, 7
        %v4833 = vsub.s32 0, %v4832
        %v4834 = vrot.slane %v4829, %v4833
        %4836 = vmatprep.subr.mxu0 0.0
        %4837 = vmatpush1.msra.mxu0 %v4813
        %4838 = vmatprep.subr.mxu0 0.0
        %4839 = vmatpush1.msra.mxu0 %v4814
        %4840 = vmatprep.subr.mxu0 0.0
        %4841 = vmatpush1.msra.mxu0 %v4815
        %4842 = vmatprep.subr.mxu0 0.0
        %4843 = vmatpush1.msra.mxu0 %v4816
        %4844 = vmatprep.subr.mxu0 0.0
        %4845 = vmatpush1.msra.mxu0 %v4817
        %4846 = vmatprep.subr.mxu0 0.0
        %4847 = vmatpush1.msra.mxu0 %v4818
        %4848 = vmatprep.subr.mxu0 0.0
        %4849 = vmatpush1.msra.mxu0 %v4819
        %4850 = vmatprep.subr.mxu0 0.0
        %4851 = vmatpush1.msra.mxu0 %v4820
        %4852 = vmatprep.subr.mxu0 0.0
        %4853 = vmatpush1.msra.mxu0 %v4821
        %4854 = vmatprep.subr.mxu0 0.0
        %4855 = vmatpush1.msra.mxu0 %v4822
        %4856 = vmatprep.subr.mxu0 0.0
        %4857 = vmatpush1.msra.mxu0 %v4823
        %4858 = vmatprep.subr.mxu0 0.0
        %4859 = vmatpush1.msra.mxu0 %v4824
        %4860 = vmatprep.subr.mxu0 0.0
        %4861 = vmatpush1.msra.mxu0 %v4825
        %4862 = vmatprep.subr.mxu0 0.0
        %4863 = vmatpush1.msra.mxu0 %v4826
        %4864 = vmatprep.subr.mxu0 0.0
        %4865 = vmatpush1.msra.mxu0 %v4827
        %4866 = vmatprep.subr.mxu0 0.0
        %4867 = vmatpush1.msra.mxu0 %v4828
        %4868 = vmatprep.subr.mxu0 0.0
        %4869 = vmatpush1.msra.mxu0 0.0
        %4870 = vmatprep.subr.mxu0 0.0
        %4871 = vmatpush1.msra.mxu0 0.0
        %4872 = vmatprep.subr.mxu0 0.0
        %4873 = vmatpush1.msra.mxu0 0.0
        %4874 = vmatprep.subr.mxu0 0.0
        %4875 = vmatpush1.msra.mxu0 0.0
        %4876 = vmatprep.subr.mxu0 0.0
        %4877 = vmatpush1.msra.mxu0 0.0
        %4878 = vmatprep.subr.mxu0 0.0
        %4879 = vmatpush1.msra.mxu0 0.0
        %4880 = vmatprep.subr.mxu0 0.0
        %4881 = vmatpush1.msra.mxu0 0.0
        %4882 = vmatprep.subr.mxu0 0.0
        %4883 = vmatpush1.msra.mxu0 0.0
        %4884 = vmatprep.subr.mxu0 0.0
        %4885 = vmatpush1.msra.mxu0 0.0
        %4886 = vmatprep.subr.mxu0 0.0
        %4887 = vmatpush1.msra.mxu0 0.0
        %4888 = vmatprep.subr.mxu0 0.0
        %4889 = vmatpush1.msra.mxu0 0.0
        %4890 = vmatprep.subr.mxu0 0.0
        %4891 = vmatpush1.msra.mxu0 0.0
        %4892 = vmatprep.subr.mxu0 0.0
        %4893 = vmatpush1.msra.mxu0 0.0
        %4894 = vmatprep.subr.mxu0 0.0
        %4895 = vmatpush1.msra.mxu0 0.0
        %4896 = vmatprep.subr.mxu0 0.0
        %4897 = vmatpush1.msra.mxu0 0.0
        %4898 = vmatprep.subr.mxu0 0.0
        %4899 = vmatpush1.msra.mxu0 0.0
        %4900 = vmatprep.mubr.f32.mxu0 0.0
        %4901 = vmatmul.mubr.f32.gmra.mrb[0].mxu0 %v4809
        %v4902 = vpop.f32.mrb[0].mxu0
        %v4903 = vadd.f32 %v4834, %v4902
        %v4904 = vpop.f32.mrb[0].mxu0
        %4905 = vmatprep.mubr.f32.mxu0 0.0
        %4906 = vmatmul.mubr.f32.gmra.mrb[0].mxu0 %v4810
        %v4907 = vpop.f32.mrb[0].mxu0
        %v4908 = vadd.f32 %v4834, %v4907
        %v4909 = vpop.f32.mrb[0].mxu0
        %4910 = vmatprep.mubr.f32.mxu0 0.0
        %4911 = vmatmul.mubr.f32.gmra.mrb[0].mxu0 %v4811
        %v4912 = vpop.f32.mrb[0].mxu0
        %v4913 = vadd.f32 %v4834, %v4912
        %v4914 = vpop.f32.mrb[0].mxu0
        %4915 = vmatprep.mubr.f32.mxu0 0.0
        %4916 = vmatmul.mubr.f32.gmra.mrb[0].mxu0 %v4812
        %v4917 = vpop.f32.mrb[0].mxu0
        %v4918 = vadd.f32 %v4834, %v4917
        %v4919 = vpop.f32.mrb[0].mxu0
        %4920 = vdwg.mxu0
        %v4921 = vadd.f32 %v4697, %v4903
        %v4922 = vadd.f32 %v4698, %v4908
        %v4923 = vadd.f32 %v4699, %v4913
        %v4924 = vadd.f32 %v4700, %v4918
        %v4925 = vld [vmem:[%s37] sm:$0x1]
        %v4926 = vld [vmem:[%s39] sm:$0x1]
        %v4927 = vsel %vm1100, %v4921, 0.0
        %4928 = vadd.xlane.f32.xlu0 %v4927
        %v4929 = vpop.xlane.xlu0 %4928
        %v4930 = vsel %vm1100, %v4922, 0.0
        %4931 = vadd.xlane.f32.xlu0 %v4930
        %v4932 = vpop.xlane.xlu0 %4931
        %v4933 = vsel %vm1100, %v4923, 0.0
        %4934 = vadd.xlane.f32.xlu0 %v4933
        %v4935 = vpop.xlane.xlu0 %4934
        %v4936 = vsel %vm1100, %v4924, 0.0
        %4937 = vadd.xlane.f32.xlu0 %v4936
        %v4938 = vpop.xlane.xlu0 %4937
        %v4939 = vmul.f32 %v4929, %v4640
        %v4940 = vmul.f32 %v4932, %v4640
        %v4941 = vmul.f32 %v4935, %v4640
        %v4942 = vmul.f32 %v4938, %v4640
        %v4943 = vsub.f32 %v4921, %v4939
        %v4944 = vsub.f32 %v4922, %v4940
        %v4945 = vsub.f32 %v4923, %v4941
        %v4946 = vsub.f32 %v4924, %v4942
        %v4947 = vmul.f32 %v4943, %v4943
        %v4948 = vmul.f32 %v4944, %v4944
        %v4949 = vmul.f32 %v4945, %v4945
        %v4950 = vmul.f32 %v4946, %v4946
        %v4951 = vsel %vm1100, %v4947, 0.0
        %4952 = vadd.xlane.f32.xlu0 %v4951
        %v4953 = vpop.xlane.xlu0 %4952
        %v4954 = vsel %vm1100, %v4948, 0.0
        %4955 = vadd.xlane.f32.xlu0 %v4954
        %v4956 = vpop.xlane.xlu0 %4955
        %v4957 = vsel %vm1100, %v4949, 0.0
        %4958 = vadd.xlane.f32.xlu0 %v4957
        %v4959 = vpop.xlane.xlu0 %4958
        %v4960 = vsel %vm1100, %v4950, 0.0
        %4961 = vadd.xlane.f32.xlu0 %v4960
        %v4962 = vpop.xlane.xlu0 %4961
        %v4963 = vmul.f32 %v4953, %v4640
        %v4964 = vmul.f32 %v4956, %v4640
        %v4965 = vmul.f32 %v4959, %v4640
        %v4966 = vmul.f32 %v4962, %v4640
        %v4967 = vadd.f32 %v4963, 1e-05
        %v4968 = vadd.f32 %v4964, 1e-05
        %v4969 = vadd.f32 %v4965, 1e-05
        %v4970 = vadd.f32 %v4966, 1e-05
        %v4971 = vrsqrt.pop %v4967
        %v4972 = vrsqrt.pop %v4968
        %v4973 = vrsqrt.pop %v4969
        %v4974 = vrsqrt.pop %v4970
        %v4975 = vmul.f32 %v4943, %v4971
        %v4976 = vmul.f32 %v4944, %v4972
        %v4977 = vmul.f32 %v4945, %v4973
        %v4978 = vmul.f32 %v4946, %v4974
        %v4980 = vlaneseq
        %v4981 = vshrl.u32 %v4980, 7
        %v4982 = vsub.s32 0, %v4981
        %v4983 = vrot.slane %v4925, %v4982
        %v4985 = vmul.f32 %v4975, %v4983
        %v4986 = vmul.f32 %v4976, %v4983
        %v4987 = vmul.f32 %v4977, %v4983
        %v4988 = vmul.f32 %v4978, %v4983
        %v4990 = vlaneseq
        %v4991 = vshrl.u32 %v4990, 7
        %v4992 = vsub.s32 0, %v4991
        %v4993 = vrot.slane %v4926, %v4992
        %v4995 = vadd.f32 %v4985, %v4993
        %v4996 = vadd.f32 %v4986, %v4993
        %v4997 = vadd.f32 %v4987, %v4993
        %v4998 = vadd.f32 %v4988, %v4993
        %v4999 = vld [vmem:[%s41] sm:$0xff]
        %v5000 = vld [vmem:[%s41 + $0x8] sm:$0xff]
        %v5001 = vld [vmem:[%s41 + $0x10] sm:$0xff]
        %v5002 = vld [vmem:[%s41 + $0x18] sm:$0xff]
        %v5003 = vld [vmem:[%s43] sm:$0x1]
        %v5005 = vlaneseq
        %v5006 = vshrl.u32 %v5005, 7
        %v5007 = vsub.s32 0, %v5006
        %v5008 = vrot.slane %v5003, %v5007
        %v5011 = vsel %vm1100, %v4995, 0
        %v5014 = vsel %vm1100, %v4996, 0
        %v5017 = vsel %vm1100, %v4997, 0
        %v5020 = vsel %vm1100, %v4998, 0
        %5022 = vmatprep.subr.mxu0 0.0
        %5023 = vmatpush1.msra.mxu0 %v4999
        %5024 = vmatprep.subr.mxu0 0.0
        %5025 = vmatpush1.msra.mxu0 %v5000
        %5026 = vmatprep.subr.mxu0 0.0
        %5027 = vmatpush1.msra.mxu0 %v5001
        %5028 = vmatprep.subr.mxu0 0.0
        %5029 = vmatpush1.msra.mxu0 %v5002
        %5030 = vmatprep.subr.mxu0 0.0
        %5031 = vmatpush1.msra.mxu0 0.0
        %5032 = vmatprep.subr.mxu0 0.0
        %5033 = vmatpush1.msra.mxu0 0.0
        %5034 = vmatprep.subr.mxu0 0.0
        %5035 = vmatpush1.msra.mxu0 0.0
        %5036 = vmatprep.subr.mxu0 0.0
        %5037 = vmatpush1.msra.mxu0 0.0
        %5038 = vmatprep.subr.mxu0 0.0
        %5039 = vmatpush1.msra.mxu0 0.0
        %5040 = vmatprep.subr.mxu0 0.0
        %5041 = vmatpush1.msra.mxu0 0.0
        %5042 = vmatprep.subr.mxu0 0.0
        %5043 = vmatpush1.msra.mxu0 0.0
        %5044 = vmatprep.subr.mxu0 0.0
        %5045 = vmatpush1.msra.mxu0 0.0
        %5046 = vmatprep.subr.mxu0 0.0
        %5047 = vmatpush1.msra.mxu0 0.0
        %5048 = vmatprep.subr.mxu0 0.0
        %5049 = vmatpush1.msra.mxu0 0.0
        %5050 = vmatprep.subr.mxu0 0.0
        %5051 = vmatpush1.msra.mxu0 0.0
        %5052 = vmatprep.subr.mxu0 0.0
        %5053 = vmatpush1.msra.mxu0 0.0
        %5054 = vmatprep.subr.mxu0 0.0
        %5055 = vmatpush1.msra.mxu0 0.0
        %5056 = vmatprep.subr.mxu0 0.0
        %5057 = vmatpush1.msra.mxu0 0.0
        %5058 = vmatprep.subr.mxu0 0.0
        %5059 = vmatpush1.msra.mxu0 0.0
        %5060 = vmatprep.subr.mxu0 0.0
        %5061 = vmatpush1.msra.mxu0 0.0
        %5062 = vmatprep.subr.mxu0 0.0
        %5063 = vmatpush1.msra.mxu0 0.0
        %5064 = vmatprep.subr.mxu0 0.0
        %5065 = vmatpush1.msra.mxu0 0.0
        %5066 = vmatprep.subr.mxu0 0.0
        %5067 = vmatpush1.msra.mxu0 0.0
        %5068 = vmatprep.subr.mxu0 0.0
        %5069 = vmatpush1.msra.mxu0 0.0
        %5070 = vmatprep.subr.mxu0 0.0
        %5071 = vmatpush1.msra.mxu0 0.0
        %5072 = vmatprep.subr.mxu0 0.0
        %5073 = vmatpush1.msra.mxu0 0.0
        %5074 = vmatprep.subr.mxu0 0.0
        %5075 = vmatpush1.msra.mxu0 0.0
        %5076 = vmatprep.subr.mxu0 0.0
        %5077 = vmatpush1.msra.mxu0 0.0
        %5078 = vmatprep.subr.mxu0 0.0
        %5079 = vmatpush1.msra.mxu0 0.0
        %5080 = vmatprep.subr.mxu0 0.0
        %5081 = vmatpush1.msra.mxu0 0.0
        %5082 = vmatprep.subr.mxu0 0.0
        %5083 = vmatpush1.msra.mxu0 0.0
        %5084 = vmatprep.subr.mxu0 0.0
        %5085 = vmatpush1.msra.mxu0 0.0
        %5086 = vmatprep.mubr.f32.mxu0 0.0
        %5087 = vmatmul.mubr.f32.gmra.mrb[0].mxu0 %v5011
        %v5088 = vpop.f32.mrb[0].mxu0
        %v5089 = vadd.f32 %v5008, %v5088
        %v5090 = vpop.f32.mrb[0].mxu0
        %5091 = vmatprep.mubr.f32.mxu0 0.0
        %5092 = vmatmul.mubr.f32.gmra.mrb[0].mxu0 %v5014
        %v5093 = vpop.f32.mrb[0].mxu0
        %v5094 = vadd.f32 %v5008, %v5093
        %v5095 = vpop.f32.mrb[0].mxu0
        %5096 = vmatprep.mubr.f32.mxu0 0.0
        %5097 = vmatmul.mubr.f32.gmra.mrb[0].mxu0 %v5017
        %v5098 = vpop.f32.mrb[0].mxu0
        %v5099 = vadd.f32 %v5008, %v5098
        %v5100 = vpop.f32.mrb[0].mxu0
        %5101 = vmatprep.mubr.f32.mxu0 0.0
        %5102 = vmatmul.mubr.f32.gmra.mrb[0].mxu0 %v5020
        %v5103 = vpop.f32.mrb[0].mxu0
        %v5104 = vadd.f32 %v5008, %v5103
        %v5105 = vpop.f32.mrb[0].mxu0
        %5106 = vdwg.mxu0
        %v5107 = vld [vmem:[%s45] sm:$0xff]
        %v5108 = vld [vmem:[%s45 + $0x8] sm:$0xff]
        %v5109 = vld [vmem:[%s45 + $0x10] sm:$0xff]
        %v5110 = vld [vmem:[%s45 + $0x18] sm:$0xff]
        %v5111 = vmul.f32 %v5089, 0.35355338
        %v5112 = vmul.f32 %v5094, 0.35355338
        %v5113 = vmul.f32 %v5099, 0.35355338
        %v5114 = vmul.f32 %v5104, 0.35355338
        %5119 = vrot.lane.b32.xlu0 %v5089, 96
        %v5120 = vpop.permute.xlu0 %5119
        %5121 = vrot.lane.b32.xlu0 %v5094, 96
        %v5122 = vpop.permute.xlu0 %5121
        %5123 = vrot.lane.b32.xlu0 %v5099, 96
        %v5124 = vpop.permute.xlu0 %5123
        %5125 = vrot.lane.b32.xlu0 %v5104, 96
        %v5126 = vpop.permute.xlu0 %5125
        %v5128 = vsel %vm1303, %v5111, 0
        %v5131 = vsel %vm1303, %v5112, 0
        %v5134 = vsel %vm1303, %v5113, 0
        %v5137 = vsel %vm1303, %v5114, 0
        %v5139 = vsel %vm1303, %v5120, 0
        %v5141 = vsel %vm1303, %v5122, 0
        %v5143 = vsel %vm1303, %v5124, 0
        %v5145 = vsel %vm1303, %v5126, 0
        %5147 = vmatprep.subr.mxu0 0.0
        %5148 = vmatpush1.xpose.msra.mxu0 %v5139
        %5149 = vmatprep.subr.mxu0 0.0
        %5150 = vmatpush1.xpose.msra.mxu0 %v5141
        %5151 = vmatprep.subr.mxu0 0.0
        %5152 = vmatpush1.xpose.msra.mxu0 %v5143
        %5153 = vmatprep.subr.mxu0 0.0
        %5154 = vmatpush1.xpose.msra.mxu0 %v5145
        %5155 = vmatprep.subr.mxu0 0.0
        %5156 = vmatpush1.xpose.msra.mxu0 0.0
        %5157 = vmatprep.subr.mxu0 0.0
        %5158 = vmatpush1.xpose.msra.mxu0 0.0
        %5159 = vmatprep.subr.mxu0 0.0
        %5160 = vmatpush1.xpose.msra.mxu0 0.0
        %5161 = vmatprep.subr.mxu0 0.0
        %5162 = vmatpush1.xpose.msra.mxu0 0.0
        %5163 = vmatprep.subr.mxu0 0.0
        %5164 = vmatpush1.xpose.msra.mxu0 0.0
        %5165 = vmatprep.subr.mxu0 0.0
        %5166 = vmatpush1.xpose.msra.mxu0 0.0
        %5167 = vmatprep.subr.mxu0 0.0
        %5168 = vmatpush1.xpose.msra.mxu0 0.0
        %5169 = vmatprep.subr.mxu0 0.0
        %5170 = vmatpush1.xpose.msra.mxu0 0.0
        %5171 = vmatprep.subr.mxu0 0.0
        %5172 = vmatpush1.xpose.msra.mxu0 0.0
        %5173 = vmatprep.subr.mxu0 0.0
        %5174 = vmatpush1.xpose.msra.mxu0 0.0
        %5175 = vmatprep.subr.mxu0 0.0
        %5176 = vmatpush1.xpose.msra.mxu0 0.0
        %5177 = vmatprep.subr.mxu0 0.0
        %5178 = vmatpush1.xpose.msra.mxu0 0.0
        %5179 = vmatprep.subr.mxu0 0.0
        %5180 = vmatpush1.xpose.msra.mxu0 0.0
        %5181 = vmatprep.subr.mxu0 0.0
        %5182 = vmatpush1.xpose.msra.mxu0 0.0
        %5183 = vmatprep.subr.mxu0 0.0
        %5184 = vmatpush1.xpose.msra.mxu0 0.0
        %5185 = vmatprep.subr.mxu0 0.0
        %5186 = vmatpush1.xpose.msra.mxu0 0.0
        %5187 = vmatprep.subr.mxu0 0.0
        %5188 = vmatpush1.xpose.msra.mxu0 0.0
        %5189 = vmatprep.subr.mxu0 0.0
        %5190 = vmatpush1.xpose.msra.mxu0 0.0
        %5191 = vmatprep.subr.mxu0 0.0
        %5192 = vmatpush1.xpose.msra.mxu0 0.0
        %5193 = vmatprep.subr.mxu0 0.0
        %5194 = vmatpush1.xpose.msra.mxu0 0.0
        %5195 = vmatprep.subr.mxu0 0.0
        %5196 = vmatpush1.xpose.msra.mxu0 0.0
        %5197 = vmatprep.subr.mxu0 0.0
        %5198 = vmatpush1.xpose.msra.mxu0 0.0
        %5199 = vmatprep.subr.mxu0 0.0
        %5200 = vmatpush1.xpose.msra.mxu0 0.0
        %5201 = vmatprep.subr.mxu0 0.0
        %5202 = vmatpush1.xpose.msra.mxu0 0.0
        %5203 = vmatprep.subr.mxu0 0.0
        %5204 = vmatpush1.xpose.msra.mxu0 0.0
        %5205 = vmatprep.subr.mxu0 0.0
        %5206 = vmatpush1.xpose.msra.mxu0 0.0
        %5207 = vmatprep.subr.mxu0 0.0
        %5208 = vmatpush1.xpose.msra.mxu0 0.0
        %5209 = vmatprep.subr.mxu0 0.0
        %5210 = vmatpush1.xpose.msra.mxu0 0.0
        %5211 = vmatprep.mubr.f32.mxu0 0.0
        %5212 = vmatmul.mubr.f32.gmra.mrb[0].mxu0 %v5128
        %v5213 = vpop.f32.mrb[0].mxu0
        %v5214 = vadd.f32 0.0, %v5213
        %v5215 = vpop.f32.mrb[0].mxu0
        %5216 = vmatprep.mubr.f32.mxu0 0.0
        %5217 = vmatmul.mubr.f32.gmra.mrb[0].mxu0 %v5131
        %v5218 = vpop.f32.mrb[0].mxu0
        %v5219 = vadd.f32 0.0, %v5218
        %v5220 = vpop.f32.mrb[0].mxu0
        %5221 = vmatprep.mubr.f32.mxu0 0.0
        %5222 = vmatmul.mubr.f32.gmra.mrb[0].mxu0 %v5134
        %v5223 = vpop.f32.mrb[0].mxu0
        %v5224 = vadd.f32 0.0, %v5223
        %v5225 = vpop.f32.mrb[0].mxu0
        %5226 = vmatprep.mubr.f32.mxu0 0.0
        %5227 = vmatmul.mubr.f32.gmra.mrb[0].mxu0 %v5137
        %v5228 = vpop.f32.mrb[0].mxu0
        %v5229 = vadd.f32 0.0, %v5228
        %v5230 = vpop.f32.mrb[0].mxu0
        %5231 = vdwg.mxu0
        %v5232 = vsel %vm1100, %v5214, -inf
        %5233 = vmax.xlane.f32.xlu0 %v5232
        %v5234 = vpop.xlane.xlu0 %5233
        %v5235 = vsel %vm1100, %v5219, -inf
        %5236 = vmax.xlane.f32.xlu0 %v5235
        %v5237 = vpop.xlane.xlu0 %5236
        %v5238 = vsel %vm1100, %v5224, -inf
        %5239 = vmax.xlane.f32.xlu0 %v5238
        %v5240 = vpop.xlane.xlu0 %5239
        %v5241 = vsel %vm1100, %v5229, -inf
        %5242 = vmax.xlane.f32.xlu0 %v5241
        %v5243 = vpop.xlane.xlu0 %5242
        %v5244 = vsub.f32 %v5214, %v5234
        %v5245 = vsub.f32 %v5219, %v5237
        %v5246 = vsub.f32 %v5224, %v5240
        %v5247 = vsub.f32 %v5229, %v5243
        %v5248 = vmul.f32 %v5244, 1.442695
        %v5249 = vpow.pop %v5248
        %v5250 = vmul.f32 %v5245, 1.442695
        %v5251 = vpow.pop %v5250
        %v5252 = vmul.f32 %v5246, 1.442695
        %v5253 = vpow.pop %v5252
        %v5254 = vmul.f32 %v5247, 1.442695
        %v5255 = vpow.pop %v5254
        %v5256 = vsel %vm1100, %v5249, 0.0
        %5257 = vadd.xlane.f32.xlu0 %v5256
        %v5258 = vpop.xlane.xlu0 %5257
        %v5259 = vsel %vm1100, %v5251, 0.0
        %5260 = vadd.xlane.f32.xlu0 %v5259
        %v5261 = vpop.xlane.xlu0 %5260
        %v5262 = vsel %vm1100, %v5253, 0.0
        %5263 = vadd.xlane.f32.xlu0 %v5262
        %v5264 = vpop.xlane.xlu0 %5263
        %v5265 = vsel %vm1100, %v5255, 0.0
        %5266 = vadd.xlane.f32.xlu0 %v5265
        %v5267 = vpop.xlane.xlu0 %5266
        %v5268 = vrcp.pop %v5258
        %v5269 = vrcp.pop %v5261
        %v5270 = vrcp.pop %v5264
        %v5271 = vrcp.pop %v5267
        %v5272 = vmul.f32 %v5249, %v5268
        %v5273 = vmul.f32 %v5251, %v5269
        %v5274 = vmul.f32 %v5253, %v5270
        %v5275 = vmul.f32 %v5255, %v5271
        %5276 = vrot.lane.b32.xlu0 %v5089, 64
        %v5277 = vpop.permute.xlu0 %5276
        %5278 = vrot.lane.b32.xlu0 %v5094, 64
        %v5279 = vpop.permute.xlu0 %5278
        %5280 = vrot.lane.b32.xlu0 %v5099, 64
        %v5281 = vpop.permute.xlu0 %5280
        %5282 = vrot.lane.b32.xlu0 %v5104, 64
        %v5283 = vpop.permute.xlu0 %5282
        %v5284 = vsel %vm1303, %v5277, 0
        %v5286 = vsel %vm1303, %v5279, 0
        %v5288 = vsel %vm1303, %v5281, 0
        %v5290 = vsel %vm1303, %v5283, 0
        %5292 = vmatprep.subr.mxu0 0.0
        %5293 = vmatpush1.msra.mxu0 %v5107
        %5294 = vmatprep.subr.mxu0 0.0
        %5295 = vmatpush1.msra.mxu0 0.0
        %5296 = vmatprep.subr.mxu0 0.0
        %5297 = vmatpush1.msra.mxu0 0.0
        %5298 = vmatprep.subr.mxu0 0.0
        %5299 = vmatpush1.msra.mxu0 0.0
        %5300 = vmatprep.subr.mxu0 0.0
        %5301 = vmatpush1.msra.mxu0 0.0
        %5302 = vmatprep.subr.mxu0 0.0
        %5303 = vmatpush1.msra.mxu0 0.0
        %5304 = vmatprep.subr.mxu0 0.0
        %5305 = vmatpush1.msra.mxu0 0.0
        %5306 = vmatprep.subr.mxu0 0.0
        %5307 = vmatpush1.msra.mxu0 0.0
        %5308 = vmatprep.subr.mxu0 0.0
        %5309 = vmatpush1.msra.mxu0 0.0
        %5310 = vmatprep.subr.mxu0 0.0
        %5311 = vmatpush1.msra.mxu0 0.0
        %5312 = vmatprep.subr.mxu0 0.0
        %5313 = vmatpush1.msra.mxu0 0.0
        %5314 = vmatprep.subr.mxu0 0.0
        %5315 = vmatpush1.msra.mxu0 0.0
        %5316 = vmatprep.subr.mxu0 0.0
        %5317 = vmatpush1.msra.mxu0 0.0
        %5318 = vmatprep.subr.mxu0 0.0
        %5319 = vmatpush1.msra.mxu0 0.0
        %5320 = vmatprep.subr.mxu0 0.0
        %5321 = vmatpush1.msra.mxu0 0.0
        %5322 = vmatprep.subr.mxu0 0.0
        %5323 = vmatpush1.msra.mxu0 0.0
        %5324 = vmatprep.subr.mxu0 0.0
        %5325 = vmatpush1.msra.mxu0 0.0
        %5326 = vmatprep.subr.mxu0 0.0
        %5327 = vmatpush1.msra.mxu0 0.0
        %5328 = vmatprep.subr.mxu0 0.0
        %5329 = vmatpush1.msra.mxu0 0.0
        %5330 = vmatprep.subr.mxu0 0.0
        %5331 = vmatpush1.msra.mxu0 0.0
        %5332 = vmatprep.subr.mxu0 0.0
        %5333 = vmatpush1.msra.mxu0 0.0
        %5334 = vmatprep.subr.mxu0 0.0
        %5335 = vmatpush1.msra.mxu0 0.0
        %5336 = vmatprep.subr.mxu0 0.0
        %5337 = vmatpush1.msra.mxu0 0.0
        %5338 = vmatprep.subr.mxu0 0.0
        %5339 = vmatpush1.msra.mxu0 0.0
        %5340 = vmatprep.subr.mxu0 0.0
        %5341 = vmatpush1.msra.mxu0 0.0
        %5342 = vmatprep.subr.mxu0 0.0
        %5343 = vmatpush1.msra.mxu0 0.0
        %5344 = vmatprep.subr.mxu0 0.0
        %5345 = vmatpush1.msra.mxu0 0.0
        %5346 = vmatprep.subr.mxu0 0.0
        %5347 = vmatpush1.msra.mxu0 0.0
        %5348 = vmatprep.subr.mxu0 0.0
        %5349 = vmatpush1.msra.mxu0 0.0
        %5350 = vmatprep.subr.mxu0 0.0
        %5351 = vmatpush1.msra.mxu0 0.0
        %5352 = vmatprep.subr.mxu0 0.0
        %5353 = vmatpush1.msra.mxu0 0.0
        %5354 = vmatprep.subr.mxu0 0.0
        %5355 = vmatpush1.msra.mxu0 0.0
        %5356 = vmatprep.mubr.f32.mxu0 0.0
        %5357 = vmatmul.mubr.f32.gmra.mrb[0].mxu0 %v5284
        %v5358 = vpop.f32.mrb[0].mxu0
        %v5359 = vadd.f32 0.0, %v5358
        %v5360 = vpop.f32.mrb[0].mxu0
        %5361 = vmatprep.mubr.f32.mxu0 0.0
        %5362 = vmatmul.mubr.f32.gmra.mrb[0].mxu0 %v5286
        %v5363 = vpop.f32.mrb[0].mxu0
        %v5364 = vadd.f32 0.0, %v5363
        %v5365 = vpop.f32.mrb[0].mxu0
        %5366 = vmatprep.mubr.f32.mxu0 0.0
        %5367 = vmatmul.mubr.f32.gmra.mrb[0].mxu0 %v5288
        %v5368 = vpop.f32.mrb[0].mxu0
        %v5369 = vadd.f32 0.0, %v5368
        %v5370 = vpop.f32.mrb[0].mxu0
        %5371 = vmatprep.mubr.f32.mxu0 0.0
        %5372 = vmatmul.mubr.f32.gmra.mrb[0].mxu0 %v5290
        %v5373 = vpop.f32.mrb[0].mxu0
        %v5374 = vadd.f32 0.0, %v5373
        %v5375 = vpop.f32.mrb[0].mxu0
        %5376 = vdwg.mxu0
        %5377 = vrot.lane.b32.xlu0 %v5111, 120
        %v5378 = vpop.permute.xlu0 %5377
        %5379 = vrot.lane.b32.xlu0 %v5112, 120
        %v5380 = vpop.permute.xlu0 %5379
        %5381 = vrot.lane.b32.xlu0 %v5113, 120
        %v5382 = vpop.permute.xlu0 %5381
        %5383 = vrot.lane.b32.xlu0 %v5114, 120
        %v5384 = vpop.permute.xlu0 %5383
        %5385 = vrot.lane.b32.xlu0 %v5089, 88
        %v5386 = vpop.permute.xlu0 %5385
        %5387 = vrot.lane.b32.xlu0 %v5094, 88
        %v5388 = vpop.permute.xlu0 %5387
        %5389 = vrot.lane.b32.xlu0 %v5099, 88
        %v5390 = vpop.permute.xlu0 %5389
        %5391 = vrot.lane.b32.xlu0 %v5104, 88
        %v5392 = vpop.permute.xlu0 %5391
        %v5393 = vsel %vm1303, %v5378, 0
        %v5395 = vsel %vm1303, %v5380, 0
        %v5397 = vsel %vm1303, %v5382, 0
        %v5399 = vsel %vm1303, %v5384, 0
        %v5401 = vsel %vm1303, %v5386, 0
        %v5403 = vsel %vm1303, %v5388, 0
        %v5405 = vsel %vm1303, %v5390, 0
        %v5407 = vsel %vm1303, %v5392, 0
        %5409 = vmatprep.subr.mxu0 0.0
        %5410 = vmatpush1.xpose.msra.mxu0 %v5401
        %5411 = vmatprep.subr.mxu0 0.0
        %5412 = vmatpush1.xpose.msra.mxu0 %v5403
        %5413 = vmatprep.subr.mxu0 0.0
        %5414 = vmatpush1.xpose.msra.mxu0 %v5405
        %5415 = vmatprep.subr.mxu0 0.0
        %5416 = vmatpush1.xpose.msra.mxu0 %v5407
        %5417 = vmatprep.subr.mxu0 0.0
        %5418 = vmatpush1.xpose.msra.mxu0 0.0
        %5419 = vmatprep.subr.mxu0 0.0
        %5420 = vmatpush1.xpose.msra.mxu0 0.0
        %5421 = vmatprep.subr.mxu0 0.0
        %5422 = vmatpush1.xpose.msra.mxu0 0.0
        %5423 = vmatprep.subr.mxu0 0.0
        %5424 = vmatpush1.xpose.msra.mxu0 0.0
        %5425 = vmatprep.subr.mxu0 0.0
        %5426 = vmatpush1.xpose.msra.mxu0 0.0
        %5427 = vmatprep.subr.mxu0 0.0
        %5428 = vmatpush1.xpose.msra.mxu0 0.0
        %5429 = vmatprep.subr.mxu0 0.0
        %5430 = vmatpush1.xpose.msra.mxu0 0.0
        %5431 = vmatprep.subr.mxu0 0.0
        %5432 = vmatpush1.xpose.msra.mxu0 0.0
        %5433 = vmatprep.subr.mxu0 0.0
        %5434 = vmatpush1.xpose.msra.mxu0 0.0
        %5435 = vmatprep.subr.mxu0 0.0
        %5436 = vmatpush1.xpose.msra.mxu0 0.0
        %5437 = vmatprep.subr.mxu0 0.0
        %5438 = vmatpush1.xpose.msra.mxu0 0.0
        %5439 = vmatprep.subr.mxu0 0.0
        %5440 = vmatpush1.xpose.msra.mxu0 0.0
        %5441 = vmatprep.subr.mxu0 0.0
        %5442 = vmatpush1.xpose.msra.mxu0 0.0
        %5443 = vmatprep.subr.mxu0 0.0
        %5444 = vmatpush1.xpose.msra.mxu0 0.0
        %5445 = vmatprep.subr.mxu0 0.0
        %5446 = vmatpush1.xpose.msra.mxu0 0.0
        %5447 = vmatprep.subr.mxu0 0.0
        %5448 = vmatpush1.xpose.msra.mxu0 0.0
        %5449 = vmatprep.subr.mxu0 0.0
        %5450 = vmatpush1.xpose.msra.mxu0 0.0
        %5451 = vmatprep.subr.mxu0 0.0
        %5452 = vmatpush1.xpose.msra.mxu0 0.0
        %5453 = vmatprep.subr.mxu0 0.0
        %5454 = vmatpush1.xpose.msra.mxu0 0.0
        %5455 = vmatprep.subr.mxu0 0.0
        %5456 = vmatpush1.xpose.msra.mxu0 0.0
        %5457 = vmatprep.subr.mxu0 0.0
        %5458 = vmatpush1.xpose.msra.mxu0 0.0
        %5459 = vmatprep.subr.mxu0 0.0
        %5460 = vmatpush1.xpose.msra.mxu0 0.0
        %5461 = vmatprep.subr.mxu0 0.0
        %5462 = vmatpush1.xpose.msra.mxu0 0.0
        %5463 = vmatprep.subr.mxu0 0.0
        %5464 = vmatpush1.xpose.msra.mxu0 0.0
        %5465 = vmatprep.subr.mxu0 0.0
        %5466 = vmatpush1.xpose.msra.mxu0 0.0
        %5467 = vmatprep.subr.mxu0 0.0
        %5468 = vmatpush1.xpose.msra.mxu0 0.0
        %5469 = vmatprep.subr.mxu0 0.0
        %5470 = vmatpush1.xpose.msra.mxu0 0.0
        %5471 = vmatprep.subr.mxu0 0.0
        %5472 = vmatpush1.xpose.msra.mxu0 0.0
        %5473 = vmatprep.mubr.f32.mxu0 0.0
        %5474 = vmatmul.mubr.f32.gmra.mrb[0].mxu0 %v5393
        %v5475 = vpop.f32.mrb[0].mxu0
        %v5476 = vadd.f32 0.0, %v5475
        %v5477 = vpop.f32.mrb[0].mxu0
        %5478 = vmatprep.mubr.f32.mxu0 0.0
        %5479 = vmatmul.mubr.f32.gmra.mrb[0].mxu0 %v5395
        %v5480 = vpop.f32.mrb[0].mxu0
        %v5481 = vadd.f32 0.0, %v5480
        %v5482 = vpop.f32.mrb[0].mxu0
        %5483 = vmatprep.mubr.f32.mxu0 0.0
        %5484 = vmatmul.mubr.f32.gmra.mrb[0].mxu0 %v5397
        %v5485 = vpop.f32.mrb[0].mxu0
        %v5486 = vadd.f32 0.0, %v5485
        %v5487 = vpop.f32.mrb[0].mxu0
        %5488 = vmatprep.mubr.f32.mxu0 0.0
        %5489 = vmatmul.mubr.f32.gmra.mrb[0].mxu0 %v5399
        %v5490 = vpop.f32.mrb[0].mxu0
        %v5491 = vadd.f32 0.0, %v5490
        %v5492 = vpop.f32.mrb[0].mxu0
        %5493 = vdwg.mxu0
        %v5494 = vsel %vm1100, %v5476, -inf
        %5495 = vmax.xlane.f32.xlu0 %v5494
        %v5496 = vpop.xlane.xlu0 %5495
        %v5497 = vsel %vm1100, %v5481, -inf
        %5498 = vmax.xlane.f32.xlu0 %v5497
        %v5499 = vpop.xlane.xlu0 %5498
        %v5500 = vsel %vm1100, %v5486, -inf
        %5501 = vmax.xlane.f32.xlu0 %v5500
        %v5502 = vpop.xlane.xlu0 %5501
        %v5503 = vsel %vm1100, %v5491, -inf
        %5504 = vmax.xlane.f32.xlu0 %v5503
        %v5505 = vpop.xlane.xlu0 %5504
        %v5506 = vsub.f32 %v5476, %v5496
        %v5507 = vsub.f32 %v5481, %v5499
        %v5508 = vsub.f32 %v5486, %v5502
        %v5509 = vsub.f32 %v5491, %v5505
        %v5510 = vmul.f32 %v5506, 1.442695
        %v5511 = vpow.pop %v5510
        %v5512 = vmul.f32 %v5507, 1.442695
        %v5513 = vpow.pop %v5512
        %v5514 = vmul.f32 %v5508, 1.442695
        %v5515 = vpow.pop %v5514
        %v5516 = vmul.f32 %v5509, 1.442695
        %v5517 = vpow.pop %v5516
        %v5518 = vsel %vm1100, %v5511, 0.0
        %5519 = vadd.xlane.f32.xlu0 %v5518
        %v5520 = vpop.xlane.xlu0 %5519
        %v5521 = vsel %vm1100, %v5513, 0.0
        %5522 = vadd.xlane.f32.xlu0 %v5521
        %v5523 = vpop.xlane.xlu0 %5522
        %v5524 = vsel %vm1100, %v5515, 0.0
        %5525 = vadd.xlane.f32.xlu0 %v5524
        %v5526 = vpop.xlane.xlu0 %5525
        %v5527 = vsel %vm1100, %v5517, 0.0
        %5528 = vadd.xlane.f32.xlu0 %v5527
        %v5529 = vpop.xlane.xlu0 %5528
        %v5530 = vrcp.pop %v5520
        %v5531 = vrcp.pop %v5523
        %v5532 = vrcp.pop %v5526
        %v5533 = vrcp.pop %v5529
        %v5534 = vmul.f32 %v5511, %v5530
        %v5535 = vmul.f32 %v5513, %v5531
        %v5536 = vmul.f32 %v5515, %v5532
        %v5537 = vmul.f32 %v5517, %v5533
        %5538 = vrot.lane.b32.xlu0 %v5089, 56
        %v5539 = vpop.permute.xlu0 %5538
        %5540 = vrot.lane.b32.xlu0 %v5094, 56
        %v5541 = vpop.permute.xlu0 %5540
        %5542 = vrot.lane.b32.xlu0 %v5099, 56
        %v5543 = vpop.permute.xlu0 %5542
        %5544 = vrot.lane.b32.xlu0 %v5104, 56
        %v5545 = vpop.permute.xlu0 %5544
        %v5546 = vsel %vm1303, %v5539, 0
        %v5548 = vsel %vm1303, %v5541, 0
        %v5550 = vsel %vm1303, %v5543, 0
        %v5552 = vsel %vm1303, %v5545, 0
        %5554 = vmatprep.subr.mxu0 0.0
        %5555 = vmatpush1.msra.mxu0 %v5108
        %5556 = vmatprep.subr.mxu0 0.0
        %5557 = vmatpush1.msra.mxu0 0.0
        %5558 = vmatprep.subr.mxu0 0.0
        %5559 = vmatpush1.msra.mxu0 0.0
        %5560 = vmatprep.subr.mxu0 0.0
        %5561 = vmatpush1.msra.mxu0 0.0
        %5562 = vmatprep.subr.mxu0 0.0
        %5563 = vmatpush1.msra.mxu0 0.0
        %5564 = vmatprep.subr.mxu0 0.0
        %5565 = vmatpush1.msra.mxu0 0.0
        %5566 = vmatprep.subr.mxu0 0.0
        %5567 = vmatpush1.msra.mxu0 0.0
        %5568 = vmatprep.subr.mxu0 0.0
        %5569 = vmatpush1.msra.mxu0 0.0
        %5570 = vmatprep.subr.mxu0 0.0
        %5571 = vmatpush1.msra.mxu0 0.0
        %5572 = vmatprep.subr.mxu0 0.0
        %5573 = vmatpush1.msra.mxu0 0.0
        %5574 = vmatprep.subr.mxu0 0.0
        %5575 = vmatpush1.msra.mxu0 0.0
        %5576 = vmatprep.subr.mxu0 0.0
        %5577 = vmatpush1.msra.mxu0 0.0
        %5578 = vmatprep.subr.mxu0 0.0
        %5579 = vmatpush1.msra.mxu0 0.0
        %5580 = vmatprep.subr.mxu0 0.0
        %5581 = vmatpush1.msra.mxu0 0.0
        %5582 = vmatprep.subr.mxu0 0.0
        %5583 = vmatpush1.msra.mxu0 0.0
        %5584 = vmatprep.subr.mxu0 0.0
        %5585 = vmatpush1.msra.mxu0 0.0
        %5586 = vmatprep.subr.mxu0 0.0
        %5587 = vmatpush1.msra.mxu0 0.0
        %5588 = vmatprep.subr.mxu0 0.0
        %5589 = vmatpush1.msra.mxu0 0.0
        %5590 = vmatprep.subr.mxu0 0.0
        %5591 = vmatpush1.msra.mxu0 0.0
        %5592 = vmatprep.subr.mxu0 0.0
        %5593 = vmatpush1.msra.mxu0 0.0
        %5594 = vmatprep.subr.mxu0 0.0
        %5595 = vmatpush1.msra.mxu0 0.0
        %5596 = vmatprep.subr.mxu0 0.0
        %5597 = vmatpush1.msra.mxu0 0.0
        %5598 = vmatprep.subr.mxu0 0.0
        %5599 = vmatpush1.msra.mxu0 0.0
        %5600 = vmatprep.subr.mxu0 0.0
        %5601 = vmatpush1.msra.mxu0 0.0
        %5602 = vmatprep.subr.mxu0 0.0
        %5603 = vmatpush1.msra.mxu0 0.0
        %5604 = vmatprep.subr.mxu0 0.0
        %5605 = vmatpush1.msra.mxu0 0.0
        %5606 = vmatprep.subr.mxu0 0.0
        %5607 = vmatpush1.msra.mxu0 0.0
        %5608 = vmatprep.subr.mxu0 0.0
        %5609 = vmatpush1.msra.mxu0 0.0
        %5610 = vmatprep.subr.mxu0 0.0
        %5611 = vmatpush1.msra.mxu0 0.0
        %5612 = vmatprep.subr.mxu0 0.0
        %5613 = vmatpush1.msra.mxu0 0.0
        %5614 = vmatprep.subr.mxu0 0.0
        %5615 = vmatpush1.msra.mxu0 0.0
        %5616 = vmatprep.subr.mxu0 0.0
        %5617 = vmatpush1.msra.mxu0 0.0
        %5618 = vmatprep.mubr.f32.mxu0 0.0
        %5619 = vmatmul.mubr.f32.gmra.mrb[0].mxu0 %v5546
        %v5620 = vpop.f32.mrb[0].mxu0
        %v5621 = vadd.f32 0.0, %v5620
        %v5622 = vpop.f32.mrb[0].mxu0
        %5623 = vmatprep.mubr.f32.mxu0 0.0
        %5624 = vmatmul.mubr.f32.gmra.mrb[0].mxu0 %v5548
        %v5625 = vpop.f32.mrb[0].mxu0
        %v5626 = vadd.f32 0.0, %v5625
        %v5627 = vpop.f32.mrb[0].mxu0
        %5628 = vmatprep.mubr.f32.mxu0 0.0
        %5629 = vmatmul.mubr.f32.gmra.mrb[0].mxu0 %v5550
        %v5630 = vpop.f32.mrb[0].mxu0
        %v5631 = vadd.f32 0.0, %v5630
        %v5632 = vpop.f32.mrb[0].mxu0
        %5633 = vmatprep.mubr.f32.mxu0 0.0
        %5634 = vmatmul.mubr.f32.gmra.mrb[0].mxu0 %v5552
        %v5635 = vpop.f32.mrb[0].mxu0
        %v5636 = vadd.f32 0.0, %v5635
        %v5637 = vpop.f32.mrb[0].mxu0
        %5638 = vdwg.mxu0
        %v5640 = vsel %vm1100, %v5534, 0
        %v5643 = vsel %vm1100, %v5535, 0
        %v5646 = vsel %vm1100, %v5536, 0
        %v5649 = vsel %vm1100, %v5537, 0
        %5651 = vmatprep.subr.mxu0 0.0
        %5652 = vmatpush1.msra.mxu0 %v5621
        %5653 = vmatprep.subr.mxu0 0.0
        %5654 = vmatpush1.msra.mxu0 %v5626
        %5655 = vmatprep.subr.mxu0 0.0
        %5656 = vmatpush1.msra.mxu0 %v5631
        %5657 = vmatprep.subr.mxu0 0.0
        %5658 = vmatpush1.msra.mxu0 %v5636
        %5659 = vmatprep.subr.mxu0 0.0
        %5660 = vmatpush1.msra.mxu0 0.0
        %5661 = vmatprep.subr.mxu0 0.0
        %5662 = vmatpush1.msra.mxu0 0.0
        %5663 = vmatprep.subr.mxu0 0.0
        %5664 = vmatpush1.msra.mxu0 0.0
        %5665 = vmatprep.subr.mxu0 0.0
        %5666 = vmatpush1.msra.mxu0 0.0
        %5667 = vmatprep.subr.mxu0 0.0
        %5668 = vmatpush1.msra.mxu0 0.0
        %5669 = vmatprep.subr.mxu0 0.0
        %5670 = vmatpush1.msra.mxu0 0.0
        %5671 = vmatprep.subr.mxu0 0.0
        %5672 = vmatpush1.msra.mxu0 0.0
        %5673 = vmatprep.subr.mxu0 0.0
        %5674 = vmatpush1.msra.mxu0 0.0
        %5675 = vmatprep.subr.mxu0 0.0
        %5676 = vmatpush1.msra.mxu0 0.0
        %5677 = vmatprep.subr.mxu0 0.0
        %5678 = vmatpush1.msra.mxu0 0.0
        %5679 = vmatprep.subr.mxu0 0.0
        %5680 = vmatpush1.msra.mxu0 0.0
        %5681 = vmatprep.subr.mxu0 0.0
        %5682 = vmatpush1.msra.mxu0 0.0
        %5683 = vmatprep.subr.mxu0 0.0
        %5684 = vmatpush1.msra.mxu0 0.0
        %5685 = vmatprep.subr.mxu0 0.0
        %5686 = vmatpush1.msra.mxu0 0.0
        %5687 = vmatprep.subr.mxu0 0.0
        %5688 = vmatpush1.msra.mxu0 0.0
        %5689 = vmatprep.subr.mxu0 0.0
        %5690 = vmatpush1.msra.mxu0 0.0
        %5691 = vmatprep.subr.mxu0 0.0
        %5692 = vmatpush1.msra.mxu0 0.0
        %5693 = vmatprep.subr.mxu0 0.0
        %5694 = vmatpush1.msra.mxu0 0.0
        %5695 = vmatprep.subr.mxu0 0.0
        %5696 = vmatpush1.msra.mxu0 0.0
        %5697 = vmatprep.subr.mxu0 0.0
        %5698 = vmatpush1.msra.mxu0 0.0
        %5699 = vmatprep.subr.mxu0 0.0
        %5700 = vmatpush1.msra.mxu0 0.0
        %5701 = vmatprep.subr.mxu0 0.0
        %5702 = vmatpush1.msra.mxu0 0.0
        %5703 = vmatprep.subr.mxu0 0.0
        %5704 = vmatpush1.msra.mxu0 0.0
        %5705 = vmatprep.subr.mxu0 0.0
        %5706 = vmatpush1.msra.mxu0 0.0
        %5707 = vmatprep.subr.mxu0 0.0
        %5708 = vmatpush1.msra.mxu0 0.0
        %5709 = vmatprep.subr.mxu0 0.0
        %5710 = vmatpush1.msra.mxu0 0.0
        %5711 = vmatprep.subr.mxu0 0.0
        %5712 = vmatpush1.msra.mxu0 0.0
        %5713 = vmatprep.subr.mxu0 0.0
        %5714 = vmatpush1.msra.mxu0 0.0
        %5715 = vmatprep.mubr.f32.mxu0 0.0
        %5716 = vmatmul.mubr.f32.gmra.mrb[0].mxu0 %v5640
        %v5717 = vpop.f32.mrb[0].mxu0
        %v5718 = vadd.f32 0.0, %v5717
        %v5719 = vpop.f32.mrb[0].mxu0
        %5720 = vmatprep.mubr.f32.mxu0 0.0
        %5721 = vmatmul.mubr.f32.gmra.mrb[0].mxu0 %v5643
        %v5722 = vpop.f32.mrb[0].mxu0
        %v5723 = vadd.f32 0.0, %v5722
        %v5724 = vpop.f32.mrb[0].mxu0
        %5725 = vmatprep.mubr.f32.mxu0 0.0
        %5726 = vmatmul.mubr.f32.gmra.mrb[0].mxu0 %v5646
        %v5727 = vpop.f32.mrb[0].mxu0
        %v5728 = vadd.f32 0.0, %v5727
        %v5729 = vpop.f32.mrb[0].mxu0
        %5730 = vmatprep.mubr.f32.mxu0 0.0
        %5731 = vmatmul.mubr.f32.gmra.mrb[0].mxu0 %v5649
        %v5732 = vpop.f32.mrb[0].mxu0
        %v5733 = vadd.f32 0.0, %v5732
        %v5734 = vpop.f32.mrb[0].mxu0
        %5735 = vdwg.mxu0
        %v5737 = vsel %vm1100, %v5272, 0
        %v5740 = vsel %vm1100, %v5273, 0
        %v5743 = vsel %vm1100, %v5274, 0
        %v5746 = vsel %vm1100, %v5275, 0
        %5748 = vmatprep.subr.mxu0 0.0
        %5749 = vmatpush1.msra.mxu0 %v5359
        %5750 = vmatprep.subr.mxu0 0.0
        %5751 = vmatpush1.msra.mxu0 %v5364
        %5752 = vmatprep.subr.mxu0 0.0
        %5753 = vmatpush1.msra.mxu0 %v5369
        %5754 = vmatprep.subr.mxu0 0.0
        %5755 = vmatpush1.msra.mxu0 %v5374
        %5756 = vmatprep.subr.mxu0 0.0
        %5757 = vmatpush1.msra.mxu0 0.0
        %5758 = vmatprep.subr.mxu0 0.0
        %5759 = vmatpush1.msra.mxu0 0.0
        %5760 = vmatprep.subr.mxu0 0.0
        %5761 = vmatpush1.msra.mxu0 0.0
        %5762 = vmatprep.subr.mxu0 0.0
        %5763 = vmatpush1.msra.mxu0 0.0
        %5764 = vmatprep.subr.mxu0 0.0
        %5765 = vmatpush1.msra.mxu0 0.0
        %5766 = vmatprep.subr.mxu0 0.0
        %5767 = vmatpush1.msra.mxu0 0.0
        %5768 = vmatprep.subr.mxu0 0.0
        %5769 = vmatpush1.msra.mxu0 0.0
        %5770 = vmatprep.subr.mxu0 0.0
        %5771 = vmatpush1.msra.mxu0 0.0
        %5772 = vmatprep.subr.mxu0 0.0
        %5773 = vmatpush1.msra.mxu0 0.0
        %5774 = vmatprep.subr.mxu0 0.0
        %5775 = vmatpush1.msra.mxu0 0.0
        %5776 = vmatprep.subr.mxu0 0.0
        %5777 = vmatpush1.msra.mxu0 0.0
        %5778 = vmatprep.subr.mxu0 0.0
        %5779 = vmatpush1.msra.mxu0 0.0
        %5780 = vmatprep.subr.mxu0 0.0
        %5781 = vmatpush1.msra.mxu0 0.0
        %5782 = vmatprep.subr.mxu0 0.0
        %5783 = vmatpush1.msra.mxu0 0.0
        %5784 = vmatprep.subr.mxu0 0.0
        %5785 = vmatpush1.msra.mxu0 0.0
        %5786 = vmatprep.subr.mxu0 0.0
        %5787 = vmatpush1.msra.mxu0 0.0
        %5788 = vmatprep.subr.mxu0 0.0
        %5789 = vmatpush1.msra.mxu0 0.0
        %5790 = vmatprep.subr.mxu0 0.0
        %5791 = vmatpush1.msra.mxu0 0.0
        %5792 = vmatprep.subr.mxu0 0.0
        %5793 = vmatpush1.msra.mxu0 0.0
        %5794 = vmatprep.subr.mxu0 0.0
        %5795 = vmatpush1.msra.mxu0 0.0
        %5796 = vmatprep.subr.mxu0 0.0
        %5797 = vmatpush1.msra.mxu0 0.0
        %5798 = vmatprep.subr.mxu0 0.0
        %5799 = vmatpush1.msra.mxu0 0.0
        %5800 = vmatprep.subr.mxu0 0.0
        %5801 = vmatpush1.msra.mxu0 0.0
        %5802 = vmatprep.subr.mxu0 0.0
        %5803 = vmatpush1.msra.mxu0 0.0
        %5804 = vmatprep.subr.mxu0 0.0
        %5805 = vmatpush1.msra.mxu0 0.0
        %5806 = vmatprep.subr.mxu0 0.0
        %5807 = vmatpush1.msra.mxu0 0.0
        %5808 = vmatprep.subr.mxu0 0.0
        %5809 = vmatpush1.msra.mxu0 0.0
        %5810 = vmatprep.subr.mxu0 0.0
        %5811 = vmatpush1.msra.mxu0 0.0
        %5812 = vmatprep.mubr.f32.mxu0 0.0
        %5813 = vmatmul.mubr.f32.gmra.mrb[0].mxu0 %v5737
        %v5814 = vpop.f32.mrb[0].mxu0
        %v5815 = vadd.f32 %v5718, %v5814
        %v5816 = vpop.f32.mrb[0].mxu0
        %5817 = vmatprep.mubr.f32.mxu0 0.0
        %5818 = vmatmul.mubr.f32.gmra.mrb[0].mxu0 %v5740
        %v5819 = vpop.f32.mrb[0].mxu0
        %v5820 = vadd.f32 %v5723, %v5819
        %v5821 = vpop.f32.mrb[0].mxu0
        %5822 = vmatprep.mubr.f32.mxu0 0.0
        %5823 = vmatmul.mubr.f32.gmra.mrb[0].mxu0 %v5743
        %v5824 = vpop.f32.mrb[0].mxu0
        %v5825 = vadd.f32 %v5728, %v5824
        %v5826 = vpop.f32.mrb[0].mxu0
        %5827 = vmatprep.mubr.f32.mxu0 0.0
        %5828 = vmatmul.mubr.f32.gmra.mrb[0].mxu0 %v5746
        %v5829 = vpop.f32.mrb[0].mxu0
        %v5830 = vadd.f32 %v5733, %v5829
        %v5831 = vpop.f32.mrb[0].mxu0
        %5832 = vdwg.mxu0
        %5833 = vrot.lane.b32.xlu0 %v5111, 112
        %v5834 = vpop.permute.xlu0 %5833
        %5835 = vrot.lane.b32.xlu0 %v5112, 112
        %v5836 = vpop.permute.xlu0 %5835
        %5837 = vrot.lane.b32.xlu0 %v5113, 112
        %v5838 = vpop.permute.xlu0 %5837
        %5839 = vrot.lane.b32.xlu0 %v5114, 112
        %v5840 = vpop.permute.xlu0 %5839
        %5841 = vrot.lane.b32.xlu0 %v5089, 80
        %v5842 = vpop.permute.xlu0 %5841
        %5843 = vrot.lane.b32.xlu0 %v5094, 80
        %v5844 = vpop.permute.xlu0 %5843
        %5845 = vrot.lane.b32.xlu0 %v5099, 80
        %v5846 = vpop.permute.xlu0 %5845
        %5847 = vrot.lane.b32.xlu0 %v5104, 80
        %v5848 = vpop.permute.xlu0 %5847
        %v5849 = vsel %vm1303, %v5834, 0
        %v5851 = vsel %vm1303, %v5836, 0
        %v5853 = vsel %vm1303, %v5838, 0
        %v5855 = vsel %vm1303, %v5840, 0
        %v5857 = vsel %vm1303, %v5842, 0
        %v5859 = vsel %vm1303, %v5844, 0
        %v5861 = vsel %vm1303, %v5846, 0
        %v5863 = vsel %vm1303, %v5848, 0
        %5865 = vmatprep.subr.mxu0 0.0
        %5866 = vmatpush1.xpose.msra.mxu0 %v5857
        %5867 = vmatprep.subr.mxu0 0.0
        %5868 = vmatpush1.xpose.msra.mxu0 %v5859
        %5869 = vmatprep.subr.mxu0 0.0
        %5870 = vmatpush1.xpose.msra.mxu0 %v5861
        %5871 = vmatprep.subr.mxu0 0.0
        %5872 = vmatpush1.xpose.msra.mxu0 %v5863
        %5873 = vmatprep.subr.mxu0 0.0
        %5874 = vmatpush1.xpose.msra.mxu0 0.0
        %5875 = vmatprep.subr.mxu0 0.0
        %5876 = vmatpush1.xpose.msra.mxu0 0.0
        %5877 = vmatprep.subr.mxu0 0.0
        %5878 = vmatpush1.xpose.msra.mxu0 0.0
        %5879 = vmatprep.subr.mxu0 0.0
        %5880 = vmatpush1.xpose.msra.mxu0 0.0
        %5881 = vmatprep.subr.mxu0 0.0
        %5882 = vmatpush1.xpose.msra.mxu0 0.0
        %5883 = vmatprep.subr.mxu0 0.0
        %5884 = vmatpush1.xpose.msra.mxu0 0.0
        %5885 = vmatprep.subr.mxu0 0.0
        %5886 = vmatpush1.xpose.msra.mxu0 0.0
        %5887 = vmatprep.subr.mxu0 0.0
        %5888 = vmatpush1.xpose.msra.mxu0 0.0
        %5889 = vmatprep.subr.mxu0 0.0
        %5890 = vmatpush1.xpose.msra.mxu0 0.0
        %5891 = vmatprep.subr.mxu0 0.0
        %5892 = vmatpush1.xpose.msra.mxu0 0.0
        %5893 = vmatprep.subr.mxu0 0.0
        %5894 = vmatpush1.xpose.msra.mxu0 0.0
        %5895 = vmatprep.subr.mxu0 0.0
        %5896 = vmatpush1.xpose.msra.mxu0 0.0
        %5897 = vmatprep.subr.mxu0 0.0
        %5898 = vmatpush1.xpose.msra.mxu0 0.0
        %5899 = vmatprep.subr.mxu0 0.0
        %5900 = vmatpush1.xpose.msra.mxu0 0.0
        %5901 = vmatprep.subr.mxu0 0.0
        %5902 = vmatpush1.xpose.msra.mxu0 0.0
        %5903 = vmatprep.subr.mxu0 0.0
        %5904 = vmatpush1.xpose.msra.mxu0 0.0
        %5905 = vmatprep.subr.mxu0 0.0
        %5906 = vmatpush1.xpose.msra.mxu0 0.0
        %5907 = vmatprep.subr.mxu0 0.0
        %5908 = vmatpush1.xpose.msra.mxu0 0.0
        %5909 = vmatprep.subr.mxu0 0.0
        %5910 = vmatpush1.xpose.msra.mxu0 0.0
        %5911 = vmatprep.subr.mxu0 0.0
        %5912 = vmatpush1.xpose.msra.mxu0 0.0
        %5913 = vmatprep.subr.mxu0 0.0
        %5914 = vmatpush1.xpose.msra.mxu0 0.0
        %5915 = vmatprep.subr.mxu0 0.0
        %5916 = vmatpush1.xpose.msra.mxu0 0.0
        %5917 = vmatprep.subr.mxu0 0.0
        %5918 = vmatpush1.xpose.msra.mxu0 0.0
        %5919 = vmatprep.subr.mxu0 0.0
        %5920 = vmatpush1.xpose.msra.mxu0 0.0
        %5921 = vmatprep.subr.mxu0 0.0
        %5922 = vmatpush1.xpose.msra.mxu0 0.0
        %5923 = vmatprep.subr.mxu0 0.0
        %5924 = vmatpush1.xpose.msra.mxu0 0.0
        %5925 = vmatprep.subr.mxu0 0.0
        %5926 = vmatpush1.xpose.msra.mxu0 0.0
        %5927 = vmatprep.subr.mxu0 0.0
        %5928 = vmatpush1.xpose.msra.mxu0 0.0
        %5929 = vmatprep.mubr.f32.mxu0 0.0
        %5930 = vmatmul.mubr.f32.gmra.mrb[0].mxu0 %v5849
        %v5931 = vpop.f32.mrb[0].mxu0
        %v5932 = vadd.f32 0.0, %v5931
        %v5933 = vpop.f32.mrb[0].mxu0
        %5934 = vmatprep.mubr.f32.mxu0 0.0
        %5935 = vmatmul.mubr.f32.gmra.mrb[0].mxu0 %v5851
        %v5936 = vpop.f32.mrb[0].mxu0
        %v5937 = vadd.f32 0.0, %v5936
        %v5938 = vpop.f32.mrb[0].mxu0
        %5939 = vmatprep.mubr.f32.mxu0 0.0
        %5940 = vmatmul.mubr.f32.gmra.mrb[0].mxu0 %v5853
        %v5941 = vpop.f32.mrb[0].mxu0
        %v5942 = vadd.f32 0.0, %v5941
        %v5943 = vpop.f32.mrb[0].mxu0
        %5944 = vmatprep.mubr.f32.mxu0 0.0
        %5945 = vmatmul.mubr.f32.gmra.mrb[0].mxu0 %v5855
        %v5946 = vpop.f32.mrb[0].mxu0
        %v5947 = vadd.f32 0.0, %v5946
        %v5948 = vpop.f32.mrb[0].mxu0
        %5949 = vdwg.mxu0
        %v5950 = vsel %vm1100, %v5932, -inf
        %5951 = vmax.xlane.f32.xlu0 %v5950
        %v5952 = vpop.xlane.xlu0 %5951
        %v5953 = vsel %vm1100, %v5937, -inf
        %5954 = vmax.xlane.f32.xlu0 %v5953
        %v5955 = vpop.xlane.xlu0 %5954
        %v5956 = vsel %vm1100, %v5942, -inf
        %5957 = vmax.xlane.f32.xlu0 %v5956
        %v5958 = vpop.xlane.xlu0 %5957
        %v5959 = vsel %vm1100, %v5947, -inf
        %5960 = vmax.xlane.f32.xlu0 %v5959
        %v5961 = vpop.xlane.xlu0 %5960
        %v5962 = vsub.f32 %v5932, %v5952
        %v5963 = vsub.f32 %v5937, %v5955
        %v5964 = vsub.f32 %v5942, %v5958
        %v5965 = vsub.f32 %v5947, %v5961
        %v5966 = vmul.f32 %v5962, 1.442695
        %v5967 = vpow.pop %v5966
        %v5968 = vmul.f32 %v5963, 1.442695
        %v5969 = vpow.pop %v5968
        %v5970 = vmul.f32 %v5964, 1.442695
        %v5971 = vpow.pop %v5970
        %v5972 = vmul.f32 %v5965, 1.442695
        %v5973 = vpow.pop %v5972
        %v5974 = vsel %vm1100, %v5967, 0.0
        %5975 = vadd.xlane.f32.xlu0 %v5974
        %v5976 = vpop.xlane.xlu0 %5975
        %v5977 = vsel %vm1100, %v5969, 0.0
        %5978 = vadd.xlane.f32.xlu0 %v5977
        %v5979 = vpop.xlane.xlu0 %5978
        %v5980 = vsel %vm1100, %v5971, 0.0
        %5981 = vadd.xlane.f32.xlu0 %v5980
        %v5982 = vpop.xlane.xlu0 %5981
        %v5983 = vsel %vm1100, %v5973, 0.0
        %5984 = vadd.xlane.f32.xlu0 %v5983
        %v5985 = vpop.xlane.xlu0 %5984
        %v5986 = vrcp.pop %v5976
        %v5987 = vrcp.pop %v5979
        %v5988 = vrcp.pop %v5982
        %v5989 = vrcp.pop %v5985
        %v5990 = vmul.f32 %v5967, %v5986
        %v5991 = vmul.f32 %v5969, %v5987
        %v5992 = vmul.f32 %v5971, %v5988
        %v5993 = vmul.f32 %v5973, %v5989
        %5994 = vrot.lane.b32.xlu0 %v5089, 48
        %v5995 = vpop.permute.xlu0 %5994
        %5996 = vrot.lane.b32.xlu0 %v5094, 48
        %v5997 = vpop.permute.xlu0 %5996
        %5998 = vrot.lane.b32.xlu0 %v5099, 48
        %v5999 = vpop.permute.xlu0 %5998
        %6000 = vrot.lane.b32.xlu0 %v5104, 48
        %v6001 = vpop.permute.xlu0 %6000
        %v6002 = vsel %vm1303, %v5995, 0
        %v6004 = vsel %vm1303, %v5997, 0
        %v6006 = vsel %vm1303, %v5999, 0
        %v6008 = vsel %vm1303, %v6001, 0
        %6010 = vmatprep.subr.mxu0 0.0
        %6011 = vmatpush1.msra.mxu0 %v5109
        %6012 = vmatprep.subr.mxu0 0.0
        %6013 = vmatpush1.msra.mxu0 0.0
        %6014 = vmatprep.subr.mxu0 0.0
        %6015 = vmatpush1.msra.mxu0 0.0
        %6016 = vmatprep.subr.mxu0 0.0
        %6017 = vmatpush1.msra.mxu0 0.0
        %6018 = vmatprep.subr.mxu0 0.0
        %6019 = vmatpush1.msra.mxu0 0.0
        %6020 = vmatprep.subr.mxu0 0.0
        %6021 = vmatpush1.msra.mxu0 0.0
        %6022 = vmatprep.subr.mxu0 0.0
        %6023 = vmatpush1.msra.mxu0 0.0
        %6024 = vmatprep.subr.mxu0 0.0
        %6025 = vmatpush1.msra.mxu0 0.0
        %6026 = vmatprep.subr.mxu0 0.0
        %6027 = vmatpush1.msra.mxu0 0.0
        %6028 = vmatprep.subr.mxu0 0.0
        %6029 = vmatpush1.msra.mxu0 0.0
        %6030 = vmatprep.subr.mxu0 0.0
        %6031 = vmatpush1.msra.mxu0 0.0
        %6032 = vmatprep.subr.mxu0 0.0
        %6033 = vmatpush1.msra.mxu0 0.0
        %6034 = vmatprep.subr.mxu0 0.0
        %6035 = vmatpush1.msra.mxu0 0.0
        %6036 = vmatprep.subr.mxu0 0.0
        %6037 = vmatpush1.msra.mxu0 0.0
        %6038 = vmatprep.subr.mxu0 0.0
        %6039 = vmatpush1.msra.mxu0 0.0
        %6040 = vmatprep.subr.mxu0 0.0
        %6041 = vmatpush1.msra.mxu0 0.0
        %6042 = vmatprep.subr.mxu0 0.0
        %6043 = vmatpush1.msra.mxu0 0.0
        %6044 = vmatprep.subr.mxu0 0.0
        %6045 = vmatpush1.msra.mxu0 0.0
        %6046 = vmatprep.subr.mxu0 0.0
        %6047 = vmatpush1.msra.mxu0 0.0
        %6048 = vmatprep.subr.mxu0 0.0
        %6049 = vmatpush1.msra.mxu0 0.0
        %6050 = vmatprep.subr.mxu0 0.0
        %6051 = vmatpush1.msra.mxu0 0.0
        %6052 = vmatprep.subr.mxu0 0.0
        %6053 = vmatpush1.msra.mxu0 0.0
        %6054 = vmatprep.subr.mxu0 0.0
        %6055 = vmatpush1.msra.mxu0 0.0
        %6056 = vmatprep.subr.mxu0 0.0
        %6057 = vmatpush1.msra.mxu0 0.0
        %6058 = vmatprep.subr.mxu0 0.0
        %6059 = vmatpush1.msra.mxu0 0.0
        %6060 = vmatprep.subr.mxu0 0.0
        %6061 = vmatpush1.msra.mxu0 0.0
        %6062 = vmatprep.subr.mxu0 0.0
        %6063 = vmatpush1.msra.mxu0 0.0
        %6064 = vmatprep.subr.mxu0 0.0
        %6065 = vmatpush1.msra.mxu0 0.0
        %6066 = vmatprep.subr.mxu0 0.0
        %6067 = vmatpush1.msra.mxu0 0.0
        %6068 = vmatprep.subr.mxu0 0.0
        %6069 = vmatpush1.msra.mxu0 0.0
        %6070 = vmatprep.subr.mxu0 0.0
        %6071 = vmatpush1.msra.mxu0 0.0
        %6072 = vmatprep.subr.mxu0 0.0
        %6073 = vmatpush1.msra.mxu0 0.0
        %6074 = vmatprep.mubr.f32.mxu0 0.0
        %6075 = vmatmul.mubr.f32.gmra.mrb[0].mxu0 %v6002
        %v6076 = vpop.f32.mrb[0].mxu0
        %v6077 = vadd.f32 0.0, %v6076
        %v6078 = vpop.f32.mrb[0].mxu0
        %6079 = vmatprep.mubr.f32.mxu0 0.0
        %6080 = vmatmul.mubr.f32.gmra.mrb[0].mxu0 %v6004
        %v6081 = vpop.f32.mrb[0].mxu0
        %v6082 = vadd.f32 0.0, %v6081
        %v6083 = vpop.f32.mrb[0].mxu0
        %6084 = vmatprep.mubr.f32.mxu0 0.0
        %6085 = vmatmul.mubr.f32.gmra.mrb[0].mxu0 %v6006
        %v6086 = vpop.f32.mrb[0].mxu0
        %v6087 = vadd.f32 0.0, %v6086
        %v6088 = vpop.f32.mrb[0].mxu0
        %6089 = vmatprep.mubr.f32.mxu0 0.0
        %6090 = vmatmul.mubr.f32.gmra.mrb[0].mxu0 %v6008
        %v6091 = vpop.f32.mrb[0].mxu0
        %v6092 = vadd.f32 0.0, %v6091
        %v6093 = vpop.f32.mrb[0].mxu0
        %6094 = vdwg.mxu0
        %v6096 = vsel %vm1100, %v5990, 0
        %v6099 = vsel %vm1100, %v5991, 0
        %v6102 = vsel %vm1100, %v5992, 0
        %v6105 = vsel %vm1100, %v5993, 0
        %6107 = vmatprep.subr.mxu0 0.0
        %6108 = vmatpush1.msra.mxu0 %v6077
        %6109 = vmatprep.subr.mxu0 0.0
        %6110 = vmatpush1.msra.mxu0 %v6082
        %6111 = vmatprep.subr.mxu0 0.0
        %6112 = vmatpush1.msra.mxu0 %v6087
        %6113 = vmatprep.subr.mxu0 0.0
        %6114 = vmatpush1.msra.mxu0 %v6092
        %6115 = vmatprep.subr.mxu0 0.0
        %6116 = vmatpush1.msra.mxu0 0.0
        %6117 = vmatprep.subr.mxu0 0.0
        %6118 = vmatpush1.msra.mxu0 0.0
        %6119 = vmatprep.subr.mxu0 0.0
        %6120 = vmatpush1.msra.mxu0 0.0
        %6121 = vmatprep.subr.mxu0 0.0
        %6122 = vmatpush1.msra.mxu0 0.0
        %6123 = vmatprep.subr.mxu0 0.0
        %6124 = vmatpush1.msra.mxu0 0.0
        %6125 = vmatprep.subr.mxu0 0.0
        %6126 = vmatpush1.msra.mxu0 0.0
        %6127 = vmatprep.subr.mxu0 0.0
        %6128 = vmatpush1.msra.mxu0 0.0
        %6129 = vmatprep.subr.mxu0 0.0
        %6130 = vmatpush1.msra.mxu0 0.0
        %6131 = vmatprep.subr.mxu0 0.0
        %6132 = vmatpush1.msra.mxu0 0.0
        %6133 = vmatprep.subr.mxu0 0.0
        %6134 = vmatpush1.msra.mxu0 0.0
        %6135 = vmatprep.subr.mxu0 0.0
        %6136 = vmatpush1.msra.mxu0 0.0
        %6137 = vmatprep.subr.mxu0 0.0
        %6138 = vmatpush1.msra.mxu0 0.0
        %6139 = vmatprep.subr.mxu0 0.0
        %6140 = vmatpush1.msra.mxu0 0.0
        %6141 = vmatprep.subr.mxu0 0.0
        %6142 = vmatpush1.msra.mxu0 0.0
        %6143 = vmatprep.subr.mxu0 0.0
        %6144 = vmatpush1.msra.mxu0 0.0
        %6145 = vmatprep.subr.mxu0 0.0
        %6146 = vmatpush1.msra.mxu0 0.0
        %6147 = vmatprep.subr.mxu0 0.0
        %6148 = vmatpush1.msra.mxu0 0.0
        %6149 = vmatprep.subr.mxu0 0.0
        %6150 = vmatpush1.msra.mxu0 0.0
        %6151 = vmatprep.subr.mxu0 0.0
        %6152 = vmatpush1.msra.mxu0 0.0
        %6153 = vmatprep.subr.mxu0 0.0
        %6154 = vmatpush1.msra.mxu0 0.0
        %6155 = vmatprep.subr.mxu0 0.0
        %6156 = vmatpush1.msra.mxu0 0.0
        %6157 = vmatprep.subr.mxu0 0.0
        %6158 = vmatpush1.msra.mxu0 0.0
        %6159 = vmatprep.subr.mxu0 0.0
        %6160 = vmatpush1.msra.mxu0 0.0
        %6161 = vmatprep.subr.mxu0 0.0
        %6162 = vmatpush1.msra.mxu0 0.0
        %6163 = vmatprep.subr.mxu0 0.0
        %6164 = vmatpush1.msra.mxu0 0.0
        %6165 = vmatprep.subr.mxu0 0.0
        %6166 = vmatpush1.msra.mxu0 0.0
        %6167 = vmatprep.subr.mxu0 0.0
        %6168 = vmatpush1.msra.mxu0 0.0
        %6169 = vmatprep.subr.mxu0 0.0
        %6170 = vmatpush1.msra.mxu0 0.0
        %6171 = vmatprep.mubr.f32.mxu0 0.0
        %6172 = vmatmul.mubr.f32.gmra.mrb[0].mxu0 %v6096
        %v6173 = vpop.f32.mrb[0].mxu0
        %v6174 = vadd.f32 0.0, %v6173
        %v6175 = vpop.f32.mrb[0].mxu0
        %6176 = vmatprep.mubr.f32.mxu0 0.0
        %6177 = vmatmul.mubr.f32.gmra.mrb[0].mxu0 %v6099
        %v6178 = vpop.f32.mrb[0].mxu0
        %v6179 = vadd.f32 0.0, %v6178
        %v6180 = vpop.f32.mrb[0].mxu0
        %6181 = vmatprep.mubr.f32.mxu0 0.0
        %6182 = vmatmul.mubr.f32.gmra.mrb[0].mxu0 %v6102
        %v6183 = vpop.f32.mrb[0].mxu0
        %v6184 = vadd.f32 0.0, %v6183
        %v6185 = vpop.f32.mrb[0].mxu0
        %6186 = vmatprep.mubr.f32.mxu0 0.0
        %6187 = vmatmul.mubr.f32.gmra.mrb[0].mxu0 %v6105
        %v6188 = vpop.f32.mrb[0].mxu0
        %v6189 = vadd.f32 0.0, %v6188
        %v6190 = vpop.f32.mrb[0].mxu0
        %6191 = vdwg.mxu0
        %v6192 = vadd.f32 %v5815, %v6174
        %v6193 = vadd.f32 %v5820, %v6179
        %v6194 = vadd.f32 %v5825, %v6184
        %v6195 = vadd.f32 %v5830, %v6189
        %6196 = vrot.lane.b32.xlu0 %v5111, 104
        %v6197 = vpop.permute.xlu0 %6196
        %6198 = vrot.lane.b32.xlu0 %v5112, 104
        %v6199 = vpop.permute.xlu0 %6198
        %6200 = vrot.lane.b32.xlu0 %v5113, 104
        %v6201 = vpop.permute.xlu0 %6200
        %6202 = vrot.lane.b32.xlu0 %v5114, 104
        %v6203 = vpop.permute.xlu0 %6202
        %6204 = vrot.lane.b32.xlu0 %v5089, 72
        %v6205 = vpop.permute.xlu0 %6204
        %6206 = vrot.lane.b32.xlu0 %v5094, 72
        %v6207 = vpop.permute.xlu0 %6206
        %6208 = vrot.lane.b32.xlu0 %v5099, 72
        %v6209 = vpop.permute.xlu0 %6208
        %6210 = vrot.lane.b32.xlu0 %v5104, 72
        %v6211 = vpop.permute.xlu0 %6210
        %v6212 = vsel %vm1303, %v6197, 0
        %v6214 = vsel %vm1303, %v6199, 0
        %v6216 = vsel %vm1303, %v6201, 0
        %v6218 = vsel %vm1303, %v6203, 0
        %v6220 = vsel %vm1303, %v6205, 0
        %v6222 = vsel %vm1303, %v6207, 0
        %v6224 = vsel %vm1303, %v6209, 0
        %v6226 = vsel %vm1303, %v6211, 0
        %6228 = vmatprep.subr.mxu0 0.0
        %6229 = vmatpush1.xpose.msra.mxu0 %v6220
        %6230 = vmatprep.subr.mxu0 0.0
        %6231 = vmatpush1.xpose.msra.mxu0 %v6222
        %6232 = vmatprep.subr.mxu0 0.0
        %6233 = vmatpush1.xpose.msra.mxu0 %v6224
        %6234 = vmatprep.subr.mxu0 0.0
        %6235 = vmatpush1.xpose.msra.mxu0 %v6226
        %6236 = vmatprep.subr.mxu0 0.0
        %6237 = vmatpush1.xpose.msra.mxu0 0.0
        %6238 = vmatprep.subr.mxu0 0.0
        %6239 = vmatpush1.xpose.msra.mxu0 0.0
        %6240 = vmatprep.subr.mxu0 0.0
        %6241 = vmatpush1.xpose.msra.mxu0 0.0
        %6242 = vmatprep.subr.mxu0 0.0
        %6243 = vmatpush1.xpose.msra.mxu0 0.0
        %6244 = vmatprep.subr.mxu0 0.0
        %6245 = vmatpush1.xpose.msra.mxu0 0.0
        %6246 = vmatprep.subr.mxu0 0.0
        %6247 = vmatpush1.xpose.msra.mxu0 0.0
        %6248 = vmatprep.subr.mxu0 0.0
        %6249 = vmatpush1.xpose.msra.mxu0 0.0
        %6250 = vmatprep.subr.mxu0 0.0
        %6251 = vmatpush1.xpose.msra.mxu0 0.0
        %6252 = vmatprep.subr.mxu0 0.0
        %6253 = vmatpush1.xpose.msra.mxu0 0.0
        %6254 = vmatprep.subr.mxu0 0.0
        %6255 = vmatpush1.xpose.msra.mxu0 0.0
        %6256 = vmatprep.subr.mxu0 0.0
        %6257 = vmatpush1.xpose.msra.mxu0 0.0
        %6258 = vmatprep.subr.mxu0 0.0
        %6259 = vmatpush1.xpose.msra.mxu0 0.0
        %6260 = vmatprep.subr.mxu0 0.0
        %6261 = vmatpush1.xpose.msra.mxu0 0.0
        %6262 = vmatprep.subr.mxu0 0.0
        %6263 = vmatpush1.xpose.msra.mxu0 0.0
        %6264 = vmatprep.subr.mxu0 0.0
        %6265 = vmatpush1.xpose.msra.mxu0 0.0
        %6266 = vmatprep.subr.mxu0 0.0
        %6267 = vmatpush1.xpose.msra.mxu0 0.0
        %6268 = vmatprep.subr.mxu0 0.0
        %6269 = vmatpush1.xpose.msra.mxu0 0.0
        %6270 = vmatprep.subr.mxu0 0.0
        %6271 = vmatpush1.xpose.msra.mxu0 0.0
        %6272 = vmatprep.subr.mxu0 0.0
        %6273 = vmatpush1.xpose.msra.mxu0 0.0
        %6274 = vmatprep.subr.mxu0 0.0
        %6275 = vmatpush1.xpose.msra.mxu0 0.0
        %6276 = vmatprep.subr.mxu0 0.0
        %6277 = vmatpush1.xpose.msra.mxu0 0.0
        %6278 = vmatprep.subr.mxu0 0.0
        %6279 = vmatpush1.xpose.msra.mxu0 0.0
        %6280 = vmatprep.subr.mxu0 0.0
        %6281 = vmatpush1.xpose.msra.mxu0 0.0
        %6282 = vmatprep.subr.mxu0 0.0
        %6283 = vmatpush1.xpose.msra.mxu0 0.0
        %6284 = vmatprep.subr.mxu0 0.0
        %6285 = vmatpush1.xpose.msra.mxu0 0.0
        %6286 = vmatprep.subr.mxu0 0.0
        %6287 = vmatpush1.xpose.msra.mxu0 0.0
        %6288 = vmatprep.subr.mxu0 0.0
        %6289 = vmatpush1.xpose.msra.mxu0 0.0
        %6290 = vmatprep.subr.mxu0 0.0
        %6291 = vmatpush1.xpose.msra.mxu0 0.0
        %6292 = vmatprep.mubr.f32.mxu0 0.0
        %6293 = vmatmul.mubr.f32.gmra.mrb[0].mxu0 %v6212
        %v6294 = vpop.f32.mrb[0].mxu0
        %v6295 = vadd.f32 0.0, %v6294
        %v6296 = vpop.f32.mrb[0].mxu0
        %6297 = vmatprep.mubr.f32.mxu0 0.0
        %6298 = vmatmul.mubr.f32.gmra.mrb[0].mxu0 %v6214
        %v6299 = vpop.f32.mrb[0].mxu0
        %v6300 = vadd.f32 0.0, %v6299
        %v6301 = vpop.f32.mrb[0].mxu0
        %6302 = vmatprep.mubr.f32.mxu0 0.0
        %6303 = vmatmul.mubr.f32.gmra.mrb[0].mxu0 %v6216
        %v6304 = vpop.f32.mrb[0].mxu0
        %v6305 = vadd.f32 0.0, %v6304
        %v6306 = vpop.f32.mrb[0].mxu0
        %6307 = vmatprep.mubr.f32.mxu0 0.0
        %6308 = vmatmul.mubr.f32.gmra.mrb[0].mxu0 %v6218
        %v6309 = vpop.f32.mrb[0].mxu0
        %v6310 = vadd.f32 0.0, %v6309
        %v6311 = vpop.f32.mrb[0].mxu0
        %6312 = vdwg.mxu0
        %v6313 = vsel %vm1100, %v6295, -inf
        %6314 = vmax.xlane.f32.xlu0 %v6313
        %v6315 = vpop.xlane.xlu0 %6314
        %v6316 = vsel %vm1100, %v6300, -inf
        %6317 = vmax.xlane.f32.xlu0 %v6316
        %v6318 = vpop.xlane.xlu0 %6317
        %v6319 = vsel %vm1100, %v6305, -inf
        %6320 = vmax.xlane.f32.xlu0 %v6319
        %v6321 = vpop.xlane.xlu0 %6320
        %v6322 = vsel %vm1100, %v6310, -inf
        %6323 = vmax.xlane.f32.xlu0 %v6322
        %v6324 = vpop.xlane.xlu0 %6323
        %v6325 = vsub.f32 %v6295, %v6315
        %v6326 = vsub.f32 %v6300, %v6318
        %v6327 = vsub.f32 %v6305, %v6321
        %v6328 = vsub.f32 %v6310, %v6324
        %v6329 = vmul.f32 %v6325, 1.442695
        %v6330 = vpow.pop %v6329
        %v6331 = vmul.f32 %v6326, 1.442695
        %v6332 = vpow.pop %v6331
        %v6333 = vmul.f32 %v6327, 1.442695
        %v6334 = vpow.pop %v6333
        %v6335 = vmul.f32 %v6328, 1.442695
        %v6336 = vpow.pop %v6335
        %v6337 = vsel %vm1100, %v6330, 0.0
        %6338 = vadd.xlane.f32.xlu0 %v6337
        %v6339 = vpop.xlane.xlu0 %6338
        %v6340 = vsel %vm1100, %v6332, 0.0
        %6341 = vadd.xlane.f32.xlu0 %v6340
        %v6342 = vpop.xlane.xlu0 %6341
        %v6343 = vsel %vm1100, %v6334, 0.0
        %6344 = vadd.xlane.f32.xlu0 %v6343
        %v6345 = vpop.xlane.xlu0 %6344
        %v6346 = vsel %vm1100, %v6336, 0.0
        %6347 = vadd.xlane.f32.xlu0 %v6346
        %v6348 = vpop.xlane.xlu0 %6347
        %v6349 = vrcp.pop %v6339
        %v6350 = vrcp.pop %v6342
        %v6351 = vrcp.pop %v6345
        %v6352 = vrcp.pop %v6348
        %v6353 = vmul.f32 %v6330, %v6349
        %v6354 = vmul.f32 %v6332, %v6350
        %v6355 = vmul.f32 %v6334, %v6351
        %v6356 = vmul.f32 %v6336, %v6352
        %6357 = vrot.lane.b32.xlu0 %v5089, 40
        %v6358 = vpop.permute.xlu0 %6357
        %6359 = vrot.lane.b32.xlu0 %v5094, 40
        %v6360 = vpop.permute.xlu0 %6359
        %6361 = vrot.lane.b32.xlu0 %v5099, 40
        %v6362 = vpop.permute.xlu0 %6361
        %6363 = vrot.lane.b32.xlu0 %v5104, 40
        %v6364 = vpop.permute.xlu0 %6363
        %v6365 = vsel %vm1303, %v6358, 0
        %v6367 = vsel %vm1303, %v6360, 0
        %v6369 = vsel %vm1303, %v6362, 0
        %v6371 = vsel %vm1303, %v6364, 0
        %6373 = vmatprep.subr.mxu0 0.0
        %6374 = vmatpush1.msra.mxu0 %v5110
        %6375 = vmatprep.subr.mxu0 0.0
        %6376 = vmatpush1.msra.mxu0 0.0
        %6377 = vmatprep.subr.mxu0 0.0
        %6378 = vmatpush1.msra.mxu0 0.0
        %6379 = vmatprep.subr.mxu0 0.0
        %6380 = vmatpush1.msra.mxu0 0.0
        %6381 = vmatprep.subr.mxu0 0.0
        %6382 = vmatpush1.msra.mxu0 0.0
        %6383 = vmatprep.subr.mxu0 0.0
        %6384 = vmatpush1.msra.mxu0 0.0
        %6385 = vmatprep.subr.mxu0 0.0
        %6386 = vmatpush1.msra.mxu0 0.0
        %6387 = vmatprep.subr.mxu0 0.0
        %6388 = vmatpush1.msra.mxu0 0.0
        %6389 = vmatprep.subr.mxu0 0.0
        %6390 = vmatpush1.msra.mxu0 0.0
        %6391 = vmatprep.subr.mxu0 0.0
        %6392 = vmatpush1.msra.mxu0 0.0
        %6393 = vmatprep.subr.mxu0 0.0
        %6394 = vmatpush1.msra.mxu0 0.0
        %6395 = vmatprep.subr.mxu0 0.0
        %6396 = vmatpush1.msra.mxu0 0.0
        %6397 = vmatprep.subr.mxu0 0.0
        %6398 = vmatpush1.msra.mxu0 0.0
        %6399 = vmatprep.subr.mxu0 0.0
        %6400 = vmatpush1.msra.mxu0 0.0
        %6401 = vmatprep.subr.mxu0 0.0
        %6402 = vmatpush1.msra.mxu0 0.0
        %6403 = vmatprep.subr.mxu0 0.0
        %6404 = vmatpush1.msra.mxu0 0.0
        %6405 = vmatprep.subr.mxu0 0.0
        %6406 = vmatpush1.msra.mxu0 0.0
        %6407 = vmatprep.subr.mxu0 0.0
        %6408 = vmatpush1.msra.mxu0 0.0
        %6409 = vmatprep.subr.mxu0 0.0
        %6410 = vmatpush1.msra.mxu0 0.0
        %6411 = vmatprep.subr.mxu0 0.0
        %6412 = vmatpush1.msra.mxu0 0.0
        %6413 = vmatprep.subr.mxu0 0.0
        %6414 = vmatpush1.msra.mxu0 0.0
        %6415 = vmatprep.subr.mxu0 0.0
        %6416 = vmatpush1.msra.mxu0 0.0
        %6417 = vmatprep.subr.mxu0 0.0
        %6418 = vmatpush1.msra.mxu0 0.0
        %6419 = vmatprep.subr.mxu0 0.0
        %6420 = vmatpush1.msra.mxu0 0.0
        %6421 = vmatprep.subr.mxu0 0.0
        %6422 = vmatpush1.msra.mxu0 0.0
        %6423 = vmatprep.subr.mxu0 0.0
        %6424 = vmatpush1.msra.mxu0 0.0
        %6425 = vmatprep.subr.mxu0 0.0
        %6426 = vmatpush1.msra.mxu0 0.0
        %6427 = vmatprep.subr.mxu0 0.0
        %6428 = vmatpush1.msra.mxu0 0.0
        %6429 = vmatprep.subr.mxu0 0.0
        %6430 = vmatpush1.msra.mxu0 0.0
        %6431 = vmatprep.subr.mxu0 0.0
        %6432 = vmatpush1.msra.mxu0 0.0
        %6433 = vmatprep.subr.mxu0 0.0
        %6434 = vmatpush1.msra.mxu0 0.0
        %6435 = vmatprep.subr.mxu0 0.0
        %6436 = vmatpush1.msra.mxu0 0.0
        %6437 = vmatprep.mubr.f32.mxu0 0.0
        %6438 = vmatmul.mubr.f32.gmra.mrb[0].mxu0 %v6365
        %v6439 = vpop.f32.mrb[0].mxu0
        %v6440 = vadd.f32 0.0, %v6439
        %v6441 = vpop.f32.mrb[0].mxu0
        %6442 = vmatprep.mubr.f32.mxu0 0.0
        %6443 = vmatmul.mubr.f32.gmra.mrb[0].mxu0 %v6367
        %v6444 = vpop.f32.mrb[0].mxu0
        %v6445 = vadd.f32 0.0, %v6444
        %v6446 = vpop.f32.mrb[0].mxu0
        %6447 = vmatprep.mubr.f32.mxu0 0.0
        %6448 = vmatmul.mubr.f32.gmra.mrb[0].mxu0 %v6369
        %v6449 = vpop.f32.mrb[0].mxu0
        %v6450 = vadd.f32 0.0, %v6449
        %v6451 = vpop.f32.mrb[0].mxu0
        %6452 = vmatprep.mubr.f32.mxu0 0.0
        %6453 = vmatmul.mubr.f32.gmra.mrb[0].mxu0 %v6371
        %v6454 = vpop.f32.mrb[0].mxu0
        %v6455 = vadd.f32 0.0, %v6454
        %v6456 = vpop.f32.mrb[0].mxu0
        %6457 = vdwg.mxu0
        %v6459 = vsel %vm1100, %v6353, 0
        %v6462 = vsel %vm1100, %v6354, 0
        %v6465 = vsel %vm1100, %v6355, 0
        %v6468 = vsel %vm1100, %v6356, 0
        %6470 = vmatprep.subr.mxu0 0.0
        %6471 = vmatpush1.msra.mxu0 %v6440
        %6472 = vmatprep.subr.mxu0 0.0
        %6473 = vmatpush1.msra.mxu0 %v6445
        %6474 = vmatprep.subr.mxu0 0.0
        %6475 = vmatpush1.msra.mxu0 %v6450
        %6476 = vmatprep.subr.mxu0 0.0
        %6477 = vmatpush1.msra.mxu0 %v6455
        %6478 = vmatprep.subr.mxu0 0.0
        %6479 = vmatpush1.msra.mxu0 0.0
        %6480 = vmatprep.subr.mxu0 0.0
        %6481 = vmatpush1.msra.mxu0 0.0
        %6482 = vmatprep.subr.mxu0 0.0
        %6483 = vmatpush1.msra.mxu0 0.0
        %6484 = vmatprep.subr.mxu0 0.0
        %6485 = vmatpush1.msra.mxu0 0.0
        %6486 = vmatprep.subr.mxu0 0.0
        %6487 = vmatpush1.msra.mxu0 0.0
        %6488 = vmatprep.subr.mxu0 0.0
        %6489 = vmatpush1.msra.mxu0 0.0
        %6490 = vmatprep.subr.mxu0 0.0
        %6491 = vmatpush1.msra.mxu0 0.0
        %6492 = vmatprep.subr.mxu0 0.0
        %6493 = vmatpush1.msra.mxu0 0.0
        %6494 = vmatprep.subr.mxu0 0.0
        %6495 = vmatpush1.msra.mxu0 0.0
        %6496 = vmatprep.subr.mxu0 0.0
        %6497 = vmatpush1.msra.mxu0 0.0
        %6498 = vmatprep.subr.mxu0 0.0
        %6499 = vmatpush1.msra.mxu0 0.0
        %6500 = vmatprep.subr.mxu0 0.0
        %6501 = vmatpush1.msra.mxu0 0.0
        %6502 = vmatprep.subr.mxu0 0.0
        %6503 = vmatpush1.msra.mxu0 0.0
        %6504 = vmatprep.subr.mxu0 0.0
        %6505 = vmatpush1.msra.mxu0 0.0
        %6506 = vmatprep.subr.mxu0 0.0
        %6507 = vmatpush1.msra.mxu0 0.0
        %6508 = vmatprep.subr.mxu0 0.0
        %6509 = vmatpush1.msra.mxu0 0.0
        %6510 = vmatprep.subr.mxu0 0.0
        %6511 = vmatpush1.msra.mxu0 0.0
        %6512 = vmatprep.subr.mxu0 0.0
        %6513 = vmatpush1.msra.mxu0 0.0
        %6514 = vmatprep.subr.mxu0 0.0
        %6515 = vmatpush1.msra.mxu0 0.0
        %6516 = vmatprep.subr.mxu0 0.0
        %6517 = vmatpush1.msra.mxu0 0.0
        %6518 = vmatprep.subr.mxu0 0.0
        %6519 = vmatpush1.msra.mxu0 0.0
        %6520 = vmatprep.subr.mxu0 0.0
        %6521 = vmatpush1.msra.mxu0 0.0
        %6522 = vmatprep.subr.mxu0 0.0
        %6523 = vmatpush1.msra.mxu0 0.0
        %6524 = vmatprep.subr.mxu0 0.0
        %6525 = vmatpush1.msra.mxu0 0.0
        %6526 = vmatprep.subr.mxu0 0.0
        %6527 = vmatpush1.msra.mxu0 0.0
        %6528 = vmatprep.subr.mxu0 0.0
        %6529 = vmatpush1.msra.mxu0 0.0
        %6530 = vmatprep.subr.mxu0 0.0
        %6531 = vmatpush1.msra.mxu0 0.0
        %6532 = vmatprep.subr.mxu0 0.0
        %6533 = vmatpush1.msra.mxu0 0.0
        %6534 = vmatprep.mubr.f32.mxu0 0.0
        %6535 = vmatmul.mubr.f32.gmra.mrb[0].mxu0 %v6459
        %v6536 = vpop.f32.mrb[0].mxu0
        %v6537 = vadd.f32 0.0, %v6536
        %v6538 = vpop.f32.mrb[0].mxu0
        %6539 = vmatprep.mubr.f32.mxu0 0.0
        %6540 = vmatmul.mubr.f32.gmra.mrb[0].mxu0 %v6462
        %v6541 = vpop.f32.mrb[0].mxu0
        %v6542 = vadd.f32 0.0, %v6541
        %v6543 = vpop.f32.mrb[0].mxu0
        %6544 = vmatprep.mubr.f32.mxu0 0.0
        %6545 = vmatmul.mubr.f32.gmra.mrb[0].mxu0 %v6465
        %v6546 = vpop.f32.mrb[0].mxu0
        %v6547 = vadd.f32 0.0, %v6546
        %v6548 = vpop.f32.mrb[0].mxu0
        %6549 = vmatprep.mubr.f32.mxu0 0.0
        %6550 = vmatmul.mubr.f32.gmra.mrb[0].mxu0 %v6468
        %v6551 = vpop.f32.mrb[0].mxu0
        %v6552 = vadd.f32 0.0, %v6551
        %v6553 = vpop.f32.mrb[0].mxu0
        %6554 = vdwg.mxu0
        %v6555 = vadd.f32 %v6192, %v6537
        %v6556 = vadd.f32 %v6193, %v6542
        %v6557 = vadd.f32 %v6194, %v6547
        %v6558 = vadd.f32 %v6195, %v6552
        %v6559 = vadd.f32 %v4995, %v6555
        %v6560 = vadd.f32 %v4996, %v6556
        %v6561 = vadd.f32 %v4997, %v6557
        %v6562 = vadd.f32 %v4998, %v6558
        %v6563 = vld [vmem:[%s47] sm:$0x1]
        %v6565 = vlaneseq
        %v6566 = vshrl.u32 %v6565, 7
        %v6567 = vsub.s32 0, %v6566
        %v6568 = vrot.slane %v6563, %v6567
        %v6570 = vadd.f32 %v6559, %v6568
        %v6571 = vadd.f32 %v6560, %v6568
        %v6572 = vadd.f32 %v6561, %v6568
        %v6573 = vadd.f32 %v6562, %v6568
        %v6574 = vld [vmem:[%s49] sm:$0x1]
        %v6575 = vld [vmem:[%s51] sm:$0x1]
        %v6576 = vsel %vm1100, %v6570, 0.0
        %6577 = vadd.xlane.f32.xlu0 %v6576
        %v6578 = vpop.xlane.xlu0 %6577
        %v6579 = vsel %vm1100, %v6571, 0.0
        %6580 = vadd.xlane.f32.xlu0 %v6579
        %v6581 = vpop.xlane.xlu0 %6580
        %v6582 = vsel %vm1100, %v6572, 0.0
        %6583 = vadd.xlane.f32.xlu0 %v6582
        %v6584 = vpop.xlane.xlu0 %6583
        %v6585 = vsel %vm1100, %v6573, 0.0
        %6586 = vadd.xlane.f32.xlu0 %v6585
        %v6587 = vpop.xlane.xlu0 %6586
        %v6588 = vmul.f32 %v6578, %v4640
        %v6589 = vmul.f32 %v6581, %v4640
        %v6590 = vmul.f32 %v6584, %v4640
        %v6591 = vmul.f32 %v6587, %v4640
        %v6592 = vsub.f32 %v6570, %v6588
        %v6593 = vsub.f32 %v6571, %v6589
        %v6594 = vsub.f32 %v6572, %v6590
        %v6595 = vsub.f32 %v6573, %v6591
        %v6596 = vmul.f32 %v6592, %v6592
        %v6597 = vmul.f32 %v6593, %v6593
        %v6598 = vmul.f32 %v6594, %v6594
        %v6599 = vmul.f32 %v6595, %v6595
        %v6600 = vsel %vm1100, %v6596, 0.0
        %6601 = vadd.xlane.f32.xlu0 %v6600
        %v6602 = vpop.xlane.xlu0 %6601
        %v6603 = vsel %vm1100, %v6597, 0.0
        %6604 = vadd.xlane.f32.xlu0 %v6603
        %v6605 = vpop.xlane.xlu0 %6604
        %v6606 = vsel %vm1100, %v6598, 0.0
        %6607 = vadd.xlane.f32.xlu0 %v6606
        %v6608 = vpop.xlane.xlu0 %6607
        %v6609 = vsel %vm1100, %v6599, 0.0
        %6610 = vadd.xlane.f32.xlu0 %v6609
        %v6611 = vpop.xlane.xlu0 %6610
        %v6612 = vmul.f32 %v6602, %v4640
        %v6613 = vmul.f32 %v6605, %v4640
        %v6614 = vmul.f32 %v6608, %v4640
        %v6615 = vmul.f32 %v6611, %v4640
        %v6616 = vadd.f32 %v6612, 1e-05
        %v6617 = vadd.f32 %v6613, 1e-05
        %v6618 = vadd.f32 %v6614, 1e-05
        %v6619 = vadd.f32 %v6615, 1e-05
        %v6620 = vrsqrt.pop %v6616
        %v6621 = vrsqrt.pop %v6617
        %v6622 = vrsqrt.pop %v6618
        %v6623 = vrsqrt.pop %v6619
        %v6624 = vmul.f32 %v6592, %v6620
        %v6625 = vmul.f32 %v6593, %v6621
        %v6626 = vmul.f32 %v6594, %v6622
        %v6627 = vmul.f32 %v6595, %v6623
        %v6629 = vlaneseq
        %v6630 = vshrl.u32 %v6629, 7
        %v6631 = vsub.s32 0, %v6630
        %v6632 = vrot.slane %v6574, %v6631
        %v6634 = vmul.f32 %v6624, %v6632
        %v6635 = vmul.f32 %v6625, %v6632
        %v6636 = vmul.f32 %v6626, %v6632
        %v6637 = vmul.f32 %v6627, %v6632
        %v6639 = vlaneseq
        %v6640 = vshrl.u32 %v6639, 7
        %v6641 = vsub.s32 0, %v6640
        %v6642 = vrot.slane %v6575, %v6641
        %v6644 = vadd.f32 %v6634, %v6642
        %v6645 = vadd.f32 %v6635, %v6642
        %v6646 = vadd.f32 %v6636, %v6642
        %v6647 = vadd.f32 %v6637, %v6642
        %v6648 = vld [vmem:[%s53] sm:$0xff]
        %v6649 = vld [vmem:[%s53 + $0x8] sm:$0xff]
        %v6650 = vld [vmem:[%s53 + $0x10] sm:$0xff]
        %v6651 = vld [vmem:[%s53 + $0x18] sm:$0xff]
        %v6652 = vld [vmem:[%s55] sm:$0x1]
        %v6654 = vlaneseq
        %v6655 = vshrl.u32 %v6654, 7
        %v6656 = vsub.s32 0, %v6655
        %v6657 = vrot.slane %v6652, %v6656
        %v6660 = vsel %vm1100, %v6644, 0
        %v6663 = vsel %vm1100, %v6645, 0
        %v6666 = vsel %vm1100, %v6646, 0
        %v6669 = vsel %vm1100, %v6647, 0
        %6671 = vmatprep.subr.mxu0 0.0
        %6672 = vmatpush1.msra.mxu0 %v6648
        %6673 = vmatprep.subr.mxu0 0.0
        %6674 = vmatpush1.msra.mxu0 %v6649
        %6675 = vmatprep.subr.mxu0 0.0
        %6676 = vmatpush1.msra.mxu0 %v6650
        %6677 = vmatprep.subr.mxu0 0.0
        %6678 = vmatpush1.msra.mxu0 %v6651
        %6679 = vmatprep.subr.mxu0 0.0
        %6680 = vmatpush1.msra.mxu0 0.0
        %6681 = vmatprep.subr.mxu0 0.0
        %6682 = vmatpush1.msra.mxu0 0.0
        %6683 = vmatprep.subr.mxu0 0.0
        %6684 = vmatpush1.msra.mxu0 0.0
        %6685 = vmatprep.subr.mxu0 0.0
        %6686 = vmatpush1.msra.mxu0 0.0
        %6687 = vmatprep.subr.mxu0 0.0
        %6688 = vmatpush1.msra.mxu0 0.0
        %6689 = vmatprep.subr.mxu0 0.0
        %6690 = vmatpush1.msra.mxu0 0.0
        %6691 = vmatprep.subr.mxu0 0.0
        %6692 = vmatpush1.msra.mxu0 0.0
        %6693 = vmatprep.subr.mxu0 0.0
        %6694 = vmatpush1.msra.mxu0 0.0
        %6695 = vmatprep.subr.mxu0 0.0
        %6696 = vmatpush1.msra.mxu0 0.0
        %6697 = vmatprep.subr.mxu0 0.0
        %6698 = vmatpush1.msra.mxu0 0.0
        %6699 = vmatprep.subr.mxu0 0.0
        %6700 = vmatpush1.msra.mxu0 0.0
        %6701 = vmatprep.subr.mxu0 0.0
        %6702 = vmatpush1.msra.mxu0 0.0
        %6703 = vmatprep.subr.mxu0 0.0
        %6704 = vmatpush1.msra.mxu0 0.0
        %6705 = vmatprep.subr.mxu0 0.0
        %6706 = vmatpush1.msra.mxu0 0.0
        %6707 = vmatprep.subr.mxu0 0.0
        %6708 = vmatpush1.msra.mxu0 0.0
        %6709 = vmatprep.subr.mxu0 0.0
        %6710 = vmatpush1.msra.mxu0 0.0
        %6711 = vmatprep.subr.mxu0 0.0
        %6712 = vmatpush1.msra.mxu0 0.0
        %6713 = vmatprep.subr.mxu0 0.0
        %6714 = vmatpush1.msra.mxu0 0.0
        %6715 = vmatprep.subr.mxu0 0.0
        %6716 = vmatpush1.msra.mxu0 0.0
        %6717 = vmatprep.subr.mxu0 0.0
        %6718 = vmatpush1.msra.mxu0 0.0
        %6719 = vmatprep.subr.mxu0 0.0
        %6720 = vmatpush1.msra.mxu0 0.0
        %6721 = vmatprep.subr.mxu0 0.0
        %6722 = vmatpush1.msra.mxu0 0.0
        %6723 = vmatprep.subr.mxu0 0.0
        %6724 = vmatpush1.msra.mxu0 0.0
        %6725 = vmatprep.subr.mxu0 0.0
        %6726 = vmatpush1.msra.mxu0 0.0
        %6727 = vmatprep.subr.mxu0 0.0
        %6728 = vmatpush1.msra.mxu0 0.0
        %6729 = vmatprep.subr.mxu0 0.0
        %6730 = vmatpush1.msra.mxu0 0.0
        %6731 = vmatprep.subr.mxu0 0.0
        %6732 = vmatpush1.msra.mxu0 0.0
        %6733 = vmatprep.subr.mxu0 0.0
        %6734 = vmatpush1.msra.mxu0 0.0
        %6735 = vmatprep.mubr.f32.mxu0 0.0
        %6736 = vmatmul.mubr.f32.gmra.mrb[0].mxu0 %v6660
        %v6737 = vpop.f32.mrb[0].mxu0
        %v6738 = vadd.f32 %v6657, %v6737
        %v6739 = vpop.f32.mrb[0].mxu0
        %6740 = vmatprep.mubr.f32.mxu0 0.0
        %6741 = vmatmul.mubr.f32.gmra.mrb[0].mxu0 %v6663
        %v6742 = vpop.f32.mrb[0].mxu0
        %v6743 = vadd.f32 %v6657, %v6742
        %v6744 = vpop.f32.mrb[0].mxu0
        %6745 = vmatprep.mubr.f32.mxu0 0.0
        %6746 = vmatmul.mubr.f32.gmra.mrb[0].mxu0 %v6666
        %v6747 = vpop.f32.mrb[0].mxu0
        %v6748 = vadd.f32 %v6657, %v6747
        %v6749 = vpop.f32.mrb[0].mxu0
        %6750 = vmatprep.mubr.f32.mxu0 0.0
        %6751 = vmatmul.mubr.f32.gmra.mrb[0].mxu0 %v6669
        %v6752 = vpop.f32.mrb[0].mxu0
        %v6753 = vadd.f32 %v6657, %v6752
        %v6754 = vpop.f32.mrb[0].mxu0
        %6755 = vdwg.mxu0
        %v6756 = vmax.f32 %v6738, 0.0
        %v6757 = vmax.f32 %v6743, 0.0
        %v6758 = vmax.f32 %v6748, 0.0
        %v6759 = vmax.f32 %v6753, 0.0
        %v6760 = vld [vmem:[%s57] sm:$0xff]
        %v6761 = vld [vmem:[%s57 + $0x8] sm:$0xff]
        %v6762 = vld [vmem:[%s57 + $0x10] sm:$0xff]
        %v6763 = vld [vmem:[%s57 + $0x18] sm:$0xff]
        %v6764 = vld [vmem:[%s57 + $0x20] sm:$0xff]
        %v6765 = vld [vmem:[%s57 + $0x28] sm:$0xff]
        %v6766 = vld [vmem:[%s57 + $0x30] sm:$0xff]
        %v6767 = vld [vmem:[%s57 + $0x38] sm:$0xff]
        %v6768 = vld [vmem:[%s57 + $0x40] sm:$0xff]
        %v6769 = vld [vmem:[%s57 + $0x48] sm:$0xff]
        %v6770 = vld [vmem:[%s57 + $0x50] sm:$0xff]
        %v6771 = vld [vmem:[%s57 + $0x58] sm:$0xff]
        %v6772 = vld [vmem:[%s57 + $0x60] sm:$0xff]
        %v6773 = vld [vmem:[%s57 + $0x68] sm:$0xff]
        %v6774 = vld [vmem:[%s57 + $0x70] sm:$0xff]
        %v6775 = vld [vmem:[%s57 + $0x78] sm:$0xff]
        %v6776 = vld [vmem:[%s59] sm:$0x1]
        %v6778 = vlaneseq
        %v6779 = vshrl.u32 %v6778, 7
        %v6780 = vsub.s32 0, %v6779
        %v6781 = vrot.slane %v6776, %v6780
        %6783 = vmatprep.subr.mxu0 0.0
        %6784 = vmatpush1.msra.mxu0 %v6760
        %6785 = vmatprep.subr.mxu0 0.0
        %6786 = vmatpush1.msra.mxu0 %v6761
        %6787 = vmatprep.subr.mxu0 0.0
        %6788 = vmatpush1.msra.mxu0 %v6762
        %6789 = vmatprep.subr.mxu0 0.0
        %6790 = vmatpush1.msra.mxu0 %v6763
        %6791 = vmatprep.subr.mxu0 0.0
        %6792 = vmatpush1.msra.mxu0 %v6764
        %6793 = vmatprep.subr.mxu0 0.0
        %6794 = vmatpush1.msra.mxu0 %v6765
        %6795 = vmatprep.subr.mxu0 0.0
        %6796 = vmatpush1.msra.mxu0 %v6766
        %6797 = vmatprep.subr.mxu0 0.0
        %6798 = vmatpush1.msra.mxu0 %v6767
        %6799 = vmatprep.subr.mxu0 0.0
        %6800 = vmatpush1.msra.mxu0 %v6768
        %6801 = vmatprep.subr.mxu0 0.0
        %6802 = vmatpush1.msra.mxu0 %v6769
        %6803 = vmatprep.subr.mxu0 0.0
        %6804 = vmatpush1.msra.mxu0 %v6770
        %6805 = vmatprep.subr.mxu0 0.0
        %6806 = vmatpush1.msra.mxu0 %v6771
        %6807 = vmatprep.subr.mxu0 0.0
        %6808 = vmatpush1.msra.mxu0 %v6772
        %6809 = vmatprep.subr.mxu0 0.0
        %6810 = vmatpush1.msra.mxu0 %v6773
        %6811 = vmatprep.subr.mxu0 0.0
        %6812 = vmatpush1.msra.mxu0 %v6774
        %6813 = vmatprep.subr.mxu0 0.0
        %6814 = vmatpush1.msra.mxu0 %v6775
        %6815 = vmatprep.subr.mxu0 0.0
        %6816 = vmatpush1.msra.mxu0 0.0
        %6817 = vmatprep.subr.mxu0 0.0
        %6818 = vmatpush1.msra.mxu0 0.0
        %6819 = vmatprep.subr.mxu0 0.0
        %6820 = vmatpush1.msra.mxu0 0.0
        %6821 = vmatprep.subr.mxu0 0.0
        %6822 = vmatpush1.msra.mxu0 0.0
        %6823 = vmatprep.subr.mxu0 0.0
        %6824 = vmatpush1.msra.mxu0 0.0
        %6825 = vmatprep.subr.mxu0 0.0
        %6826 = vmatpush1.msra.mxu0 0.0
        %6827 = vmatprep.subr.mxu0 0.0
        %6828 = vmatpush1.msra.mxu0 0.0
        %6829 = vmatprep.subr.mxu0 0.0
        %6830 = vmatpush1.msra.mxu0 0.0
        %6831 = vmatprep.subr.mxu0 0.0
        %6832 = vmatpush1.msra.mxu0 0.0
        %6833 = vmatprep.subr.mxu0 0.0
        %6834 = vmatpush1.msra.mxu0 0.0
        %6835 = vmatprep.subr.mxu0 0.0
        %6836 = vmatpush1.msra.mxu0 0.0
        %6837 = vmatprep.subr.mxu0 0.0
        %6838 = vmatpush1.msra.mxu0 0.0
        %6839 = vmatprep.subr.mxu0 0.0
        %6840 = vmatpush1.msra.mxu0 0.0
        %6841 = vmatprep.subr.mxu0 0.0
        %6842 = vmatpush1.msra.mxu0 0.0
        %6843 = vmatprep.subr.mxu0 0.0
        %6844 = vmatpush1.msra.mxu0 0.0
        %6845 = vmatprep.subr.mxu0 0.0
        %6846 = vmatpush1.msra.mxu0 0.0
        %6847 = vmatprep.mubr.f32.mxu0 0.0
        %6848 = vmatmul.mubr.f32.gmra.mrb[0].mxu0 %v6756
        %v6849 = vpop.f32.mrb[0].mxu0
        %v6850 = vadd.f32 %v6781, %v6849
        %v6851 = vpop.f32.mrb[0].mxu0
        %6852 = vmatprep.mubr.f32.mxu0 0.0
        %6853 = vmatmul.mubr.f32.gmra.mrb[0].mxu0 %v6757
        %v6854 = vpop.f32.mrb[0].mxu0
        %v6855 = vadd.f32 %v6781, %v6854
        %v6856 = vpop.f32.mrb[0].mxu0
        %6857 = vmatprep.mubr.f32.mxu0 0.0
        %6858 = vmatmul.mubr.f32.gmra.mrb[0].mxu0 %v6758
        %v6859 = vpop.f32.mrb[0].mxu0
        %v6860 = vadd.f32 %v6781, %v6859
        %v6861 = vpop.f32.mrb[0].mxu0
        %6862 = vmatprep.mubr.f32.mxu0 0.0
        %6863 = vmatmul.mubr.f32.gmra.mrb[0].mxu0 %v6759
        %v6864 = vpop.f32.mrb[0].mxu0
        %v6865 = vadd.f32 %v6781, %v6864
        %v6866 = vpop.f32.mrb[0].mxu0
        %6867 = vdwg.mxu0
        %v6868 = vadd.f32 %v6644, %v6850
        %v6869 = vadd.f32 %v6645, %v6855
        %v6870 = vadd.f32 %v6646, %v6860
        %v6871 = vadd.f32 %v6647, %v6865
        %v6872 = vld [vmem:[%s61] sm:$0x1]
        %v6873 = vld [vmem:[%s63] sm:$0x1]
        %v6874 = vsel %vm1100, %v6868, 0.0
        %6875 = vadd.xlane.f32.xlu0 %v6874
        %v6876 = vpop.xlane.xlu0 %6875
        %v6877 = vsel %vm1100, %v6869, 0.0
        %6878 = vadd.xlane.f32.xlu0 %v6877
        %v6879 = vpop.xlane.xlu0 %6878
        %v6880 = vsel %vm1100, %v6870, 0.0
        %6881 = vadd.xlane.f32.xlu0 %v6880
        %v6882 = vpop.xlane.xlu0 %6881
        %v6883 = vsel %vm1100, %v6871, 0.0
        %6884 = vadd.xlane.f32.xlu0 %v6883
        %v6885 = vpop.xlane.xlu0 %6884
        %v6886 = vmul.f32 %v6876, %v4640
        %v6887 = vmul.f32 %v6879, %v4640
        %v6888 = vmul.f32 %v6882, %v4640
        %v6889 = vmul.f32 %v6885, %v4640
        %v6890 = vsub.f32 %v6868, %v6886
        %v6891 = vsub.f32 %v6869, %v6887
        %v6892 = vsub.f32 %v6870, %v6888
        %v6893 = vsub.f32 %v6871, %v6889
        %v6894 = vmul.f32 %v6890, %v6890
        %v6895 = vmul.f32 %v6891, %v6891
        %v6896 = vmul.f32 %v6892, %v6892
        %v6897 = vmul.f32 %v6893, %v6893
        %v6898 = vsel %vm1100, %v6894, 0.0
        %6899 = vadd.xlane.f32.xlu0 %v6898
        %v6900 = vpop.xlane.xlu0 %6899
        %v6901 = vsel %vm1100, %v6895, 0.0
        %6902 = vadd.xlane.f32.xlu0 %v6901
        %v6903 = vpop.xlane.xlu0 %6902
        %v6904 = vsel %vm1100, %v6896, 0.0
        %6905 = vadd.xlane.f32.xlu0 %v6904
        %v6906 = vpop.xlane.xlu0 %6905
        %v6907 = vsel %vm1100, %v6897, 0.0
        %6908 = vadd.xlane.f32.xlu0 %v6907
        %v6909 = vpop.xlane.xlu0 %6908
        %v6910 = vmul.f32 %v6900, %v4640
        %v6911 = vmul.f32 %v6903, %v4640
        %v6912 = vmul.f32 %v6906, %v4640
        %v6913 = vmul.f32 %v6909, %v4640
        %v6914 = vadd.f32 %v6910, 1e-05
        %v6915 = vadd.f32 %v6911, 1e-05
        %v6916 = vadd.f32 %v6912, 1e-05
        %v6917 = vadd.f32 %v6913, 1e-05
        %v6918 = vrsqrt.pop %v6914
        %v6919 = vrsqrt.pop %v6915
        %v6920 = vrsqrt.pop %v6916
        %v6921 = vrsqrt.pop %v6917
        %v6922 = vmul.f32 %v6890, %v6918
        %v6923 = vmul.f32 %v6891, %v6919
        %v6924 = vmul.f32 %v6892, %v6920
        %v6925 = vmul.f32 %v6893, %v6921
        %v6927 = vlaneseq
        %v6928 = vshrl.u32 %v6927, 7
        %v6929 = vsub.s32 0, %v6928
        %v6930 = vrot.slane %v6872, %v6929
        %v6932 = vmul.f32 %v6922, %v6930
        %v6933 = vmul.f32 %v6923, %v6930
        %v6934 = vmul.f32 %v6924, %v6930
        %v6935 = vmul.f32 %v6925, %v6930
        %v6937 = vlaneseq
        %v6938 = vshrl.u32 %v6937, 7
        %v6939 = vsub.s32 0, %v6938
        %v6940 = vrot.slane %v6873, %v6939
        %v6942 = vadd.f32 %v6932, %v6940
        %v6943 = vadd.f32 %v6933, %v6940
        %v6944 = vadd.f32 %v6934, %v6940
        %v6945 = vadd.f32 %v6935, %v6940
        %6946 = vst.msk [vmem:[%s979] sm:$0xff] %vm1100, %v6942
        %6947 = vst.msk [vmem:[%s979 + $0x8] sm:$0xff] %vm1100, %v6943
        %6948 = vst.msk [vmem:[%s979 + $0x10] sm:$0xff] %vm1100, %v6944
        %6949 = vst.msk [vmem:[%s979 + $0x18] sm:$0xff] %vm1100, %v6945
        %s6950 = sand.u32 %s764, 1
        %s6951 = scalar_lea.sflag [#allocation3], %s6950
        %s6952 = sand.u32 %s764, 1
        %s6953 = smul.addr %s6952, 32
        %s6954 = scalar_lea.vmem [#allocation2], %s6953
        // Predicated region
        $region149: #{_lambda_.1} parent=147 // pred_check
          %p6955 = pneg %p774
        $region150: #{_lambda_.1} parent=147 // pred_check_branch
          %6957 = sbr.rel (%p6955) target = $region152
        $region151: #{_lambda_.1} parent=147 // pred_region
          %s6959 = ssub.s32 512, 512
          %6960 = vsyncadd %s6951, %s6959
          %s6961 = smul.addr %s79, 4
          %s6962 = smul.addr %s6961, 128
          %s6963 = scalar_lea.hbm %s65, %s6962
          %s6964 = sshll.u32 %s6954, 4
          %s6965 = int_to_ptr.vmem [resolvable:$true] %s6964
          %6970 = dma.vmem_to_hbm [thread:$0]  %s6965, 512, %s6963, %s6951, 128, 128, 8
        $region152: #{_lambda_.1} parent=147 // pred_fallthru
          _
      $region148: #{_lambda_.1} parent=5 // pred_fallthru
        _
      %p6971 = scmp.le.s32.totalorder 2, %s74
      // Predicated region
      $region153: #{_lambda_.1} parent=5 // pred_check
        %p6972 = pneg %p6971
      $region154: #{_lambda_.1} parent=5 // pred_check_branch
        %6974 = sbr.rel (%p6972) target = $region156
      $region155: #{_lambda_.1} parent=5 // pred_region
        %s6975 = ssub.s32 %s74, 2
        // Predicated region
        $region157: #{_lambda_.1} parent=155 // pred_check
          %p6976 = pneg %p780
        $region158: #{_lambda_.1} parent=155 // pred_check_branch
          %6978 = sbr.rel (%p6976) target = $region160
        $region159: #{_lambda_.1} parent=155 // pred_region
          %s6979 = sand.u32 %s765, 1
          %s6980 = scalar_lea.sflag [#allocation3], %s6979
          %s6981 = sand.u32 %s765, 1
          %s6982 = smul.addr %s6981, 32
          %s6983 = scalar_lea.vmem [#allocation2], %s6982
          %6984 = dma.done %s6980, 512
        $region160: #{_lambda_.1} parent=155 // pred_fallthru
          _
      $region156: #{_lambda_.1} parent=5 // pred_fallthru
        _
    $region6: #{_lambda_.1} parent=1 // loop_footer
      %s78 = sadd.s32 1, %s74
    $region7: #{_lambda_.1} parent=1 // loop_footer_branch
      %73 = sbr.rel target = $region3
    $region8: #{_lambda_.1} parent=1 // loop_exit
      _
    %6985 = vsyncpa [#allocation3], 1
    %s6986 = scalar_lea.sflag [#allocation3], 1
    %6987 = vsyncpa %s6986, 1

</llo_original>
